<compile_context>
chip_gen: v6e
topology: v6e:2x2x1
jax: 0.10.0
libtpu: 0.0.40
codegen_flags: <defaults>
</compile_context>

<pallas_src>
import functools

import jax
import jax.numpy as jnp
from jax.experimental import pallas as pl
from jax.experimental.pallas import tpu as pltpu

_HIGHEST = jax.lax.Precision.HIGHEST


def _round_up(x, m):
    return ((x + m - 1) // m) * m


def _dynamics_kernel(action_ref, state_ref, w1_ref, b1_ref, w2_ref, b2_ref,
                     w3_ref, b3_ref, out_ref):
    """One batch tile, feature-major (batch on lanes).

    Shapes per tile:
      action_ref: (A, TB)   state_ref: (S, TB)
      w1_ref: (HP, A+S)  b1_ref: (HP, 1)
      w2_ref: (HP, HP)   b2_ref: (HP, 1)
      w3_ref: (S,  HP)   b3_ref: (S, 1)
      out_ref: (S, TB)
    """
    # x^T = cat((action, state), dim=-1)^T : in-kernel sublane concat, no HBM cat.
    x = jnp.concatenate([action_ref[...], state_ref[...]], axis=0)

    h1 = jnp.dot(w1_ref[...], x, preferred_element_type=jnp.float32,
                 precision=_HIGHEST) + b1_ref[...]
    h1 = jnp.maximum(h1, 0.0)

    h2 = jnp.dot(w2_ref[...], h1, preferred_element_type=jnp.float32,
                 precision=_HIGHEST) + b2_ref[...]
    h2 = jnp.maximum(h2, 0.0)

    y = jnp.dot(w3_ref[...], h2, preferred_element_type=jnp.float32,
                precision=_HIGHEST) + b3_ref[...]
    out_ref[...] = y.astype(out_ref.dtype)


@functools.partial(jax.jit, static_argnames=("block_b",))
def absolute_dynamics_forward(params, state, action, *, block_b=2048):
    """Pallas equivalent of AbsoluteDynamicsModel.forward(state, action).

    Supports arbitrary leading dims (..., state_dim)/(..., action_dim); they are
    flattened into a batch that is placed on the TPU lane axis inside the kernel.
    """
    w1, b1, w2, b2, w3, b3 = params
    hidden = w1.shape[1]
    state_dim = w3.shape[1]
    action_dim = w1.shape[0] - state_dim
    in_dim = action_dim + state_dim
    hp = _round_up(hidden, 128)          # 100 -> 128, zero-padded (identical results)
    f32 = jnp.float32

    lead = state.shape[:-1]
    s2 = state.reshape(-1, state_dim).astype(f32)
    a2 = action.reshape(-1, action_dim).astype(f32)
    B = s2.shape[0]

    # --- weight prep (once, tiny): pad hidden to 128, go feature-major ------------
    w1p = jnp.zeros((in_dim, hp), f32).at[:, :hidden].set(w1.astype(f32))
    b1p = jnp.zeros((hp,), f32).at[:hidden].set(b1.reshape(-1).astype(f32))
    w2p = jnp.zeros((hp, hp), f32).at[:hidden, :hidden].set(w2.astype(f32))
    b2p = jnp.zeros((hp,), f32).at[:hidden].set(b2.reshape(-1).astype(f32))
    w3p = jnp.zeros((hp, state_dim), f32).at[:hidden, :].set(w3.astype(f32))
    b3p = b3.reshape(-1).astype(f32)

    w1t = w1p.T                          # (hp, in_dim)
    b1t = b1p.reshape(hp, 1)
    w2t = w2p.T                          # (hp, hp)
    b2t = b2p.reshape(hp, 1)
    w3t = w3p.T                          # (state_dim, hp)
    b3t = b3p.reshape(state_dim, 1)

    # --- batch tiling: batch on lanes, quantum 128 ---------------------------------
    block_b = _round_up(max(int(block_b), 128), 128)
    tb = min(block_b, _round_up(B, 128))
    bp = _round_up(B, tb)
    if bp // tb == 1 and tb > 128:
        # v7x megacore: split into >=2 (even) grid steps so the "parallel" axis gives
        # both TensorCores work.  Harmless on single-TC v5e/v6e.
        tb = _round_up((tb + 1) // 2, 128)
        bp = _round_up(B, tb)

    if bp != B:                          # rows are independent; pad is sliced off
        a2 = jnp.pad(a2, ((0, bp - B), (0, 0)))
        s2 = jnp.pad(s2, ((0, bp - B), (0, 0)))
    # Feature-major slabs (XLA-side layout plumbing, outside the kernel).
    a_t = a2.T                           # (action_dim, bp)
    s_t = s2.T                           # (state_dim, bp)

    grid = (bp // tb,)
    batch_spec = lambda rows: pl.BlockSpec((rows, tb), lambda i: (0, i))
    const_spec = lambda r, c: pl.BlockSpec((r, c), lambda i: (0, 0))

    flops = 2 * bp * (in_dim * hp + hp * hp + hp * state_dim)
    bytes_accessed = 4 * (a_t.size + s_t.size + w1t.size + b1t.size + w2t.size
                          + b2t.size + w3t.size + b3t.size + bp * state_dim)

    out_t = pl.pallas_call(
        _dynamics_kernel,
        out_shape=jax.ShapeDtypeStruct((state_dim, bp), f32),
        grid=grid,
        in_specs=[
            batch_spec(action_dim),           # action^T tile  (A, tb)
            batch_spec(state_dim),            # state^T tile   (S, tb)
            const_spec(hp, in_dim),           # W1^T  (resident)
            const_spec(hp, 1),                # b1
            const_spec(hp, hp),               # W2^T
            const_spec(hp, 1),                # b2
            const_spec(state_dim, hp),        # W3^T
            const_spec(state_dim, 1),         # b3
        ],
        out_specs=batch_spec(state_dim),      # next_state^T tile (S, tb), lane-dense
        compiler_params=pltpu.CompilerParams(
            dimension_semantics=("parallel",)),
        cost_estimate=pl.CostEstimate(
            flops=int(flops), transcendentals=0,
            bytes_accessed=int(bytes_accessed)),
    )(a_t, s_t, w1t, b1t, w2t, b2t, w3t, b3t)

    return out_t[:, :B].T.reshape(*lead, state_dim)


def _reference_forward(params, state, action):
    """Pure-JAX reference mirroring the PyTorch forward (f32, HIGHEST matmuls)."""
    w1, b1, w2, b2, w3, b3 = params
    x = jnp.concatenate([action, state], axis=-1)
    h1 = jnp.maximum(jnp.dot(x, w1, precision=_HIGHEST) + b1, 0.0)
    h2 = jnp.maximum(jnp.dot(h1, w2, precision=_HIGHEST) + b2, 0.0)
    return jnp.dot(h2, w3, precision=_HIGHEST) + b3


def init_params(key, state_dim, action_dim, hidden):
    """Deterministic synthetic parameters for the dynamics MLP.

    Weights stored as [in_features, out_features] (x @ W + b); loaders from the
    PyTorch module must transpose nn.Linear's [out, in].  The first `action_dim`
    rows of w1 correspond to the action block (cat order = (action, state)).
    """
    in_dim = state_dim + action_dim
    k1, k2, k3, k4, k5, k6 = jax.random.split(key, 6)
    w1 = jax.random.normal(k1, (in_dim, hidden), jnp.float32) * 0.1
    b1 = jax.random.normal(k4, (hidden,), jnp.float32) * 0.01
    w2 = jax.random.normal(k2, (hidden, hidden), jnp.float32) * 0.1
    b2 = jax.random.normal(k5, (hidden,), jnp.float32) * 0.01
    w3 = jax.random.normal(k3, (hidden, state_dim), jnp.float32) * 0.1
    b3 = jax.random.normal(k6, (state_dim,), jnp.float32) * 0.01
    return (w1, b1, w2, b2, w3, b3)


if __name__ == "__main__":
    B, STATE_DIM, ACTION_DIM, HIDDEN = 600, 4, 4, 100   # hidden=100 per the module

    key = jax.random.PRNGKey(0)
    kp, ks, ka = jax.random.split(key, 3)

    params = init_params(kp, STATE_DIM, ACTION_DIM, HIDDEN)
    state = jax.random.normal(ks, (B, STATE_DIM), jnp.float32)
    action = jax.random.normal(ka, (B, ACTION_DIM), jnp.float32)

    # Default block_b: at B=600 this exercises batch padding AND the >=2-step
    # megacore split (grid=(2,), tb=384).
    next_state = absolute_dynamics_forward(params, state, action)
    next_state = jax.block_until_ready(next_state)

    ref = _reference_forward(params, state, action)
    assert next_state.shape == (B, STATE_DIM), next_state.shape
    assert jnp.allclose(next_state, ref, rtol=1e-5, atol=1e-5), (
        float(jnp.max(jnp.abs(next_state - ref))))

    print("KERNEL_OK")
</pallas_src>

<mosaic_0001>
module attributes {stable_mosaic.version = 11 : i64} {
  func.func @_dynamics_kernel(%arg0: i32, %arg1: memref<4x384xf32, #tpu.memory_space<vmem>>, %arg2: memref<4x384xf32, #tpu.memory_space<vmem>>, %arg3: memref<128x8xf32, #tpu.memory_space<vmem>>, %arg4: memref<128x1xf32, #tpu.memory_space<vmem>>, %arg5: memref<128x128xf32, #tpu.memory_space<vmem>>, %arg6: memref<128x1xf32, #tpu.memory_space<vmem>>, %arg7: memref<4x128xf32, #tpu.memory_space<vmem>>, %arg8: memref<4x1xf32, #tpu.memory_space<vmem>>, %arg9: memref<4x384xf32, #tpu.memory_space<vmem>>) attributes {dimension_semantics = [#tpu.dimension_semantics<parallel>], iteration_bounds = array<i64: 2>, scalar_prefetch = 0 : i64, scratch_operands = 0 : i64, tpu.core_type = #tpu.core_type<tc>, window_params = [{transform_indices = @transform_0, window_bounds = array<i64: 4, 384>}, {transform_indices = @transform_1, window_bounds = array<i64: 4, 384>}, {pipeline_mode = #tpu.pipeline_mode<synchronous>, transform_indices = @transform_2, window_bounds = array<i64: 128, 8>}, {pipeline_mode = #tpu.pipeline_mode<synchronous>, transform_indices = @transform_3, window_bounds = array<i64: 128, 1>}, {pipeline_mode = #tpu.pipeline_mode<synchronous>, transform_indices = @transform_4, window_bounds = array<i64: 128, 128>}, {pipeline_mode = #tpu.pipeline_mode<synchronous>, transform_indices = @transform_5, window_bounds = array<i64: 128, 1>}, {pipeline_mode = #tpu.pipeline_mode<synchronous>, transform_indices = @transform_6, window_bounds = array<i64: 4, 128>}, {pipeline_mode = #tpu.pipeline_mode<synchronous>, transform_indices = @transform_7, window_bounds = array<i64: 4, 1>}, {transform_indices = @transform_8, window_bounds = array<i64: 4, 384>}]} {
    %c0 = arith.constant 0 : index
    %c0_0 = arith.constant 0 : index
    %0 = vector.load %arg1[%c0, %c0_0] : memref<4x384xf32, #tpu.memory_space<vmem>>, vector<4x384xf32>
    %c0_1 = arith.constant 0 : index
    %c0_2 = arith.constant 0 : index
    %1 = vector.load %arg2[%c0_1, %c0_2] : memref<4x384xf32, #tpu.memory_space<vmem>>, vector<4x384xf32>
    %2 = tpu.concatenate %0, %1 in 0 : vector<4x384xf32>, vector<4x384xf32> -> vector<8x384xf32>
    %c0_3 = arith.constant 0 : index
    %c0_4 = arith.constant 0 : index
    %3 = vector.load %arg3[%c0_3, %c0_4] : memref<128x8xf32, #tpu.memory_space<vmem>>, vector<128x8xf32>
    %cst = arith.constant dense<0.000000e+00> : vector<128x384xf32>
    %4 = tpu.matmul %3, %2, %cst {dimension_numbers = #tpu.dot_dimension_numbers<[1], [0], [0], [1], [0, 0, 1, 1], [], []>, precision = #tpu.contract_precision<fp32>} : vector<128x8xf32>, vector<8x384xf32>, vector<128x384xf32> -> vector<128x384xf32>
    %c0_5 = arith.constant 0 : index
    %c0_6 = arith.constant 0 : index
    %5 = vector.load %arg4[%c0_5, %c0_6] : memref<128x1xf32, #tpu.memory_space<vmem>>, vector<128x1xf32>
    %6 = vector.broadcast %5 : vector<128x1xf32> to vector<128x384xf32>
    %7 = arith.addf %4, %6 : vector<128x384xf32>
    %cst_7 = arith.constant 0.000000e+00 : f32
    %8 = vector.broadcast %cst_7 : f32 to vector<128x384xf32>
    %9 = arith.maximumf %7, %8 : vector<128x384xf32>
    %c0_8 = arith.constant 0 : index
    %c0_9 = arith.constant 0 : index
    %10 = vector.load %arg5[%c0_8, %c0_9] : memref<128x128xf32, #tpu.memory_space<vmem>>, vector<128x128xf32>
    %cst_10 = arith.constant dense<0.000000e+00> : vector<128x384xf32>
    %11 = tpu.matmul %10, %9, %cst_10 {dimension_numbers = #tpu.dot_dimension_numbers<[1], [0], [0], [1], [0, 0, 1, 1], [], []>, precision = #tpu.contract_precision<fp32>} : vector<128x128xf32>, vector<128x384xf32>, vector<128x384xf32> -> vector<128x384xf32>
    %c0_11 = arith.constant 0 : index
    %c0_12 = arith.constant 0 : index
    %12 = vector.load %arg6[%c0_11, %c0_12] : memref<128x1xf32, #tpu.memory_space<vmem>>, vector<128x1xf32>
    %13 = vector.broadcast %12 : vector<128x1xf32> to vector<128x384xf32>
    %14 = arith.addf %11, %13 : vector<128x384xf32>
    %cst_13 = arith.constant 0.000000e+00 : f32
    %15 = vector.broadcast %cst_13 : f32 to vector<128x384xf32>
    %16 = arith.maximumf %14, %15 : vector<128x384xf32>
    %c0_14 = arith.constant 0 : index
    %c0_15 = arith.constant 0 : index
    %17 = vector.load %arg7[%c0_14, %c0_15] : memref<4x128xf32, #tpu.memory_space<vmem>>, vector<4x128xf32>
    %cst_16 = arith.constant dense<0.000000e+00> : vector<4x384xf32>
    %18 = tpu.matmul %17, %16, %cst_16 {dimension_numbers = #tpu.dot_dimension_numbers<[1], [0], [0], [1], [0, 0, 1, 1], [], []>, precision = #tpu.contract_precision<fp32>} : vector<4x128xf32>, vector<128x384xf32>, vector<4x384xf32> -> vector<4x384xf32>
    %c0_17 = arith.constant 0 : index
    %c0_18 = arith.constant 0 : index
    %19 = vector.load %arg8[%c0_17, %c0_18] : memref<4x1xf32, #tpu.memory_space<vmem>>, vector<4x1xf32>
    %20 = vector.broadcast %19 : vector<4x1xf32> to vector<4x384xf32>
    %21 = arith.addf %18, %20 : vector<4x384xf32>
    %c0_19 = arith.constant 0 : index
    %c0_20 = arith.constant 0 : index
    %22 = vector.load %arg9[%c0_19, %c0_20] : memref<4x384xf32, #tpu.memory_space<vmem>>, vector<4x384xf32>
    tpu.vector_store %arg9[%c0_19, %c0_20], %21 {strides = array<i32>} : memref<4x384xf32, #tpu.memory_space<vmem>>, vector<4x384xf32>,
    return
  }
  func.func @transform_0(%arg0: i32) -> (i32, i32) {
    %c0_i32 = arith.constant 0 : i32
    %c0_i32_0 = arith.constant 0 : i32
    return %c0_i32, %arg0 : i32, i32
  }
  func.func @transform_1(%arg0: i32) -> (i32, i32) {
    %c0_i32 = arith.constant 0 : i32
    %c0_i32_0 = arith.constant 0 : i32
    return %c0_i32, %arg0 : i32, i32
  }
  func.func @transform_2(%arg0: i32) -> (i32, i32) {
    %c0_i32 = arith.constant 0 : i32
    %c0_i32_0 = arith.constant 0 : i32
    %c0_i32_1 = arith.constant 0 : i32
    return %c0_i32, %c0_i32_0 : i32, i32
  }
  func.func @transform_3(%arg0: i32) -> (i32, i32) {
    %c0_i32 = arith.constant 0 : i32
    %c0_i32_0 = arith.constant 0 : i32
    %c0_i32_1 = arith.constant 0 : i32
    return %c0_i32, %c0_i32_0 : i32, i32
  }
  func.func @transform_4(%arg0: i32) -> (i32, i32) {
    %c0_i32 = arith.constant 0 : i32
    %c0_i32_0 = arith.constant 0 : i32
    %c0_i32_1 = arith.constant 0 : i32
    return %c0_i32, %c0_i32_0 : i32, i32
  }
  func.func @transform_5(%arg0: i32) -> (i32, i32) {
    %c0_i32 = arith.constant 0 : i32
    %c0_i32_0 = arith.constant 0 : i32
    %c0_i32_1 = arith.constant 0 : i32
    return %c0_i32, %c0_i32_0 : i32, i32
  }
  func.func @transform_6(%arg0: i32) -> (i32, i32) {
    %c0_i32 = arith.constant 0 : i32
    %c0_i32_0 = arith.constant 0 : i32
    %c0_i32_1 = arith.constant 0 : i32
    return %c0_i32, %c0_i32_0 : i32, i32
  }
  func.func @transform_7(%arg0: i32) -> (i32, i32) {
    %c0_i32 = arith.constant 0 : i32
    %c0_i32_0 = arith.constant 0 : i32
    %c0_i32_1 = arith.constant 0 : i32
    return %c0_i32, %c0_i32_0 : i32, i32
  }
  func.func @transform_8(%arg0: i32) -> (i32, i32) {
    %c0_i32 = arith.constant 0 : i32
    %c0_i32_0 = arith.constant 0 : i32
    return %c0_i32, %arg0 : i32, i32
  }
}

</mosaic_0001>

<llo_original>
// kernel: absolute_dynamics_forward.1
$region0: #{absolute_dynamics_forward.1}
  #allocation0 [shape = 'u32[]', space=smem, size = 0x4, offset = 0x4, fixed_abs, tag = 'smem constant byte address 0x4 - core index']
  #allocation1 [shape = 'u32[144,128]{1,0:T(1,128)}', space=vmem, size = 0x12000, scoped, tag = 'internal scratch']
  %s0 = inlined_call_operand.vmem [shape: f32[4,768], index: 0, kind: input, shape index: {}]
  %s1 = inlined_call_operand.vmem [shape: f32[4,768], index: 1, kind: input, shape index: {}]
  %s2 = inlined_call_operand.vmem [shape: f32[128,8], index: 2, kind: input, shape index: {}]
  %s3 = inlined_call_operand.vmem [shape: f32[128,1], index: 3, kind: input, shape index: {}]
  %s4 = inlined_call_operand.vmem [shape: f32[128,128], index: 4, kind: input, shape index: {}]
  %s5 = inlined_call_operand.vmem [shape: f32[128,1], index: 5, kind: input, shape index: {}]
  %s6 = inlined_call_operand.vmem [shape: f32[4,128], index: 6, kind: input, shape index: {}]
  %s7 = inlined_call_operand.vmem [shape: f32[4,1], index: 7, kind: input, shape index: {}]
  %s8 = inlined_call_operand.vmem [shape: f32[4,768], index: 8, kind: output, shape index: {}]
  %s9 = sld [smem:[#allocation0]]
  $region65: #{absolute_dynamics_forward.1} parent=0
    _
  %s11 = ssub.s32 1, %s9
  %s12 = scalar_select 0, %s11, %s9
  loop: start=0, step=1, limit=4
  $region2: #{absolute_dynamics_forward.1} parent=0 // loop_pre_header
    _
  $region3: #{absolute_dynamics_forward.1} parent=0 // loop_header
    %s14 = sphi 0, %s18
    %p15 = scmp.ge.s32.totalorder %s14, 4
    %s24 = sphi 0, %s26
    %s27 = sphi 0, %s24
    %s28 = sphi 0, %s27
    %s44 = sphi 0, %s28
    %s50 = sphi 0, %s52
    %s53 = sphi 0, %s50
    %s54 = sphi 0, %s53
    %s70 = sphi 0, %s54
    %s74 = sphi 0, %s74
    %s76 = sphi 0, %s74
    %s77 = sphi 0, %s76
    %s91 = sphi 0, %s77
    %s95 = sphi 0, %s95
    %s97 = sphi 0, %s95
    %s98 = sphi 0, %s97
    %s112 = sphi 0, %s98
    %s116 = sphi 0, %s116
    %s118 = sphi 0, %s116
    %s119 = sphi 0, %s118
    %s133 = sphi 0, %s119
    %s137 = sphi 0, %s137
    %s139 = sphi 0, %s137
    %s140 = sphi 0, %s139
    %s154 = sphi 0, %s140
    %s158 = sphi 0, %s158
    %s160 = sphi 0, %s158
    %s161 = sphi 0, %s160
    %s175 = sphi 0, %s161
    %s179 = sphi 0, %s179
    %s181 = sphi 0, %s179
    %s182 = sphi 0, %s181
    %s196 = sphi 0, %s182
    %s202 = sphi 0, %s204
    %s205 = sphi 0, %s202
    %s206 = sphi 0, %s205
    %s222 = sphi 0, %s206
  $region4: #{absolute_dynamics_forward.1} parent=0 // loop_header_branch
    %17 = sbr.rel (%p15) target = $region8
  $region5: #{absolute_dynamics_forward.1} parent=0 // loop_body
    %s19 = ssub.s32 %s14, 1
    %s20 = ssub.s32 %s14, 2
    %s21 = sadd.s32 %s14, 1
    %s22 = ssub.s32 %s14, %s21
    %p23 = scmp.eq.s32.totalorder %s22, 0
    %s25 = sadd.s32 %s24, 1
    %s26 = scalar_select %p23, %s24, %s25
    %p29 = pneg %p23
    %p30 = scmp.eq.s32.totalorder %s14, 1
    %p31 = por %p29, %p30
    %p32 = scmp.ne.s32.totalorder %s24, %s27
    %p33 = scmp.eq.s32.totalorder %s14, 0
    %p34 = por %p32, %p33
    %p35 = scmp.ne.s32.totalorder %s24, %s27
    %p36 = scmp.eq.s32.totalorder %s19, 1
    %p37 = por %p35, %p36
    %p38 = scmp.ne.s32.totalorder %s27, %s28
    %p39 = scmp.eq.s32.totalorder %s19, 0
    %p40 = por %p38, %p39
    %p41 = scmp.ne.s32.totalorder %s27, %s28
    %p42 = scmp.eq.s32.totalorder %s20, 1
    %p43 = por %p41, %p42
    %p45 = scmp.ne.s32.totalorder %s28, %s44
    %p46 = scmp.eq.s32.totalorder %s20, 0
    %p47 = por %p45, %p46
    %s48 = ssub.s32 %s14, %s21
    %p49 = scmp.eq.s32.totalorder %s48, 0
    %s51 = sadd.s32 %s50, 1
    %s52 = scalar_select %p49, %s50, %s51
    %p55 = pneg %p49
    %p56 = scmp.eq.s32.totalorder %s14, 1
    %p57 = por %p55, %p56
    %p58 = scmp.ne.s32.totalorder %s50, %s53
    %p59 = scmp.eq.s32.totalorder %s14, 0
    %p60 = por %p58, %p59
    %p61 = scmp.ne.s32.totalorder %s50, %s53
    %p62 = scmp.eq.s32.totalorder %s19, 1
    %p63 = por %p61, %p62
    %p64 = scmp.ne.s32.totalorder %s53, %s54
    %p65 = scmp.eq.s32.totalorder %s19, 0
    %p66 = por %p64, %p65
    %p67 = scmp.ne.s32.totalorder %s53, %s54
    %p68 = scmp.eq.s32.totalorder %s20, 1
    %p69 = por %p67, %p68
    %p71 = scmp.ne.s32.totalorder %s54, %s70
    %p72 = scmp.eq.s32.totalorder %s20, 0
    %p73 = por %p71, %p72
    %s75 = sadd.s32 %s74, 1
    %p78 = scmp.eq.s32.totalorder %s14, 1
    %p79 = scmp.ne.s32.totalorder %s74, %s76
    %p80 = scmp.eq.s32.totalorder %s14, 0
    %p81 = por %p79, %p80
    %p82 = scmp.ne.s32.totalorder %s74, %s76
    %p83 = scmp.eq.s32.totalorder %s19, 1
    %p84 = por %p82, %p83
    %p85 = scmp.ne.s32.totalorder %s76, %s77
    %p86 = scmp.eq.s32.totalorder %s19, 0
    %p87 = por %p85, %p86
    %p88 = scmp.ne.s32.totalorder %s76, %s77
    %p89 = scmp.eq.s32.totalorder %s20, 1
    %p90 = por %p88, %p89
    %p92 = scmp.ne.s32.totalorder %s77, %s91
    %p93 = scmp.eq.s32.totalorder %s20, 0
    %p94 = por %p92, %p93
    %s96 = sadd.s32 %s95, 1
    %p99 = scmp.eq.s32.totalorder %s14, 1
    %p100 = scmp.ne.s32.totalorder %s95, %s97
    %p101 = scmp.eq.s32.totalorder %s14, 0
    %p102 = por %p100, %p101
    %p103 = scmp.ne.s32.totalorder %s95, %s97
    %p104 = scmp.eq.s32.totalorder %s19, 1
    %p105 = por %p103, %p104
    %p106 = scmp.ne.s32.totalorder %s97, %s98
    %p107 = scmp.eq.s32.totalorder %s19, 0
    %p108 = por %p106, %p107
    %p109 = scmp.ne.s32.totalorder %s97, %s98
    %p110 = scmp.eq.s32.totalorder %s20, 1
    %p111 = por %p109, %p110
    %p113 = scmp.ne.s32.totalorder %s98, %s112
    %p114 = scmp.eq.s32.totalorder %s20, 0
    %p115 = por %p113, %p114
    %s117 = sadd.s32 %s116, 1
    %p120 = scmp.eq.s32.totalorder %s14, 1
    %p121 = scmp.ne.s32.totalorder %s116, %s118
    %p122 = scmp.eq.s32.totalorder %s14, 0
    %p123 = por %p121, %p122
    %p124 = scmp.ne.s32.totalorder %s116, %s118
    %p125 = scmp.eq.s32.totalorder %s19, 1
    %p126 = por %p124, %p125
    %p127 = scmp.ne.s32.totalorder %s118, %s119
    %p128 = scmp.eq.s32.totalorder %s19, 0
    %p129 = por %p127, %p128
    %p130 = scmp.ne.s32.totalorder %s118, %s119
    %p131 = scmp.eq.s32.totalorder %s20, 1
    %p132 = por %p130, %p131
    %p134 = scmp.ne.s32.totalorder %s119, %s133
    %p135 = scmp.eq.s32.totalorder %s20, 0
    %p136 = por %p134, %p135
    %s138 = sadd.s32 %s137, 1
    %p141 = scmp.eq.s32.totalorder %s14, 1
    %p142 = scmp.ne.s32.totalorder %s137, %s139
    %p143 = scmp.eq.s32.totalorder %s14, 0
    %p144 = por %p142, %p143
    %p145 = scmp.ne.s32.totalorder %s137, %s139
    %p146 = scmp.eq.s32.totalorder %s19, 1
    %p147 = por %p145, %p146
    %p148 = scmp.ne.s32.totalorder %s139, %s140
    %p149 = scmp.eq.s32.totalorder %s19, 0
    %p150 = por %p148, %p149
    %p151 = scmp.ne.s32.totalorder %s139, %s140
    %p152 = scmp.eq.s32.totalorder %s20, 1
    %p153 = por %p151, %p152
    %p155 = scmp.ne.s32.totalorder %s140, %s154
    %p156 = scmp.eq.s32.totalorder %s20, 0
    %p157 = por %p155, %p156
    %s159 = sadd.s32 %s158, 1
    %p162 = scmp.eq.s32.totalorder %s14, 1
    %p163 = scmp.ne.s32.totalorder %s158, %s160
    %p164 = scmp.eq.s32.totalorder %s14, 0
    %p165 = por %p163, %p164
    %p166 = scmp.ne.s32.totalorder %s158, %s160
    %p167 = scmp.eq.s32.totalorder %s19, 1
    %p168 = por %p166, %p167
    %p169 = scmp.ne.s32.totalorder %s160, %s161
    %p170 = scmp.eq.s32.totalorder %s19, 0
    %p171 = por %p169, %p170
    %p172 = scmp.ne.s32.totalorder %s160, %s161
    %p173 = scmp.eq.s32.totalorder %s20, 1
    %p174 = por %p172, %p173
    %p176 = scmp.ne.s32.totalorder %s161, %s175
    %p177 = scmp.eq.s32.totalorder %s20, 0
    %p178 = por %p176, %p177
    %s180 = sadd.s32 %s179, 1
    %p183 = scmp.eq.s32.totalorder %s14, 1
    %p184 = scmp.ne.s32.totalorder %s179, %s181
    %p185 = scmp.eq.s32.totalorder %s14, 0
    %p186 = por %p184, %p185
    %p187 = scmp.ne.s32.totalorder %s179, %s181
    %p188 = scmp.eq.s32.totalorder %s19, 1
    %p189 = por %p187, %p188
    %p190 = scmp.ne.s32.totalorder %s181, %s182
    %p191 = scmp.eq.s32.totalorder %s19, 0
    %p192 = por %p190, %p191
    %p193 = scmp.ne.s32.totalorder %s181, %s182
    %p194 = scmp.eq.s32.totalorder %s20, 1
    %p195 = por %p193, %p194
    %p197 = scmp.ne.s32.totalorder %s182, %s196
    %p198 = scmp.eq.s32.totalorder %s20, 0
    %p199 = por %p197, %p198
    %s200 = ssub.s32 %s14, %s21
    %p201 = scmp.eq.s32.totalorder %s200, 0
    %s203 = sadd.s32 %s202, 1
    %s204 = scalar_select %p201, %s202, %s203
    %p207 = pneg %p201
    %p208 = scmp.eq.s32.totalorder %s14, 1
    %p209 = por %p207, %p208
    %p210 = scmp.ne.s32.totalorder %s202, %s205
    %p211 = scmp.eq.s32.totalorder %s14, 0
    %p212 = por %p210, %p211
    %p213 = scmp.ne.s32.totalorder %s202, %s205
    %p214 = scmp.eq.s32.totalorder %s19, 1
    %p215 = por %p213, %p214
    %p216 = scmp.ne.s32.totalorder %s205, %s206
    %p217 = scmp.eq.s32.totalorder %s19, 0
    %p218 = por %p216, %p217
    %p219 = scmp.ne.s32.totalorder %s205, %s206
    %p220 = scmp.eq.s32.totalorder %s20, 1
    %p221 = por %p219, %p220
    %p223 = scmp.ne.s32.totalorder %s206, %s222
    %p224 = scmp.eq.s32.totalorder %s20, 0
    %p225 = por %p223, %p224
    %p226 = scmp.le.s32.totalorder 1, %s14
    %p227 = scmp.lt.s32.totalorder %s14, 3
    %p228 = pnand %p226, %p227
    %p229 = pneg %p228
    // Predicated region
    $region9: #{absolute_dynamics_forward.1} parent=5 // pred_check
      _
    $region10: #{absolute_dynamics_forward.1} parent=5 // pred_check_branch
      %231 = sbr.rel (%p228) target = $region12
    $region11: #{absolute_dynamics_forward.1} parent=5 // pred_region
      %s232 = ssub.s32 %s14, 1
      // Predicated region
      $region13: #{absolute_dynamics_forward.1} parent=11 // pred_check
        %p233 = pneg %p87
      $region14: #{absolute_dynamics_forward.1} parent=11 // pred_check_branch
        %235 = sbr.rel (%p233) target = $region16
      $region15: #{absolute_dynamics_forward.1} parent=11 // pred_region
        _
      $region16: #{absolute_dynamics_forward.1} parent=11 // pred_fallthru
        _
      // Predicated region
      $region17: #{absolute_dynamics_forward.1} parent=11 // pred_check
        %p236 = pneg %p108
      $region18: #{absolute_dynamics_forward.1} parent=11 // pred_check_branch
        %238 = sbr.rel (%p236) target = $region20
      $region19: #{absolute_dynamics_forward.1} parent=11 // pred_region
        _
      $region20: #{absolute_dynamics_forward.1} parent=11 // pred_fallthru
        _
      // Predicated region
      $region21: #{absolute_dynamics_forward.1} parent=11 // pred_check
        %p239 = pneg %p129
      $region22: #{absolute_dynamics_forward.1} parent=11 // pred_check_branch
        %241 = sbr.rel (%p239) target = $region24
      $region23: #{absolute_dynamics_forward.1} parent=11 // pred_region
        _
      $region24: #{absolute_dynamics_forward.1} parent=11 // pred_fallthru
        _
      // Predicated region
      $region25: #{absolute_dynamics_forward.1} parent=11 // pred_check
        %p242 = pneg %p150
      $region26: #{absolute_dynamics_forward.1} parent=11 // pred_check_branch
        %244 = sbr.rel (%p242) target = $region28
      $region27: #{absolute_dynamics_forward.1} parent=11 // pred_region
        _
      $region28: #{absolute_dynamics_forward.1} parent=11 // pred_fallthru
        _
      // Predicated region
      $region29: #{absolute_dynamics_forward.1} parent=11 // pred_check
        %p245 = pneg %p171
      $region30: #{absolute_dynamics_forward.1} parent=11 // pred_check_branch
        %247 = sbr.rel (%p245) target = $region32
      $region31: #{absolute_dynamics_forward.1} parent=11 // pred_region
        _
      $region32: #{absolute_dynamics_forward.1} parent=11 // pred_fallthru
        _
      // Predicated region
      $region33: #{absolute_dynamics_forward.1} parent=11 // pred_check
        %p248 = pneg %p192
      $region34: #{absolute_dynamics_forward.1} parent=11 // pred_check_branch
        %250 = sbr.rel (%p248) target = $region36
      $region35: #{absolute_dynamics_forward.1} parent=11 // pred_region
        _
      $region36: #{absolute_dynamics_forward.1} parent=11 // pred_fallthru
        _
    $region12: #{absolute_dynamics_forward.1} parent=5 // pred_fallthru
      _
    %p251 = scmp.lt.s32.totalorder %s14, 2
    // Predicated region
    $region37: #{absolute_dynamics_forward.1} parent=5 // pred_check
      %p252 = pneg %p251
    $region38: #{absolute_dynamics_forward.1} parent=5 // pred_check_branch
      %254 = sbr.rel (%p252) target = $region40
    $region39: #{absolute_dynamics_forward.1} parent=5 // pred_region
      // Predicated region
      $region41: #{absolute_dynamics_forward.1} parent=39 // pred_check
        %p255 = pneg %p34
      $region42: #{absolute_dynamics_forward.1} parent=39 // pred_check_branch
        %257 = sbr.rel (%p255) target = $region44
      $region43: #{absolute_dynamics_forward.1} parent=39 // pred_region
        %s258 = smul.u32 3, %s14
        %p259 = scmp.lt.s32.totalorder %s258, 5
        %s260 = scalar_select %p259, %s258, 5
        %s261 = smul.addr %s260, 4
        %s262 = scalar_lea.vmem %s0, %s261
        %s263 = smul.u32 3, %s14
      $region44: #{absolute_dynamics_forward.1} parent=39 // pred_fallthru
        _
      // Predicated region
      $region45: #{absolute_dynamics_forward.1} parent=39 // pred_check
        %p264 = pneg %p60
      $region46: #{absolute_dynamics_forward.1} parent=39 // pred_check_branch
        %266 = sbr.rel (%p264) target = $region48
      $region47: #{absolute_dynamics_forward.1} parent=39 // pred_region
        %s267 = smul.u32 3, %s14
        %p268 = scmp.lt.s32.totalorder %s267, 5
        %s269 = scalar_select %p268, %s267, 5
        %s270 = smul.addr %s269, 4
        %s271 = scalar_lea.vmem %s1, %s270
        %s272 = smul.u32 3, %s14
      $region48: #{absolute_dynamics_forward.1} parent=39 // pred_fallthru
        _
    $region40: #{absolute_dynamics_forward.1} parent=5 // pred_fallthru
      _
    %p273 = scmp.le.s32.totalorder 1, %s14
    %p274 = scmp.lt.s32.totalorder %s14, 3
    %p275 = pnand %p273, %p274
    %p276 = pneg %p275
    // Predicated region
    $region49: #{absolute_dynamics_forward.1} parent=5 // pred_check
      _
    $region50: #{absolute_dynamics_forward.1} parent=5 // pred_check_branch
      %278 = sbr.rel (%p275) target = $region52
    $region51: #{absolute_dynamics_forward.1} parent=5 // pred_region
      %s279 = ssub.s32 %s14, 1
      %s280 = smul.u32 3, %s19
      %p281 = scmp.lt.s32.totalorder %s280, 5
      %s282 = scalar_select %p281, %s280, 5
      %s283 = smul.addr %s282, 4
      %s284 = scalar_lea.vmem %s0, %s283
      %p285 = pneg %p40
      %p286 = pneg %p37
      %s287 = smul.u32 3, %s19
      %p288 = scmp.lt.s32.totalorder %s287, 5
      %s289 = scalar_select %p288, %s287, 5
      %s290 = smul.addr %s289, 4
      %s291 = scalar_lea.vmem %s1, %s290
      %p292 = pneg %p66
      %p293 = pneg %p63
      %p294 = pneg %p87
      %p295 = pneg %p84
      %p296 = pneg %p108
      %p297 = pneg %p105
      %p298 = pneg %p129
      %p299 = pneg %p126
      %p300 = pneg %p150
      %p301 = pneg %p147
      %p302 = pneg %p171
      %p303 = pneg %p168
      %p304 = pneg %p192
      %p305 = pneg %p189
      %p306 = pneg %p218
      %p307 = pneg %p215
      %s308 = smul.u32 3, %s19
      %p309 = scmp.lt.s32.totalorder %s308, 5
      %s310 = scalar_select %p309, %s308, 5
      %s311 = smul.addr %s310, 4
      %s312 = scalar_lea.vmem %s8, %s311
      %s313 = smul.u32 3, %s19
      %p314 = scmp.lt.s32.totalorder %s313, 5
      %s315 = scalar_select %p314, %s313, 5
      %s316 = smul.addr %s315, 4
      %s317 = scalar_lea.vmem %s0, %s316
      %s318 = smul.u32 3, %s19
      %s319 = smul.u32 3, %s19
      %p320 = scmp.lt.s32.totalorder %s319, 5
      %s321 = scalar_select %p320, %s319, 5
      %s322 = smul.addr %s321, 4
      %s323 = scalar_lea.vmem %s1, %s322
      %s324 = smul.u32 3, %s19
      %s325 = smul.u32 3, %s19
      %p326 = scmp.lt.s32.totalorder %s325, 5
      %s327 = scalar_select %p326, %s325, 5
      %s328 = smul.addr %s327, 4
      %s329 = scalar_lea.vmem %s8, %s328
      %s330 = smul.u32 3, %s19
      %v331 = vld [vmem:[%s317] sm:$0xff]
      %v332 = vld [vmem:[%s317 + $0x8] sm:$0xf]
      %v333 = vld [vmem:[%s323] sm:$0xff]
      %v334 = vld [vmem:[%s323 + $0x8] sm:$0xf]
      %v336 = vcombine.high %v331, %v331
      %v340 = vcombine.low %v333, %v333
      %v341 = vcombine.low %v334, %v334
      %vm344 = vcmask 1043456
      %v345 = vsel %vm344, %v331, %v340
      %v346 = vsel %vm344, %v336, %v333
      %v347 = vsel %vm344, %v332, %v341
      %v348 = vld [vmem:[%s2] sm:$0xff]
      %v349 = vld [vmem:[%s2 + $0x8] sm:$0xff]
      %v350 = vld [vmem:[%s2 + $0x10] sm:$0xff]
      %v351 = vld [vmem:[%s2 + $0x18] sm:$0xff]
      %v352 = vld [vmem:[%s2 + $0x20] sm:$0xff]
      %v353 = vld [vmem:[%s2 + $0x28] sm:$0xff]
      %v354 = vld [vmem:[%s2 + $0x30] sm:$0xff]
      %v355 = vld [vmem:[%s2 + $0x38] sm:$0xff]
      %v356 = vld [vmem:[%s2 + $0x40] sm:$0xff]
      %v357 = vld [vmem:[%s2 + $0x48] sm:$0xff]
      %v358 = vld [vmem:[%s2 + $0x50] sm:$0xff]
      %v359 = vld [vmem:[%s2 + $0x58] sm:$0xff]
      %v360 = vld [vmem:[%s2 + $0x60] sm:$0xff]
      %v361 = vld [vmem:[%s2 + $0x68] sm:$0xff]
      %v362 = vld [vmem:[%s2 + $0x70] sm:$0xff]
      %v363 = vld [vmem:[%s2 + $0x78] sm:$0xff]
      %v364 = vld [vmem:[%s3] sm:$0xff]
      %v365 = vld [vmem:[%s3 + $0x8] sm:$0xff]
      %v366 = vld [vmem:[%s3 + $0x10] sm:$0xff]
      %v367 = vld [vmem:[%s3 + $0x18] sm:$0xff]
      %v368 = vld [vmem:[%s3 + $0x20] sm:$0xff]
      %v369 = vld [vmem:[%s3 + $0x28] sm:$0xff]
      %v370 = vld [vmem:[%s3 + $0x30] sm:$0xff]
      %v371 = vld [vmem:[%s3 + $0x38] sm:$0xff]
      %v372 = vld [vmem:[%s3 + $0x40] sm:$0xff]
      %v373 = vld [vmem:[%s3 + $0x48] sm:$0xff]
      %v374 = vld [vmem:[%s3 + $0x50] sm:$0xff]
      %v375 = vld [vmem:[%s3 + $0x58] sm:$0xff]
      %v376 = vld [vmem:[%s3 + $0x60] sm:$0xff]
      %v377 = vld [vmem:[%s3 + $0x68] sm:$0xff]
      %v378 = vld [vmem:[%s3 + $0x70] sm:$0xff]
      %v379 = vld [vmem:[%s3 + $0x78] sm:$0xff]
      %381 = vset.pattern.permute.xlu0 0
      %382 = vperm.xlu0 %381, %v364
      %v383 = vpop.permute.xlu0 %382
      %386 = vset.pattern.permute.xlu0 0
      %387 = vperm.xlu0 %386, %v365
      %v388 = vpop.permute.xlu0 %387
      %391 = vset.pattern.permute.xlu0 0
      %392 = vperm.xlu0 %391, %v366
      %v393 = vpop.permute.xlu0 %392
      %396 = vset.pattern.permute.xlu0 0
      %397 = vperm.xlu0 %396, %v367
      %v398 = vpop.permute.xlu0 %397
      %401 = vset.pattern.permute.xlu0 0
      %402 = vperm.xlu0 %401, %v368
      %v403 = vpop.permute.xlu0 %402
      %406 = vset.pattern.permute.xlu0 0
      %407 = vperm.xlu0 %406, %v369
      %v408 = vpop.permute.xlu0 %407
      %411 = vset.pattern.permute.xlu0 0
      %412 = vperm.xlu0 %411, %v370
      %v413 = vpop.permute.xlu0 %412
      %416 = vset.pattern.permute.xlu0 0
      %417 = vperm.xlu0 %416, %v371
      %v418 = vpop.permute.xlu0 %417
      %421 = vset.pattern.permute.xlu0 0
      %422 = vperm.xlu0 %421, %v372
      %v423 = vpop.permute.xlu0 %422
      %426 = vset.pattern.permute.xlu0 0
      %427 = vperm.xlu0 %426, %v373
      %v428 = vpop.permute.xlu0 %427
      %431 = vset.pattern.permute.xlu0 0
      %432 = vperm.xlu0 %431, %v374
      %v433 = vpop.permute.xlu0 %432
      %436 = vset.pattern.permute.xlu0 0
      %437 = vperm.xlu0 %436, %v375
      %v438 = vpop.permute.xlu0 %437
      %441 = vset.pattern.permute.xlu0 0
      %442 = vperm.xlu0 %441, %v376
      %v443 = vpop.permute.xlu0 %442
      %446 = vset.pattern.permute.xlu0 0
      %447 = vperm.xlu0 %446, %v377
      %v448 = vpop.permute.xlu0 %447
      %451 = vset.pattern.permute.xlu0 0
      %452 = vperm.xlu0 %451, %v378
      %v453 = vpop.permute.xlu0 %452
      %456 = vset.pattern.permute.xlu0 0
      %457 = vperm.xlu0 %456, %v379
      %v458 = vpop.permute.xlu0 %457
      %vm460 = vcmask 64512
      %v462 = vsel %vm460, %v348, 0
      %v465 = vsel %vm460, %v349, 0
      %v468 = vsel %vm460, %v350, 0
      %v471 = vsel %vm460, %v351, 0
      %v474 = vsel %vm460, %v352, 0
      %v477 = vsel %vm460, %v353, 0
      %v480 = vsel %vm460, %v354, 0
      %v483 = vsel %vm460, %v355, 0
      %v486 = vsel %vm460, %v356, 0
      %v489 = vsel %vm460, %v357, 0
      %v492 = vsel %vm460, %v358, 0
      %v495 = vsel %vm460, %v359, 0
      %v498 = vsel %vm460, %v360, 0
      %v501 = vsel %vm460, %v361, 0
      %v504 = vsel %vm460, %v362, 0
      %v507 = vsel %vm460, %v363, 0
      %509 = vmatprep.subr.mxu0 0.0
      %510 = vmatpush1.msra.mxu0 0.0
      %511 = vmatprep.subr.mxu0 0.0
      %512 = vmatpush1.msra.mxu0 0.0
      %513 = vmatprep.subr.mxu0 0.0
      %514 = vmatpush1.msra.mxu0 0.0
      %515 = vmatprep.subr.mxu0 0.0
      %516 = vmatpush1.msra.mxu0 0.0
      %517 = vmatprep.subr.mxu0 0.0
      %518 = vmatpush1.msra.mxu0 0.0
      %519 = vmatprep.subr.mxu0 0.0
      %520 = vmatpush1.msra.mxu0 0.0
      %521 = vmatprep.subr.mxu0 0.0
      %522 = vmatpush1.msra.mxu0 0.0
      %523 = vmatprep.subr.mxu0 0.0
      %524 = vmatpush1.msra.mxu0 0.0
      %525 = vmatprep.subr.mxu0 0.0
      %526 = vmatpush1.msra.mxu0 0.0
      %527 = vmatprep.subr.mxu0 0.0
      %528 = vmatpush1.msra.mxu0 0.0
      %529 = vmatprep.subr.mxu0 0.0
      %530 = vmatpush1.msra.mxu0 0.0
      %531 = vmatprep.subr.mxu0 0.0
      %532 = vmatpush1.msra.mxu0 0.0
      %533 = vmatprep.subr.mxu0 0.0
      %534 = vmatpush1.msra.mxu0 0.0
      %535 = vmatprep.subr.mxu0 0.0
      %536 = vmatpush1.msra.mxu0 0.0
      %537 = vmatprep.subr.mxu0 0.0
      %538 = vmatpush1.msra.mxu0 0.0
      %v539 = vand.u32 %v346, 4294901760
      %540 = vmatprep.subr.mxu0 %v539
      %v541 = vand.u32 %v345, 4294901760
      %542 = vmatpush1.msra.mxu0 %v541
      %543 = vmatprep.subr.mxu0 0.0
      %544 = vmatpush2.msra.mxu0 0.0
      %545 = vmatprep.subr.mxu0 0.0
      %546 = vmatpush2.msra.mxu0 0.0
      %547 = vmatprep.subr.mxu0 0.0
      %548 = vmatpush2.msra.mxu0 0.0
      %549 = vmatprep.subr.mxu0 0.0
      %550 = vmatpush2.msra.mxu0 0.0
      %551 = vmatprep.subr.mxu0 0.0
      %552 = vmatpush2.msra.mxu0 0.0
      %553 = vmatprep.subr.mxu0 0.0
      %554 = vmatpush2.msra.mxu0 0.0
      %555 = vmatprep.subr.mxu0 0.0
      %556 = vmatpush2.msra.mxu0 0.0
      %557 = vmatprep.subr.mxu0 0.0
      %558 = vmatpush2.msra.mxu0 0.0
      %559 = vmatprep.subr.mxu0 0.0
      %560 = vmatpush2.msra.mxu0 0.0
      %561 = vmatprep.subr.mxu0 0.0
      %562 = vmatpush2.msra.mxu0 0.0
      %563 = vmatprep.subr.mxu0 0.0
      %564 = vmatpush2.msra.mxu0 0.0
      %565 = vmatprep.subr.mxu0 0.0
      %566 = vmatpush2.msra.mxu0 0.0
      %567 = vmatprep.subr.mxu0 0.0
      %568 = vmatpush2.msra.mxu0 0.0
      %569 = vmatprep.subr.mxu0 0.0
      %570 = vmatpush2.msra.mxu0 0.0
      %571 = vmatprep.subr.mxu0 0.0
      %572 = vmatpush2.msra.mxu0 0.0
      %573 = vmatprep.subr.mxu0 0.0
      %574 = vmatpush2.msra.mxu0 0.0
      %575 = vmatprep.mubr.f32.mxu0 0.0
      %v576 = vand.u32 %v462, 4294901760
      %v577 = vsub.f32 %v462, %v576
      %v578 = vand.u32 %v577, 4294901760
      %v579 = vsub.f32 %v577, %v578
      %v580 = vand.u32 %v579, 4294901760
      %581 = vmatmul.mubr.f32.gmra.mxu0 %v580
      %v582 = vpop.f32.mrf.mxu0
      %v583 = vadd.f32 %v383, %v582
      %v584 = vpop.f32.mrf.mxu0
      %v585 = vadd.f32 %v383, %v584
      %586 = vmatprep.mubr.f32.mxu0 0.0
      %v587 = vand.u32 %v465, 4294901760
      %v588 = vsub.f32 %v465, %v587
      %v589 = vand.u32 %v588, 4294901760
      %v590 = vsub.f32 %v588, %v589
      %v591 = vand.u32 %v590, 4294901760
      %592 = vmatmul.mubr.f32.gmra.mxu0 %v591
      %v593 = vpop.f32.mrf.mxu0
      %v594 = vadd.f32 %v388, %v593
      %v595 = vpop.f32.mrf.mxu0
      %v596 = vadd.f32 %v388, %v595
      %597 = vmatprep.mubr.f32.mxu0 0.0
      %v598 = vand.u32 %v468, 4294901760
      %v599 = vsub.f32 %v468, %v598
      %v600 = vand.u32 %v599, 4294901760
      %v601 = vsub.f32 %v599, %v600
      %v602 = vand.u32 %v601, 4294901760
      %603 = vmatmul.mubr.f32.gmra.mxu0 %v602
      %v604 = vpop.f32.mrf.mxu0
      %v605 = vadd.f32 %v393, %v604
      %v606 = vpop.f32.mrf.mxu0
      %v607 = vadd.f32 %v393, %v606
      %608 = vmatprep.mubr.f32.mxu0 0.0
      %v609 = vand.u32 %v471, 4294901760
      %v610 = vsub.f32 %v471, %v609
      %v611 = vand.u32 %v610, 4294901760
      %v612 = vsub.f32 %v610, %v611
      %v613 = vand.u32 %v612, 4294901760
      %614 = vmatmul.mubr.f32.gmra.mxu0 %v613
      %v615 = vpop.f32.mrf.mxu0
      %v616 = vadd.f32 %v398, %v615
      %v617 = vpop.f32.mrf.mxu0
      %v618 = vadd.f32 %v398, %v617
      %619 = vmatprep.mubr.f32.mxu0 0.0
      %v620 = vand.u32 %v474, 4294901760
      %v621 = vsub.f32 %v474, %v620
      %v622 = vand.u32 %v621, 4294901760
      %v623 = vsub.f32 %v621, %v622
      %v624 = vand.u32 %v623, 4294901760
      %625 = vmatmul.mubr.f32.gmra.mxu0 %v624
      %v626 = vpop.f32.mrf.mxu0
      %v627 = vadd.f32 %v403, %v626
      %v628 = vpop.f32.mrf.mxu0
      %v629 = vadd.f32 %v403, %v628
      %630 = vmatprep.mubr.f32.mxu0 0.0
      %v631 = vand.u32 %v477, 4294901760
      %v632 = vsub.f32 %v477, %v631
      %v633 = vand.u32 %v632, 4294901760
      %v634 = vsub.f32 %v632, %v633
      %v635 = vand.u32 %v634, 4294901760
      %636 = vmatmul.mubr.f32.gmra.mxu0 %v635
      %v637 = vpop.f32.mrf.mxu0
      %v638 = vadd.f32 %v408, %v637
      %v639 = vpop.f32.mrf.mxu0
      %v640 = vadd.f32 %v408, %v639
      %641 = vmatprep.mubr.f32.mxu0 0.0
      %v642 = vand.u32 %v480, 4294901760
      %v643 = vsub.f32 %v480, %v642
      %v644 = vand.u32 %v643, 4294901760
      %v645 = vsub.f32 %v643, %v644
      %v646 = vand.u32 %v645, 4294901760
      %647 = vmatmul.mubr.f32.gmra.mxu0 %v646
      %v648 = vpop.f32.mrf.mxu0
      %v649 = vadd.f32 %v413, %v648
      %v650 = vpop.f32.mrf.mxu0
      %v651 = vadd.f32 %v413, %v650
      %652 = vmatprep.mubr.f32.mxu0 0.0
      %v653 = vand.u32 %v483, 4294901760
      %v654 = vsub.f32 %v483, %v653
      %v655 = vand.u32 %v654, 4294901760
      %v656 = vsub.f32 %v654, %v655
      %v657 = vand.u32 %v656, 4294901760
      %658 = vmatmul.mubr.f32.gmra.mxu0 %v657
      %v659 = vpop.f32.mrf.mxu0
      %v660 = vadd.f32 %v418, %v659
      %v661 = vpop.f32.mrf.mxu0
      %v662 = vadd.f32 %v418, %v661
      %663 = vmatprep.mubr.f32.mxu0 0.0
      %v664 = vand.u32 %v486, 4294901760
      %v665 = vsub.f32 %v486, %v664
      %v666 = vand.u32 %v665, 4294901760
      %v667 = vsub.f32 %v665, %v666
      %v668 = vand.u32 %v667, 4294901760
      %669 = vmatmul.mubr.f32.gmra.mxu0 %v668
      %v670 = vpop.f32.mrf.mxu0
      %v671 = vadd.f32 %v423, %v670
      %v672 = vpop.f32.mrf.mxu0
      %v673 = vadd.f32 %v423, %v672
      %674 = vmatprep.mubr.f32.mxu0 0.0
      %v675 = vand.u32 %v489, 4294901760
      %v676 = vsub.f32 %v489, %v675
      %v677 = vand.u32 %v676, 4294901760
      %v678 = vsub.f32 %v676, %v677
      %v679 = vand.u32 %v678, 4294901760
      %680 = vmatmul.mubr.f32.gmra.mxu0 %v679
      %v681 = vpop.f32.mrf.mxu0
      %v682 = vadd.f32 %v428, %v681
      %v683 = vpop.f32.mrf.mxu0
      %v684 = vadd.f32 %v428, %v683
      %685 = vmatprep.mubr.f32.mxu0 0.0
      %v686 = vand.u32 %v492, 4294901760
      %v687 = vsub.f32 %v492, %v686
      %v688 = vand.u32 %v687, 4294901760
      %v689 = vsub.f32 %v687, %v688
      %v690 = vand.u32 %v689, 4294901760
      %691 = vmatmul.mubr.f32.gmra.mxu0 %v690
      %v692 = vpop.f32.mrf.mxu0
      %v693 = vadd.f32 %v433, %v692
      %v694 = vpop.f32.mrf.mxu0
      %v695 = vadd.f32 %v433, %v694
      %696 = vmatprep.mubr.f32.mxu0 0.0
      %v697 = vand.u32 %v495, 4294901760
      %v698 = vsub.f32 %v495, %v697
      %v699 = vand.u32 %v698, 4294901760
      %v700 = vsub.f32 %v698, %v699
      %v701 = vand.u32 %v700, 4294901760
      %702 = vmatmul.mubr.f32.gmra.mxu0 %v701
      %v703 = vpop.f32.mrf.mxu0
      %v704 = vadd.f32 %v438, %v703
      %v705 = vpop.f32.mrf.mxu0
      %v706 = vadd.f32 %v438, %v705
      %707 = vmatprep.mubr.f32.mxu0 0.0
      %v708 = vand.u32 %v498, 4294901760
      %v709 = vsub.f32 %v498, %v708
      %v710 = vand.u32 %v709, 4294901760
      %v711 = vsub.f32 %v709, %v710
      %v712 = vand.u32 %v711, 4294901760
      %713 = vmatmul.mubr.f32.gmra.mxu0 %v712
      %v714 = vpop.f32.mrf.mxu0
      %v715 = vadd.f32 %v443, %v714
      %v716 = vpop.f32.mrf.mxu0
      %v717 = vadd.f32 %v443, %v716
      %718 = vmatprep.mubr.f32.mxu0 0.0
      %v719 = vand.u32 %v501, 4294901760
      %v720 = vsub.f32 %v501, %v719
      %v721 = vand.u32 %v720, 4294901760
      %v722 = vsub.f32 %v720, %v721
      %v723 = vand.u32 %v722, 4294901760
      %724 = vmatmul.mubr.f32.gmra.mxu0 %v723
      %v725 = vpop.f32.mrf.mxu0
      %v726 = vadd.f32 %v448, %v725
      %v727 = vpop.f32.mrf.mxu0
      %v728 = vadd.f32 %v448, %v727
      %729 = vmatprep.mubr.f32.mxu0 0.0
      %v730 = vand.u32 %v504, 4294901760
      %v731 = vsub.f32 %v504, %v730
      %v732 = vand.u32 %v731, 4294901760
      %v733 = vsub.f32 %v731, %v732
      %v734 = vand.u32 %v733, 4294901760
      %735 = vmatmul.mubr.f32.gmra.mxu0 %v734
      %v736 = vpop.f32.mrf.mxu0
      %v737 = vadd.f32 %v453, %v736
      %v738 = vpop.f32.mrf.mxu0
      %v739 = vadd.f32 %v453, %v738
      %740 = vmatprep.mubr.f32.mxu0 0.0
      %v741 = vand.u32 %v507, 4294901760
      %v742 = vsub.f32 %v507, %v741
      %v743 = vand.u32 %v742, 4294901760
      %v744 = vsub.f32 %v742, %v743
      %v745 = vand.u32 %v744, 4294901760
      %746 = vmatmul.mubr.f32.gmra.mxu0 %v745
      %v747 = vpop.f32.mrf.mxu0
      %v748 = vadd.f32 %v458, %v747
      %v749 = vpop.f32.mrf.mxu0
      %v750 = vadd.f32 %v458, %v749
      %751 = vdwg.mxu0
      %752 = vmatprep.subr.mxu0 0.0
      %753 = vmatpush1.msra.mxu0 0.0
      %754 = vmatprep.subr.mxu0 0.0
      %755 = vmatpush1.msra.mxu0 0.0
      %756 = vmatprep.subr.mxu0 0.0
      %757 = vmatpush1.msra.mxu0 0.0
      %758 = vmatprep.subr.mxu0 0.0
      %759 = vmatpush1.msra.mxu0 0.0
      %760 = vmatprep.subr.mxu0 0.0
      %761 = vmatpush1.msra.mxu0 0.0
      %762 = vmatprep.subr.mxu0 0.0
      %763 = vmatpush1.msra.mxu0 0.0
      %764 = vmatprep.subr.mxu0 0.0
      %765 = vmatpush1.msra.mxu0 0.0
      %766 = vmatprep.subr.mxu0 0.0
      %767 = vmatpush1.msra.mxu0 0.0
      %768 = vmatprep.subr.mxu0 0.0
      %769 = vmatpush1.msra.mxu0 0.0
      %770 = vmatprep.subr.mxu0 0.0
      %771 = vmatpush1.msra.mxu0 0.0
      %772 = vmatprep.subr.mxu0 0.0
      %773 = vmatpush1.msra.mxu0 0.0
      %774 = vmatprep.subr.mxu0 0.0
      %775 = vmatpush1.msra.mxu0 0.0
      %776 = vmatprep.subr.mxu0 0.0
      %777 = vmatpush1.msra.mxu0 0.0
      %778 = vmatprep.subr.mxu0 0.0
      %779 = vmatpush1.msra.mxu0 0.0
      %780 = vmatprep.subr.mxu0 0.0
      %781 = vmatpush1.msra.mxu0 0.0
      %v782 = vand.u32 %v346, 4294901760
      %v783 = vsub.f32 %v346, %v782
      %v784 = vand.u32 %v783, 4294901760
      %v785 = vsub.f32 %v783, %v784
      %v786 = vand.u32 %v785, 4294901760
      %787 = vmatprep.subr.mxu0 %v786
      %v788 = vand.u32 %v345, 4294901760
      %v789 = vsub.f32 %v345, %v788
      %v790 = vand.u32 %v789, 4294901760
      %v791 = vsub.f32 %v789, %v790
      %v792 = vand.u32 %v791, 4294901760
      %793 = vmatpush1.msra.mxu0 %v792
      %794 = vmatprep.subr.mxu0 0.0
      %795 = vmatpush2.msra.mxu0 0.0
      %796 = vmatprep.subr.mxu0 0.0
      %797 = vmatpush2.msra.mxu0 0.0
      %798 = vmatprep.subr.mxu0 0.0
      %799 = vmatpush2.msra.mxu0 0.0
      %800 = vmatprep.subr.mxu0 0.0
      %801 = vmatpush2.msra.mxu0 0.0
      %802 = vmatprep.subr.mxu0 0.0
      %803 = vmatpush2.msra.mxu0 0.0
      %804 = vmatprep.subr.mxu0 0.0
      %805 = vmatpush2.msra.mxu0 0.0
      %806 = vmatprep.subr.mxu0 0.0
      %807 = vmatpush2.msra.mxu0 0.0
      %808 = vmatprep.subr.mxu0 0.0
      %809 = vmatpush2.msra.mxu0 0.0
      %810 = vmatprep.subr.mxu0 0.0
      %811 = vmatpush2.msra.mxu0 0.0
      %812 = vmatprep.subr.mxu0 0.0
      %813 = vmatpush2.msra.mxu0 0.0
      %814 = vmatprep.subr.mxu0 0.0
      %815 = vmatpush2.msra.mxu0 0.0
      %816 = vmatprep.subr.mxu0 0.0
      %817 = vmatpush2.msra.mxu0 0.0
      %818 = vmatprep.subr.mxu0 0.0
      %819 = vmatpush2.msra.mxu0 0.0
      %820 = vmatprep.subr.mxu0 0.0
      %821 = vmatpush2.msra.mxu0 0.0
      %822 = vmatprep.subr.mxu0 0.0
      %823 = vmatpush2.msra.mxu0 0.0
      %824 = vmatprep.subr.mxu0 0.0
      %825 = vmatpush2.msra.mxu0 0.0
      %826 = vmatprep.mubr.f32.mxu0 0.0
      %v827 = vand.u32 %v462, 4294901760
      %828 = vmatmul.mubr.f32.gmra.mxu0 %v827
      %v829 = vpop.f32.mrf.mxu0
      %v830 = vadd.f32 %v583, %v829
      %v831 = vpop.f32.mrf.mxu0
      %v832 = vadd.f32 %v585, %v831
      %833 = vmatprep.mubr.f32.mxu0 0.0
      %v834 = vand.u32 %v465, 4294901760
      %835 = vmatmul.mubr.f32.gmra.mxu0 %v834
      %v836 = vpop.f32.mrf.mxu0
      %v837 = vadd.f32 %v594, %v836
      %v838 = vpop.f32.mrf.mxu0
      %v839 = vadd.f32 %v596, %v838
      %840 = vmatprep.mubr.f32.mxu0 0.0
      %v841 = vand.u32 %v468, 4294901760
      %842 = vmatmul.mubr.f32.gmra.mxu0 %v841
      %v843 = vpop.f32.mrf.mxu0
      %v844 = vadd.f32 %v605, %v843
      %v845 = vpop.f32.mrf.mxu0
      %v846 = vadd.f32 %v607, %v845
      %847 = vmatprep.mubr.f32.mxu0 0.0
      %v848 = vand.u32 %v471, 4294901760
      %849 = vmatmul.mubr.f32.gmra.mxu0 %v848
      %v850 = vpop.f32.mrf.mxu0
      %v851 = vadd.f32 %v616, %v850
      %v852 = vpop.f32.mrf.mxu0
      %v853 = vadd.f32 %v618, %v852
      %854 = vmatprep.mubr.f32.mxu0 0.0
      %v855 = vand.u32 %v474, 4294901760
      %856 = vmatmul.mubr.f32.gmra.mxu0 %v855
      %v857 = vpop.f32.mrf.mxu0
      %v858 = vadd.f32 %v627, %v857
      %v859 = vpop.f32.mrf.mxu0
      %v860 = vadd.f32 %v629, %v859
      %861 = vmatprep.mubr.f32.mxu0 0.0
      %v862 = vand.u32 %v477, 4294901760
      %863 = vmatmul.mubr.f32.gmra.mxu0 %v862
      %v864 = vpop.f32.mrf.mxu0
      %v865 = vadd.f32 %v638, %v864
      %v866 = vpop.f32.mrf.mxu0
      %v867 = vadd.f32 %v640, %v866
      %868 = vmatprep.mubr.f32.mxu0 0.0
      %v869 = vand.u32 %v480, 4294901760
      %870 = vmatmul.mubr.f32.gmra.mxu0 %v869
      %v871 = vpop.f32.mrf.mxu0
      %v872 = vadd.f32 %v649, %v871
      %v873 = vpop.f32.mrf.mxu0
      %v874 = vadd.f32 %v651, %v873
      %875 = vmatprep.mubr.f32.mxu0 0.0
      %v876 = vand.u32 %v483, 4294901760
      %877 = vmatmul.mubr.f32.gmra.mxu0 %v876
      %v878 = vpop.f32.mrf.mxu0
      %v879 = vadd.f32 %v660, %v878
      %v880 = vpop.f32.mrf.mxu0
      %v881 = vadd.f32 %v662, %v880
      %882 = vmatprep.mubr.f32.mxu0 0.0
      %v883 = vand.u32 %v486, 4294901760
      %884 = vmatmul.mubr.f32.gmra.mxu0 %v883
      %v885 = vpop.f32.mrf.mxu0
      %v886 = vadd.f32 %v671, %v885
      %v887 = vpop.f32.mrf.mxu0
      %v888 = vadd.f32 %v673, %v887
      %889 = vmatprep.mubr.f32.mxu0 0.0
      %v890 = vand.u32 %v489, 4294901760
      %891 = vmatmul.mubr.f32.gmra.mxu0 %v890
      %v892 = vpop.f32.mrf.mxu0
      %v893 = vadd.f32 %v682, %v892
      %v894 = vpop.f32.mrf.mxu0
      %v895 = vadd.f32 %v684, %v894
      %896 = vmatprep.mubr.f32.mxu0 0.0
      %v897 = vand.u32 %v492, 4294901760
      %898 = vmatmul.mubr.f32.gmra.mxu0 %v897
      %v899 = vpop.f32.mrf.mxu0
      %v900 = vadd.f32 %v693, %v899
      %v901 = vpop.f32.mrf.mxu0
      %v902 = vadd.f32 %v695, %v901
      %903 = vmatprep.mubr.f32.mxu0 0.0
      %v904 = vand.u32 %v495, 4294901760
      %905 = vmatmul.mubr.f32.gmra.mxu0 %v904
      %v906 = vpop.f32.mrf.mxu0
      %v907 = vadd.f32 %v704, %v906
      %v908 = vpop.f32.mrf.mxu0
      %v909 = vadd.f32 %v706, %v908
      %910 = vmatprep.mubr.f32.mxu0 0.0
      %v911 = vand.u32 %v498, 4294901760
      %912 = vmatmul.mubr.f32.gmra.mxu0 %v911
      %v913 = vpop.f32.mrf.mxu0
      %v914 = vadd.f32 %v715, %v913
      %v915 = vpop.f32.mrf.mxu0
      %v916 = vadd.f32 %v717, %v915
      %917 = vmatprep.mubr.f32.mxu0 0.0
      %v918 = vand.u32 %v501, 4294901760
      %919 = vmatmul.mubr.f32.gmra.mxu0 %v918
      %v920 = vpop.f32.mrf.mxu0
      %v921 = vadd.f32 %v726, %v920
      %v922 = vpop.f32.mrf.mxu0
      %v923 = vadd.f32 %v728, %v922
      %924 = vmatprep.mubr.f32.mxu0 0.0
      %v925 = vand.u32 %v504, 4294901760
      %926 = vmatmul.mubr.f32.gmra.mxu0 %v925
      %v927 = vpop.f32.mrf.mxu0
      %v928 = vadd.f32 %v737, %v927
      %v929 = vpop.f32.mrf.mxu0
      %v930 = vadd.f32 %v739, %v929
      %931 = vmatprep.mubr.f32.mxu0 0.0
      %v932 = vand.u32 %v507, 4294901760
      %933 = vmatmul.mubr.f32.gmra.mxu0 %v932
      %v934 = vpop.f32.mrf.mxu0
      %v935 = vadd.f32 %v748, %v934
      %v936 = vpop.f32.mrf.mxu0
      %v937 = vadd.f32 %v750, %v936
      %938 = vdwg.mxu0
      %939 = vmatprep.subr.mxu0 0.0
      %940 = vmatpush1.msra.mxu0 0.0
      %941 = vmatprep.subr.mxu0 0.0
      %942 = vmatpush1.msra.mxu0 0.0
      %943 = vmatprep.subr.mxu0 0.0
      %944 = vmatpush1.msra.mxu0 0.0
      %945 = vmatprep.subr.mxu0 0.0
      %946 = vmatpush1.msra.mxu0 0.0
      %947 = vmatprep.subr.mxu0 0.0
      %948 = vmatpush1.msra.mxu0 0.0
      %949 = vmatprep.subr.mxu0 0.0
      %950 = vmatpush1.msra.mxu0 0.0
      %951 = vmatprep.subr.mxu0 0.0
      %952 = vmatpush1.msra.mxu0 0.0
      %953 = vmatprep.subr.mxu0 0.0
      %954 = vmatpush1.msra.mxu0 0.0
      %955 = vmatprep.subr.mxu0 0.0
      %956 = vmatpush1.msra.mxu0 0.0
      %957 = vmatprep.subr.mxu0 0.0
      %958 = vmatpush1.msra.mxu0 0.0
      %959 = vmatprep.subr.mxu0 0.0
      %960 = vmatpush1.msra.mxu0 0.0
      %961 = vmatprep.subr.mxu0 0.0
      %962 = vmatpush1.msra.mxu0 0.0
      %963 = vmatprep.subr.mxu0 0.0
      %964 = vmatpush1.msra.mxu0 0.0
      %965 = vmatprep.subr.mxu0 0.0
      %966 = vmatpush1.msra.mxu0 0.0
      %967 = vmatprep.subr.mxu0 0.0
      %968 = vmatpush1.msra.mxu0 0.0
      %v969 = vand.u32 %v346, 4294901760
      %v970 = vsub.f32 %v346, %v969
      %971 = vmatprep.subr.mxu0 %v970
      %v972 = vand.u32 %v345, 4294901760
      %v973 = vsub.f32 %v345, %v972
      %974 = vmatpush1.msra.mxu0 %v973
      %975 = vmatprep.subr.mxu0 0.0
      %976 = vmatpush2.msra.mxu0 0.0
      %977 = vmatprep.subr.mxu0 0.0
      %978 = vmatpush2.msra.mxu0 0.0
      %979 = vmatprep.subr.mxu0 0.0
      %980 = vmatpush2.msra.mxu0 0.0
      %981 = vmatprep.subr.mxu0 0.0
      %982 = vmatpush2.msra.mxu0 0.0
      %983 = vmatprep.subr.mxu0 0.0
      %984 = vmatpush2.msra.mxu0 0.0
      %985 = vmatprep.subr.mxu0 0.0
      %986 = vmatpush2.msra.mxu0 0.0
      %987 = vmatprep.subr.mxu0 0.0
      %988 = vmatpush2.msra.mxu0 0.0
      %989 = vmatprep.subr.mxu0 0.0
      %990 = vmatpush2.msra.mxu0 0.0
      %991 = vmatprep.subr.mxu0 0.0
      %992 = vmatpush2.msra.mxu0 0.0
      %993 = vmatprep.subr.mxu0 0.0
      %994 = vmatpush2.msra.mxu0 0.0
      %995 = vmatprep.subr.mxu0 0.0
      %996 = vmatpush2.msra.mxu0 0.0
      %997 = vmatprep.subr.mxu0 0.0
      %998 = vmatpush2.msra.mxu0 0.0
      %999 = vmatprep.subr.mxu0 0.0
      %1000 = vmatpush2.msra.mxu0 0.0
      %1001 = vmatprep.subr.mxu0 0.0
      %1002 = vmatpush2.msra.mxu0 0.0
      %1003 = vmatprep.subr.mxu0 0.0
      %1004 = vmatpush2.msra.mxu0 0.0
      %1005 = vmatprep.subr.mxu0 0.0
      %1006 = vmatpush2.msra.mxu0 0.0
      %1007 = vmatprep.mubr.f32.mxu0 0.0
      %v1008 = vand.u32 %v462, 4294901760
      %v1009 = vsub.f32 %v462, %v1008
      %1010 = vmatmul.mubr.f32.gmra.mxu0 %v1009
      %v1011 = vpop.f32.mrf.mxu0
      %v1012 = vadd.f32 %v830, %v1011
      %v1013 = vpop.f32.mrf.mxu0
      %v1014 = vadd.f32 %v832, %v1013
      %1015 = vmatprep.mubr.f32.mxu0 0.0
      %v1016 = vand.u32 %v465, 4294901760
      %v1017 = vsub.f32 %v465, %v1016
      %1018 = vmatmul.mubr.f32.gmra.mxu0 %v1017
      %v1019 = vpop.f32.mrf.mxu0
      %v1020 = vadd.f32 %v837, %v1019
      %v1021 = vpop.f32.mrf.mxu0
      %v1022 = vadd.f32 %v839, %v1021
      %1023 = vmatprep.mubr.f32.mxu0 0.0
      %v1024 = vand.u32 %v468, 4294901760
      %v1025 = vsub.f32 %v468, %v1024
      %1026 = vmatmul.mubr.f32.gmra.mxu0 %v1025
      %v1027 = vpop.f32.mrf.mxu0
      %v1028 = vadd.f32 %v844, %v1027
      %v1029 = vpop.f32.mrf.mxu0
      %v1030 = vadd.f32 %v846, %v1029
      %1031 = vmatprep.mubr.f32.mxu0 0.0
      %v1032 = vand.u32 %v471, 4294901760
      %v1033 = vsub.f32 %v471, %v1032
      %1034 = vmatmul.mubr.f32.gmra.mxu0 %v1033
      %v1035 = vpop.f32.mrf.mxu0
      %v1036 = vadd.f32 %v851, %v1035
      %v1037 = vpop.f32.mrf.mxu0
      %v1038 = vadd.f32 %v853, %v1037
      %1039 = vmatprep.mubr.f32.mxu0 0.0
      %v1040 = vand.u32 %v474, 4294901760
      %v1041 = vsub.f32 %v474, %v1040
      %1042 = vmatmul.mubr.f32.gmra.mxu0 %v1041
      %v1043 = vpop.f32.mrf.mxu0
      %v1044 = vadd.f32 %v858, %v1043
      %v1045 = vpop.f32.mrf.mxu0
      %v1046 = vadd.f32 %v860, %v1045
      %1047 = vmatprep.mubr.f32.mxu0 0.0
      %v1048 = vand.u32 %v477, 4294901760
      %v1049 = vsub.f32 %v477, %v1048
      %1050 = vmatmul.mubr.f32.gmra.mxu0 %v1049
      %v1051 = vpop.f32.mrf.mxu0
      %v1052 = vadd.f32 %v865, %v1051
      %v1053 = vpop.f32.mrf.mxu0
      %v1054 = vadd.f32 %v867, %v1053
      %1055 = vmatprep.mubr.f32.mxu0 0.0
      %v1056 = vand.u32 %v480, 4294901760
      %v1057 = vsub.f32 %v480, %v1056
      %1058 = vmatmul.mubr.f32.gmra.mxu0 %v1057
      %v1059 = vpop.f32.mrf.mxu0
      %v1060 = vadd.f32 %v872, %v1059
      %v1061 = vpop.f32.mrf.mxu0
      %v1062 = vadd.f32 %v874, %v1061
      %1063 = vmatprep.mubr.f32.mxu0 0.0
      %v1064 = vand.u32 %v483, 4294901760
      %v1065 = vsub.f32 %v483, %v1064
      %1066 = vmatmul.mubr.f32.gmra.mxu0 %v1065
      %v1067 = vpop.f32.mrf.mxu0
      %v1068 = vadd.f32 %v879, %v1067
      %v1069 = vpop.f32.mrf.mxu0
      %v1070 = vadd.f32 %v881, %v1069
      %1071 = vmatprep.mubr.f32.mxu0 0.0
      %v1072 = vand.u32 %v486, 4294901760
      %v1073 = vsub.f32 %v486, %v1072
      %1074 = vmatmul.mubr.f32.gmra.mxu0 %v1073
      %v1075 = vpop.f32.mrf.mxu0
      %v1076 = vadd.f32 %v886, %v1075
      %v1077 = vpop.f32.mrf.mxu0
      %v1078 = vadd.f32 %v888, %v1077
      %1079 = vmatprep.mubr.f32.mxu0 0.0
      %v1080 = vand.u32 %v489, 4294901760
      %v1081 = vsub.f32 %v489, %v1080
      %1082 = vmatmul.mubr.f32.gmra.mxu0 %v1081
      %v1083 = vpop.f32.mrf.mxu0
      %v1084 = vadd.f32 %v893, %v1083
      %v1085 = vpop.f32.mrf.mxu0
      %v1086 = vadd.f32 %v895, %v1085
      %1087 = vmatprep.mubr.f32.mxu0 0.0
      %v1088 = vand.u32 %v492, 4294901760
      %v1089 = vsub.f32 %v492, %v1088
      %1090 = vmatmul.mubr.f32.gmra.mxu0 %v1089
      %v1091 = vpop.f32.mrf.mxu0
      %v1092 = vadd.f32 %v900, %v1091
      %v1093 = vpop.f32.mrf.mxu0
      %v1094 = vadd.f32 %v902, %v1093
      %1095 = vmatprep.mubr.f32.mxu0 0.0
      %v1096 = vand.u32 %v495, 4294901760
      %v1097 = vsub.f32 %v495, %v1096
      %1098 = vmatmul.mubr.f32.gmra.mxu0 %v1097
      %v1099 = vpop.f32.mrf.mxu0
      %v1100 = vadd.f32 %v907, %v1099
      %v1101 = vpop.f32.mrf.mxu0
      %v1102 = vadd.f32 %v909, %v1101
      %1103 = vmatprep.mubr.f32.mxu0 0.0
      %v1104 = vand.u32 %v498, 4294901760
      %v1105 = vsub.f32 %v498, %v1104
      %1106 = vmatmul.mubr.f32.gmra.mxu0 %v1105
      %v1107 = vpop.f32.mrf.mxu0
      %v1108 = vadd.f32 %v914, %v1107
      %v1109 = vpop.f32.mrf.mxu0
      %v1110 = vadd.f32 %v916, %v1109
      %1111 = vmatprep.mubr.f32.mxu0 0.0
      %v1112 = vand.u32 %v501, 4294901760
      %v1113 = vsub.f32 %v501, %v1112
      %1114 = vmatmul.mubr.f32.gmra.mxu0 %v1113
      %v1115 = vpop.f32.mrf.mxu0
      %v1116 = vadd.f32 %v921, %v1115
      %v1117 = vpop.f32.mrf.mxu0
      %v1118 = vadd.f32 %v923, %v1117
      %1119 = vmatprep.mubr.f32.mxu0 0.0
      %v1120 = vand.u32 %v504, 4294901760
      %v1121 = vsub.f32 %v504, %v1120
      %1122 = vmatmul.mubr.f32.gmra.mxu0 %v1121
      %v1123 = vpop.f32.mrf.mxu0
      %v1124 = vadd.f32 %v928, %v1123
      %v1125 = vpop.f32.mrf.mxu0
      %v1126 = vadd.f32 %v930, %v1125
      %1127 = vmatprep.mubr.f32.mxu0 0.0
      %v1128 = vand.u32 %v507, 4294901760
      %v1129 = vsub.f32 %v507, %v1128
      %1130 = vmatmul.mubr.f32.gmra.mxu0 %v1129
      %v1131 = vpop.f32.mrf.mxu0
      %v1132 = vadd.f32 %v935, %v1131
      %v1133 = vpop.f32.mrf.mxu0
      %v1134 = vadd.f32 %v937, %v1133
      %1135 = vdwg.mxu0
      %1136 = vmatprep.subr.mxu0 0.0
      %1137 = vmatpush1.msra.mxu0 0.0
      %1138 = vmatprep.subr.mxu0 0.0
      %1139 = vmatpush1.msra.mxu0 0.0
      %1140 = vmatprep.subr.mxu0 0.0
      %1141 = vmatpush1.msra.mxu0 0.0
      %1142 = vmatprep.subr.mxu0 0.0
      %1143 = vmatpush1.msra.mxu0 0.0
      %1144 = vmatprep.subr.mxu0 0.0
      %1145 = vmatpush1.msra.mxu0 0.0
      %1146 = vmatprep.subr.mxu0 0.0
      %1147 = vmatpush1.msra.mxu0 0.0
      %1148 = vmatprep.subr.mxu0 0.0
      %1149 = vmatpush1.msra.mxu0 0.0
      %1150 = vmatprep.subr.mxu0 0.0
      %1151 = vmatpush1.msra.mxu0 0.0
      %1152 = vmatprep.subr.mxu0 0.0
      %1153 = vmatpush1.msra.mxu0 0.0
      %1154 = vmatprep.subr.mxu0 0.0
      %1155 = vmatpush1.msra.mxu0 0.0
      %1156 = vmatprep.subr.mxu0 0.0
      %1157 = vmatpush1.msra.mxu0 0.0
      %1158 = vmatprep.subr.mxu0 0.0
      %1159 = vmatpush1.msra.mxu0 0.0
      %1160 = vmatprep.subr.mxu0 0.0
      %1161 = vmatpush1.msra.mxu0 0.0
      %1162 = vmatprep.subr.mxu0 0.0
      %1163 = vmatpush1.msra.mxu0 0.0
      %1164 = vmatprep.subr.mxu0 0.0
      %1165 = vmatpush1.msra.mxu0 0.0
      %v1166 = vand.u32 %v346, 4294901760
      %1167 = vmatprep.subr.mxu0 %v1166
      %v1168 = vand.u32 %v345, 4294901760
      %1169 = vmatpush1.msra.mxu0 %v1168
      %1170 = vmatprep.subr.mxu0 0.0
      %1171 = vmatpush2.msra.mxu0 0.0
      %1172 = vmatprep.subr.mxu0 0.0
      %1173 = vmatpush2.msra.mxu0 0.0
      %1174 = vmatprep.subr.mxu0 0.0
      %1175 = vmatpush2.msra.mxu0 0.0
      %1176 = vmatprep.subr.mxu0 0.0
      %1177 = vmatpush2.msra.mxu0 0.0
      %1178 = vmatprep.subr.mxu0 0.0
      %1179 = vmatpush2.msra.mxu0 0.0
      %1180 = vmatprep.subr.mxu0 0.0
      %1181 = vmatpush2.msra.mxu0 0.0
      %1182 = vmatprep.subr.mxu0 0.0
      %1183 = vmatpush2.msra.mxu0 0.0
      %1184 = vmatprep.subr.mxu0 0.0
      %1185 = vmatpush2.msra.mxu0 0.0
      %1186 = vmatprep.subr.mxu0 0.0
      %1187 = vmatpush2.msra.mxu0 0.0
      %1188 = vmatprep.subr.mxu0 0.0
      %1189 = vmatpush2.msra.mxu0 0.0
      %1190 = vmatprep.subr.mxu0 0.0
      %1191 = vmatpush2.msra.mxu0 0.0
      %1192 = vmatprep.subr.mxu0 0.0
      %1193 = vmatpush2.msra.mxu0 0.0
      %1194 = vmatprep.subr.mxu0 0.0
      %1195 = vmatpush2.msra.mxu0 0.0
      %1196 = vmatprep.subr.mxu0 0.0
      %1197 = vmatpush2.msra.mxu0 0.0
      %1198 = vmatprep.subr.mxu0 0.0
      %1199 = vmatpush2.msra.mxu0 0.0
      %1200 = vmatprep.subr.mxu0 0.0
      %1201 = vmatpush2.msra.mxu0 0.0
      %1202 = vmatprep.mubr.f32.mxu0 0.0
      %v1203 = vand.u32 %v462, 4294901760
      %v1204 = vsub.f32 %v462, %v1203
      %v1205 = vand.u32 %v1204, 4294901760
      %1206 = vmatmul.mubr.f32.gmra.mxu0 %v1205
      %v1207 = vpop.f32.mrf.mxu0
      %v1208 = vadd.f32 %v1012, %v1207
      %v1209 = vpop.f32.mrf.mxu0
      %v1210 = vadd.f32 %v1014, %v1209
      %1211 = vmatprep.mubr.f32.mxu0 0.0
      %v1212 = vand.u32 %v465, 4294901760
      %v1213 = vsub.f32 %v465, %v1212
      %v1214 = vand.u32 %v1213, 4294901760
      %1215 = vmatmul.mubr.f32.gmra.mxu0 %v1214
      %v1216 = vpop.f32.mrf.mxu0
      %v1217 = vadd.f32 %v1020, %v1216
      %v1218 = vpop.f32.mrf.mxu0
      %v1219 = vadd.f32 %v1022, %v1218
      %1220 = vmatprep.mubr.f32.mxu0 0.0
      %v1221 = vand.u32 %v468, 4294901760
      %v1222 = vsub.f32 %v468, %v1221
      %v1223 = vand.u32 %v1222, 4294901760
      %1224 = vmatmul.mubr.f32.gmra.mxu0 %v1223
      %v1225 = vpop.f32.mrf.mxu0
      %v1226 = vadd.f32 %v1028, %v1225
      %v1227 = vpop.f32.mrf.mxu0
      %v1228 = vadd.f32 %v1030, %v1227
      %1229 = vmatprep.mubr.f32.mxu0 0.0
      %v1230 = vand.u32 %v471, 4294901760
      %v1231 = vsub.f32 %v471, %v1230
      %v1232 = vand.u32 %v1231, 4294901760
      %1233 = vmatmul.mubr.f32.gmra.mxu0 %v1232
      %v1234 = vpop.f32.mrf.mxu0
      %v1235 = vadd.f32 %v1036, %v1234
      %v1236 = vpop.f32.mrf.mxu0
      %v1237 = vadd.f32 %v1038, %v1236
      %1238 = vmatprep.mubr.f32.mxu0 0.0
      %v1239 = vand.u32 %v474, 4294901760
      %v1240 = vsub.f32 %v474, %v1239
      %v1241 = vand.u32 %v1240, 4294901760
      %1242 = vmatmul.mubr.f32.gmra.mxu0 %v1241
      %v1243 = vpop.f32.mrf.mxu0
      %v1244 = vadd.f32 %v1044, %v1243
      %v1245 = vpop.f32.mrf.mxu0
      %v1246 = vadd.f32 %v1046, %v1245
      %1247 = vmatprep.mubr.f32.mxu0 0.0
      %v1248 = vand.u32 %v477, 4294901760
      %v1249 = vsub.f32 %v477, %v1248
      %v1250 = vand.u32 %v1249, 4294901760
      %1251 = vmatmul.mubr.f32.gmra.mxu0 %v1250
      %v1252 = vpop.f32.mrf.mxu0
      %v1253 = vadd.f32 %v1052, %v1252
      %v1254 = vpop.f32.mrf.mxu0
      %v1255 = vadd.f32 %v1054, %v1254
      %1256 = vmatprep.mubr.f32.mxu0 0.0
      %v1257 = vand.u32 %v480, 4294901760
      %v1258 = vsub.f32 %v480, %v1257
      %v1259 = vand.u32 %v1258, 4294901760
      %1260 = vmatmul.mubr.f32.gmra.mxu0 %v1259
      %v1261 = vpop.f32.mrf.mxu0
      %v1262 = vadd.f32 %v1060, %v1261
      %v1263 = vpop.f32.mrf.mxu0
      %v1264 = vadd.f32 %v1062, %v1263
      %1265 = vmatprep.mubr.f32.mxu0 0.0
      %v1266 = vand.u32 %v483, 4294901760
      %v1267 = vsub.f32 %v483, %v1266
      %v1268 = vand.u32 %v1267, 4294901760
      %1269 = vmatmul.mubr.f32.gmra.mxu0 %v1268
      %v1270 = vpop.f32.mrf.mxu0
      %v1271 = vadd.f32 %v1068, %v1270
      %v1272 = vpop.f32.mrf.mxu0
      %v1273 = vadd.f32 %v1070, %v1272
      %1274 = vmatprep.mubr.f32.mxu0 0.0
      %v1275 = vand.u32 %v486, 4294901760
      %v1276 = vsub.f32 %v486, %v1275
      %v1277 = vand.u32 %v1276, 4294901760
      %1278 = vmatmul.mubr.f32.gmra.mxu0 %v1277
      %v1279 = vpop.f32.mrf.mxu0
      %v1280 = vadd.f32 %v1076, %v1279
      %v1281 = vpop.f32.mrf.mxu0
      %v1282 = vadd.f32 %v1078, %v1281
      %1283 = vmatprep.mubr.f32.mxu0 0.0
      %v1284 = vand.u32 %v489, 4294901760
      %v1285 = vsub.f32 %v489, %v1284
      %v1286 = vand.u32 %v1285, 4294901760
      %1287 = vmatmul.mubr.f32.gmra.mxu0 %v1286
      %v1288 = vpop.f32.mrf.mxu0
      %v1289 = vadd.f32 %v1084, %v1288
      %v1290 = vpop.f32.mrf.mxu0
      %v1291 = vadd.f32 %v1086, %v1290
      %1292 = vmatprep.mubr.f32.mxu0 0.0
      %v1293 = vand.u32 %v492, 4294901760
      %v1294 = vsub.f32 %v492, %v1293
      %v1295 = vand.u32 %v1294, 4294901760
      %1296 = vmatmul.mubr.f32.gmra.mxu0 %v1295
      %v1297 = vpop.f32.mrf.mxu0
      %v1298 = vadd.f32 %v1092, %v1297
      %v1299 = vpop.f32.mrf.mxu0
      %v1300 = vadd.f32 %v1094, %v1299
      %1301 = vmatprep.mubr.f32.mxu0 0.0
      %v1302 = vand.u32 %v495, 4294901760
      %v1303 = vsub.f32 %v495, %v1302
      %v1304 = vand.u32 %v1303, 4294901760
      %1305 = vmatmul.mubr.f32.gmra.mxu0 %v1304
      %v1306 = vpop.f32.mrf.mxu0
      %v1307 = vadd.f32 %v1100, %v1306
      %v1308 = vpop.f32.mrf.mxu0
      %v1309 = vadd.f32 %v1102, %v1308
      %1310 = vmatprep.mubr.f32.mxu0 0.0
      %v1311 = vand.u32 %v498, 4294901760
      %v1312 = vsub.f32 %v498, %v1311
      %v1313 = vand.u32 %v1312, 4294901760
      %1314 = vmatmul.mubr.f32.gmra.mxu0 %v1313
      %v1315 = vpop.f32.mrf.mxu0
      %v1316 = vadd.f32 %v1108, %v1315
      %v1317 = vpop.f32.mrf.mxu0
      %v1318 = vadd.f32 %v1110, %v1317
      %1319 = vmatprep.mubr.f32.mxu0 0.0
      %v1320 = vand.u32 %v501, 4294901760
      %v1321 = vsub.f32 %v501, %v1320
      %v1322 = vand.u32 %v1321, 4294901760
      %1323 = vmatmul.mubr.f32.gmra.mxu0 %v1322
      %v1324 = vpop.f32.mrf.mxu0
      %v1325 = vadd.f32 %v1116, %v1324
      %v1326 = vpop.f32.mrf.mxu0
      %v1327 = vadd.f32 %v1118, %v1326
      %1328 = vmatprep.mubr.f32.mxu0 0.0
      %v1329 = vand.u32 %v504, 4294901760
      %v1330 = vsub.f32 %v504, %v1329
      %v1331 = vand.u32 %v1330, 4294901760
      %1332 = vmatmul.mubr.f32.gmra.mxu0 %v1331
      %v1333 = vpop.f32.mrf.mxu0
      %v1334 = vadd.f32 %v1124, %v1333
      %v1335 = vpop.f32.mrf.mxu0
      %v1336 = vadd.f32 %v1126, %v1335
      %1337 = vmatprep.mubr.f32.mxu0 0.0
      %v1338 = vand.u32 %v507, 4294901760
      %v1339 = vsub.f32 %v507, %v1338
      %v1340 = vand.u32 %v1339, 4294901760
      %1341 = vmatmul.mubr.f32.gmra.mxu0 %v1340
      %v1342 = vpop.f32.mrf.mxu0
      %v1343 = vadd.f32 %v1132, %v1342
      %v1344 = vpop.f32.mrf.mxu0
      %v1345 = vadd.f32 %v1134, %v1344
      %1346 = vdwg.mxu0
      %1347 = vmatprep.subr.mxu0 0.0
      %1348 = vmatpush1.msra.mxu0 0.0
      %1349 = vmatprep.subr.mxu0 0.0
      %1350 = vmatpush1.msra.mxu0 0.0
      %1351 = vmatprep.subr.mxu0 0.0
      %1352 = vmatpush1.msra.mxu0 0.0
      %1353 = vmatprep.subr.mxu0 0.0
      %1354 = vmatpush1.msra.mxu0 0.0
      %1355 = vmatprep.subr.mxu0 0.0
      %1356 = vmatpush1.msra.mxu0 0.0
      %1357 = vmatprep.subr.mxu0 0.0
      %1358 = vmatpush1.msra.mxu0 0.0
      %1359 = vmatprep.subr.mxu0 0.0
      %1360 = vmatpush1.msra.mxu0 0.0
      %1361 = vmatprep.subr.mxu0 0.0
      %1362 = vmatpush1.msra.mxu0 0.0
      %1363 = vmatprep.subr.mxu0 0.0
      %1364 = vmatpush1.msra.mxu0 0.0
      %1365 = vmatprep.subr.mxu0 0.0
      %1366 = vmatpush1.msra.mxu0 0.0
      %1367 = vmatprep.subr.mxu0 0.0
      %1368 = vmatpush1.msra.mxu0 0.0
      %1369 = vmatprep.subr.mxu0 0.0
      %1370 = vmatpush1.msra.mxu0 0.0
      %1371 = vmatprep.subr.mxu0 0.0
      %1372 = vmatpush1.msra.mxu0 0.0
      %1373 = vmatprep.subr.mxu0 0.0
      %1374 = vmatpush1.msra.mxu0 0.0
      %1375 = vmatprep.subr.mxu0 0.0
      %1376 = vmatpush1.msra.mxu0 0.0
      %v1377 = vand.u32 %v346, 4294901760
      %v1378 = vsub.f32 %v346, %v1377
      %v1379 = vand.u32 %v1378, 4294901760
      %1380 = vmatprep.subr.mxu0 %v1379
      %v1381 = vand.u32 %v345, 4294901760
      %v1382 = vsub.f32 %v345, %v1381
      %v1383 = vand.u32 %v1382, 4294901760
      %1384 = vmatpush1.msra.mxu0 %v1383
      %1385 = vmatprep.subr.mxu0 0.0
      %1386 = vmatpush2.msra.mxu0 0.0
      %1387 = vmatprep.subr.mxu0 0.0
      %1388 = vmatpush2.msra.mxu0 0.0
      %1389 = vmatprep.subr.mxu0 0.0
      %1390 = vmatpush2.msra.mxu0 0.0
      %1391 = vmatprep.subr.mxu0 0.0
      %1392 = vmatpush2.msra.mxu0 0.0
      %1393 = vmatprep.subr.mxu0 0.0
      %1394 = vmatpush2.msra.mxu0 0.0
      %1395 = vmatprep.subr.mxu0 0.0
      %1396 = vmatpush2.msra.mxu0 0.0
      %1397 = vmatprep.subr.mxu0 0.0
      %1398 = vmatpush2.msra.mxu0 0.0
      %1399 = vmatprep.subr.mxu0 0.0
      %1400 = vmatpush2.msra.mxu0 0.0
      %1401 = vmatprep.subr.mxu0 0.0
      %1402 = vmatpush2.msra.mxu0 0.0
      %1403 = vmatprep.subr.mxu0 0.0
      %1404 = vmatpush2.msra.mxu0 0.0
      %1405 = vmatprep.subr.mxu0 0.0
      %1406 = vmatpush2.msra.mxu0 0.0
      %1407 = vmatprep.subr.mxu0 0.0
      %1408 = vmatpush2.msra.mxu0 0.0
      %1409 = vmatprep.subr.mxu0 0.0
      %1410 = vmatpush2.msra.mxu0 0.0
      %1411 = vmatprep.subr.mxu0 0.0
      %1412 = vmatpush2.msra.mxu0 0.0
      %1413 = vmatprep.subr.mxu0 0.0
      %1414 = vmatpush2.msra.mxu0 0.0
      %1415 = vmatprep.subr.mxu0 0.0
      %1416 = vmatpush2.msra.mxu0 0.0
      %1417 = vmatprep.mubr.f32.mxu0 0.0
      %v1418 = vand.u32 %v462, 4294901760
      %1419 = vmatmul.mubr.f32.gmra.mxu0 %v1418
      %v1420 = vpop.f32.mrf.mxu0
      %v1421 = vadd.f32 %v1208, %v1420
      %v1422 = vpop.f32.mrf.mxu0
      %v1423 = vadd.f32 %v1210, %v1422
      %1424 = vmatprep.mubr.f32.mxu0 0.0
      %v1425 = vand.u32 %v465, 4294901760
      %1426 = vmatmul.mubr.f32.gmra.mxu0 %v1425
      %v1427 = vpop.f32.mrf.mxu0
      %v1428 = vadd.f32 %v1217, %v1427
      %v1429 = vpop.f32.mrf.mxu0
      %v1430 = vadd.f32 %v1219, %v1429
      %1431 = vmatprep.mubr.f32.mxu0 0.0
      %v1432 = vand.u32 %v468, 4294901760
      %1433 = vmatmul.mubr.f32.gmra.mxu0 %v1432
      %v1434 = vpop.f32.mrf.mxu0
      %v1435 = vadd.f32 %v1226, %v1434
      %v1436 = vpop.f32.mrf.mxu0
      %v1437 = vadd.f32 %v1228, %v1436
      %1438 = vmatprep.mubr.f32.mxu0 0.0
      %v1439 = vand.u32 %v471, 4294901760
      %1440 = vmatmul.mubr.f32.gmra.mxu0 %v1439
      %v1441 = vpop.f32.mrf.mxu0
      %v1442 = vadd.f32 %v1235, %v1441
      %v1443 = vpop.f32.mrf.mxu0
      %v1444 = vadd.f32 %v1237, %v1443
      %1445 = vmatprep.mubr.f32.mxu0 0.0
      %v1446 = vand.u32 %v474, 4294901760
      %1447 = vmatmul.mubr.f32.gmra.mxu0 %v1446
      %v1448 = vpop.f32.mrf.mxu0
      %v1449 = vadd.f32 %v1244, %v1448
      %v1450 = vpop.f32.mrf.mxu0
      %v1451 = vadd.f32 %v1246, %v1450
      %1452 = vmatprep.mubr.f32.mxu0 0.0
      %v1453 = vand.u32 %v477, 4294901760
      %1454 = vmatmul.mubr.f32.gmra.mxu0 %v1453
      %v1455 = vpop.f32.mrf.mxu0
      %v1456 = vadd.f32 %v1253, %v1455
      %v1457 = vpop.f32.mrf.mxu0
      %v1458 = vadd.f32 %v1255, %v1457
      %1459 = vmatprep.mubr.f32.mxu0 0.0
      %v1460 = vand.u32 %v480, 4294901760
      %1461 = vmatmul.mubr.f32.gmra.mxu0 %v1460
      %v1462 = vpop.f32.mrf.mxu0
      %v1463 = vadd.f32 %v1262, %v1462
      %v1464 = vpop.f32.mrf.mxu0
      %v1465 = vadd.f32 %v1264, %v1464
      %1466 = vmatprep.mubr.f32.mxu0 0.0
      %v1467 = vand.u32 %v483, 4294901760
      %1468 = vmatmul.mubr.f32.gmra.mxu0 %v1467
      %v1469 = vpop.f32.mrf.mxu0
      %v1470 = vadd.f32 %v1271, %v1469
      %v1471 = vpop.f32.mrf.mxu0
      %v1472 = vadd.f32 %v1273, %v1471
      %1473 = vmatprep.mubr.f32.mxu0 0.0
      %v1474 = vand.u32 %v486, 4294901760
      %1475 = vmatmul.mubr.f32.gmra.mxu0 %v1474
      %v1476 = vpop.f32.mrf.mxu0
      %v1477 = vadd.f32 %v1280, %v1476
      %v1478 = vpop.f32.mrf.mxu0
      %v1479 = vadd.f32 %v1282, %v1478
      %1480 = vmatprep.mubr.f32.mxu0 0.0
      %v1481 = vand.u32 %v489, 4294901760
      %1482 = vmatmul.mubr.f32.gmra.mxu0 %v1481
      %v1483 = vpop.f32.mrf.mxu0
      %v1484 = vadd.f32 %v1289, %v1483
      %v1485 = vpop.f32.mrf.mxu0
      %v1486 = vadd.f32 %v1291, %v1485
      %1487 = vmatprep.mubr.f32.mxu0 0.0
      %v1488 = vand.u32 %v492, 4294901760
      %1489 = vmatmul.mubr.f32.gmra.mxu0 %v1488
      %v1490 = vpop.f32.mrf.mxu0
      %v1491 = vadd.f32 %v1298, %v1490
      %v1492 = vpop.f32.mrf.mxu0
      %v1493 = vadd.f32 %v1300, %v1492
      %1494 = vmatprep.mubr.f32.mxu0 0.0
      %v1495 = vand.u32 %v495, 4294901760
      %1496 = vmatmul.mubr.f32.gmra.mxu0 %v1495
      %v1497 = vpop.f32.mrf.mxu0
      %v1498 = vadd.f32 %v1307, %v1497
      %v1499 = vpop.f32.mrf.mxu0
      %v1500 = vadd.f32 %v1309, %v1499
      %1501 = vmatprep.mubr.f32.mxu0 0.0
      %v1502 = vand.u32 %v498, 4294901760
      %1503 = vmatmul.mubr.f32.gmra.mxu0 %v1502
      %v1504 = vpop.f32.mrf.mxu0
      %v1505 = vadd.f32 %v1316, %v1504
      %v1506 = vpop.f32.mrf.mxu0
      %v1507 = vadd.f32 %v1318, %v1506
      %1508 = vmatprep.mubr.f32.mxu0 0.0
      %v1509 = vand.u32 %v501, 4294901760
      %1510 = vmatmul.mubr.f32.gmra.mxu0 %v1509
      %v1511 = vpop.f32.mrf.mxu0
      %v1512 = vadd.f32 %v1325, %v1511
      %v1513 = vpop.f32.mrf.mxu0
      %v1514 = vadd.f32 %v1327, %v1513
      %1515 = vmatprep.mubr.f32.mxu0 0.0
      %v1516 = vand.u32 %v504, 4294901760
      %1517 = vmatmul.mubr.f32.gmra.mxu0 %v1516
      %v1518 = vpop.f32.mrf.mxu0
      %v1519 = vadd.f32 %v1334, %v1518
      %v1520 = vpop.f32.mrf.mxu0
      %v1521 = vadd.f32 %v1336, %v1520
      %1522 = vmatprep.mubr.f32.mxu0 0.0
      %v1523 = vand.u32 %v507, 4294901760
      %1524 = vmatmul.mubr.f32.gmra.mxu0 %v1523
      %v1525 = vpop.f32.mrf.mxu0
      %v1526 = vadd.f32 %v1343, %v1525
      %v1527 = vpop.f32.mrf.mxu0
      %v1528 = vadd.f32 %v1345, %v1527
      %1529 = vdwg.mxu0
      %1530 = vmatprep.subr.mxu0 0.0
      %1531 = vmatpush1.msra.mxu0 0.0
      %1532 = vmatprep.subr.mxu0 0.0
      %1533 = vmatpush1.msra.mxu0 0.0
      %1534 = vmatprep.subr.mxu0 0.0
      %1535 = vmatpush1.msra.mxu0 0.0
      %1536 = vmatprep.subr.mxu0 0.0
      %1537 = vmatpush1.msra.mxu0 0.0
      %1538 = vmatprep.subr.mxu0 0.0
      %1539 = vmatpush1.msra.mxu0 0.0
      %1540 = vmatprep.subr.mxu0 0.0
      %1541 = vmatpush1.msra.mxu0 0.0
      %1542 = vmatprep.subr.mxu0 0.0
      %1543 = vmatpush1.msra.mxu0 0.0
      %1544 = vmatprep.subr.mxu0 0.0
      %1545 = vmatpush1.msra.mxu0 0.0
      %1546 = vmatprep.subr.mxu0 0.0
      %1547 = vmatpush1.msra.mxu0 0.0
      %1548 = vmatprep.subr.mxu0 0.0
      %1549 = vmatpush1.msra.mxu0 0.0
      %1550 = vmatprep.subr.mxu0 0.0
      %1551 = vmatpush1.msra.mxu0 0.0
      %1552 = vmatprep.subr.mxu0 0.0
      %1553 = vmatpush1.msra.mxu0 0.0
      %1554 = vmatprep.subr.mxu0 0.0
      %1555 = vmatpush1.msra.mxu0 0.0
      %1556 = vmatprep.subr.mxu0 0.0
      %1557 = vmatpush1.msra.mxu0 0.0
      %1558 = vmatprep.subr.mxu0 0.0
      %1559 = vmatpush1.msra.mxu0 0.0
      %v1560 = vand.u32 %v346, 4294901760
      %1561 = vmatprep.subr.mxu0 %v1560
      %v1562 = vand.u32 %v345, 4294901760
      %1563 = vmatpush1.msra.mxu0 %v1562
      %1564 = vmatprep.subr.mxu0 0.0
      %1565 = vmatpush2.msra.mxu0 0.0
      %1566 = vmatprep.subr.mxu0 0.0
      %1567 = vmatpush2.msra.mxu0 0.0
      %1568 = vmatprep.subr.mxu0 0.0
      %1569 = vmatpush2.msra.mxu0 0.0
      %1570 = vmatprep.subr.mxu0 0.0
      %1571 = vmatpush2.msra.mxu0 0.0
      %1572 = vmatprep.subr.mxu0 0.0
      %1573 = vmatpush2.msra.mxu0 0.0
      %1574 = vmatprep.subr.mxu0 0.0
      %1575 = vmatpush2.msra.mxu0 0.0
      %1576 = vmatprep.subr.mxu0 0.0
      %1577 = vmatpush2.msra.mxu0 0.0
      %1578 = vmatprep.subr.mxu0 0.0
      %1579 = vmatpush2.msra.mxu0 0.0
      %1580 = vmatprep.subr.mxu0 0.0
      %1581 = vmatpush2.msra.mxu0 0.0
      %1582 = vmatprep.subr.mxu0 0.0
      %1583 = vmatpush2.msra.mxu0 0.0
      %1584 = vmatprep.subr.mxu0 0.0
      %1585 = vmatpush2.msra.mxu0 0.0
      %1586 = vmatprep.subr.mxu0 0.0
      %1587 = vmatpush2.msra.mxu0 0.0
      %1588 = vmatprep.subr.mxu0 0.0
      %1589 = vmatpush2.msra.mxu0 0.0
      %1590 = vmatprep.subr.mxu0 0.0
      %1591 = vmatpush2.msra.mxu0 0.0
      %1592 = vmatprep.subr.mxu0 0.0
      %1593 = vmatpush2.msra.mxu0 0.0
      %1594 = vmatprep.subr.mxu0 0.0
      %1595 = vmatpush2.msra.mxu0 0.0
      %1596 = vmatprep.mubr.f32.mxu0 0.0
      %v1597 = vand.u32 %v462, 4294901760
      %1598 = vmatmul.mubr.f32.gmra.mxu0 %v1597
      %v1599 = vpop.f32.mrf.mxu0
      %v1600 = vadd.f32 %v1421, %v1599
      %v1601 = vpop.f32.mrf.mxu0
      %v1602 = vadd.f32 %v1423, %v1601
      %1603 = vmatprep.mubr.f32.mxu0 0.0
      %v1604 = vand.u32 %v465, 4294901760
      %1605 = vmatmul.mubr.f32.gmra.mxu0 %v1604
      %v1606 = vpop.f32.mrf.mxu0
      %v1607 = vadd.f32 %v1428, %v1606
      %v1608 = vpop.f32.mrf.mxu0
      %v1609 = vadd.f32 %v1430, %v1608
      %1610 = vmatprep.mubr.f32.mxu0 0.0
      %v1611 = vand.u32 %v468, 4294901760
      %1612 = vmatmul.mubr.f32.gmra.mxu0 %v1611
      %v1613 = vpop.f32.mrf.mxu0
      %v1614 = vadd.f32 %v1435, %v1613
      %v1615 = vpop.f32.mrf.mxu0
      %v1616 = vadd.f32 %v1437, %v1615
      %1617 = vmatprep.mubr.f32.mxu0 0.0
      %v1618 = vand.u32 %v471, 4294901760
      %1619 = vmatmul.mubr.f32.gmra.mxu0 %v1618
      %v1620 = vpop.f32.mrf.mxu0
      %v1621 = vadd.f32 %v1442, %v1620
      %v1622 = vpop.f32.mrf.mxu0
      %v1623 = vadd.f32 %v1444, %v1622
      %1624 = vmatprep.mubr.f32.mxu0 0.0
      %v1625 = vand.u32 %v474, 4294901760
      %1626 = vmatmul.mubr.f32.gmra.mxu0 %v1625
      %v1627 = vpop.f32.mrf.mxu0
      %v1628 = vadd.f32 %v1449, %v1627
      %v1629 = vpop.f32.mrf.mxu0
      %v1630 = vadd.f32 %v1451, %v1629
      %1631 = vmatprep.mubr.f32.mxu0 0.0
      %v1632 = vand.u32 %v477, 4294901760
      %1633 = vmatmul.mubr.f32.gmra.mxu0 %v1632
      %v1634 = vpop.f32.mrf.mxu0
      %v1635 = vadd.f32 %v1456, %v1634
      %v1636 = vpop.f32.mrf.mxu0
      %v1637 = vadd.f32 %v1458, %v1636
      %1638 = vmatprep.mubr.f32.mxu0 0.0
      %v1639 = vand.u32 %v480, 4294901760
      %1640 = vmatmul.mubr.f32.gmra.mxu0 %v1639
      %v1641 = vpop.f32.mrf.mxu0
      %v1642 = vadd.f32 %v1463, %v1641
      %v1643 = vpop.f32.mrf.mxu0
      %v1644 = vadd.f32 %v1465, %v1643
      %1645 = vmatprep.mubr.f32.mxu0 0.0
      %v1646 = vand.u32 %v483, 4294901760
      %1647 = vmatmul.mubr.f32.gmra.mxu0 %v1646
      %v1648 = vpop.f32.mrf.mxu0
      %v1649 = vadd.f32 %v1470, %v1648
      %v1650 = vpop.f32.mrf.mxu0
      %v1651 = vadd.f32 %v1472, %v1650
      %1652 = vmatprep.mubr.f32.mxu0 0.0
      %v1653 = vand.u32 %v486, 4294901760
      %1654 = vmatmul.mubr.f32.gmra.mxu0 %v1653
      %v1655 = vpop.f32.mrf.mxu0
      %v1656 = vadd.f32 %v1477, %v1655
      %v1657 = vpop.f32.mrf.mxu0
      %v1658 = vadd.f32 %v1479, %v1657
      %1659 = vmatprep.mubr.f32.mxu0 0.0
      %v1660 = vand.u32 %v489, 4294901760
      %1661 = vmatmul.mubr.f32.gmra.mxu0 %v1660
      %v1662 = vpop.f32.mrf.mxu0
      %v1663 = vadd.f32 %v1484, %v1662
      %v1664 = vpop.f32.mrf.mxu0
      %v1665 = vadd.f32 %v1486, %v1664
      %1666 = vmatprep.mubr.f32.mxu0 0.0
      %v1667 = vand.u32 %v492, 4294901760
      %1668 = vmatmul.mubr.f32.gmra.mxu0 %v1667
      %v1669 = vpop.f32.mrf.mxu0
      %v1670 = vadd.f32 %v1491, %v1669
      %v1671 = vpop.f32.mrf.mxu0
      %v1672 = vadd.f32 %v1493, %v1671
      %1673 = vmatprep.mubr.f32.mxu0 0.0
      %v1674 = vand.u32 %v495, 4294901760
      %1675 = vmatmul.mubr.f32.gmra.mxu0 %v1674
      %v1676 = vpop.f32.mrf.mxu0
      %v1677 = vadd.f32 %v1498, %v1676
      %v1678 = vpop.f32.mrf.mxu0
      %v1679 = vadd.f32 %v1500, %v1678
      %1680 = vmatprep.mubr.f32.mxu0 0.0
      %v1681 = vand.u32 %v498, 4294901760
      %1682 = vmatmul.mubr.f32.gmra.mxu0 %v1681
      %v1683 = vpop.f32.mrf.mxu0
      %v1684 = vadd.f32 %v1505, %v1683
      %v1685 = vpop.f32.mrf.mxu0
      %v1686 = vadd.f32 %v1507, %v1685
      %1687 = vmatprep.mubr.f32.mxu0 0.0
      %v1688 = vand.u32 %v501, 4294901760
      %1689 = vmatmul.mubr.f32.gmra.mxu0 %v1688
      %v1690 = vpop.f32.mrf.mxu0
      %v1691 = vadd.f32 %v1512, %v1690
      %v1692 = vpop.f32.mrf.mxu0
      %v1693 = vadd.f32 %v1514, %v1692
      %1694 = vmatprep.mubr.f32.mxu0 0.0
      %v1695 = vand.u32 %v504, 4294901760
      %1696 = vmatmul.mubr.f32.gmra.mxu0 %v1695
      %v1697 = vpop.f32.mrf.mxu0
      %v1698 = vadd.f32 %v1519, %v1697
      %v1699 = vpop.f32.mrf.mxu0
      %v1700 = vadd.f32 %v1521, %v1699
      %1701 = vmatprep.mubr.f32.mxu0 0.0
      %v1702 = vand.u32 %v507, 4294901760
      %1703 = vmatmul.mubr.f32.gmra.mxu0 %v1702
      %v1704 = vpop.f32.mrf.mxu0
      %v1705 = vadd.f32 %v1526, %v1704
      %v1706 = vpop.f32.mrf.mxu0
      %v1707 = vadd.f32 %v1528, %v1706
      %1708 = vdwg.mxu0
      %1709 = vmatprep.subr.mxu0 0.0
      %1710 = vmatpush1.msra.mxu0 0.0
      %1711 = vmatprep.subr.mxu0 0.0
      %1712 = vmatpush1.msra.mxu0 0.0
      %1713 = vmatprep.subr.mxu0 0.0
      %1714 = vmatpush1.msra.mxu0 0.0
      %1715 = vmatprep.subr.mxu0 0.0
      %1716 = vmatpush1.msra.mxu0 0.0
      %1717 = vmatprep.subr.mxu0 0.0
      %1718 = vmatpush1.msra.mxu0 0.0
      %1719 = vmatprep.subr.mxu0 0.0
      %1720 = vmatpush1.msra.mxu0 0.0
      %1721 = vmatprep.subr.mxu0 0.0
      %1722 = vmatpush1.msra.mxu0 0.0
      %1723 = vmatprep.subr.mxu0 0.0
      %1724 = vmatpush1.msra.mxu0 0.0
      %1725 = vmatprep.subr.mxu0 0.0
      %1726 = vmatpush1.msra.mxu0 0.0
      %1727 = vmatprep.subr.mxu0 0.0
      %1728 = vmatpush1.msra.mxu0 0.0
      %1729 = vmatprep.subr.mxu0 0.0
      %1730 = vmatpush1.msra.mxu0 0.0
      %1731 = vmatprep.subr.mxu0 0.0
      %1732 = vmatpush1.msra.mxu0 0.0
      %1733 = vmatprep.subr.mxu0 0.0
      %1734 = vmatpush1.msra.mxu0 0.0
      %1735 = vmatprep.subr.mxu0 0.0
      %1736 = vmatpush1.msra.mxu0 0.0
      %1737 = vmatprep.subr.mxu0 0.0
      %1738 = vmatpush1.msra.mxu0 0.0
      %1739 = vmatprep.subr.mxu0 0.0
      %v1740 = vand.u32 %v347, 4294901760
      %1741 = vmatpush1.msra.mxu0 %v1740
      %1742 = vmatprep.subr.mxu0 0.0
      %1743 = vmatpush2.msra.mxu0 0.0
      %1744 = vmatprep.subr.mxu0 0.0
      %1745 = vmatpush2.msra.mxu0 0.0
      %1746 = vmatprep.subr.mxu0 0.0
      %1747 = vmatpush2.msra.mxu0 0.0
      %1748 = vmatprep.subr.mxu0 0.0
      %1749 = vmatpush2.msra.mxu0 0.0
      %1750 = vmatprep.subr.mxu0 0.0
      %1751 = vmatpush2.msra.mxu0 0.0
      %1752 = vmatprep.subr.mxu0 0.0
      %1753 = vmatpush2.msra.mxu0 0.0
      %1754 = vmatprep.subr.mxu0 0.0
      %1755 = vmatpush2.msra.mxu0 0.0
      %1756 = vmatprep.subr.mxu0 0.0
      %1757 = vmatpush2.msra.mxu0 0.0
      %1758 = vmatprep.subr.mxu0 0.0
      %1759 = vmatpush2.msra.mxu0 0.0
      %1760 = vmatprep.subr.mxu0 0.0
      %1761 = vmatpush2.msra.mxu0 0.0
      %1762 = vmatprep.subr.mxu0 0.0
      %1763 = vmatpush2.msra.mxu0 0.0
      %1764 = vmatprep.subr.mxu0 0.0
      %1765 = vmatpush2.msra.mxu0 0.0
      %1766 = vmatprep.subr.mxu0 0.0
      %1767 = vmatpush2.msra.mxu0 0.0
      %1768 = vmatprep.subr.mxu0 0.0
      %1769 = vmatpush2.msra.mxu0 0.0
      %1770 = vmatprep.subr.mxu0 0.0
      %1771 = vmatpush2.msra.mxu0 0.0
      %1772 = vmatprep.subr.mxu0 0.0
      %1773 = vmatpush2.msra.mxu0 0.0
      %1774 = vmatprep.mubr.f32.mxu0 0.0
      %v1775 = vand.u32 %v462, 4294901760
      %v1776 = vsub.f32 %v462, %v1775
      %v1777 = vand.u32 %v1776, 4294901760
      %v1778 = vsub.f32 %v1776, %v1777
      %v1779 = vand.u32 %v1778, 4294901760
      %1780 = vmatmul.mubr.f32.gmra.mxu0 %v1779
      %v1781 = vpop.f32.mrf.mxu0
      %v1782 = vadd.f32 %v383, %v1781
      %v1783 = vpop.f32.mrf.mxu0
      %1784 = vmatprep.mubr.f32.mxu0 0.0
      %v1785 = vand.u32 %v465, 4294901760
      %v1786 = vsub.f32 %v465, %v1785
      %v1787 = vand.u32 %v1786, 4294901760
      %v1788 = vsub.f32 %v1786, %v1787
      %v1789 = vand.u32 %v1788, 4294901760
      %1790 = vmatmul.mubr.f32.gmra.mxu0 %v1789
      %v1791 = vpop.f32.mrf.mxu0
      %v1792 = vadd.f32 %v388, %v1791
      %v1793 = vpop.f32.mrf.mxu0
      %1794 = vmatprep.mubr.f32.mxu0 0.0
      %v1795 = vand.u32 %v468, 4294901760
      %v1796 = vsub.f32 %v468, %v1795
      %v1797 = vand.u32 %v1796, 4294901760
      %v1798 = vsub.f32 %v1796, %v1797
      %v1799 = vand.u32 %v1798, 4294901760
      %1800 = vmatmul.mubr.f32.gmra.mxu0 %v1799
      %v1801 = vpop.f32.mrf.mxu0
      %v1802 = vadd.f32 %v393, %v1801
      %v1803 = vpop.f32.mrf.mxu0
      %1804 = vmatprep.mubr.f32.mxu0 0.0
      %v1805 = vand.u32 %v471, 4294901760
      %v1806 = vsub.f32 %v471, %v1805
      %v1807 = vand.u32 %v1806, 4294901760
      %v1808 = vsub.f32 %v1806, %v1807
      %v1809 = vand.u32 %v1808, 4294901760
      %1810 = vmatmul.mubr.f32.gmra.mxu0 %v1809
      %v1811 = vpop.f32.mrf.mxu0
      %v1812 = vadd.f32 %v398, %v1811
      %v1813 = vpop.f32.mrf.mxu0
      %1814 = vmatprep.mubr.f32.mxu0 0.0
      %v1815 = vand.u32 %v474, 4294901760
      %v1816 = vsub.f32 %v474, %v1815
      %v1817 = vand.u32 %v1816, 4294901760
      %v1818 = vsub.f32 %v1816, %v1817
      %v1819 = vand.u32 %v1818, 4294901760
      %1820 = vmatmul.mubr.f32.gmra.mxu0 %v1819
      %v1821 = vpop.f32.mrf.mxu0
      %v1822 = vadd.f32 %v403, %v1821
      %v1823 = vpop.f32.mrf.mxu0
      %1824 = vmatprep.mubr.f32.mxu0 0.0
      %v1825 = vand.u32 %v477, 4294901760
      %v1826 = vsub.f32 %v477, %v1825
      %v1827 = vand.u32 %v1826, 4294901760
      %v1828 = vsub.f32 %v1826, %v1827
      %v1829 = vand.u32 %v1828, 4294901760
      %1830 = vmatmul.mubr.f32.gmra.mxu0 %v1829
      %v1831 = vpop.f32.mrf.mxu0
      %v1832 = vadd.f32 %v408, %v1831
      %v1833 = vpop.f32.mrf.mxu0
      %1834 = vmatprep.mubr.f32.mxu0 0.0
      %v1835 = vand.u32 %v480, 4294901760
      %v1836 = vsub.f32 %v480, %v1835
      %v1837 = vand.u32 %v1836, 4294901760
      %v1838 = vsub.f32 %v1836, %v1837
      %v1839 = vand.u32 %v1838, 4294901760
      %1840 = vmatmul.mubr.f32.gmra.mxu0 %v1839
      %v1841 = vpop.f32.mrf.mxu0
      %v1842 = vadd.f32 %v413, %v1841
      %v1843 = vpop.f32.mrf.mxu0
      %1844 = vmatprep.mubr.f32.mxu0 0.0
      %v1845 = vand.u32 %v483, 4294901760
      %v1846 = vsub.f32 %v483, %v1845
      %v1847 = vand.u32 %v1846, 4294901760
      %v1848 = vsub.f32 %v1846, %v1847
      %v1849 = vand.u32 %v1848, 4294901760
      %1850 = vmatmul.mubr.f32.gmra.mxu0 %v1849
      %v1851 = vpop.f32.mrf.mxu0
      %v1852 = vadd.f32 %v418, %v1851
      %v1853 = vpop.f32.mrf.mxu0
      %1854 = vmatprep.mubr.f32.mxu0 0.0
      %v1855 = vand.u32 %v486, 4294901760
      %v1856 = vsub.f32 %v486, %v1855
      %v1857 = vand.u32 %v1856, 4294901760
      %v1858 = vsub.f32 %v1856, %v1857
      %v1859 = vand.u32 %v1858, 4294901760
      %1860 = vmatmul.mubr.f32.gmra.mxu0 %v1859
      %v1861 = vpop.f32.mrf.mxu0
      %v1862 = vadd.f32 %v423, %v1861
      %v1863 = vpop.f32.mrf.mxu0
      %1864 = vmatprep.mubr.f32.mxu0 0.0
      %v1865 = vand.u32 %v489, 4294901760
      %v1866 = vsub.f32 %v489, %v1865
      %v1867 = vand.u32 %v1866, 4294901760
      %v1868 = vsub.f32 %v1866, %v1867
      %v1869 = vand.u32 %v1868, 4294901760
      %1870 = vmatmul.mubr.f32.gmra.mxu0 %v1869
      %v1871 = vpop.f32.mrf.mxu0
      %v1872 = vadd.f32 %v428, %v1871
      %v1873 = vpop.f32.mrf.mxu0
      %1874 = vmatprep.mubr.f32.mxu0 0.0
      %v1875 = vand.u32 %v492, 4294901760
      %v1876 = vsub.f32 %v492, %v1875
      %v1877 = vand.u32 %v1876, 4294901760
      %v1878 = vsub.f32 %v1876, %v1877
      %v1879 = vand.u32 %v1878, 4294901760
      %1880 = vmatmul.mubr.f32.gmra.mxu0 %v1879
      %v1881 = vpop.f32.mrf.mxu0
      %v1882 = vadd.f32 %v433, %v1881
      %v1883 = vpop.f32.mrf.mxu0
      %1884 = vmatprep.mubr.f32.mxu0 0.0
      %v1885 = vand.u32 %v495, 4294901760
      %v1886 = vsub.f32 %v495, %v1885
      %v1887 = vand.u32 %v1886, 4294901760
      %v1888 = vsub.f32 %v1886, %v1887
      %v1889 = vand.u32 %v1888, 4294901760
      %1890 = vmatmul.mubr.f32.gmra.mxu0 %v1889
      %v1891 = vpop.f32.mrf.mxu0
      %v1892 = vadd.f32 %v438, %v1891
      %v1893 = vpop.f32.mrf.mxu0
      %1894 = vmatprep.mubr.f32.mxu0 0.0
      %v1895 = vand.u32 %v498, 4294901760
      %v1896 = vsub.f32 %v498, %v1895
      %v1897 = vand.u32 %v1896, 4294901760
      %v1898 = vsub.f32 %v1896, %v1897
      %v1899 = vand.u32 %v1898, 4294901760
      %1900 = vmatmul.mubr.f32.gmra.mxu0 %v1899
      %v1901 = vpop.f32.mrf.mxu0
      %v1902 = vadd.f32 %v443, %v1901
      %v1903 = vpop.f32.mrf.mxu0
      %1904 = vmatprep.mubr.f32.mxu0 0.0
      %v1905 = vand.u32 %v501, 4294901760
      %v1906 = vsub.f32 %v501, %v1905
      %v1907 = vand.u32 %v1906, 4294901760
      %v1908 = vsub.f32 %v1906, %v1907
      %v1909 = vand.u32 %v1908, 4294901760
      %1910 = vmatmul.mubr.f32.gmra.mxu0 %v1909
      %v1911 = vpop.f32.mrf.mxu0
      %v1912 = vadd.f32 %v448, %v1911
      %v1913 = vpop.f32.mrf.mxu0
      %1914 = vmatprep.mubr.f32.mxu0 0.0
      %v1915 = vand.u32 %v504, 4294901760
      %v1916 = vsub.f32 %v504, %v1915
      %v1917 = vand.u32 %v1916, 4294901760
      %v1918 = vsub.f32 %v1916, %v1917
      %v1919 = vand.u32 %v1918, 4294901760
      %1920 = vmatmul.mubr.f32.gmra.mxu0 %v1919
      %v1921 = vpop.f32.mrf.mxu0
      %v1922 = vadd.f32 %v453, %v1921
      %v1923 = vpop.f32.mrf.mxu0
      %1924 = vmatprep.mubr.f32.mxu0 0.0
      %v1925 = vand.u32 %v507, 4294901760
      %v1926 = vsub.f32 %v507, %v1925
      %v1927 = vand.u32 %v1926, 4294901760
      %v1928 = vsub.f32 %v1926, %v1927
      %v1929 = vand.u32 %v1928, 4294901760
      %1930 = vmatmul.mubr.f32.gmra.mxu0 %v1929
      %v1931 = vpop.f32.mrf.mxu0
      %v1932 = vadd.f32 %v458, %v1931
      %v1933 = vpop.f32.mrf.mxu0
      %1934 = vdwg.mxu0
      %1935 = vmatprep.subr.mxu0 0.0
      %1936 = vmatpush1.msra.mxu0 0.0
      %1937 = vmatprep.subr.mxu0 0.0
      %1938 = vmatpush1.msra.mxu0 0.0
      %1939 = vmatprep.subr.mxu0 0.0
      %1940 = vmatpush1.msra.mxu0 0.0
      %1941 = vmatprep.subr.mxu0 0.0
      %1942 = vmatpush1.msra.mxu0 0.0
      %1943 = vmatprep.subr.mxu0 0.0
      %1944 = vmatpush1.msra.mxu0 0.0
      %1945 = vmatprep.subr.mxu0 0.0
      %1946 = vmatpush1.msra.mxu0 0.0
      %1947 = vmatprep.subr.mxu0 0.0
      %1948 = vmatpush1.msra.mxu0 0.0
      %1949 = vmatprep.subr.mxu0 0.0
      %1950 = vmatpush1.msra.mxu0 0.0
      %1951 = vmatprep.subr.mxu0 0.0
      %1952 = vmatpush1.msra.mxu0 0.0
      %1953 = vmatprep.subr.mxu0 0.0
      %1954 = vmatpush1.msra.mxu0 0.0
      %1955 = vmatprep.subr.mxu0 0.0
      %1956 = vmatpush1.msra.mxu0 0.0
      %1957 = vmatprep.subr.mxu0 0.0
      %1958 = vmatpush1.msra.mxu0 0.0
      %1959 = vmatprep.subr.mxu0 0.0
      %1960 = vmatpush1.msra.mxu0 0.0
      %1961 = vmatprep.subr.mxu0 0.0
      %1962 = vmatpush1.msra.mxu0 0.0
      %1963 = vmatprep.subr.mxu0 0.0
      %1964 = vmatpush1.msra.mxu0 0.0
      %1965 = vmatprep.subr.mxu0 0.0
      %v1966 = vand.u32 %v347, 4294901760
      %v1967 = vsub.f32 %v347, %v1966
      %v1968 = vand.u32 %v1967, 4294901760
      %v1969 = vsub.f32 %v1967, %v1968
      %v1970 = vand.u32 %v1969, 4294901760
      %1971 = vmatpush1.msra.mxu0 %v1970
      %1972 = vmatprep.subr.mxu0 0.0
      %1973 = vmatpush2.msra.mxu0 0.0
      %1974 = vmatprep.subr.mxu0 0.0
      %1975 = vmatpush2.msra.mxu0 0.0
      %1976 = vmatprep.subr.mxu0 0.0
      %1977 = vmatpush2.msra.mxu0 0.0
      %1978 = vmatprep.subr.mxu0 0.0
      %1979 = vmatpush2.msra.mxu0 0.0
      %1980 = vmatprep.subr.mxu0 0.0
      %1981 = vmatpush2.msra.mxu0 0.0
      %1982 = vmatprep.subr.mxu0 0.0
      %1983 = vmatpush2.msra.mxu0 0.0
      %1984 = vmatprep.subr.mxu0 0.0
      %1985 = vmatpush2.msra.mxu0 0.0
      %1986 = vmatprep.subr.mxu0 0.0
      %1987 = vmatpush2.msra.mxu0 0.0
      %1988 = vmatprep.subr.mxu0 0.0
      %1989 = vmatpush2.msra.mxu0 0.0
      %1990 = vmatprep.subr.mxu0 0.0
      %1991 = vmatpush2.msra.mxu0 0.0
      %1992 = vmatprep.subr.mxu0 0.0
      %1993 = vmatpush2.msra.mxu0 0.0
      %1994 = vmatprep.subr.mxu0 0.0
      %1995 = vmatpush2.msra.mxu0 0.0
      %1996 = vmatprep.subr.mxu0 0.0
      %1997 = vmatpush2.msra.mxu0 0.0
      %1998 = vmatprep.subr.mxu0 0.0
      %1999 = vmatpush2.msra.mxu0 0.0
      %2000 = vmatprep.subr.mxu0 0.0
      %2001 = vmatpush2.msra.mxu0 0.0
      %2002 = vmatprep.subr.mxu0 0.0
      %2003 = vmatpush2.msra.mxu0 0.0
      %2004 = vmatprep.mubr.f32.mxu0 0.0
      %v2005 = vand.u32 %v462, 4294901760
      %2006 = vmatmul.mubr.f32.gmra.mxu0 %v2005
      %v2007 = vpop.f32.mrf.mxu0
      %v2008 = vadd.f32 %v1782, %v2007
      %v2009 = vpop.f32.mrf.mxu0
      %2010 = vmatprep.mubr.f32.mxu0 0.0
      %v2011 = vand.u32 %v465, 4294901760
      %2012 = vmatmul.mubr.f32.gmra.mxu0 %v2011
      %v2013 = vpop.f32.mrf.mxu0
      %v2014 = vadd.f32 %v1792, %v2013
      %v2015 = vpop.f32.mrf.mxu0
      %2016 = vmatprep.mubr.f32.mxu0 0.0
      %v2017 = vand.u32 %v468, 4294901760
      %2018 = vmatmul.mubr.f32.gmra.mxu0 %v2017
      %v2019 = vpop.f32.mrf.mxu0
      %v2020 = vadd.f32 %v1802, %v2019
      %v2021 = vpop.f32.mrf.mxu0
      %2022 = vmatprep.mubr.f32.mxu0 0.0
      %v2023 = vand.u32 %v471, 4294901760
      %2024 = vmatmul.mubr.f32.gmra.mxu0 %v2023
      %v2025 = vpop.f32.mrf.mxu0
      %v2026 = vadd.f32 %v1812, %v2025
      %v2027 = vpop.f32.mrf.mxu0
      %2028 = vmatprep.mubr.f32.mxu0 0.0
      %v2029 = vand.u32 %v474, 4294901760
      %2030 = vmatmul.mubr.f32.gmra.mxu0 %v2029
      %v2031 = vpop.f32.mrf.mxu0
      %v2032 = vadd.f32 %v1822, %v2031
      %v2033 = vpop.f32.mrf.mxu0
      %2034 = vmatprep.mubr.f32.mxu0 0.0
      %v2035 = vand.u32 %v477, 4294901760
      %2036 = vmatmul.mubr.f32.gmra.mxu0 %v2035
      %v2037 = vpop.f32.mrf.mxu0
      %v2038 = vadd.f32 %v1832, %v2037
      %v2039 = vpop.f32.mrf.mxu0
      %2040 = vmatprep.mubr.f32.mxu0 0.0
      %v2041 = vand.u32 %v480, 4294901760
      %2042 = vmatmul.mubr.f32.gmra.mxu0 %v2041
      %v2043 = vpop.f32.mrf.mxu0
      %v2044 = vadd.f32 %v1842, %v2043
      %v2045 = vpop.f32.mrf.mxu0
      %2046 = vmatprep.mubr.f32.mxu0 0.0
      %v2047 = vand.u32 %v483, 4294901760
      %2048 = vmatmul.mubr.f32.gmra.mxu0 %v2047
      %v2049 = vpop.f32.mrf.mxu0
      %v2050 = vadd.f32 %v1852, %v2049
      %v2051 = vpop.f32.mrf.mxu0
      %2052 = vmatprep.mubr.f32.mxu0 0.0
      %v2053 = vand.u32 %v486, 4294901760
      %2054 = vmatmul.mubr.f32.gmra.mxu0 %v2053
      %v2055 = vpop.f32.mrf.mxu0
      %v2056 = vadd.f32 %v1862, %v2055
      %v2057 = vpop.f32.mrf.mxu0
      %2058 = vmatprep.mubr.f32.mxu0 0.0
      %v2059 = vand.u32 %v489, 4294901760
      %2060 = vmatmul.mubr.f32.gmra.mxu0 %v2059
      %v2061 = vpop.f32.mrf.mxu0
      %v2062 = vadd.f32 %v1872, %v2061
      %v2063 = vpop.f32.mrf.mxu0
      %2064 = vmatprep.mubr.f32.mxu0 0.0
      %v2065 = vand.u32 %v492, 4294901760
      %2066 = vmatmul.mubr.f32.gmra.mxu0 %v2065
      %v2067 = vpop.f32.mrf.mxu0
      %v2068 = vadd.f32 %v1882, %v2067
      %v2069 = vpop.f32.mrf.mxu0
      %2070 = vmatprep.mubr.f32.mxu0 0.0
      %v2071 = vand.u32 %v495, 4294901760
      %2072 = vmatmul.mubr.f32.gmra.mxu0 %v2071
      %v2073 = vpop.f32.mrf.mxu0
      %v2074 = vadd.f32 %v1892, %v2073
      %v2075 = vpop.f32.mrf.mxu0
      %2076 = vmatprep.mubr.f32.mxu0 0.0
      %v2077 = vand.u32 %v498, 4294901760
      %2078 = vmatmul.mubr.f32.gmra.mxu0 %v2077
      %v2079 = vpop.f32.mrf.mxu0
      %v2080 = vadd.f32 %v1902, %v2079
      %v2081 = vpop.f32.mrf.mxu0
      %2082 = vmatprep.mubr.f32.mxu0 0.0
      %v2083 = vand.u32 %v501, 4294901760
      %2084 = vmatmul.mubr.f32.gmra.mxu0 %v2083
      %v2085 = vpop.f32.mrf.mxu0
      %v2086 = vadd.f32 %v1912, %v2085
      %v2087 = vpop.f32.mrf.mxu0
      %2088 = vmatprep.mubr.f32.mxu0 0.0
      %v2089 = vand.u32 %v504, 4294901760
      %2090 = vmatmul.mubr.f32.gmra.mxu0 %v2089
      %v2091 = vpop.f32.mrf.mxu0
      %v2092 = vadd.f32 %v1922, %v2091
      %v2093 = vpop.f32.mrf.mxu0
      %2094 = vmatprep.mubr.f32.mxu0 0.0
      %v2095 = vand.u32 %v507, 4294901760
      %2096 = vmatmul.mubr.f32.gmra.mxu0 %v2095
      %v2097 = vpop.f32.mrf.mxu0
      %v2098 = vadd.f32 %v1932, %v2097
      %v2099 = vpop.f32.mrf.mxu0
      %2100 = vdwg.mxu0
      %2101 = vmatprep.subr.mxu0 0.0
      %2102 = vmatpush1.msra.mxu0 0.0
      %2103 = vmatprep.subr.mxu0 0.0
      %2104 = vmatpush1.msra.mxu0 0.0
      %2105 = vmatprep.subr.mxu0 0.0
      %2106 = vmatpush1.msra.mxu0 0.0
      %2107 = vmatprep.subr.mxu0 0.0
      %2108 = vmatpush1.msra.mxu0 0.0
      %2109 = vmatprep.subr.mxu0 0.0
      %2110 = vmatpush1.msra.mxu0 0.0
      %2111 = vmatprep.subr.mxu0 0.0
      %2112 = vmatpush1.msra.mxu0 0.0
      %2113 = vmatprep.subr.mxu0 0.0
      %2114 = vmatpush1.msra.mxu0 0.0
      %2115 = vmatprep.subr.mxu0 0.0
      %2116 = vmatpush1.msra.mxu0 0.0
      %2117 = vmatprep.subr.mxu0 0.0
      %2118 = vmatpush1.msra.mxu0 0.0
      %2119 = vmatprep.subr.mxu0 0.0
      %2120 = vmatpush1.msra.mxu0 0.0
      %2121 = vmatprep.subr.mxu0 0.0
      %2122 = vmatpush1.msra.mxu0 0.0
      %2123 = vmatprep.subr.mxu0 0.0
      %2124 = vmatpush1.msra.mxu0 0.0
      %2125 = vmatprep.subr.mxu0 0.0
      %2126 = vmatpush1.msra.mxu0 0.0
      %2127 = vmatprep.subr.mxu0 0.0
      %2128 = vmatpush1.msra.mxu0 0.0
      %2129 = vmatprep.subr.mxu0 0.0
      %2130 = vmatpush1.msra.mxu0 0.0
      %2131 = vmatprep.subr.mxu0 0.0
      %v2132 = vand.u32 %v347, 4294901760
      %v2133 = vsub.f32 %v347, %v2132
      %2134 = vmatpush1.msra.mxu0 %v2133
      %2135 = vmatprep.subr.mxu0 0.0
      %2136 = vmatpush2.msra.mxu0 0.0
      %2137 = vmatprep.subr.mxu0 0.0
      %2138 = vmatpush2.msra.mxu0 0.0
      %2139 = vmatprep.subr.mxu0 0.0
      %2140 = vmatpush2.msra.mxu0 0.0
      %2141 = vmatprep.subr.mxu0 0.0
      %2142 = vmatpush2.msra.mxu0 0.0
      %2143 = vmatprep.subr.mxu0 0.0
      %2144 = vmatpush2.msra.mxu0 0.0
      %2145 = vmatprep.subr.mxu0 0.0
      %2146 = vmatpush2.msra.mxu0 0.0
      %2147 = vmatprep.subr.mxu0 0.0
      %2148 = vmatpush2.msra.mxu0 0.0
      %2149 = vmatprep.subr.mxu0 0.0
      %2150 = vmatpush2.msra.mxu0 0.0
      %2151 = vmatprep.subr.mxu0 0.0
      %2152 = vmatpush2.msra.mxu0 0.0
      %2153 = vmatprep.subr.mxu0 0.0
      %2154 = vmatpush2.msra.mxu0 0.0
      %2155 = vmatprep.subr.mxu0 0.0
      %2156 = vmatpush2.msra.mxu0 0.0
      %2157 = vmatprep.subr.mxu0 0.0
      %2158 = vmatpush2.msra.mxu0 0.0
      %2159 = vmatprep.subr.mxu0 0.0
      %2160 = vmatpush2.msra.mxu0 0.0
      %2161 = vmatprep.subr.mxu0 0.0
      %2162 = vmatpush2.msra.mxu0 0.0
      %2163 = vmatprep.subr.mxu0 0.0
      %2164 = vmatpush2.msra.mxu0 0.0
      %2165 = vmatprep.subr.mxu0 0.0
      %2166 = vmatpush2.msra.mxu0 0.0
      %2167 = vmatprep.mubr.f32.mxu0 0.0
      %v2168 = vand.u32 %v462, 4294901760
      %v2169 = vsub.f32 %v462, %v2168
      %2170 = vmatmul.mubr.f32.gmra.mxu0 %v2169
      %v2171 = vpop.f32.mrf.mxu0
      %v2172 = vadd.f32 %v2008, %v2171
      %v2173 = vpop.f32.mrf.mxu0
      %2174 = vmatprep.mubr.f32.mxu0 0.0
      %v2175 = vand.u32 %v465, 4294901760
      %v2176 = vsub.f32 %v465, %v2175
      %2177 = vmatmul.mubr.f32.gmra.mxu0 %v2176
      %v2178 = vpop.f32.mrf.mxu0
      %v2179 = vadd.f32 %v2014, %v2178
      %v2180 = vpop.f32.mrf.mxu0
      %2181 = vmatprep.mubr.f32.mxu0 0.0
      %v2182 = vand.u32 %v468, 4294901760
      %v2183 = vsub.f32 %v468, %v2182
      %2184 = vmatmul.mubr.f32.gmra.mxu0 %v2183
      %v2185 = vpop.f32.mrf.mxu0
      %v2186 = vadd.f32 %v2020, %v2185
      %v2187 = vpop.f32.mrf.mxu0
      %2188 = vmatprep.mubr.f32.mxu0 0.0
      %v2189 = vand.u32 %v471, 4294901760
      %v2190 = vsub.f32 %v471, %v2189
      %2191 = vmatmul.mubr.f32.gmra.mxu0 %v2190
      %v2192 = vpop.f32.mrf.mxu0
      %v2193 = vadd.f32 %v2026, %v2192
      %v2194 = vpop.f32.mrf.mxu0
      %2195 = vmatprep.mubr.f32.mxu0 0.0
      %v2196 = vand.u32 %v474, 4294901760
      %v2197 = vsub.f32 %v474, %v2196
      %2198 = vmatmul.mubr.f32.gmra.mxu0 %v2197
      %v2199 = vpop.f32.mrf.mxu0
      %v2200 = vadd.f32 %v2032, %v2199
      %v2201 = vpop.f32.mrf.mxu0
      %2202 = vmatprep.mubr.f32.mxu0 0.0
      %v2203 = vand.u32 %v477, 4294901760
      %v2204 = vsub.f32 %v477, %v2203
      %2205 = vmatmul.mubr.f32.gmra.mxu0 %v2204
      %v2206 = vpop.f32.mrf.mxu0
      %v2207 = vadd.f32 %v2038, %v2206
      %v2208 = vpop.f32.mrf.mxu0
      %2209 = vmatprep.mubr.f32.mxu0 0.0
      %v2210 = vand.u32 %v480, 4294901760
      %v2211 = vsub.f32 %v480, %v2210
      %2212 = vmatmul.mubr.f32.gmra.mxu0 %v2211
      %v2213 = vpop.f32.mrf.mxu0
      %v2214 = vadd.f32 %v2044, %v2213
      %v2215 = vpop.f32.mrf.mxu0
      %2216 = vmatprep.mubr.f32.mxu0 0.0
      %v2217 = vand.u32 %v483, 4294901760
      %v2218 = vsub.f32 %v483, %v2217
      %2219 = vmatmul.mubr.f32.gmra.mxu0 %v2218
      %v2220 = vpop.f32.mrf.mxu0
      %v2221 = vadd.f32 %v2050, %v2220
      %v2222 = vpop.f32.mrf.mxu0
      %2223 = vmatprep.mubr.f32.mxu0 0.0
      %v2224 = vand.u32 %v486, 4294901760
      %v2225 = vsub.f32 %v486, %v2224
      %2226 = vmatmul.mubr.f32.gmra.mxu0 %v2225
      %v2227 = vpop.f32.mrf.mxu0
      %v2228 = vadd.f32 %v2056, %v2227
      %v2229 = vpop.f32.mrf.mxu0
      %2230 = vmatprep.mubr.f32.mxu0 0.0
      %v2231 = vand.u32 %v489, 4294901760
      %v2232 = vsub.f32 %v489, %v2231
      %2233 = vmatmul.mubr.f32.gmra.mxu0 %v2232
      %v2234 = vpop.f32.mrf.mxu0
      %v2235 = vadd.f32 %v2062, %v2234
      %v2236 = vpop.f32.mrf.mxu0
      %2237 = vmatprep.mubr.f32.mxu0 0.0
      %v2238 = vand.u32 %v492, 4294901760
      %v2239 = vsub.f32 %v492, %v2238
      %2240 = vmatmul.mubr.f32.gmra.mxu0 %v2239
      %v2241 = vpop.f32.mrf.mxu0
      %v2242 = vadd.f32 %v2068, %v2241
      %v2243 = vpop.f32.mrf.mxu0
      %2244 = vmatprep.mubr.f32.mxu0 0.0
      %v2245 = vand.u32 %v495, 4294901760
      %v2246 = vsub.f32 %v495, %v2245
      %2247 = vmatmul.mubr.f32.gmra.mxu0 %v2246
      %v2248 = vpop.f32.mrf.mxu0
      %v2249 = vadd.f32 %v2074, %v2248
      %v2250 = vpop.f32.mrf.mxu0
      %2251 = vmatprep.mubr.f32.mxu0 0.0
      %v2252 = vand.u32 %v498, 4294901760
      %v2253 = vsub.f32 %v498, %v2252
      %2254 = vmatmul.mubr.f32.gmra.mxu0 %v2253
      %v2255 = vpop.f32.mrf.mxu0
      %v2256 = vadd.f32 %v2080, %v2255
      %v2257 = vpop.f32.mrf.mxu0
      %2258 = vmatprep.mubr.f32.mxu0 0.0
      %v2259 = vand.u32 %v501, 4294901760
      %v2260 = vsub.f32 %v501, %v2259
      %2261 = vmatmul.mubr.f32.gmra.mxu0 %v2260
      %v2262 = vpop.f32.mrf.mxu0
      %v2263 = vadd.f32 %v2086, %v2262
      %v2264 = vpop.f32.mrf.mxu0
      %2265 = vmatprep.mubr.f32.mxu0 0.0
      %v2266 = vand.u32 %v504, 4294901760
      %v2267 = vsub.f32 %v504, %v2266
      %2268 = vmatmul.mubr.f32.gmra.mxu0 %v2267
      %v2269 = vpop.f32.mrf.mxu0
      %v2270 = vadd.f32 %v2092, %v2269
      %v2271 = vpop.f32.mrf.mxu0
      %2272 = vmatprep.mubr.f32.mxu0 0.0
      %v2273 = vand.u32 %v507, 4294901760
      %v2274 = vsub.f32 %v507, %v2273
      %2275 = vmatmul.mubr.f32.gmra.mxu0 %v2274
      %v2276 = vpop.f32.mrf.mxu0
      %v2277 = vadd.f32 %v2098, %v2276
      %v2278 = vpop.f32.mrf.mxu0
      %2279 = vdwg.mxu0
      %2280 = vmatprep.subr.mxu0 0.0
      %2281 = vmatpush1.msra.mxu0 0.0
      %2282 = vmatprep.subr.mxu0 0.0
      %2283 = vmatpush1.msra.mxu0 0.0
      %2284 = vmatprep.subr.mxu0 0.0
      %2285 = vmatpush1.msra.mxu0 0.0
      %2286 = vmatprep.subr.mxu0 0.0
      %2287 = vmatpush1.msra.mxu0 0.0
      %2288 = vmatprep.subr.mxu0 0.0
      %2289 = vmatpush1.msra.mxu0 0.0
      %2290 = vmatprep.subr.mxu0 0.0
      %2291 = vmatpush1.msra.mxu0 0.0
      %2292 = vmatprep.subr.mxu0 0.0
      %2293 = vmatpush1.msra.mxu0 0.0
      %2294 = vmatprep.subr.mxu0 0.0
      %2295 = vmatpush1.msra.mxu0 0.0
      %2296 = vmatprep.subr.mxu0 0.0
      %2297 = vmatpush1.msra.mxu0 0.0
      %2298 = vmatprep.subr.mxu0 0.0
      %2299 = vmatpush1.msra.mxu0 0.0
      %2300 = vmatprep.subr.mxu0 0.0
      %2301 = vmatpush1.msra.mxu0 0.0
      %2302 = vmatprep.subr.mxu0 0.0
      %2303 = vmatpush1.msra.mxu0 0.0
      %2304 = vmatprep.subr.mxu0 0.0
      %2305 = vmatpush1.msra.mxu0 0.0
      %2306 = vmatprep.subr.mxu0 0.0
      %2307 = vmatpush1.msra.mxu0 0.0
      %2308 = vmatprep.subr.mxu0 0.0
      %2309 = vmatpush1.msra.mxu0 0.0
      %2310 = vmatprep.subr.mxu0 0.0
      %v2311 = vand.u32 %v347, 4294901760
      %2312 = vmatpush1.msra.mxu0 %v2311
      %2313 = vmatprep.subr.mxu0 0.0
      %2314 = vmatpush2.msra.mxu0 0.0
      %2315 = vmatprep.subr.mxu0 0.0
      %2316 = vmatpush2.msra.mxu0 0.0
      %2317 = vmatprep.subr.mxu0 0.0
      %2318 = vmatpush2.msra.mxu0 0.0
      %2319 = vmatprep.subr.mxu0 0.0
      %2320 = vmatpush2.msra.mxu0 0.0
      %2321 = vmatprep.subr.mxu0 0.0
      %2322 = vmatpush2.msra.mxu0 0.0
      %2323 = vmatprep.subr.mxu0 0.0
      %2324 = vmatpush2.msra.mxu0 0.0
      %2325 = vmatprep.subr.mxu0 0.0
      %2326 = vmatpush2.msra.mxu0 0.0
      %2327 = vmatprep.subr.mxu0 0.0
      %2328 = vmatpush2.msra.mxu0 0.0
      %2329 = vmatprep.subr.mxu0 0.0
      %2330 = vmatpush2.msra.mxu0 0.0
      %2331 = vmatprep.subr.mxu0 0.0
      %2332 = vmatpush2.msra.mxu0 0.0
      %2333 = vmatprep.subr.mxu0 0.0
      %2334 = vmatpush2.msra.mxu0 0.0
      %2335 = vmatprep.subr.mxu0 0.0
      %2336 = vmatpush2.msra.mxu0 0.0
      %2337 = vmatprep.subr.mxu0 0.0
      %2338 = vmatpush2.msra.mxu0 0.0
      %2339 = vmatprep.subr.mxu0 0.0
      %2340 = vmatpush2.msra.mxu0 0.0
      %2341 = vmatprep.subr.mxu0 0.0
      %2342 = vmatpush2.msra.mxu0 0.0
      %2343 = vmatprep.subr.mxu0 0.0
      %2344 = vmatpush2.msra.mxu0 0.0
      %2345 = vmatprep.mubr.f32.mxu0 0.0
      %v2346 = vand.u32 %v462, 4294901760
      %v2347 = vsub.f32 %v462, %v2346
      %v2348 = vand.u32 %v2347, 4294901760
      %2349 = vmatmul.mubr.f32.gmra.mxu0 %v2348
      %v2350 = vpop.f32.mrf.mxu0
      %v2351 = vadd.f32 %v2172, %v2350
      %v2352 = vpop.f32.mrf.mxu0
      %2353 = vmatprep.mubr.f32.mxu0 0.0
      %v2354 = vand.u32 %v465, 4294901760
      %v2355 = vsub.f32 %v465, %v2354
      %v2356 = vand.u32 %v2355, 4294901760
      %2357 = vmatmul.mubr.f32.gmra.mxu0 %v2356
      %v2358 = vpop.f32.mrf.mxu0
      %v2359 = vadd.f32 %v2179, %v2358
      %v2360 = vpop.f32.mrf.mxu0
      %2361 = vmatprep.mubr.f32.mxu0 0.0
      %v2362 = vand.u32 %v468, 4294901760
      %v2363 = vsub.f32 %v468, %v2362
      %v2364 = vand.u32 %v2363, 4294901760
      %2365 = vmatmul.mubr.f32.gmra.mxu0 %v2364
      %v2366 = vpop.f32.mrf.mxu0
      %v2367 = vadd.f32 %v2186, %v2366
      %v2368 = vpop.f32.mrf.mxu0
      %2369 = vmatprep.mubr.f32.mxu0 0.0
      %v2370 = vand.u32 %v471, 4294901760
      %v2371 = vsub.f32 %v471, %v2370
      %v2372 = vand.u32 %v2371, 4294901760
      %2373 = vmatmul.mubr.f32.gmra.mxu0 %v2372
      %v2374 = vpop.f32.mrf.mxu0
      %v2375 = vadd.f32 %v2193, %v2374
      %v2376 = vpop.f32.mrf.mxu0
      %2377 = vmatprep.mubr.f32.mxu0 0.0
      %v2378 = vand.u32 %v474, 4294901760
      %v2379 = vsub.f32 %v474, %v2378
      %v2380 = vand.u32 %v2379, 4294901760
      %2381 = vmatmul.mubr.f32.gmra.mxu0 %v2380
      %v2382 = vpop.f32.mrf.mxu0
      %v2383 = vadd.f32 %v2200, %v2382
      %v2384 = vpop.f32.mrf.mxu0
      %2385 = vmatprep.mubr.f32.mxu0 0.0
      %v2386 = vand.u32 %v477, 4294901760
      %v2387 = vsub.f32 %v477, %v2386
      %v2388 = vand.u32 %v2387, 4294901760
      %2389 = vmatmul.mubr.f32.gmra.mxu0 %v2388
      %v2390 = vpop.f32.mrf.mxu0
      %v2391 = vadd.f32 %v2207, %v2390
      %v2392 = vpop.f32.mrf.mxu0
      %2393 = vmatprep.mubr.f32.mxu0 0.0
      %v2394 = vand.u32 %v480, 4294901760
      %v2395 = vsub.f32 %v480, %v2394
      %v2396 = vand.u32 %v2395, 4294901760
      %2397 = vmatmul.mubr.f32.gmra.mxu0 %v2396
      %v2398 = vpop.f32.mrf.mxu0
      %v2399 = vadd.f32 %v2214, %v2398
      %v2400 = vpop.f32.mrf.mxu0
      %2401 = vmatprep.mubr.f32.mxu0 0.0
      %v2402 = vand.u32 %v483, 4294901760
      %v2403 = vsub.f32 %v483, %v2402
      %v2404 = vand.u32 %v2403, 4294901760
      %2405 = vmatmul.mubr.f32.gmra.mxu0 %v2404
      %v2406 = vpop.f32.mrf.mxu0
      %v2407 = vadd.f32 %v2221, %v2406
      %v2408 = vpop.f32.mrf.mxu0
      %2409 = vmatprep.mubr.f32.mxu0 0.0
      %v2410 = vand.u32 %v486, 4294901760
      %v2411 = vsub.f32 %v486, %v2410
      %v2412 = vand.u32 %v2411, 4294901760
      %2413 = vmatmul.mubr.f32.gmra.mxu0 %v2412
      %v2414 = vpop.f32.mrf.mxu0
      %v2415 = vadd.f32 %v2228, %v2414
      %v2416 = vpop.f32.mrf.mxu0
      %2417 = vmatprep.mubr.f32.mxu0 0.0
      %v2418 = vand.u32 %v489, 4294901760
      %v2419 = vsub.f32 %v489, %v2418
      %v2420 = vand.u32 %v2419, 4294901760
      %2421 = vmatmul.mubr.f32.gmra.mxu0 %v2420
      %v2422 = vpop.f32.mrf.mxu0
      %v2423 = vadd.f32 %v2235, %v2422
      %v2424 = vpop.f32.mrf.mxu0
      %2425 = vmatprep.mubr.f32.mxu0 0.0
      %v2426 = vand.u32 %v492, 4294901760
      %v2427 = vsub.f32 %v492, %v2426
      %v2428 = vand.u32 %v2427, 4294901760
      %2429 = vmatmul.mubr.f32.gmra.mxu0 %v2428
      %v2430 = vpop.f32.mrf.mxu0
      %v2431 = vadd.f32 %v2242, %v2430
      %v2432 = vpop.f32.mrf.mxu0
      %2433 = vmatprep.mubr.f32.mxu0 0.0
      %v2434 = vand.u32 %v495, 4294901760
      %v2435 = vsub.f32 %v495, %v2434
      %v2436 = vand.u32 %v2435, 4294901760
      %2437 = vmatmul.mubr.f32.gmra.mxu0 %v2436
      %v2438 = vpop.f32.mrf.mxu0
      %v2439 = vadd.f32 %v2249, %v2438
      %v2440 = vpop.f32.mrf.mxu0
      %2441 = vmatprep.mubr.f32.mxu0 0.0
      %v2442 = vand.u32 %v498, 4294901760
      %v2443 = vsub.f32 %v498, %v2442
      %v2444 = vand.u32 %v2443, 4294901760
      %2445 = vmatmul.mubr.f32.gmra.mxu0 %v2444
      %v2446 = vpop.f32.mrf.mxu0
      %v2447 = vadd.f32 %v2256, %v2446
      %v2448 = vpop.f32.mrf.mxu0
      %2449 = vmatprep.mubr.f32.mxu0 0.0
      %v2450 = vand.u32 %v501, 4294901760
      %v2451 = vsub.f32 %v501, %v2450
      %v2452 = vand.u32 %v2451, 4294901760
      %2453 = vmatmul.mubr.f32.gmra.mxu0 %v2452
      %v2454 = vpop.f32.mrf.mxu0
      %v2455 = vadd.f32 %v2263, %v2454
      %v2456 = vpop.f32.mrf.mxu0
      %2457 = vmatprep.mubr.f32.mxu0 0.0
      %v2458 = vand.u32 %v504, 4294901760
      %v2459 = vsub.f32 %v504, %v2458
      %v2460 = vand.u32 %v2459, 4294901760
      %2461 = vmatmul.mubr.f32.gmra.mxu0 %v2460
      %v2462 = vpop.f32.mrf.mxu0
      %v2463 = vadd.f32 %v2270, %v2462
      %v2464 = vpop.f32.mrf.mxu0
      %2465 = vmatprep.mubr.f32.mxu0 0.0
      %v2466 = vand.u32 %v507, 4294901760
      %v2467 = vsub.f32 %v507, %v2466
      %v2468 = vand.u32 %v2467, 4294901760
      %2469 = vmatmul.mubr.f32.gmra.mxu0 %v2468
      %v2470 = vpop.f32.mrf.mxu0
      %v2471 = vadd.f32 %v2277, %v2470
      %v2472 = vpop.f32.mrf.mxu0
      %2473 = vdwg.mxu0
      %2474 = vmatprep.subr.mxu0 0.0
      %2475 = vmatpush1.msra.mxu0 0.0
      %2476 = vmatprep.subr.mxu0 0.0
      %2477 = vmatpush1.msra.mxu0 0.0
      %2478 = vmatprep.subr.mxu0 0.0
      %2479 = vmatpush1.msra.mxu0 0.0
      %2480 = vmatprep.subr.mxu0 0.0
      %2481 = vmatpush1.msra.mxu0 0.0
      %2482 = vmatprep.subr.mxu0 0.0
      %2483 = vmatpush1.msra.mxu0 0.0
      %2484 = vmatprep.subr.mxu0 0.0
      %2485 = vmatpush1.msra.mxu0 0.0
      %2486 = vmatprep.subr.mxu0 0.0
      %2487 = vmatpush1.msra.mxu0 0.0
      %2488 = vmatprep.subr.mxu0 0.0
      %2489 = vmatpush1.msra.mxu0 0.0
      %2490 = vmatprep.subr.mxu0 0.0
      %2491 = vmatpush1.msra.mxu0 0.0
      %2492 = vmatprep.subr.mxu0 0.0
      %2493 = vmatpush1.msra.mxu0 0.0
      %2494 = vmatprep.subr.mxu0 0.0
      %2495 = vmatpush1.msra.mxu0 0.0
      %2496 = vmatprep.subr.mxu0 0.0
      %2497 = vmatpush1.msra.mxu0 0.0
      %2498 = vmatprep.subr.mxu0 0.0
      %2499 = vmatpush1.msra.mxu0 0.0
      %2500 = vmatprep.subr.mxu0 0.0
      %2501 = vmatpush1.msra.mxu0 0.0
      %2502 = vmatprep.subr.mxu0 0.0
      %2503 = vmatpush1.msra.mxu0 0.0
      %2504 = vmatprep.subr.mxu0 0.0
      %v2505 = vand.u32 %v347, 4294901760
      %v2506 = vsub.f32 %v347, %v2505
      %v2507 = vand.u32 %v2506, 4294901760
      %2508 = vmatpush1.msra.mxu0 %v2507
      %2509 = vmatprep.subr.mxu0 0.0
      %2510 = vmatpush2.msra.mxu0 0.0
      %2511 = vmatprep.subr.mxu0 0.0
      %2512 = vmatpush2.msra.mxu0 0.0
      %2513 = vmatprep.subr.mxu0 0.0
      %2514 = vmatpush2.msra.mxu0 0.0
      %2515 = vmatprep.subr.mxu0 0.0
      %2516 = vmatpush2.msra.mxu0 0.0
      %2517 = vmatprep.subr.mxu0 0.0
      %2518 = vmatpush2.msra.mxu0 0.0
      %2519 = vmatprep.subr.mxu0 0.0
      %2520 = vmatpush2.msra.mxu0 0.0
      %2521 = vmatprep.subr.mxu0 0.0
      %2522 = vmatpush2.msra.mxu0 0.0
      %2523 = vmatprep.subr.mxu0 0.0
      %2524 = vmatpush2.msra.mxu0 0.0
      %2525 = vmatprep.subr.mxu0 0.0
      %2526 = vmatpush2.msra.mxu0 0.0
      %2527 = vmatprep.subr.mxu0 0.0
      %2528 = vmatpush2.msra.mxu0 0.0
      %2529 = vmatprep.subr.mxu0 0.0
      %2530 = vmatpush2.msra.mxu0 0.0
      %2531 = vmatprep.subr.mxu0 0.0
      %2532 = vmatpush2.msra.mxu0 0.0
      %2533 = vmatprep.subr.mxu0 0.0
      %2534 = vmatpush2.msra.mxu0 0.0
      %2535 = vmatprep.subr.mxu0 0.0
      %2536 = vmatpush2.msra.mxu0 0.0
      %2537 = vmatprep.subr.mxu0 0.0
      %2538 = vmatpush2.msra.mxu0 0.0
      %2539 = vmatprep.subr.mxu0 0.0
      %2540 = vmatpush2.msra.mxu0 0.0
      %2541 = vmatprep.mubr.f32.mxu0 0.0
      %v2542 = vand.u32 %v462, 4294901760
      %2543 = vmatmul.mubr.f32.gmra.mxu0 %v2542
      %v2544 = vpop.f32.mrf.mxu0
      %v2545 = vadd.f32 %v2351, %v2544
      %v2546 = vpop.f32.mrf.mxu0
      %2547 = vmatprep.mubr.f32.mxu0 0.0
      %v2548 = vand.u32 %v465, 4294901760
      %2549 = vmatmul.mubr.f32.gmra.mxu0 %v2548
      %v2550 = vpop.f32.mrf.mxu0
      %v2551 = vadd.f32 %v2359, %v2550
      %v2552 = vpop.f32.mrf.mxu0
      %2553 = vmatprep.mubr.f32.mxu0 0.0
      %v2554 = vand.u32 %v468, 4294901760
      %2555 = vmatmul.mubr.f32.gmra.mxu0 %v2554
      %v2556 = vpop.f32.mrf.mxu0
      %v2557 = vadd.f32 %v2367, %v2556
      %v2558 = vpop.f32.mrf.mxu0
      %2559 = vmatprep.mubr.f32.mxu0 0.0
      %v2560 = vand.u32 %v471, 4294901760
      %2561 = vmatmul.mubr.f32.gmra.mxu0 %v2560
      %v2562 = vpop.f32.mrf.mxu0
      %v2563 = vadd.f32 %v2375, %v2562
      %v2564 = vpop.f32.mrf.mxu0
      %2565 = vmatprep.mubr.f32.mxu0 0.0
      %v2566 = vand.u32 %v474, 4294901760
      %2567 = vmatmul.mubr.f32.gmra.mxu0 %v2566
      %v2568 = vpop.f32.mrf.mxu0
      %v2569 = vadd.f32 %v2383, %v2568
      %v2570 = vpop.f32.mrf.mxu0
      %2571 = vmatprep.mubr.f32.mxu0 0.0
      %v2572 = vand.u32 %v477, 4294901760
      %2573 = vmatmul.mubr.f32.gmra.mxu0 %v2572
      %v2574 = vpop.f32.mrf.mxu0
      %v2575 = vadd.f32 %v2391, %v2574
      %v2576 = vpop.f32.mrf.mxu0
      %2577 = vmatprep.mubr.f32.mxu0 0.0
      %v2578 = vand.u32 %v480, 4294901760
      %2579 = vmatmul.mubr.f32.gmra.mxu0 %v2578
      %v2580 = vpop.f32.mrf.mxu0
      %v2581 = vadd.f32 %v2399, %v2580
      %v2582 = vpop.f32.mrf.mxu0
      %2583 = vmatprep.mubr.f32.mxu0 0.0
      %v2584 = vand.u32 %v483, 4294901760
      %2585 = vmatmul.mubr.f32.gmra.mxu0 %v2584
      %v2586 = vpop.f32.mrf.mxu0
      %v2587 = vadd.f32 %v2407, %v2586
      %v2588 = vpop.f32.mrf.mxu0
      %2589 = vmatprep.mubr.f32.mxu0 0.0
      %v2590 = vand.u32 %v486, 4294901760
      %2591 = vmatmul.mubr.f32.gmra.mxu0 %v2590
      %v2592 = vpop.f32.mrf.mxu0
      %v2593 = vadd.f32 %v2415, %v2592
      %v2594 = vpop.f32.mrf.mxu0
      %2595 = vmatprep.mubr.f32.mxu0 0.0
      %v2596 = vand.u32 %v489, 4294901760
      %2597 = vmatmul.mubr.f32.gmra.mxu0 %v2596
      %v2598 = vpop.f32.mrf.mxu0
      %v2599 = vadd.f32 %v2423, %v2598
      %v2600 = vpop.f32.mrf.mxu0
      %2601 = vmatprep.mubr.f32.mxu0 0.0
      %v2602 = vand.u32 %v492, 4294901760
      %2603 = vmatmul.mubr.f32.gmra.mxu0 %v2602
      %v2604 = vpop.f32.mrf.mxu0
      %v2605 = vadd.f32 %v2431, %v2604
      %v2606 = vpop.f32.mrf.mxu0
      %2607 = vmatprep.mubr.f32.mxu0 0.0
      %v2608 = vand.u32 %v495, 4294901760
      %2609 = vmatmul.mubr.f32.gmra.mxu0 %v2608
      %v2610 = vpop.f32.mrf.mxu0
      %v2611 = vadd.f32 %v2439, %v2610
      %v2612 = vpop.f32.mrf.mxu0
      %2613 = vmatprep.mubr.f32.mxu0 0.0
      %v2614 = vand.u32 %v498, 4294901760
      %2615 = vmatmul.mubr.f32.gmra.mxu0 %v2614
      %v2616 = vpop.f32.mrf.mxu0
      %v2617 = vadd.f32 %v2447, %v2616
      %v2618 = vpop.f32.mrf.mxu0
      %2619 = vmatprep.mubr.f32.mxu0 0.0
      %v2620 = vand.u32 %v501, 4294901760
      %2621 = vmatmul.mubr.f32.gmra.mxu0 %v2620
      %v2622 = vpop.f32.mrf.mxu0
      %v2623 = vadd.f32 %v2455, %v2622
      %v2624 = vpop.f32.mrf.mxu0
      %2625 = vmatprep.mubr.f32.mxu0 0.0
      %v2626 = vand.u32 %v504, 4294901760
      %2627 = vmatmul.mubr.f32.gmra.mxu0 %v2626
      %v2628 = vpop.f32.mrf.mxu0
      %v2629 = vadd.f32 %v2463, %v2628
      %v2630 = vpop.f32.mrf.mxu0
      %2631 = vmatprep.mubr.f32.mxu0 0.0
      %v2632 = vand.u32 %v507, 4294901760
      %2633 = vmatmul.mubr.f32.gmra.mxu0 %v2632
      %v2634 = vpop.f32.mrf.mxu0
      %v2635 = vadd.f32 %v2471, %v2634
      %v2636 = vpop.f32.mrf.mxu0
      %2637 = vdwg.mxu0
      %2638 = vmatprep.subr.mxu0 0.0
      %2639 = vmatpush1.msra.mxu0 0.0
      %2640 = vmatprep.subr.mxu0 0.0
      %2641 = vmatpush1.msra.mxu0 0.0
      %2642 = vmatprep.subr.mxu0 0.0
      %2643 = vmatpush1.msra.mxu0 0.0
      %2644 = vmatprep.subr.mxu0 0.0
      %2645 = vmatpush1.msra.mxu0 0.0
      %2646 = vmatprep.subr.mxu0 0.0
      %2647 = vmatpush1.msra.mxu0 0.0
      %2648 = vmatprep.subr.mxu0 0.0
      %2649 = vmatpush1.msra.mxu0 0.0
      %2650 = vmatprep.subr.mxu0 0.0
      %2651 = vmatpush1.msra.mxu0 0.0
      %2652 = vmatprep.subr.mxu0 0.0
      %2653 = vmatpush1.msra.mxu0 0.0
      %2654 = vmatprep.subr.mxu0 0.0
      %2655 = vmatpush1.msra.mxu0 0.0
      %2656 = vmatprep.subr.mxu0 0.0
      %2657 = vmatpush1.msra.mxu0 0.0
      %2658 = vmatprep.subr.mxu0 0.0
      %2659 = vmatpush1.msra.mxu0 0.0
      %2660 = vmatprep.subr.mxu0 0.0
      %2661 = vmatpush1.msra.mxu0 0.0
      %2662 = vmatprep.subr.mxu0 0.0
      %2663 = vmatpush1.msra.mxu0 0.0
      %2664 = vmatprep.subr.mxu0 0.0
      %2665 = vmatpush1.msra.mxu0 0.0
      %2666 = vmatprep.subr.mxu0 0.0
      %2667 = vmatpush1.msra.mxu0 0.0
      %2668 = vmatprep.subr.mxu0 0.0
      %v2669 = vand.u32 %v347, 4294901760
      %2670 = vmatpush1.msra.mxu0 %v2669
      %2671 = vmatprep.subr.mxu0 0.0
      %2672 = vmatpush2.msra.mxu0 0.0
      %2673 = vmatprep.subr.mxu0 0.0
      %2674 = vmatpush2.msra.mxu0 0.0
      %2675 = vmatprep.subr.mxu0 0.0
      %2676 = vmatpush2.msra.mxu0 0.0
      %2677 = vmatprep.subr.mxu0 0.0
      %2678 = vmatpush2.msra.mxu0 0.0
      %2679 = vmatprep.subr.mxu0 0.0
      %2680 = vmatpush2.msra.mxu0 0.0
      %2681 = vmatprep.subr.mxu0 0.0
      %2682 = vmatpush2.msra.mxu0 0.0
      %2683 = vmatprep.subr.mxu0 0.0
      %2684 = vmatpush2.msra.mxu0 0.0
      %2685 = vmatprep.subr.mxu0 0.0
      %2686 = vmatpush2.msra.mxu0 0.0
      %2687 = vmatprep.subr.mxu0 0.0
      %2688 = vmatpush2.msra.mxu0 0.0
      %2689 = vmatprep.subr.mxu0 0.0
      %2690 = vmatpush2.msra.mxu0 0.0
      %2691 = vmatprep.subr.mxu0 0.0
      %2692 = vmatpush2.msra.mxu0 0.0
      %2693 = vmatprep.subr.mxu0 0.0
      %2694 = vmatpush2.msra.mxu0 0.0
      %2695 = vmatprep.subr.mxu0 0.0
      %2696 = vmatpush2.msra.mxu0 0.0
      %2697 = vmatprep.subr.mxu0 0.0
      %2698 = vmatpush2.msra.mxu0 0.0
      %2699 = vmatprep.subr.mxu0 0.0
      %2700 = vmatpush2.msra.mxu0 0.0
      %2701 = vmatprep.subr.mxu0 0.0
      %2702 = vmatpush2.msra.mxu0 0.0
      %2703 = vmatprep.mubr.f32.mxu0 0.0
      %v2704 = vand.u32 %v462, 4294901760
      %2705 = vmatmul.mubr.f32.gmra.mxu0 %v2704
      %v2706 = vpop.f32.mrf.mxu0
      %v2707 = vadd.f32 %v2545, %v2706
      %v2708 = vpop.f32.mrf.mxu0
      %2709 = vmatprep.mubr.f32.mxu0 0.0
      %v2710 = vand.u32 %v465, 4294901760
      %2711 = vmatmul.mubr.f32.gmra.mxu0 %v2710
      %v2712 = vpop.f32.mrf.mxu0
      %v2713 = vadd.f32 %v2551, %v2712
      %v2714 = vpop.f32.mrf.mxu0
      %2715 = vmatprep.mubr.f32.mxu0 0.0
      %v2716 = vand.u32 %v468, 4294901760
      %2717 = vmatmul.mubr.f32.gmra.mxu0 %v2716
      %v2718 = vpop.f32.mrf.mxu0
      %v2719 = vadd.f32 %v2557, %v2718
      %v2720 = vpop.f32.mrf.mxu0
      %2721 = vmatprep.mubr.f32.mxu0 0.0
      %v2722 = vand.u32 %v471, 4294901760
      %2723 = vmatmul.mubr.f32.gmra.mxu0 %v2722
      %v2724 = vpop.f32.mrf.mxu0
      %v2725 = vadd.f32 %v2563, %v2724
      %v2726 = vpop.f32.mrf.mxu0
      %2727 = vmatprep.mubr.f32.mxu0 0.0
      %v2728 = vand.u32 %v474, 4294901760
      %2729 = vmatmul.mubr.f32.gmra.mxu0 %v2728
      %v2730 = vpop.f32.mrf.mxu0
      %v2731 = vadd.f32 %v2569, %v2730
      %v2732 = vpop.f32.mrf.mxu0
      %2733 = vmatprep.mubr.f32.mxu0 0.0
      %v2734 = vand.u32 %v477, 4294901760
      %2735 = vmatmul.mubr.f32.gmra.mxu0 %v2734
      %v2736 = vpop.f32.mrf.mxu0
      %v2737 = vadd.f32 %v2575, %v2736
      %v2738 = vpop.f32.mrf.mxu0
      %2739 = vmatprep.mubr.f32.mxu0 0.0
      %v2740 = vand.u32 %v480, 4294901760
      %2741 = vmatmul.mubr.f32.gmra.mxu0 %v2740
      %v2742 = vpop.f32.mrf.mxu0
      %v2743 = vadd.f32 %v2581, %v2742
      %v2744 = vpop.f32.mrf.mxu0
      %2745 = vmatprep.mubr.f32.mxu0 0.0
      %v2746 = vand.u32 %v483, 4294901760
      %2747 = vmatmul.mubr.f32.gmra.mxu0 %v2746
      %v2748 = vpop.f32.mrf.mxu0
      %v2749 = vadd.f32 %v2587, %v2748
      %v2750 = vpop.f32.mrf.mxu0
      %2751 = vmatprep.mubr.f32.mxu0 0.0
      %v2752 = vand.u32 %v486, 4294901760
      %2753 = vmatmul.mubr.f32.gmra.mxu0 %v2752
      %v2754 = vpop.f32.mrf.mxu0
      %v2755 = vadd.f32 %v2593, %v2754
      %v2756 = vpop.f32.mrf.mxu0
      %2757 = vmatprep.mubr.f32.mxu0 0.0
      %v2758 = vand.u32 %v489, 4294901760
      %2759 = vmatmul.mubr.f32.gmra.mxu0 %v2758
      %v2760 = vpop.f32.mrf.mxu0
      %v2761 = vadd.f32 %v2599, %v2760
      %v2762 = vpop.f32.mrf.mxu0
      %2763 = vmatprep.mubr.f32.mxu0 0.0
      %v2764 = vand.u32 %v492, 4294901760
      %2765 = vmatmul.mubr.f32.gmra.mxu0 %v2764
      %v2766 = vpop.f32.mrf.mxu0
      %v2767 = vadd.f32 %v2605, %v2766
      %v2768 = vpop.f32.mrf.mxu0
      %2769 = vmatprep.mubr.f32.mxu0 0.0
      %v2770 = vand.u32 %v495, 4294901760
      %2771 = vmatmul.mubr.f32.gmra.mxu0 %v2770
      %v2772 = vpop.f32.mrf.mxu0
      %v2773 = vadd.f32 %v2611, %v2772
      %v2774 = vpop.f32.mrf.mxu0
      %2775 = vmatprep.mubr.f32.mxu0 0.0
      %v2776 = vand.u32 %v498, 4294901760
      %2777 = vmatmul.mubr.f32.gmra.mxu0 %v2776
      %v2778 = vpop.f32.mrf.mxu0
      %v2779 = vadd.f32 %v2617, %v2778
      %v2780 = vpop.f32.mrf.mxu0
      %2781 = vmatprep.mubr.f32.mxu0 0.0
      %v2782 = vand.u32 %v501, 4294901760
      %2783 = vmatmul.mubr.f32.gmra.mxu0 %v2782
      %v2784 = vpop.f32.mrf.mxu0
      %v2785 = vadd.f32 %v2623, %v2784
      %v2786 = vpop.f32.mrf.mxu0
      %2787 = vmatprep.mubr.f32.mxu0 0.0
      %v2788 = vand.u32 %v504, 4294901760
      %2789 = vmatmul.mubr.f32.gmra.mxu0 %v2788
      %v2790 = vpop.f32.mrf.mxu0
      %v2791 = vadd.f32 %v2629, %v2790
      %v2792 = vpop.f32.mrf.mxu0
      %2793 = vmatprep.mubr.f32.mxu0 0.0
      %v2794 = vand.u32 %v507, 4294901760
      %2795 = vmatmul.mubr.f32.gmra.mxu0 %v2794
      %v2796 = vpop.f32.mrf.mxu0
      %v2797 = vadd.f32 %v2635, %v2796
      %v2798 = vpop.f32.mrf.mxu0
      %2799 = vdwg.mxu0
      %v2800 = vmax.f32 %v1600, 0.0
      %v2801 = vmax.f32 %v1602, 0.0
      %v2802 = vmax.f32 %v2707, 0.0
      %v2803 = vmax.f32 %v1607, 0.0
      %v2804 = vmax.f32 %v1609, 0.0
      %v2805 = vmax.f32 %v2713, 0.0
      %v2806 = vmax.f32 %v1614, 0.0
      %v2807 = vmax.f32 %v1616, 0.0
      %v2808 = vmax.f32 %v2719, 0.0
      %v2809 = vmax.f32 %v1621, 0.0
      %v2810 = vmax.f32 %v1623, 0.0
      %v2811 = vmax.f32 %v2725, 0.0
      %v2812 = vmax.f32 %v1628, 0.0
      %v2813 = vmax.f32 %v1630, 0.0
      %v2814 = vmax.f32 %v2731, 0.0
      %v2815 = vmax.f32 %v1635, 0.0
      %v2816 = vmax.f32 %v1637, 0.0
      %v2817 = vmax.f32 %v2737, 0.0
      %v2818 = vmax.f32 %v1642, 0.0
      %v2819 = vmax.f32 %v1644, 0.0
      %v2820 = vmax.f32 %v2743, 0.0
      %v2821 = vmax.f32 %v1649, 0.0
      %v2822 = vmax.f32 %v1651, 0.0
      %v2823 = vmax.f32 %v2749, 0.0
      %v2824 = vmax.f32 %v1656, 0.0
      %v2825 = vmax.f32 %v1658, 0.0
      %v2826 = vmax.f32 %v2755, 0.0
      %v2827 = vmax.f32 %v1663, 0.0
      %v2828 = vmax.f32 %v1665, 0.0
      %v2829 = vmax.f32 %v2761, 0.0
      %v2830 = vmax.f32 %v1670, 0.0
      %v2831 = vmax.f32 %v1672, 0.0
      %v2832 = vmax.f32 %v2767, 0.0
      %v2833 = vmax.f32 %v1677, 0.0
      %v2834 = vmax.f32 %v1679, 0.0
      %v2835 = vmax.f32 %v2773, 0.0
      %v2836 = vmax.f32 %v1684, 0.0
      %v2837 = vmax.f32 %v1686, 0.0
      %v2838 = vmax.f32 %v2779, 0.0
      %v2839 = vmax.f32 %v1691, 0.0
      %v2840 = vmax.f32 %v1693, 0.0
      %v2841 = vmax.f32 %v2785, 0.0
      %v2842 = vmax.f32 %v1698, 0.0
      %v2843 = vmax.f32 %v1700, 0.0
      %v2844 = vmax.f32 %v2791, 0.0
      %v2845 = vmax.f32 %v1705, 0.0
      %v2846 = vmax.f32 %v1707, 0.0
      %v2847 = vmax.f32 %v2797, 0.0
      %v2848 = vld [vmem:[%s4] sm:$0xff]
      %v2849 = vld [vmem:[%s4 + $0x8] sm:$0xff]
      %v2850 = vld [vmem:[%s4 + $0x10] sm:$0xff]
      %v2851 = vld [vmem:[%s4 + $0x18] sm:$0xff]
      %v2852 = vld [vmem:[%s4 + $0x20] sm:$0xff]
      %v2853 = vld [vmem:[%s4 + $0x28] sm:$0xff]
      %v2854 = vld [vmem:[%s4 + $0x30] sm:$0xff]
      %v2855 = vld [vmem:[%s4 + $0x38] sm:$0xff]
      %v2856 = vld [vmem:[%s4 + $0x40] sm:$0xff]
      %v2857 = vld [vmem:[%s4 + $0x48] sm:$0xff]
      %v2858 = vld [vmem:[%s4 + $0x50] sm:$0xff]
      %v2859 = vld [vmem:[%s4 + $0x58] sm:$0xff]
      %v2860 = vld [vmem:[%s4 + $0x60] sm:$0xff]
      %v2861 = vld [vmem:[%s4 + $0x68] sm:$0xff]
      %v2862 = vld [vmem:[%s4 + $0x70] sm:$0xff]
      %v2863 = vld [vmem:[%s4 + $0x78] sm:$0xff]
      %v2864 = vld [vmem:[%s5] sm:$0xff]
      %v2865 = vld [vmem:[%s5 + $0x8] sm:$0xff]
      %v2866 = vld [vmem:[%s5 + $0x10] sm:$0xff]
      %v2867 = vld [vmem:[%s5 + $0x18] sm:$0xff]
      %v2868 = vld [vmem:[%s5 + $0x20] sm:$0xff]
      %v2869 = vld [vmem:[%s5 + $0x28] sm:$0xff]
      %v2870 = vld [vmem:[%s5 + $0x30] sm:$0xff]
      %v2871 = vld [vmem:[%s5 + $0x38] sm:$0xff]
      %v2872 = vld [vmem:[%s5 + $0x40] sm:$0xff]
      %v2873 = vld [vmem:[%s5 + $0x48] sm:$0xff]
      %v2874 = vld [vmem:[%s5 + $0x50] sm:$0xff]
      %v2875 = vld [vmem:[%s5 + $0x58] sm:$0xff]
      %v2876 = vld [vmem:[%s5 + $0x60] sm:$0xff]
      %v2877 = vld [vmem:[%s5 + $0x68] sm:$0xff]
      %v2878 = vld [vmem:[%s5 + $0x70] sm:$0xff]
      %v2879 = vld [vmem:[%s5 + $0x78] sm:$0xff]
      %2881 = vset.pattern.permute.xlu0 0
      %2882 = vperm.xlu0 %2881, %v2864
      %v2883 = vpop.permute.xlu0 %2882
      %2886 = vset.pattern.permute.xlu0 0
      %2887 = vperm.xlu0 %2886, %v2865
      %v2888 = vpop.permute.xlu0 %2887
      %2891 = vset.pattern.permute.xlu0 0
      %2892 = vperm.xlu0 %2891, %v2866
      %v2893 = vpop.permute.xlu0 %2892
      %2896 = vset.pattern.permute.xlu0 0
      %2897 = vperm.xlu0 %2896, %v2867
      %v2898 = vpop.permute.xlu0 %2897
      %2901 = vset.pattern.permute.xlu0 0
      %2902 = vperm.xlu0 %2901, %v2868
      %v2903 = vpop.permute.xlu0 %2902
      %2906 = vset.pattern.permute.xlu0 0
      %2907 = vperm.xlu0 %2906, %v2869
      %v2908 = vpop.permute.xlu0 %2907
      %2911 = vset.pattern.permute.xlu0 0
      %2912 = vperm.xlu0 %2911, %v2870
      %v2913 = vpop.permute.xlu0 %2912
      %2916 = vset.pattern.permute.xlu0 0
      %2917 = vperm.xlu0 %2916, %v2871
      %v2918 = vpop.permute.xlu0 %2917
      %2921 = vset.pattern.permute.xlu0 0
      %2922 = vperm.xlu0 %2921, %v2872
      %v2923 = vpop.permute.xlu0 %2922
      %2926 = vset.pattern.permute.xlu0 0
      %2927 = vperm.xlu0 %2926, %v2873
      %v2928 = vpop.permute.xlu0 %2927
      %2931 = vset.pattern.permute.xlu0 0
      %2932 = vperm.xlu0 %2931, %v2874
      %v2933 = vpop.permute.xlu0 %2932
      %2936 = vset.pattern.permute.xlu0 0
      %2937 = vperm.xlu0 %2936, %v2875
      %v2938 = vpop.permute.xlu0 %2937
      %2941 = vset.pattern.permute.xlu0 0
      %2942 = vperm.xlu0 %2941, %v2876
      %v2943 = vpop.permute.xlu0 %2942
      %2946 = vset.pattern.permute.xlu0 0
      %2947 = vperm.xlu0 %2946, %v2877
      %v2948 = vpop.permute.xlu0 %2947
      %2951 = vset.pattern.permute.xlu0 0
      %2952 = vperm.xlu0 %2951, %v2878
      %v2953 = vpop.permute.xlu0 %2952
      %2956 = vset.pattern.permute.xlu0 0
      %2957 = vperm.xlu0 %2956, %v2879
      %v2958 = vpop.permute.xlu0 %2957
      %v2960 = vand.u32 %v2846, 4294901760
      %2961 = vmatprep.subr.mxu0 %v2960
      %v2962 = vand.u32 %v2845, 4294901760
      %2963 = vmatpush1.msra.mxu0 %v2962
      %v2964 = vand.u32 %v2843, 4294901760
      %2965 = vmatprep.subr.mxu0 %v2964
      %v2966 = vand.u32 %v2842, 4294901760
      %2967 = vmatpush1.msra.mxu0 %v2966
      %v2968 = vand.u32 %v2840, 4294901760
      %2969 = vmatprep.subr.mxu0 %v2968
      %v2970 = vand.u32 %v2839, 4294901760
      %2971 = vmatpush1.msra.mxu0 %v2970
      %v2972 = vand.u32 %v2837, 4294901760
      %2973 = vmatprep.subr.mxu0 %v2972
      %v2974 = vand.u32 %v2836, 4294901760
      %2975 = vmatpush1.msra.mxu0 %v2974
      %v2976 = vand.u32 %v2834, 4294901760
      %2977 = vmatprep.subr.mxu0 %v2976
      %v2978 = vand.u32 %v2833, 4294901760
      %2979 = vmatpush1.msra.mxu0 %v2978
      %v2980 = vand.u32 %v2831, 4294901760
      %2981 = vmatprep.subr.mxu0 %v2980
      %v2982 = vand.u32 %v2830, 4294901760
      %2983 = vmatpush1.msra.mxu0 %v2982
      %v2984 = vand.u32 %v2828, 4294901760
      %2985 = vmatprep.subr.mxu0 %v2984
      %v2986 = vand.u32 %v2827, 4294901760
      %2987 = vmatpush1.msra.mxu0 %v2986
      %v2988 = vand.u32 %v2825, 4294901760
      %2989 = vmatprep.subr.mxu0 %v2988
      %v2990 = vand.u32 %v2824, 4294901760
      %2991 = vmatpush1.msra.mxu0 %v2990
      %v2992 = vand.u32 %v2822, 4294901760
      %2993 = vmatprep.subr.mxu0 %v2992
      %v2994 = vand.u32 %v2821, 4294901760
      %2995 = vmatpush1.msra.mxu0 %v2994
      %v2996 = vand.u32 %v2819, 4294901760
      %2997 = vmatprep.subr.mxu0 %v2996
      %v2998 = vand.u32 %v2818, 4294901760
      %2999 = vmatpush1.msra.mxu0 %v2998
      %v3000 = vand.u32 %v2816, 4294901760
      %3001 = vmatprep.subr.mxu0 %v3000
      %v3002 = vand.u32 %v2815, 4294901760
      %3003 = vmatpush1.msra.mxu0 %v3002
      %v3004 = vand.u32 %v2813, 4294901760
      %3005 = vmatprep.subr.mxu0 %v3004
      %v3006 = vand.u32 %v2812, 4294901760
      %3007 = vmatpush1.msra.mxu0 %v3006
      %v3008 = vand.u32 %v2810, 4294901760
      %3009 = vmatprep.subr.mxu0 %v3008
      %v3010 = vand.u32 %v2809, 4294901760
      %3011 = vmatpush1.msra.mxu0 %v3010
      %v3012 = vand.u32 %v2807, 4294901760
      %3013 = vmatprep.subr.mxu0 %v3012
      %v3014 = vand.u32 %v2806, 4294901760
      %3015 = vmatpush1.msra.mxu0 %v3014
      %v3016 = vand.u32 %v2804, 4294901760
      %3017 = vmatprep.subr.mxu0 %v3016
      %v3018 = vand.u32 %v2803, 4294901760
      %3019 = vmatpush1.msra.mxu0 %v3018
      %v3020 = vand.u32 %v2801, 4294901760
      %3021 = vmatprep.subr.mxu0 %v3020
      %v3022 = vand.u32 %v2800, 4294901760
      %3023 = vmatpush1.msra.mxu0 %v3022
      %3024 = vmatprep.subr.mxu0 0.0
      %3025 = vmatpush2.msra.mxu0 0.0
      %3026 = vmatprep.subr.mxu0 0.0
      %3027 = vmatpush2.msra.mxu0 0.0
      %3028 = vmatprep.subr.mxu0 0.0
      %3029 = vmatpush2.msra.mxu0 0.0
      %3030 = vmatprep.subr.mxu0 0.0
      %3031 = vmatpush2.msra.mxu0 0.0
      %3032 = vmatprep.subr.mxu0 0.0
      %3033 = vmatpush2.msra.mxu0 0.0
      %3034 = vmatprep.subr.mxu0 0.0
      %3035 = vmatpush2.msra.mxu0 0.0
      %3036 = vmatprep.subr.mxu0 0.0
      %3037 = vmatpush2.msra.mxu0 0.0
      %3038 = vmatprep.subr.mxu0 0.0
      %3039 = vmatpush2.msra.mxu0 0.0
      %3040 = vmatprep.subr.mxu0 0.0
      %3041 = vmatpush2.msra.mxu0 0.0
      %3042 = vmatprep.subr.mxu0 0.0
      %3043 = vmatpush2.msra.mxu0 0.0
      %3044 = vmatprep.subr.mxu0 0.0
      %3045 = vmatpush2.msra.mxu0 0.0
      %3046 = vmatprep.subr.mxu0 0.0
      %3047 = vmatpush2.msra.mxu0 0.0
      %3048 = vmatprep.subr.mxu0 0.0
      %3049 = vmatpush2.msra.mxu0 0.0
      %3050 = vmatprep.subr.mxu0 0.0
      %3051 = vmatpush2.msra.mxu0 0.0
      %3052 = vmatprep.subr.mxu0 0.0
      %3053 = vmatpush2.msra.mxu0 0.0
      %3054 = vmatprep.subr.mxu0 0.0
      %3055 = vmatpush2.msra.mxu0 0.0
      %3056 = vmatprep.mubr.f32.mxu0 0.0
      %v3057 = vand.u32 %v2848, 4294901760
      %v3058 = vsub.f32 %v2848, %v3057
      %v3059 = vand.u32 %v3058, 4294901760
      %v3060 = vsub.f32 %v3058, %v3059
      %v3061 = vand.u32 %v3060, 4294901760
      %3062 = vmatmul.mubr.f32.gmra.mxu0 %v3061
      %v3063 = vpop.f32.mrf.mxu0
      %v3064 = vadd.f32 %v2883, %v3063
      %v3065 = vpop.f32.mrf.mxu0
      %v3066 = vadd.f32 %v2883, %v3065
      %3067 = vmatprep.mubr.f32.mxu0 0.0
      %v3068 = vand.u32 %v2849, 4294901760
      %v3069 = vsub.f32 %v2849, %v3068
      %v3070 = vand.u32 %v3069, 4294901760
      %v3071 = vsub.f32 %v3069, %v3070
      %v3072 = vand.u32 %v3071, 4294901760
      %3073 = vmatmul.mubr.f32.gmra.mxu0 %v3072
      %v3074 = vpop.f32.mrf.mxu0
      %v3075 = vadd.f32 %v2888, %v3074
      %v3076 = vpop.f32.mrf.mxu0
      %v3077 = vadd.f32 %v2888, %v3076
      %3078 = vmatprep.mubr.f32.mxu0 0.0
      %v3079 = vand.u32 %v2850, 4294901760
      %v3080 = vsub.f32 %v2850, %v3079
      %v3081 = vand.u32 %v3080, 4294901760
      %v3082 = vsub.f32 %v3080, %v3081
      %v3083 = vand.u32 %v3082, 4294901760
      %3084 = vmatmul.mubr.f32.gmra.mxu0 %v3083
      %v3085 = vpop.f32.mrf.mxu0
      %v3086 = vadd.f32 %v2893, %v3085
      %v3087 = vpop.f32.mrf.mxu0
      %v3088 = vadd.f32 %v2893, %v3087
      %3089 = vmatprep.mubr.f32.mxu0 0.0
      %v3090 = vand.u32 %v2851, 4294901760
      %v3091 = vsub.f32 %v2851, %v3090
      %v3092 = vand.u32 %v3091, 4294901760
      %v3093 = vsub.f32 %v3091, %v3092
      %v3094 = vand.u32 %v3093, 4294901760
      %3095 = vmatmul.mubr.f32.gmra.mxu0 %v3094
      %v3096 = vpop.f32.mrf.mxu0
      %v3097 = vadd.f32 %v2898, %v3096
      %v3098 = vpop.f32.mrf.mxu0
      %v3099 = vadd.f32 %v2898, %v3098
      %3100 = vmatprep.mubr.f32.mxu0 0.0
      %v3101 = vand.u32 %v2852, 4294901760
      %v3102 = vsub.f32 %v2852, %v3101
      %v3103 = vand.u32 %v3102, 4294901760
      %v3104 = vsub.f32 %v3102, %v3103
      %v3105 = vand.u32 %v3104, 4294901760
      %3106 = vmatmul.mubr.f32.gmra.mxu0 %v3105
      %v3107 = vpop.f32.mrf.mxu0
      %v3108 = vadd.f32 %v2903, %v3107
      %v3109 = vpop.f32.mrf.mxu0
      %v3110 = vadd.f32 %v2903, %v3109
      %3111 = vmatprep.mubr.f32.mxu0 0.0
      %v3112 = vand.u32 %v2853, 4294901760
      %v3113 = vsub.f32 %v2853, %v3112
      %v3114 = vand.u32 %v3113, 4294901760
      %v3115 = vsub.f32 %v3113, %v3114
      %v3116 = vand.u32 %v3115, 4294901760
      %3117 = vmatmul.mubr.f32.gmra.mxu0 %v3116
      %v3118 = vpop.f32.mrf.mxu0
      %v3119 = vadd.f32 %v2908, %v3118
      %v3120 = vpop.f32.mrf.mxu0
      %v3121 = vadd.f32 %v2908, %v3120
      %3122 = vmatprep.mubr.f32.mxu0 0.0
      %v3123 = vand.u32 %v2854, 4294901760
      %v3124 = vsub.f32 %v2854, %v3123
      %v3125 = vand.u32 %v3124, 4294901760
      %v3126 = vsub.f32 %v3124, %v3125
      %v3127 = vand.u32 %v3126, 4294901760
      %3128 = vmatmul.mubr.f32.gmra.mxu0 %v3127
      %v3129 = vpop.f32.mrf.mxu0
      %v3130 = vadd.f32 %v2913, %v3129
      %v3131 = vpop.f32.mrf.mxu0
      %v3132 = vadd.f32 %v2913, %v3131
      %3133 = vmatprep.mubr.f32.mxu0 0.0
      %v3134 = vand.u32 %v2855, 4294901760
      %v3135 = vsub.f32 %v2855, %v3134
      %v3136 = vand.u32 %v3135, 4294901760
      %v3137 = vsub.f32 %v3135, %v3136
      %v3138 = vand.u32 %v3137, 4294901760
      %3139 = vmatmul.mubr.f32.gmra.mxu0 %v3138
      %v3140 = vpop.f32.mrf.mxu0
      %v3141 = vadd.f32 %v2918, %v3140
      %v3142 = vpop.f32.mrf.mxu0
      %v3143 = vadd.f32 %v2918, %v3142
      %3144 = vmatprep.mubr.f32.mxu0 0.0
      %v3145 = vand.u32 %v2856, 4294901760
      %v3146 = vsub.f32 %v2856, %v3145
      %v3147 = vand.u32 %v3146, 4294901760
      %v3148 = vsub.f32 %v3146, %v3147
      %v3149 = vand.u32 %v3148, 4294901760
      %3150 = vmatmul.mubr.f32.gmra.mxu0 %v3149
      %v3151 = vpop.f32.mrf.mxu0
      %v3152 = vadd.f32 %v2923, %v3151
      %v3153 = vpop.f32.mrf.mxu0
      %v3154 = vadd.f32 %v2923, %v3153
      %3155 = vmatprep.mubr.f32.mxu0 0.0
      %v3156 = vand.u32 %v2857, 4294901760
      %v3157 = vsub.f32 %v2857, %v3156
      %v3158 = vand.u32 %v3157, 4294901760
      %v3159 = vsub.f32 %v3157, %v3158
      %v3160 = vand.u32 %v3159, 4294901760
      %3161 = vmatmul.mubr.f32.gmra.mxu0 %v3160
      %v3162 = vpop.f32.mrf.mxu0
      %v3163 = vadd.f32 %v2928, %v3162
      %v3164 = vpop.f32.mrf.mxu0
      %v3165 = vadd.f32 %v2928, %v3164
      %3166 = vmatprep.mubr.f32.mxu0 0.0
      %v3167 = vand.u32 %v2858, 4294901760
      %v3168 = vsub.f32 %v2858, %v3167
      %v3169 = vand.u32 %v3168, 4294901760
      %v3170 = vsub.f32 %v3168, %v3169
      %v3171 = vand.u32 %v3170, 4294901760
      %3172 = vmatmul.mubr.f32.gmra.mxu0 %v3171
      %v3173 = vpop.f32.mrf.mxu0
      %v3174 = vadd.f32 %v2933, %v3173
      %v3175 = vpop.f32.mrf.mxu0
      %v3176 = vadd.f32 %v2933, %v3175
      %3177 = vmatprep.mubr.f32.mxu0 0.0
      %v3178 = vand.u32 %v2859, 4294901760
      %v3179 = vsub.f32 %v2859, %v3178
      %v3180 = vand.u32 %v3179, 4294901760
      %v3181 = vsub.f32 %v3179, %v3180
      %v3182 = vand.u32 %v3181, 4294901760
      %3183 = vmatmul.mubr.f32.gmra.mxu0 %v3182
      %v3184 = vpop.f32.mrf.mxu0
      %v3185 = vadd.f32 %v2938, %v3184
      %v3186 = vpop.f32.mrf.mxu0
      %v3187 = vadd.f32 %v2938, %v3186
      %3188 = vmatprep.mubr.f32.mxu0 0.0
      %v3189 = vand.u32 %v2860, 4294901760
      %v3190 = vsub.f32 %v2860, %v3189
      %v3191 = vand.u32 %v3190, 4294901760
      %v3192 = vsub.f32 %v3190, %v3191
      %v3193 = vand.u32 %v3192, 4294901760
      %3194 = vmatmul.mubr.f32.gmra.mxu0 %v3193
      %v3195 = vpop.f32.mrf.mxu0
      %v3196 = vadd.f32 %v2943, %v3195
      %v3197 = vpop.f32.mrf.mxu0
      %v3198 = vadd.f32 %v2943, %v3197
      %3199 = vmatprep.mubr.f32.mxu0 0.0
      %v3200 = vand.u32 %v2861, 4294901760
      %v3201 = vsub.f32 %v2861, %v3200
      %v3202 = vand.u32 %v3201, 4294901760
      %v3203 = vsub.f32 %v3201, %v3202
      %v3204 = vand.u32 %v3203, 4294901760
      %3205 = vmatmul.mubr.f32.gmra.mxu0 %v3204
      %v3206 = vpop.f32.mrf.mxu0
      %v3207 = vadd.f32 %v2948, %v3206
      %v3208 = vpop.f32.mrf.mxu0
      %v3209 = vadd.f32 %v2948, %v3208
      %3210 = vmatprep.mubr.f32.mxu0 0.0
      %v3211 = vand.u32 %v2862, 4294901760
      %v3212 = vsub.f32 %v2862, %v3211
      %v3213 = vand.u32 %v3212, 4294901760
      %v3214 = vsub.f32 %v3212, %v3213
      %v3215 = vand.u32 %v3214, 4294901760
      %3216 = vmatmul.mubr.f32.gmra.mxu0 %v3215
      %v3217 = vpop.f32.mrf.mxu0
      %v3218 = vadd.f32 %v2953, %v3217
      %v3219 = vpop.f32.mrf.mxu0
      %v3220 = vadd.f32 %v2953, %v3219
      %3221 = vmatprep.mubr.f32.mxu0 0.0
      %v3222 = vand.u32 %v2863, 4294901760
      %v3223 = vsub.f32 %v2863, %v3222
      %v3224 = vand.u32 %v3223, 4294901760
      %v3225 = vsub.f32 %v3223, %v3224
      %v3226 = vand.u32 %v3225, 4294901760
      %3227 = vmatmul.mubr.f32.gmra.mxu0 %v3226
      %v3228 = vpop.f32.mrf.mxu0
      %v3229 = vadd.f32 %v2958, %v3228
      %v3230 = vpop.f32.mrf.mxu0
      %v3231 = vadd.f32 %v2958, %v3230
      %3232 = vdwg.mxu0
      %v3233 = vand.u32 %v2846, 4294901760
      %v3234 = vsub.f32 %v2846, %v3233
      %v3235 = vand.u32 %v3234, 4294901760
      %v3236 = vsub.f32 %v3234, %v3235
      %v3237 = vand.u32 %v3236, 4294901760
      %3238 = vmatprep.subr.mxu0 %v3237
      %v3239 = vand.u32 %v2845, 4294901760
      %v3240 = vsub.f32 %v2845, %v3239
      %v3241 = vand.u32 %v3240, 4294901760
      %v3242 = vsub.f32 %v3240, %v3241
      %v3243 = vand.u32 %v3242, 4294901760
      %3244 = vmatpush1.msra.mxu0 %v3243
      %v3245 = vand.u32 %v2843, 4294901760
      %v3246 = vsub.f32 %v2843, %v3245
      %v3247 = vand.u32 %v3246, 4294901760
      %v3248 = vsub.f32 %v3246, %v3247
      %v3249 = vand.u32 %v3248, 4294901760
      %3250 = vmatprep.subr.mxu0 %v3249
      %v3251 = vand.u32 %v2842, 4294901760
      %v3252 = vsub.f32 %v2842, %v3251
      %v3253 = vand.u32 %v3252, 4294901760
      %v3254 = vsub.f32 %v3252, %v3253
      %v3255 = vand.u32 %v3254, 4294901760
      %3256 = vmatpush1.msra.mxu0 %v3255
      %v3257 = vand.u32 %v2840, 4294901760
      %v3258 = vsub.f32 %v2840, %v3257
      %v3259 = vand.u32 %v3258, 4294901760
      %v3260 = vsub.f32 %v3258, %v3259
      %v3261 = vand.u32 %v3260, 4294901760
      %3262 = vmatprep.subr.mxu0 %v3261
      %v3263 = vand.u32 %v2839, 4294901760
      %v3264 = vsub.f32 %v2839, %v3263
      %v3265 = vand.u32 %v3264, 4294901760
      %v3266 = vsub.f32 %v3264, %v3265
      %v3267 = vand.u32 %v3266, 4294901760
      %3268 = vmatpush1.msra.mxu0 %v3267
      %v3269 = vand.u32 %v2837, 4294901760
      %v3270 = vsub.f32 %v2837, %v3269
      %v3271 = vand.u32 %v3270, 4294901760
      %v3272 = vsub.f32 %v3270, %v3271
      %v3273 = vand.u32 %v3272, 4294901760
      %3274 = vmatprep.subr.mxu0 %v3273
      %v3275 = vand.u32 %v2836, 4294901760
      %v3276 = vsub.f32 %v2836, %v3275
      %v3277 = vand.u32 %v3276, 4294901760
      %v3278 = vsub.f32 %v3276, %v3277
      %v3279 = vand.u32 %v3278, 4294901760
      %3280 = vmatpush1.msra.mxu0 %v3279
      %v3281 = vand.u32 %v2834, 4294901760
      %v3282 = vsub.f32 %v2834, %v3281
      %v3283 = vand.u32 %v3282, 4294901760
      %v3284 = vsub.f32 %v3282, %v3283
      %v3285 = vand.u32 %v3284, 4294901760
      %3286 = vmatprep.subr.mxu0 %v3285
      %v3287 = vand.u32 %v2833, 4294901760
      %v3288 = vsub.f32 %v2833, %v3287
      %v3289 = vand.u32 %v3288, 4294901760
      %v3290 = vsub.f32 %v3288, %v3289
      %v3291 = vand.u32 %v3290, 4294901760
      %3292 = vmatpush1.msra.mxu0 %v3291
      %v3293 = vand.u32 %v2831, 4294901760
      %v3294 = vsub.f32 %v2831, %v3293
      %v3295 = vand.u32 %v3294, 4294901760
      %v3296 = vsub.f32 %v3294, %v3295
      %v3297 = vand.u32 %v3296, 4294901760
      %3298 = vmatprep.subr.mxu0 %v3297
      %v3299 = vand.u32 %v2830, 4294901760
      %v3300 = vsub.f32 %v2830, %v3299
      %v3301 = vand.u32 %v3300, 4294901760
      %v3302 = vsub.f32 %v3300, %v3301
      %v3303 = vand.u32 %v3302, 4294901760
      %3304 = vmatpush1.msra.mxu0 %v3303
      %v3305 = vand.u32 %v2828, 4294901760
      %v3306 = vsub.f32 %v2828, %v3305
      %v3307 = vand.u32 %v3306, 4294901760
      %v3308 = vsub.f32 %v3306, %v3307
      %v3309 = vand.u32 %v3308, 4294901760
      %3310 = vmatprep.subr.mxu0 %v3309
      %v3311 = vand.u32 %v2827, 4294901760
      %v3312 = vsub.f32 %v2827, %v3311
      %v3313 = vand.u32 %v3312, 4294901760
      %v3314 = vsub.f32 %v3312, %v3313
      %v3315 = vand.u32 %v3314, 4294901760
      %3316 = vmatpush1.msra.mxu0 %v3315
      %v3317 = vand.u32 %v2825, 4294901760
      %v3318 = vsub.f32 %v2825, %v3317
      %v3319 = vand.u32 %v3318, 4294901760
      %v3320 = vsub.f32 %v3318, %v3319
      %v3321 = vand.u32 %v3320, 4294901760
      %3322 = vmatprep.subr.mxu0 %v3321
      %v3323 = vand.u32 %v2824, 4294901760
      %v3324 = vsub.f32 %v2824, %v3323
      %v3325 = vand.u32 %v3324, 4294901760
      %v3326 = vsub.f32 %v3324, %v3325
      %v3327 = vand.u32 %v3326, 4294901760
      %3328 = vmatpush1.msra.mxu0 %v3327
      %v3329 = vand.u32 %v2822, 4294901760
      %v3330 = vsub.f32 %v2822, %v3329
      %v3331 = vand.u32 %v3330, 4294901760
      %v3332 = vsub.f32 %v3330, %v3331
      %v3333 = vand.u32 %v3332, 4294901760
      %3334 = vmatprep.subr.mxu0 %v3333
      %v3335 = vand.u32 %v2821, 4294901760
      %v3336 = vsub.f32 %v2821, %v3335
      %v3337 = vand.u32 %v3336, 4294901760
      %v3338 = vsub.f32 %v3336, %v3337
      %v3339 = vand.u32 %v3338, 4294901760
      %3340 = vmatpush1.msra.mxu0 %v3339
      %v3341 = vand.u32 %v2819, 4294901760
      %v3342 = vsub.f32 %v2819, %v3341
      %v3343 = vand.u32 %v3342, 4294901760
      %v3344 = vsub.f32 %v3342, %v3343
      %v3345 = vand.u32 %v3344, 4294901760
      %3346 = vmatprep.subr.mxu0 %v3345
      %v3347 = vand.u32 %v2818, 4294901760
      %v3348 = vsub.f32 %v2818, %v3347
      %v3349 = vand.u32 %v3348, 4294901760
      %v3350 = vsub.f32 %v3348, %v3349
      %v3351 = vand.u32 %v3350, 4294901760
      %3352 = vmatpush1.msra.mxu0 %v3351
      %v3353 = vand.u32 %v2816, 4294901760
      %v3354 = vsub.f32 %v2816, %v3353
      %v3355 = vand.u32 %v3354, 4294901760
      %v3356 = vsub.f32 %v3354, %v3355
      %v3357 = vand.u32 %v3356, 4294901760
      %3358 = vmatprep.subr.mxu0 %v3357
      %v3359 = vand.u32 %v2815, 4294901760
      %v3360 = vsub.f32 %v2815, %v3359
      %v3361 = vand.u32 %v3360, 4294901760
      %v3362 = vsub.f32 %v3360, %v3361
      %v3363 = vand.u32 %v3362, 4294901760
      %3364 = vmatpush1.msra.mxu0 %v3363
      %v3365 = vand.u32 %v2813, 4294901760
      %v3366 = vsub.f32 %v2813, %v3365
      %v3367 = vand.u32 %v3366, 4294901760
      %v3368 = vsub.f32 %v3366, %v3367
      %v3369 = vand.u32 %v3368, 4294901760
      %3370 = vmatprep.subr.mxu0 %v3369
      %v3371 = vand.u32 %v2812, 4294901760
      %v3372 = vsub.f32 %v2812, %v3371
      %v3373 = vand.u32 %v3372, 4294901760
      %v3374 = vsub.f32 %v3372, %v3373
      %v3375 = vand.u32 %v3374, 4294901760
      %3376 = vmatpush1.msra.mxu0 %v3375
      %v3377 = vand.u32 %v2810, 4294901760
      %v3378 = vsub.f32 %v2810, %v3377
      %v3379 = vand.u32 %v3378, 4294901760
      %v3380 = vsub.f32 %v3378, %v3379
      %v3381 = vand.u32 %v3380, 4294901760
      %3382 = vmatprep.subr.mxu0 %v3381
      %v3383 = vand.u32 %v2809, 4294901760
      %v3384 = vsub.f32 %v2809, %v3383
      %v3385 = vand.u32 %v3384, 4294901760
      %v3386 = vsub.f32 %v3384, %v3385
      %v3387 = vand.u32 %v3386, 4294901760
      %3388 = vmatpush1.msra.mxu0 %v3387
      %v3389 = vand.u32 %v2807, 4294901760
      %v3390 = vsub.f32 %v2807, %v3389
      %v3391 = vand.u32 %v3390, 4294901760
      %v3392 = vsub.f32 %v3390, %v3391
      %v3393 = vand.u32 %v3392, 4294901760
      %3394 = vmatprep.subr.mxu0 %v3393
      %v3395 = vand.u32 %v2806, 4294901760
      %v3396 = vsub.f32 %v2806, %v3395
      %v3397 = vand.u32 %v3396, 4294901760
      %v3398 = vsub.f32 %v3396, %v3397
      %v3399 = vand.u32 %v3398, 4294901760
      %3400 = vmatpush1.msra.mxu0 %v3399
      %v3401 = vand.u32 %v2804, 4294901760
      %v3402 = vsub.f32 %v2804, %v3401
      %v3403 = vand.u32 %v3402, 4294901760
      %v3404 = vsub.f32 %v3402, %v3403
      %v3405 = vand.u32 %v3404, 4294901760
      %3406 = vmatprep.subr.mxu0 %v3405
      %v3407 = vand.u32 %v2803, 4294901760
      %v3408 = vsub.f32 %v2803, %v3407
      %v3409 = vand.u32 %v3408, 4294901760
      %v3410 = vsub.f32 %v3408, %v3409
      %v3411 = vand.u32 %v3410, 4294901760
      %3412 = vmatpush1.msra.mxu0 %v3411
      %v3413 = vand.u32 %v2801, 4294901760
      %v3414 = vsub.f32 %v2801, %v3413
      %v3415 = vand.u32 %v3414, 4294901760
      %v3416 = vsub.f32 %v3414, %v3415
      %v3417 = vand.u32 %v3416, 4294901760
      %3418 = vmatprep.subr.mxu0 %v3417
      %v3419 = vand.u32 %v2800, 4294901760
      %v3420 = vsub.f32 %v2800, %v3419
      %v3421 = vand.u32 %v3420, 4294901760
      %v3422 = vsub.f32 %v3420, %v3421
      %v3423 = vand.u32 %v3422, 4294901760
      %3424 = vmatpush1.msra.mxu0 %v3423
      %3425 = vmatprep.subr.mxu0 0.0
      %3426 = vmatpush2.msra.mxu0 0.0
      %3427 = vmatprep.subr.mxu0 0.0
      %3428 = vmatpush2.msra.mxu0 0.0
      %3429 = vmatprep.subr.mxu0 0.0
      %3430 = vmatpush2.msra.mxu0 0.0
      %3431 = vmatprep.subr.mxu0 0.0
      %3432 = vmatpush2.msra.mxu0 0.0
      %3433 = vmatprep.subr.mxu0 0.0
      %3434 = vmatpush2.msra.mxu0 0.0
      %3435 = vmatprep.subr.mxu0 0.0
      %3436 = vmatpush2.msra.mxu0 0.0
      %3437 = vmatprep.subr.mxu0 0.0
      %3438 = vmatpush2.msra.mxu0 0.0
      %3439 = vmatprep.subr.mxu0 0.0
      %3440 = vmatpush2.msra.mxu0 0.0
      %3441 = vmatprep.subr.mxu0 0.0
      %3442 = vmatpush2.msra.mxu0 0.0
      %3443 = vmatprep.subr.mxu0 0.0
      %3444 = vmatpush2.msra.mxu0 0.0
      %3445 = vmatprep.subr.mxu0 0.0
      %3446 = vmatpush2.msra.mxu0 0.0
      %3447 = vmatprep.subr.mxu0 0.0
      %3448 = vmatpush2.msra.mxu0 0.0
      %3449 = vmatprep.subr.mxu0 0.0
      %3450 = vmatpush2.msra.mxu0 0.0
      %3451 = vmatprep.subr.mxu0 0.0
      %3452 = vmatpush2.msra.mxu0 0.0
      %3453 = vmatprep.subr.mxu0 0.0
      %3454 = vmatpush2.msra.mxu0 0.0
      %3455 = vmatprep.subr.mxu0 0.0
      %3456 = vmatpush2.msra.mxu0 0.0
      %3457 = vmatprep.mubr.f32.mxu0 0.0
      %v3458 = vand.u32 %v2848, 4294901760
      %3459 = vmatmul.mubr.f32.gmra.mxu0 %v3458
      %v3460 = vpop.f32.mrf.mxu0
      %v3461 = vadd.f32 %v3064, %v3460
      %v3462 = vpop.f32.mrf.mxu0
      %v3463 = vadd.f32 %v3066, %v3462
      %3464 = vmatprep.mubr.f32.mxu0 0.0
      %v3465 = vand.u32 %v2849, 4294901760
      %3466 = vmatmul.mubr.f32.gmra.mxu0 %v3465
      %v3467 = vpop.f32.mrf.mxu0
      %v3468 = vadd.f32 %v3075, %v3467
      %v3469 = vpop.f32.mrf.mxu0
      %v3470 = vadd.f32 %v3077, %v3469
      %3471 = vmatprep.mubr.f32.mxu0 0.0
      %v3472 = vand.u32 %v2850, 4294901760
      %3473 = vmatmul.mubr.f32.gmra.mxu0 %v3472
      %v3474 = vpop.f32.mrf.mxu0
      %v3475 = vadd.f32 %v3086, %v3474
      %v3476 = vpop.f32.mrf.mxu0
      %v3477 = vadd.f32 %v3088, %v3476
      %3478 = vmatprep.mubr.f32.mxu0 0.0
      %v3479 = vand.u32 %v2851, 4294901760
      %3480 = vmatmul.mubr.f32.gmra.mxu0 %v3479
      %v3481 = vpop.f32.mrf.mxu0
      %v3482 = vadd.f32 %v3097, %v3481
      %v3483 = vpop.f32.mrf.mxu0
      %v3484 = vadd.f32 %v3099, %v3483
      %3485 = vmatprep.mubr.f32.mxu0 0.0
      %v3486 = vand.u32 %v2852, 4294901760
      %3487 = vmatmul.mubr.f32.gmra.mxu0 %v3486
      %v3488 = vpop.f32.mrf.mxu0
      %v3489 = vadd.f32 %v3108, %v3488
      %v3490 = vpop.f32.mrf.mxu0
      %v3491 = vadd.f32 %v3110, %v3490
      %3492 = vmatprep.mubr.f32.mxu0 0.0
      %v3493 = vand.u32 %v2853, 4294901760
      %3494 = vmatmul.mubr.f32.gmra.mxu0 %v3493
      %v3495 = vpop.f32.mrf.mxu0
      %v3496 = vadd.f32 %v3119, %v3495
      %v3497 = vpop.f32.mrf.mxu0
      %v3498 = vadd.f32 %v3121, %v3497
      %3499 = vmatprep.mubr.f32.mxu0 0.0
      %v3500 = vand.u32 %v2854, 4294901760
      %3501 = vmatmul.mubr.f32.gmra.mxu0 %v3500
      %v3502 = vpop.f32.mrf.mxu0
      %v3503 = vadd.f32 %v3130, %v3502
      %v3504 = vpop.f32.mrf.mxu0
      %v3505 = vadd.f32 %v3132, %v3504
      %3506 = vmatprep.mubr.f32.mxu0 0.0
      %v3507 = vand.u32 %v2855, 4294901760
      %3508 = vmatmul.mubr.f32.gmra.mxu0 %v3507
      %v3509 = vpop.f32.mrf.mxu0
      %v3510 = vadd.f32 %v3141, %v3509
      %v3511 = vpop.f32.mrf.mxu0
      %v3512 = vadd.f32 %v3143, %v3511
      %3513 = vmatprep.mubr.f32.mxu0 0.0
      %v3514 = vand.u32 %v2856, 4294901760
      %3515 = vmatmul.mubr.f32.gmra.mxu0 %v3514
      %v3516 = vpop.f32.mrf.mxu0
      %v3517 = vadd.f32 %v3152, %v3516
      %v3518 = vpop.f32.mrf.mxu0
      %v3519 = vadd.f32 %v3154, %v3518
      %3520 = vmatprep.mubr.f32.mxu0 0.0
      %v3521 = vand.u32 %v2857, 4294901760
      %3522 = vmatmul.mubr.f32.gmra.mxu0 %v3521
      %v3523 = vpop.f32.mrf.mxu0
      %v3524 = vadd.f32 %v3163, %v3523
      %v3525 = vpop.f32.mrf.mxu0
      %v3526 = vadd.f32 %v3165, %v3525
      %3527 = vmatprep.mubr.f32.mxu0 0.0
      %v3528 = vand.u32 %v2858, 4294901760
      %3529 = vmatmul.mubr.f32.gmra.mxu0 %v3528
      %v3530 = vpop.f32.mrf.mxu0
      %v3531 = vadd.f32 %v3174, %v3530
      %v3532 = vpop.f32.mrf.mxu0
      %v3533 = vadd.f32 %v3176, %v3532
      %3534 = vmatprep.mubr.f32.mxu0 0.0
      %v3535 = vand.u32 %v2859, 4294901760
      %3536 = vmatmul.mubr.f32.gmra.mxu0 %v3535
      %v3537 = vpop.f32.mrf.mxu0
      %v3538 = vadd.f32 %v3185, %v3537
      %v3539 = vpop.f32.mrf.mxu0
      %v3540 = vadd.f32 %v3187, %v3539
      %3541 = vmatprep.mubr.f32.mxu0 0.0
      %v3542 = vand.u32 %v2860, 4294901760
      %3543 = vmatmul.mubr.f32.gmra.mxu0 %v3542
      %v3544 = vpop.f32.mrf.mxu0
      %v3545 = vadd.f32 %v3196, %v3544
      %v3546 = vpop.f32.mrf.mxu0
      %v3547 = vadd.f32 %v3198, %v3546
      %3548 = vmatprep.mubr.f32.mxu0 0.0
      %v3549 = vand.u32 %v2861, 4294901760
      %3550 = vmatmul.mubr.f32.gmra.mxu0 %v3549
      %v3551 = vpop.f32.mrf.mxu0
      %v3552 = vadd.f32 %v3207, %v3551
      %v3553 = vpop.f32.mrf.mxu0
      %v3554 = vadd.f32 %v3209, %v3553
      %3555 = vmatprep.mubr.f32.mxu0 0.0
      %v3556 = vand.u32 %v2862, 4294901760
      %3557 = vmatmul.mubr.f32.gmra.mxu0 %v3556
      %v3558 = vpop.f32.mrf.mxu0
      %v3559 = vadd.f32 %v3218, %v3558
      %v3560 = vpop.f32.mrf.mxu0
      %v3561 = vadd.f32 %v3220, %v3560
      %3562 = vmatprep.mubr.f32.mxu0 0.0
      %v3563 = vand.u32 %v2863, 4294901760
      %3564 = vmatmul.mubr.f32.gmra.mxu0 %v3563
      %v3565 = vpop.f32.mrf.mxu0
      %v3566 = vadd.f32 %v3229, %v3565
      %v3567 = vpop.f32.mrf.mxu0
      %v3568 = vadd.f32 %v3231, %v3567
      %3569 = vdwg.mxu0
      %v3570 = vand.u32 %v2846, 4294901760
      %v3571 = vsub.f32 %v2846, %v3570
      %3572 = vmatprep.subr.mxu0 %v3571
      %v3573 = vand.u32 %v2845, 4294901760
      %v3574 = vsub.f32 %v2845, %v3573
      %3575 = vmatpush1.msra.mxu0 %v3574
      %v3576 = vand.u32 %v2843, 4294901760
      %v3577 = vsub.f32 %v2843, %v3576
      %3578 = vmatprep.subr.mxu0 %v3577
      %v3579 = vand.u32 %v2842, 4294901760
      %v3580 = vsub.f32 %v2842, %v3579
      %3581 = vmatpush1.msra.mxu0 %v3580
      %v3582 = vand.u32 %v2840, 4294901760
      %v3583 = vsub.f32 %v2840, %v3582
      %3584 = vmatprep.subr.mxu0 %v3583
      %v3585 = vand.u32 %v2839, 4294901760
      %v3586 = vsub.f32 %v2839, %v3585
      %3587 = vmatpush1.msra.mxu0 %v3586
      %v3588 = vand.u32 %v2837, 4294901760
      %v3589 = vsub.f32 %v2837, %v3588
      %3590 = vmatprep.subr.mxu0 %v3589
      %v3591 = vand.u32 %v2836, 4294901760
      %v3592 = vsub.f32 %v2836, %v3591
      %3593 = vmatpush1.msra.mxu0 %v3592
      %v3594 = vand.u32 %v2834, 4294901760
      %v3595 = vsub.f32 %v2834, %v3594
      %3596 = vmatprep.subr.mxu0 %v3595
      %v3597 = vand.u32 %v2833, 4294901760
      %v3598 = vsub.f32 %v2833, %v3597
      %3599 = vmatpush1.msra.mxu0 %v3598
      %v3600 = vand.u32 %v2831, 4294901760
      %v3601 = vsub.f32 %v2831, %v3600
      %3602 = vmatprep.subr.mxu0 %v3601
      %v3603 = vand.u32 %v2830, 4294901760
      %v3604 = vsub.f32 %v2830, %v3603
      %3605 = vmatpush1.msra.mxu0 %v3604
      %v3606 = vand.u32 %v2828, 4294901760
      %v3607 = vsub.f32 %v2828, %v3606
      %3608 = vmatprep.subr.mxu0 %v3607
      %v3609 = vand.u32 %v2827, 4294901760
      %v3610 = vsub.f32 %v2827, %v3609
      %3611 = vmatpush1.msra.mxu0 %v3610
      %v3612 = vand.u32 %v2825, 4294901760
      %v3613 = vsub.f32 %v2825, %v3612
      %3614 = vmatprep.subr.mxu0 %v3613
      %v3615 = vand.u32 %v2824, 4294901760
      %v3616 = vsub.f32 %v2824, %v3615
      %3617 = vmatpush1.msra.mxu0 %v3616
      %v3618 = vand.u32 %v2822, 4294901760
      %v3619 = vsub.f32 %v2822, %v3618
      %3620 = vmatprep.subr.mxu0 %v3619
      %v3621 = vand.u32 %v2821, 4294901760
      %v3622 = vsub.f32 %v2821, %v3621
      %3623 = vmatpush1.msra.mxu0 %v3622
      %v3624 = vand.u32 %v2819, 4294901760
      %v3625 = vsub.f32 %v2819, %v3624
      %3626 = vmatprep.subr.mxu0 %v3625
      %v3627 = vand.u32 %v2818, 4294901760
      %v3628 = vsub.f32 %v2818, %v3627
      %3629 = vmatpush1.msra.mxu0 %v3628
      %v3630 = vand.u32 %v2816, 4294901760
      %v3631 = vsub.f32 %v2816, %v3630
      %3632 = vmatprep.subr.mxu0 %v3631
      %v3633 = vand.u32 %v2815, 4294901760
      %v3634 = vsub.f32 %v2815, %v3633
      %3635 = vmatpush1.msra.mxu0 %v3634
      %v3636 = vand.u32 %v2813, 4294901760
      %v3637 = vsub.f32 %v2813, %v3636
      %3638 = vmatprep.subr.mxu0 %v3637
      %v3639 = vand.u32 %v2812, 4294901760
      %v3640 = vsub.f32 %v2812, %v3639
      %3641 = vmatpush1.msra.mxu0 %v3640
      %v3642 = vand.u32 %v2810, 4294901760
      %v3643 = vsub.f32 %v2810, %v3642
      %3644 = vmatprep.subr.mxu0 %v3643
      %v3645 = vand.u32 %v2809, 4294901760
      %v3646 = vsub.f32 %v2809, %v3645
      %3647 = vmatpush1.msra.mxu0 %v3646
      %v3648 = vand.u32 %v2807, 4294901760
      %v3649 = vsub.f32 %v2807, %v3648
      %3650 = vmatprep.subr.mxu0 %v3649
      %v3651 = vand.u32 %v2806, 4294901760
      %v3652 = vsub.f32 %v2806, %v3651
      %3653 = vmatpush1.msra.mxu0 %v3652
      %v3654 = vand.u32 %v2804, 4294901760
      %v3655 = vsub.f32 %v2804, %v3654
      %3656 = vmatprep.subr.mxu0 %v3655
      %v3657 = vand.u32 %v2803, 4294901760
      %v3658 = vsub.f32 %v2803, %v3657
      %3659 = vmatpush1.msra.mxu0 %v3658
      %v3660 = vand.u32 %v2801, 4294901760
      %v3661 = vsub.f32 %v2801, %v3660
      %3662 = vmatprep.subr.mxu0 %v3661
      %v3663 = vand.u32 %v2800, 4294901760
      %v3664 = vsub.f32 %v2800, %v3663
      %3665 = vmatpush1.msra.mxu0 %v3664
      %3666 = vmatprep.subr.mxu0 0.0
      %3667 = vmatpush2.msra.mxu0 0.0
      %3668 = vmatprep.subr.mxu0 0.0
      %3669 = vmatpush2.msra.mxu0 0.0
      %3670 = vmatprep.subr.mxu0 0.0
      %3671 = vmatpush2.msra.mxu0 0.0
      %3672 = vmatprep.subr.mxu0 0.0
      %3673 = vmatpush2.msra.mxu0 0.0
      %3674 = vmatprep.subr.mxu0 0.0
      %3675 = vmatpush2.msra.mxu0 0.0
      %3676 = vmatprep.subr.mxu0 0.0
      %3677 = vmatpush2.msra.mxu0 0.0
      %3678 = vmatprep.subr.mxu0 0.0
      %3679 = vmatpush2.msra.mxu0 0.0
      %3680 = vmatprep.subr.mxu0 0.0
      %3681 = vmatpush2.msra.mxu0 0.0
      %3682 = vmatprep.subr.mxu0 0.0
      %3683 = vmatpush2.msra.mxu0 0.0
      %3684 = vmatprep.subr.mxu0 0.0
      %3685 = vmatpush2.msra.mxu0 0.0
      %3686 = vmatprep.subr.mxu0 0.0
      %3687 = vmatpush2.msra.mxu0 0.0
      %3688 = vmatprep.subr.mxu0 0.0
      %3689 = vmatpush2.msra.mxu0 0.0
      %3690 = vmatprep.subr.mxu0 0.0
      %3691 = vmatpush2.msra.mxu0 0.0
      %3692 = vmatprep.subr.mxu0 0.0
      %3693 = vmatpush2.msra.mxu0 0.0
      %3694 = vmatprep.subr.mxu0 0.0
      %3695 = vmatpush2.msra.mxu0 0.0
      %3696 = vmatprep.subr.mxu0 0.0
      %3697 = vmatpush2.msra.mxu0 0.0
      %3698 = vmatprep.mubr.f32.mxu0 0.0
      %v3699 = vand.u32 %v2848, 4294901760
      %v3700 = vsub.f32 %v2848, %v3699
      %3701 = vmatmul.mubr.f32.gmra.mxu0 %v3700
      %v3702 = vpop.f32.mrf.mxu0
      %v3703 = vadd.f32 %v3461, %v3702
      %v3704 = vpop.f32.mrf.mxu0
      %v3705 = vadd.f32 %v3463, %v3704
      %3706 = vmatprep.mubr.f32.mxu0 0.0
      %v3707 = vand.u32 %v2849, 4294901760
      %v3708 = vsub.f32 %v2849, %v3707
      %3709 = vmatmul.mubr.f32.gmra.mxu0 %v3708
      %v3710 = vpop.f32.mrf.mxu0
      %v3711 = vadd.f32 %v3468, %v3710
      %v3712 = vpop.f32.mrf.mxu0
      %v3713 = vadd.f32 %v3470, %v3712
      %3714 = vmatprep.mubr.f32.mxu0 0.0
      %v3715 = vand.u32 %v2850, 4294901760
      %v3716 = vsub.f32 %v2850, %v3715
      %3717 = vmatmul.mubr.f32.gmra.mxu0 %v3716
      %v3718 = vpop.f32.mrf.mxu0
      %v3719 = vadd.f32 %v3475, %v3718
      %v3720 = vpop.f32.mrf.mxu0
      %v3721 = vadd.f32 %v3477, %v3720
      %3722 = vmatprep.mubr.f32.mxu0 0.0
      %v3723 = vand.u32 %v2851, 4294901760
      %v3724 = vsub.f32 %v2851, %v3723
      %3725 = vmatmul.mubr.f32.gmra.mxu0 %v3724
      %v3726 = vpop.f32.mrf.mxu0
      %v3727 = vadd.f32 %v3482, %v3726
      %v3728 = vpop.f32.mrf.mxu0
      %v3729 = vadd.f32 %v3484, %v3728
      %3730 = vmatprep.mubr.f32.mxu0 0.0
      %v3731 = vand.u32 %v2852, 4294901760
      %v3732 = vsub.f32 %v2852, %v3731
      %3733 = vmatmul.mubr.f32.gmra.mxu0 %v3732
      %v3734 = vpop.f32.mrf.mxu0
      %v3735 = vadd.f32 %v3489, %v3734
      %v3736 = vpop.f32.mrf.mxu0
      %v3737 = vadd.f32 %v3491, %v3736
      %3738 = vmatprep.mubr.f32.mxu0 0.0
      %v3739 = vand.u32 %v2853, 4294901760
      %v3740 = vsub.f32 %v2853, %v3739
      %3741 = vmatmul.mubr.f32.gmra.mxu0 %v3740
      %v3742 = vpop.f32.mrf.mxu0
      %v3743 = vadd.f32 %v3496, %v3742
      %v3744 = vpop.f32.mrf.mxu0
      %v3745 = vadd.f32 %v3498, %v3744
      %3746 = vmatprep.mubr.f32.mxu0 0.0
      %v3747 = vand.u32 %v2854, 4294901760
      %v3748 = vsub.f32 %v2854, %v3747
      %3749 = vmatmul.mubr.f32.gmra.mxu0 %v3748
      %v3750 = vpop.f32.mrf.mxu0
      %v3751 = vadd.f32 %v3503, %v3750
      %v3752 = vpop.f32.mrf.mxu0
      %v3753 = vadd.f32 %v3505, %v3752
      %3754 = vmatprep.mubr.f32.mxu0 0.0
      %v3755 = vand.u32 %v2855, 4294901760
      %v3756 = vsub.f32 %v2855, %v3755
      %3757 = vmatmul.mubr.f32.gmra.mxu0 %v3756
      %v3758 = vpop.f32.mrf.mxu0
      %v3759 = vadd.f32 %v3510, %v3758
      %v3760 = vpop.f32.mrf.mxu0
      %v3761 = vadd.f32 %v3512, %v3760
      %3762 = vmatprep.mubr.f32.mxu0 0.0
      %v3763 = vand.u32 %v2856, 4294901760
      %v3764 = vsub.f32 %v2856, %v3763
      %3765 = vmatmul.mubr.f32.gmra.mxu0 %v3764
      %v3766 = vpop.f32.mrf.mxu0
      %v3767 = vadd.f32 %v3517, %v3766
      %v3768 = vpop.f32.mrf.mxu0
      %v3769 = vadd.f32 %v3519, %v3768
      %3770 = vmatprep.mubr.f32.mxu0 0.0
      %v3771 = vand.u32 %v2857, 4294901760
      %v3772 = vsub.f32 %v2857, %v3771
      %3773 = vmatmul.mubr.f32.gmra.mxu0 %v3772
      %v3774 = vpop.f32.mrf.mxu0
      %v3775 = vadd.f32 %v3524, %v3774
      %v3776 = vpop.f32.mrf.mxu0
      %v3777 = vadd.f32 %v3526, %v3776
      %3778 = vmatprep.mubr.f32.mxu0 0.0
      %v3779 = vand.u32 %v2858, 4294901760
      %v3780 = vsub.f32 %v2858, %v3779
      %3781 = vmatmul.mubr.f32.gmra.mxu0 %v3780
      %v3782 = vpop.f32.mrf.mxu0
      %v3783 = vadd.f32 %v3531, %v3782
      %v3784 = vpop.f32.mrf.mxu0
      %v3785 = vadd.f32 %v3533, %v3784
      %3786 = vmatprep.mubr.f32.mxu0 0.0
      %v3787 = vand.u32 %v2859, 4294901760
      %v3788 = vsub.f32 %v2859, %v3787
      %3789 = vmatmul.mubr.f32.gmra.mxu0 %v3788
      %v3790 = vpop.f32.mrf.mxu0
      %v3791 = vadd.f32 %v3538, %v3790
      %v3792 = vpop.f32.mrf.mxu0
      %v3793 = vadd.f32 %v3540, %v3792
      %3794 = vmatprep.mubr.f32.mxu0 0.0
      %v3795 = vand.u32 %v2860, 4294901760
      %v3796 = vsub.f32 %v2860, %v3795
      %3797 = vmatmul.mubr.f32.gmra.mxu0 %v3796
      %v3798 = vpop.f32.mrf.mxu0
      %v3799 = vadd.f32 %v3545, %v3798
      %v3800 = vpop.f32.mrf.mxu0
      %v3801 = vadd.f32 %v3547, %v3800
      %3802 = vmatprep.mubr.f32.mxu0 0.0
      %v3803 = vand.u32 %v2861, 4294901760
      %v3804 = vsub.f32 %v2861, %v3803
      %3805 = vmatmul.mubr.f32.gmra.mxu0 %v3804
      %v3806 = vpop.f32.mrf.mxu0
      %v3807 = vadd.f32 %v3552, %v3806
      %v3808 = vpop.f32.mrf.mxu0
      %v3809 = vadd.f32 %v3554, %v3808
      %3810 = vmatprep.mubr.f32.mxu0 0.0
      %v3811 = vand.u32 %v2862, 4294901760
      %v3812 = vsub.f32 %v2862, %v3811
      %3813 = vmatmul.mubr.f32.gmra.mxu0 %v3812
      %v3814 = vpop.f32.mrf.mxu0
      %v3815 = vadd.f32 %v3559, %v3814
      %v3816 = vpop.f32.mrf.mxu0
      %v3817 = vadd.f32 %v3561, %v3816
      %3818 = vmatprep.mubr.f32.mxu0 0.0
      %v3819 = vand.u32 %v2863, 4294901760
      %v3820 = vsub.f32 %v2863, %v3819
      %3821 = vmatmul.mubr.f32.gmra.mxu0 %v3820
      %v3822 = vpop.f32.mrf.mxu0
      %v3823 = vadd.f32 %v3566, %v3822
      %v3824 = vpop.f32.mrf.mxu0
      %v3825 = vadd.f32 %v3568, %v3824
      %3826 = vdwg.mxu0
      %v3827 = vand.u32 %v2846, 4294901760
      %3828 = vmatprep.subr.mxu0 %v3827
      %v3829 = vand.u32 %v2845, 4294901760
      %3830 = vmatpush1.msra.mxu0 %v3829
      %v3831 = vand.u32 %v2843, 4294901760
      %3832 = vmatprep.subr.mxu0 %v3831
      %v3833 = vand.u32 %v2842, 4294901760
      %3834 = vmatpush1.msra.mxu0 %v3833
      %v3835 = vand.u32 %v2840, 4294901760
      %3836 = vmatprep.subr.mxu0 %v3835
      %v3837 = vand.u32 %v2839, 4294901760
      %3838 = vmatpush1.msra.mxu0 %v3837
      %v3839 = vand.u32 %v2837, 4294901760
      %3840 = vmatprep.subr.mxu0 %v3839
      %v3841 = vand.u32 %v2836, 4294901760
      %3842 = vmatpush1.msra.mxu0 %v3841
      %v3843 = vand.u32 %v2834, 4294901760
      %3844 = vmatprep.subr.mxu0 %v3843
      %v3845 = vand.u32 %v2833, 4294901760
      %3846 = vmatpush1.msra.mxu0 %v3845
      %v3847 = vand.u32 %v2831, 4294901760
      %3848 = vmatprep.subr.mxu0 %v3847
      %v3849 = vand.u32 %v2830, 4294901760
      %3850 = vmatpush1.msra.mxu0 %v3849
      %v3851 = vand.u32 %v2828, 4294901760
      %3852 = vmatprep.subr.mxu0 %v3851
      %v3853 = vand.u32 %v2827, 4294901760
      %3854 = vmatpush1.msra.mxu0 %v3853
      %v3855 = vand.u32 %v2825, 4294901760
      %3856 = vmatprep.subr.mxu0 %v3855
      %v3857 = vand.u32 %v2824, 4294901760
      %3858 = vmatpush1.msra.mxu0 %v3857
      %v3859 = vand.u32 %v2822, 4294901760
      %3860 = vmatprep.subr.mxu0 %v3859
      %v3861 = vand.u32 %v2821, 4294901760
      %3862 = vmatpush1.msra.mxu0 %v3861
      %v3863 = vand.u32 %v2819, 4294901760
      %3864 = vmatprep.subr.mxu0 %v3863
      %v3865 = vand.u32 %v2818, 4294901760
      %3866 = vmatpush1.msra.mxu0 %v3865
      %v3867 = vand.u32 %v2816, 4294901760
      %3868 = vmatprep.subr.mxu0 %v3867
      %v3869 = vand.u32 %v2815, 4294901760
      %3870 = vmatpush1.msra.mxu0 %v3869
      %v3871 = vand.u32 %v2813, 4294901760
      %3872 = vmatprep.subr.mxu0 %v3871
      %v3873 = vand.u32 %v2812, 4294901760
      %3874 = vmatpush1.msra.mxu0 %v3873
      %v3875 = vand.u32 %v2810, 4294901760
      %3876 = vmatprep.subr.mxu0 %v3875
      %v3877 = vand.u32 %v2809, 4294901760
      %3878 = vmatpush1.msra.mxu0 %v3877
      %v3879 = vand.u32 %v2807, 4294901760
      %3880 = vmatprep.subr.mxu0 %v3879
      %v3881 = vand.u32 %v2806, 4294901760
      %3882 = vmatpush1.msra.mxu0 %v3881
      %v3883 = vand.u32 %v2804, 4294901760
      %3884 = vmatprep.subr.mxu0 %v3883
      %v3885 = vand.u32 %v2803, 4294901760
      %3886 = vmatpush1.msra.mxu0 %v3885
      %v3887 = vand.u32 %v2801, 4294901760
      %3888 = vmatprep.subr.mxu0 %v3887
      %v3889 = vand.u32 %v2800, 4294901760
      %3890 = vmatpush1.msra.mxu0 %v3889
      %3891 = vmatprep.subr.mxu0 0.0
      %3892 = vmatpush2.msra.mxu0 0.0
      %3893 = vmatprep.subr.mxu0 0.0
      %3894 = vmatpush2.msra.mxu0 0.0
      %3895 = vmatprep.subr.mxu0 0.0
      %3896 = vmatpush2.msra.mxu0 0.0
      %3897 = vmatprep.subr.mxu0 0.0
      %3898 = vmatpush2.msra.mxu0 0.0
      %3899 = vmatprep.subr.mxu0 0.0
      %3900 = vmatpush2.msra.mxu0 0.0
      %3901 = vmatprep.subr.mxu0 0.0
      %3902 = vmatpush2.msra.mxu0 0.0
      %3903 = vmatprep.subr.mxu0 0.0
      %3904 = vmatpush2.msra.mxu0 0.0
      %3905 = vmatprep.subr.mxu0 0.0
      %3906 = vmatpush2.msra.mxu0 0.0
      %3907 = vmatprep.subr.mxu0 0.0
      %3908 = vmatpush2.msra.mxu0 0.0
      %3909 = vmatprep.subr.mxu0 0.0
      %3910 = vmatpush2.msra.mxu0 0.0
      %3911 = vmatprep.subr.mxu0 0.0
      %3912 = vmatpush2.msra.mxu0 0.0
      %3913 = vmatprep.subr.mxu0 0.0
      %3914 = vmatpush2.msra.mxu0 0.0
      %3915 = vmatprep.subr.mxu0 0.0
      %3916 = vmatpush2.msra.mxu0 0.0
      %3917 = vmatprep.subr.mxu0 0.0
      %3918 = vmatpush2.msra.mxu0 0.0
      %3919 = vmatprep.subr.mxu0 0.0
      %3920 = vmatpush2.msra.mxu0 0.0
      %3921 = vmatprep.subr.mxu0 0.0
      %3922 = vmatpush2.msra.mxu0 0.0
      %3923 = vmatprep.mubr.f32.mxu0 0.0
      %v3924 = vand.u32 %v2848, 4294901760
      %v3925 = vsub.f32 %v2848, %v3924
      %v3926 = vand.u32 %v3925, 4294901760
      %3927 = vmatmul.mubr.f32.gmra.mxu0 %v3926
      %v3928 = vpop.f32.mrf.mxu0
      %v3929 = vadd.f32 %v3703, %v3928
      %v3930 = vpop.f32.mrf.mxu0
      %v3931 = vadd.f32 %v3705, %v3930
      %3932 = vmatprep.mubr.f32.mxu0 0.0
      %v3933 = vand.u32 %v2849, 4294901760
      %v3934 = vsub.f32 %v2849, %v3933
      %v3935 = vand.u32 %v3934, 4294901760
      %3936 = vmatmul.mubr.f32.gmra.mxu0 %v3935
      %v3937 = vpop.f32.mrf.mxu0
      %v3938 = vadd.f32 %v3711, %v3937
      %v3939 = vpop.f32.mrf.mxu0
      %v3940 = vadd.f32 %v3713, %v3939
      %3941 = vmatprep.mubr.f32.mxu0 0.0
      %v3942 = vand.u32 %v2850, 4294901760
      %v3943 = vsub.f32 %v2850, %v3942
      %v3944 = vand.u32 %v3943, 4294901760
      %3945 = vmatmul.mubr.f32.gmra.mxu0 %v3944
      %v3946 = vpop.f32.mrf.mxu0
      %v3947 = vadd.f32 %v3719, %v3946
      %v3948 = vpop.f32.mrf.mxu0
      %v3949 = vadd.f32 %v3721, %v3948
      %3950 = vmatprep.mubr.f32.mxu0 0.0
      %v3951 = vand.u32 %v2851, 4294901760
      %v3952 = vsub.f32 %v2851, %v3951
      %v3953 = vand.u32 %v3952, 4294901760
      %3954 = vmatmul.mubr.f32.gmra.mxu0 %v3953
      %v3955 = vpop.f32.mrf.mxu0
      %v3956 = vadd.f32 %v3727, %v3955
      %v3957 = vpop.f32.mrf.mxu0
      %v3958 = vadd.f32 %v3729, %v3957
      %3959 = vmatprep.mubr.f32.mxu0 0.0
      %v3960 = vand.u32 %v2852, 4294901760
      %v3961 = vsub.f32 %v2852, %v3960
      %v3962 = vand.u32 %v3961, 4294901760
      %3963 = vmatmul.mubr.f32.gmra.mxu0 %v3962
      %v3964 = vpop.f32.mrf.mxu0
      %v3965 = vadd.f32 %v3735, %v3964
      %v3966 = vpop.f32.mrf.mxu0
      %v3967 = vadd.f32 %v3737, %v3966
      %3968 = vmatprep.mubr.f32.mxu0 0.0
      %v3969 = vand.u32 %v2853, 4294901760
      %v3970 = vsub.f32 %v2853, %v3969
      %v3971 = vand.u32 %v3970, 4294901760
      %3972 = vmatmul.mubr.f32.gmra.mxu0 %v3971
      %v3973 = vpop.f32.mrf.mxu0
      %v3974 = vadd.f32 %v3743, %v3973
      %v3975 = vpop.f32.mrf.mxu0
      %v3976 = vadd.f32 %v3745, %v3975
      %3977 = vmatprep.mubr.f32.mxu0 0.0
      %v3978 = vand.u32 %v2854, 4294901760
      %v3979 = vsub.f32 %v2854, %v3978
      %v3980 = vand.u32 %v3979, 4294901760
      %3981 = vmatmul.mubr.f32.gmra.mxu0 %v3980
      %v3982 = vpop.f32.mrf.mxu0
      %v3983 = vadd.f32 %v3751, %v3982
      %v3984 = vpop.f32.mrf.mxu0
      %v3985 = vadd.f32 %v3753, %v3984
      %3986 = vmatprep.mubr.f32.mxu0 0.0
      %v3987 = vand.u32 %v2855, 4294901760
      %v3988 = vsub.f32 %v2855, %v3987
      %v3989 = vand.u32 %v3988, 4294901760
      %3990 = vmatmul.mubr.f32.gmra.mxu0 %v3989
      %v3991 = vpop.f32.mrf.mxu0
      %v3992 = vadd.f32 %v3759, %v3991
      %v3993 = vpop.f32.mrf.mxu0
      %v3994 = vadd.f32 %v3761, %v3993
      %3995 = vmatprep.mubr.f32.mxu0 0.0
      %v3996 = vand.u32 %v2856, 4294901760
      %v3997 = vsub.f32 %v2856, %v3996
      %v3998 = vand.u32 %v3997, 4294901760
      %3999 = vmatmul.mubr.f32.gmra.mxu0 %v3998
      %v4000 = vpop.f32.mrf.mxu0
      %v4001 = vadd.f32 %v3767, %v4000
      %v4002 = vpop.f32.mrf.mxu0
      %v4003 = vadd.f32 %v3769, %v4002
      %4004 = vmatprep.mubr.f32.mxu0 0.0
      %v4005 = vand.u32 %v2857, 4294901760
      %v4006 = vsub.f32 %v2857, %v4005
      %v4007 = vand.u32 %v4006, 4294901760
      %4008 = vmatmul.mubr.f32.gmra.mxu0 %v4007
      %v4009 = vpop.f32.mrf.mxu0
      %v4010 = vadd.f32 %v3775, %v4009
      %v4011 = vpop.f32.mrf.mxu0
      %v4012 = vadd.f32 %v3777, %v4011
      %4013 = vmatprep.mubr.f32.mxu0 0.0
      %v4014 = vand.u32 %v2858, 4294901760
      %v4015 = vsub.f32 %v2858, %v4014
      %v4016 = vand.u32 %v4015, 4294901760
      %4017 = vmatmul.mubr.f32.gmra.mxu0 %v4016
      %v4018 = vpop.f32.mrf.mxu0
      %v4019 = vadd.f32 %v3783, %v4018
      %v4020 = vpop.f32.mrf.mxu0
      %v4021 = vadd.f32 %v3785, %v4020
      %4022 = vmatprep.mubr.f32.mxu0 0.0
      %v4023 = vand.u32 %v2859, 4294901760
      %v4024 = vsub.f32 %v2859, %v4023
      %v4025 = vand.u32 %v4024, 4294901760
      %4026 = vmatmul.mubr.f32.gmra.mxu0 %v4025
      %v4027 = vpop.f32.mrf.mxu0
      %v4028 = vadd.f32 %v3791, %v4027
      %v4029 = vpop.f32.mrf.mxu0
      %v4030 = vadd.f32 %v3793, %v4029
      %4031 = vmatprep.mubr.f32.mxu0 0.0
      %v4032 = vand.u32 %v2860, 4294901760
      %v4033 = vsub.f32 %v2860, %v4032
      %v4034 = vand.u32 %v4033, 4294901760
      %4035 = vmatmul.mubr.f32.gmra.mxu0 %v4034
      %v4036 = vpop.f32.mrf.mxu0
      %v4037 = vadd.f32 %v3799, %v4036
      %v4038 = vpop.f32.mrf.mxu0
      %v4039 = vadd.f32 %v3801, %v4038
      %4040 = vmatprep.mubr.f32.mxu0 0.0
      %v4041 = vand.u32 %v2861, 4294901760
      %v4042 = vsub.f32 %v2861, %v4041
      %v4043 = vand.u32 %v4042, 4294901760
      %4044 = vmatmul.mubr.f32.gmra.mxu0 %v4043
      %v4045 = vpop.f32.mrf.mxu0
      %v4046 = vadd.f32 %v3807, %v4045
      %v4047 = vpop.f32.mrf.mxu0
      %v4048 = vadd.f32 %v3809, %v4047
      %4049 = vmatprep.mubr.f32.mxu0 0.0
      %v4050 = vand.u32 %v2862, 4294901760
      %v4051 = vsub.f32 %v2862, %v4050
      %v4052 = vand.u32 %v4051, 4294901760
      %4053 = vmatmul.mubr.f32.gmra.mxu0 %v4052
      %v4054 = vpop.f32.mrf.mxu0
      %v4055 = vadd.f32 %v3815, %v4054
      %v4056 = vpop.f32.mrf.mxu0
      %v4057 = vadd.f32 %v3817, %v4056
      %4058 = vmatprep.mubr.f32.mxu0 0.0
      %v4059 = vand.u32 %v2863, 4294901760
      %v4060 = vsub.f32 %v2863, %v4059
      %v4061 = vand.u32 %v4060, 4294901760
      %4062 = vmatmul.mubr.f32.gmra.mxu0 %v4061
      %v4063 = vpop.f32.mrf.mxu0
      %v4064 = vadd.f32 %v3823, %v4063
      %v4065 = vpop.f32.mrf.mxu0
      %v4066 = vadd.f32 %v3825, %v4065
      %4067 = vdwg.mxu0
      %v4068 = vand.u32 %v2846, 4294901760
      %v4069 = vsub.f32 %v2846, %v4068
      %v4070 = vand.u32 %v4069, 4294901760
      %4071 = vmatprep.subr.mxu0 %v4070
      %v4072 = vand.u32 %v2845, 4294901760
      %v4073 = vsub.f32 %v2845, %v4072
      %v4074 = vand.u32 %v4073, 4294901760
      %4075 = vmatpush1.msra.mxu0 %v4074
      %v4076 = vand.u32 %v2843, 4294901760
      %v4077 = vsub.f32 %v2843, %v4076
      %v4078 = vand.u32 %v4077, 4294901760
      %4079 = vmatprep.subr.mxu0 %v4078
      %v4080 = vand.u32 %v2842, 4294901760
      %v4081 = vsub.f32 %v2842, %v4080
      %v4082 = vand.u32 %v4081, 4294901760
      %4083 = vmatpush1.msra.mxu0 %v4082
      %v4084 = vand.u32 %v2840, 4294901760
      %v4085 = vsub.f32 %v2840, %v4084
      %v4086 = vand.u32 %v4085, 4294901760
      %4087 = vmatprep.subr.mxu0 %v4086
      %v4088 = vand.u32 %v2839, 4294901760
      %v4089 = vsub.f32 %v2839, %v4088
      %v4090 = vand.u32 %v4089, 4294901760
      %4091 = vmatpush1.msra.mxu0 %v4090
      %v4092 = vand.u32 %v2837, 4294901760
      %v4093 = vsub.f32 %v2837, %v4092
      %v4094 = vand.u32 %v4093, 4294901760
      %4095 = vmatprep.subr.mxu0 %v4094
      %v4096 = vand.u32 %v2836, 4294901760
      %v4097 = vsub.f32 %v2836, %v4096
      %v4098 = vand.u32 %v4097, 4294901760
      %4099 = vmatpush1.msra.mxu0 %v4098
      %v4100 = vand.u32 %v2834, 4294901760
      %v4101 = vsub.f32 %v2834, %v4100
      %v4102 = vand.u32 %v4101, 4294901760
      %4103 = vmatprep.subr.mxu0 %v4102
      %v4104 = vand.u32 %v2833, 4294901760
      %v4105 = vsub.f32 %v2833, %v4104
      %v4106 = vand.u32 %v4105, 4294901760
      %4107 = vmatpush1.msra.mxu0 %v4106
      %v4108 = vand.u32 %v2831, 4294901760
      %v4109 = vsub.f32 %v2831, %v4108
      %v4110 = vand.u32 %v4109, 4294901760
      %4111 = vmatprep.subr.mxu0 %v4110
      %v4112 = vand.u32 %v2830, 4294901760
      %v4113 = vsub.f32 %v2830, %v4112
      %v4114 = vand.u32 %v4113, 4294901760
      %4115 = vmatpush1.msra.mxu0 %v4114
      %v4116 = vand.u32 %v2828, 4294901760
      %v4117 = vsub.f32 %v2828, %v4116
      %v4118 = vand.u32 %v4117, 4294901760
      %4119 = vmatprep.subr.mxu0 %v4118
      %v4120 = vand.u32 %v2827, 4294901760
      %v4121 = vsub.f32 %v2827, %v4120
      %v4122 = vand.u32 %v4121, 4294901760
      %4123 = vmatpush1.msra.mxu0 %v4122
      %v4124 = vand.u32 %v2825, 4294901760
      %v4125 = vsub.f32 %v2825, %v4124
      %v4126 = vand.u32 %v4125, 4294901760
      %4127 = vmatprep.subr.mxu0 %v4126
      %v4128 = vand.u32 %v2824, 4294901760
      %v4129 = vsub.f32 %v2824, %v4128
      %v4130 = vand.u32 %v4129, 4294901760
      %4131 = vmatpush1.msra.mxu0 %v4130
      %v4132 = vand.u32 %v2822, 4294901760
      %v4133 = vsub.f32 %v2822, %v4132
      %v4134 = vand.u32 %v4133, 4294901760
      %4135 = vmatprep.subr.mxu0 %v4134
      %v4136 = vand.u32 %v2821, 4294901760
      %v4137 = vsub.f32 %v2821, %v4136
      %v4138 = vand.u32 %v4137, 4294901760
      %4139 = vmatpush1.msra.mxu0 %v4138
      %v4140 = vand.u32 %v2819, 4294901760
      %v4141 = vsub.f32 %v2819, %v4140
      %v4142 = vand.u32 %v4141, 4294901760
      %4143 = vmatprep.subr.mxu0 %v4142
      %v4144 = vand.u32 %v2818, 4294901760
      %v4145 = vsub.f32 %v2818, %v4144
      %v4146 = vand.u32 %v4145, 4294901760
      %4147 = vmatpush1.msra.mxu0 %v4146
      %v4148 = vand.u32 %v2816, 4294901760
      %v4149 = vsub.f32 %v2816, %v4148
      %v4150 = vand.u32 %v4149, 4294901760
      %4151 = vmatprep.subr.mxu0 %v4150
      %v4152 = vand.u32 %v2815, 4294901760
      %v4153 = vsub.f32 %v2815, %v4152
      %v4154 = vand.u32 %v4153, 4294901760
      %4155 = vmatpush1.msra.mxu0 %v4154
      %v4156 = vand.u32 %v2813, 4294901760
      %v4157 = vsub.f32 %v2813, %v4156
      %v4158 = vand.u32 %v4157, 4294901760
      %4159 = vmatprep.subr.mxu0 %v4158
      %v4160 = vand.u32 %v2812, 4294901760
      %v4161 = vsub.f32 %v2812, %v4160
      %v4162 = vand.u32 %v4161, 4294901760
      %4163 = vmatpush1.msra.mxu0 %v4162
      %v4164 = vand.u32 %v2810, 4294901760
      %v4165 = vsub.f32 %v2810, %v4164
      %v4166 = vand.u32 %v4165, 4294901760
      %4167 = vmatprep.subr.mxu0 %v4166
      %v4168 = vand.u32 %v2809, 4294901760
      %v4169 = vsub.f32 %v2809, %v4168
      %v4170 = vand.u32 %v4169, 4294901760
      %4171 = vmatpush1.msra.mxu0 %v4170
      %v4172 = vand.u32 %v2807, 4294901760
      %v4173 = vsub.f32 %v2807, %v4172
      %v4174 = vand.u32 %v4173, 4294901760
      %4175 = vmatprep.subr.mxu0 %v4174
      %v4176 = vand.u32 %v2806, 4294901760
      %v4177 = vsub.f32 %v2806, %v4176
      %v4178 = vand.u32 %v4177, 4294901760
      %4179 = vmatpush1.msra.mxu0 %v4178
      %v4180 = vand.u32 %v2804, 4294901760
      %v4181 = vsub.f32 %v2804, %v4180
      %v4182 = vand.u32 %v4181, 4294901760
      %4183 = vmatprep.subr.mxu0 %v4182
      %v4184 = vand.u32 %v2803, 4294901760
      %v4185 = vsub.f32 %v2803, %v4184
      %v4186 = vand.u32 %v4185, 4294901760
      %4187 = vmatpush1.msra.mxu0 %v4186
      %v4188 = vand.u32 %v2801, 4294901760
      %v4189 = vsub.f32 %v2801, %v4188
      %v4190 = vand.u32 %v4189, 4294901760
      %4191 = vmatprep.subr.mxu0 %v4190
      %v4192 = vand.u32 %v2800, 4294901760
      %v4193 = vsub.f32 %v2800, %v4192
      %v4194 = vand.u32 %v4193, 4294901760
      %4195 = vmatpush1.msra.mxu0 %v4194
      %4196 = vmatprep.subr.mxu0 0.0
      %4197 = vmatpush2.msra.mxu0 0.0
      %4198 = vmatprep.subr.mxu0 0.0
      %4199 = vmatpush2.msra.mxu0 0.0
      %4200 = vmatprep.subr.mxu0 0.0
      %4201 = vmatpush2.msra.mxu0 0.0
      %4202 = vmatprep.subr.mxu0 0.0
      %4203 = vmatpush2.msra.mxu0 0.0
      %4204 = vmatprep.subr.mxu0 0.0
      %4205 = vmatpush2.msra.mxu0 0.0
      %4206 = vmatprep.subr.mxu0 0.0
      %4207 = vmatpush2.msra.mxu0 0.0
      %4208 = vmatprep.subr.mxu0 0.0
      %4209 = vmatpush2.msra.mxu0 0.0
      %4210 = vmatprep.subr.mxu0 0.0
      %4211 = vmatpush2.msra.mxu0 0.0
      %4212 = vmatprep.subr.mxu0 0.0
      %4213 = vmatpush2.msra.mxu0 0.0
      %4214 = vmatprep.subr.mxu0 0.0
      %4215 = vmatpush2.msra.mxu0 0.0
      %4216 = vmatprep.subr.mxu0 0.0
      %4217 = vmatpush2.msra.mxu0 0.0
      %4218 = vmatprep.subr.mxu0 0.0
      %4219 = vmatpush2.msra.mxu0 0.0
      %4220 = vmatprep.subr.mxu0 0.0
      %4221 = vmatpush2.msra.mxu0 0.0
      %4222 = vmatprep.subr.mxu0 0.0
      %4223 = vmatpush2.msra.mxu0 0.0
      %4224 = vmatprep.subr.mxu0 0.0
      %4225 = vmatpush2.msra.mxu0 0.0
      %4226 = vmatprep.subr.mxu0 0.0
      %4227 = vmatpush2.msra.mxu0 0.0
      %4228 = vmatprep.mubr.f32.mxu0 0.0
      %v4229 = vand.u32 %v2848, 4294901760
      %4230 = vmatmul.mubr.f32.gmra.mxu0 %v4229
      %v4231 = vpop.f32.mrf.mxu0
      %v4232 = vadd.f32 %v3929, %v4231
      %v4233 = vpop.f32.mrf.mxu0
      %v4234 = vadd.f32 %v3931, %v4233
      %4235 = vmatprep.mubr.f32.mxu0 0.0
      %v4236 = vand.u32 %v2849, 4294901760
      %4237 = vmatmul.mubr.f32.gmra.mxu0 %v4236
      %v4238 = vpop.f32.mrf.mxu0
      %v4239 = vadd.f32 %v3938, %v4238
      %v4240 = vpop.f32.mrf.mxu0
      %v4241 = vadd.f32 %v3940, %v4240
      %4242 = vmatprep.mubr.f32.mxu0 0.0
      %v4243 = vand.u32 %v2850, 4294901760
      %4244 = vmatmul.mubr.f32.gmra.mxu0 %v4243
      %v4245 = vpop.f32.mrf.mxu0
      %v4246 = vadd.f32 %v3947, %v4245
      %v4247 = vpop.f32.mrf.mxu0
      %v4248 = vadd.f32 %v3949, %v4247
      %4249 = vmatprep.mubr.f32.mxu0 0.0
      %v4250 = vand.u32 %v2851, 4294901760
      %4251 = vmatmul.mubr.f32.gmra.mxu0 %v4250
      %v4252 = vpop.f32.mrf.mxu0
      %v4253 = vadd.f32 %v3956, %v4252
      %v4254 = vpop.f32.mrf.mxu0
      %v4255 = vadd.f32 %v3958, %v4254
      %4256 = vmatprep.mubr.f32.mxu0 0.0
      %v4257 = vand.u32 %v2852, 4294901760
      %4258 = vmatmul.mubr.f32.gmra.mxu0 %v4257
      %v4259 = vpop.f32.mrf.mxu0
      %v4260 = vadd.f32 %v3965, %v4259
      %v4261 = vpop.f32.mrf.mxu0
      %v4262 = vadd.f32 %v3967, %v4261
      %4263 = vmatprep.mubr.f32.mxu0 0.0
      %v4264 = vand.u32 %v2853, 4294901760
      %4265 = vmatmul.mubr.f32.gmra.mxu0 %v4264
      %v4266 = vpop.f32.mrf.mxu0
      %v4267 = vadd.f32 %v3974, %v4266
      %v4268 = vpop.f32.mrf.mxu0
      %v4269 = vadd.f32 %v3976, %v4268
      %4270 = vmatprep.mubr.f32.mxu0 0.0
      %v4271 = vand.u32 %v2854, 4294901760
      %4272 = vmatmul.mubr.f32.gmra.mxu0 %v4271
      %v4273 = vpop.f32.mrf.mxu0
      %v4274 = vadd.f32 %v3983, %v4273
      %v4275 = vpop.f32.mrf.mxu0
      %v4276 = vadd.f32 %v3985, %v4275
      %4277 = vmatprep.mubr.f32.mxu0 0.0
      %v4278 = vand.u32 %v2855, 4294901760
      %4279 = vmatmul.mubr.f32.gmra.mxu0 %v4278
      %v4280 = vpop.f32.mrf.mxu0
      %v4281 = vadd.f32 %v3992, %v4280
      %v4282 = vpop.f32.mrf.mxu0
      %v4283 = vadd.f32 %v3994, %v4282
      %4284 = vmatprep.mubr.f32.mxu0 0.0
      %v4285 = vand.u32 %v2856, 4294901760
      %4286 = vmatmul.mubr.f32.gmra.mxu0 %v4285
      %v4287 = vpop.f32.mrf.mxu0
      %v4288 = vadd.f32 %v4001, %v4287
      %v4289 = vpop.f32.mrf.mxu0
      %v4290 = vadd.f32 %v4003, %v4289
      %4291 = vmatprep.mubr.f32.mxu0 0.0
      %v4292 = vand.u32 %v2857, 4294901760
      %4293 = vmatmul.mubr.f32.gmra.mxu0 %v4292
      %v4294 = vpop.f32.mrf.mxu0
      %v4295 = vadd.f32 %v4010, %v4294
      %v4296 = vpop.f32.mrf.mxu0
      %v4297 = vadd.f32 %v4012, %v4296
      %4298 = vmatprep.mubr.f32.mxu0 0.0
      %v4299 = vand.u32 %v2858, 4294901760
      %4300 = vmatmul.mubr.f32.gmra.mxu0 %v4299
      %v4301 = vpop.f32.mrf.mxu0
      %v4302 = vadd.f32 %v4019, %v4301
      %v4303 = vpop.f32.mrf.mxu0
      %v4304 = vadd.f32 %v4021, %v4303
      %4305 = vmatprep.mubr.f32.mxu0 0.0
      %v4306 = vand.u32 %v2859, 4294901760
      %4307 = vmatmul.mubr.f32.gmra.mxu0 %v4306
      %v4308 = vpop.f32.mrf.mxu0
      %v4309 = vadd.f32 %v4028, %v4308
      %v4310 = vpop.f32.mrf.mxu0
      %v4311 = vadd.f32 %v4030, %v4310
      %4312 = vmatprep.mubr.f32.mxu0 0.0
      %v4313 = vand.u32 %v2860, 4294901760
      %4314 = vmatmul.mubr.f32.gmra.mxu0 %v4313
      %v4315 = vpop.f32.mrf.mxu0
      %v4316 = vadd.f32 %v4037, %v4315
      %v4317 = vpop.f32.mrf.mxu0
      %v4318 = vadd.f32 %v4039, %v4317
      %4319 = vmatprep.mubr.f32.mxu0 0.0
      %v4320 = vand.u32 %v2861, 4294901760
      %4321 = vmatmul.mubr.f32.gmra.mxu0 %v4320
      %v4322 = vpop.f32.mrf.mxu0
      %v4323 = vadd.f32 %v4046, %v4322
      %v4324 = vpop.f32.mrf.mxu0
      %v4325 = vadd.f32 %v4048, %v4324
      %4326 = vmatprep.mubr.f32.mxu0 0.0
      %v4327 = vand.u32 %v2862, 4294901760
      %4328 = vmatmul.mubr.f32.gmra.mxu0 %v4327
      %v4329 = vpop.f32.mrf.mxu0
      %v4330 = vadd.f32 %v4055, %v4329
      %v4331 = vpop.f32.mrf.mxu0
      %v4332 = vadd.f32 %v4057, %v4331
      %4333 = vmatprep.mubr.f32.mxu0 0.0
      %v4334 = vand.u32 %v2863, 4294901760
      %4335 = vmatmul.mubr.f32.gmra.mxu0 %v4334
      %v4336 = vpop.f32.mrf.mxu0
      %v4337 = vadd.f32 %v4064, %v4336
      %v4338 = vpop.f32.mrf.mxu0
      %v4339 = vadd.f32 %v4066, %v4338
      %4340 = vdwg.mxu0
      %v4341 = vand.u32 %v2846, 4294901760
      %4342 = vmatprep.subr.mxu0 %v4341
      %v4343 = vand.u32 %v2845, 4294901760
      %4344 = vmatpush1.msra.mxu0 %v4343
      %v4345 = vand.u32 %v2843, 4294901760
      %4346 = vmatprep.subr.mxu0 %v4345
      %v4347 = vand.u32 %v2842, 4294901760
      %4348 = vmatpush1.msra.mxu0 %v4347
      %v4349 = vand.u32 %v2840, 4294901760
      %4350 = vmatprep.subr.mxu0 %v4349
      %v4351 = vand.u32 %v2839, 4294901760
      %4352 = vmatpush1.msra.mxu0 %v4351
      %v4353 = vand.u32 %v2837, 4294901760
      %4354 = vmatprep.subr.mxu0 %v4353
      %v4355 = vand.u32 %v2836, 4294901760
      %4356 = vmatpush1.msra.mxu0 %v4355
      %v4357 = vand.u32 %v2834, 4294901760
      %4358 = vmatprep.subr.mxu0 %v4357
      %v4359 = vand.u32 %v2833, 4294901760
      %4360 = vmatpush1.msra.mxu0 %v4359
      %v4361 = vand.u32 %v2831, 4294901760
      %4362 = vmatprep.subr.mxu0 %v4361
      %v4363 = vand.u32 %v2830, 4294901760
      %4364 = vmatpush1.msra.mxu0 %v4363
      %v4365 = vand.u32 %v2828, 4294901760
      %4366 = vmatprep.subr.mxu0 %v4365
      %v4367 = vand.u32 %v2827, 4294901760
      %4368 = vmatpush1.msra.mxu0 %v4367
      %v4369 = vand.u32 %v2825, 4294901760
      %4370 = vmatprep.subr.mxu0 %v4369
      %v4371 = vand.u32 %v2824, 4294901760
      %4372 = vmatpush1.msra.mxu0 %v4371
      %v4373 = vand.u32 %v2822, 4294901760
      %4374 = vmatprep.subr.mxu0 %v4373
      %v4375 = vand.u32 %v2821, 4294901760
      %4376 = vmatpush1.msra.mxu0 %v4375
      %v4377 = vand.u32 %v2819, 4294901760
      %4378 = vmatprep.subr.mxu0 %v4377
      %v4379 = vand.u32 %v2818, 4294901760
      %4380 = vmatpush1.msra.mxu0 %v4379
      %v4381 = vand.u32 %v2816, 4294901760
      %4382 = vmatprep.subr.mxu0 %v4381
      %v4383 = vand.u32 %v2815, 4294901760
      %4384 = vmatpush1.msra.mxu0 %v4383
      %v4385 = vand.u32 %v2813, 4294901760
      %4386 = vmatprep.subr.mxu0 %v4385
      %v4387 = vand.u32 %v2812, 4294901760
      %4388 = vmatpush1.msra.mxu0 %v4387
      %v4389 = vand.u32 %v2810, 4294901760
      %4390 = vmatprep.subr.mxu0 %v4389
      %v4391 = vand.u32 %v2809, 4294901760
      %4392 = vmatpush1.msra.mxu0 %v4391
      %v4393 = vand.u32 %v2807, 4294901760
      %4394 = vmatprep.subr.mxu0 %v4393
      %v4395 = vand.u32 %v2806, 4294901760
      %4396 = vmatpush1.msra.mxu0 %v4395
      %v4397 = vand.u32 %v2804, 4294901760
      %4398 = vmatprep.subr.mxu0 %v4397
      %v4399 = vand.u32 %v2803, 4294901760
      %4400 = vmatpush1.msra.mxu0 %v4399
      %v4401 = vand.u32 %v2801, 4294901760
      %4402 = vmatprep.subr.mxu0 %v4401
      %v4403 = vand.u32 %v2800, 4294901760
      %4404 = vmatpush1.msra.mxu0 %v4403
      %4405 = vmatprep.subr.mxu0 0.0
      %4406 = vmatpush2.msra.mxu0 0.0
      %4407 = vmatprep.subr.mxu0 0.0
      %4408 = vmatpush2.msra.mxu0 0.0
      %4409 = vmatprep.subr.mxu0 0.0
      %4410 = vmatpush2.msra.mxu0 0.0
      %4411 = vmatprep.subr.mxu0 0.0
      %4412 = vmatpush2.msra.mxu0 0.0
      %4413 = vmatprep.subr.mxu0 0.0
      %4414 = vmatpush2.msra.mxu0 0.0
      %4415 = vmatprep.subr.mxu0 0.0
      %4416 = vmatpush2.msra.mxu0 0.0
      %4417 = vmatprep.subr.mxu0 0.0
      %4418 = vmatpush2.msra.mxu0 0.0
      %4419 = vmatprep.subr.mxu0 0.0
      %4420 = vmatpush2.msra.mxu0 0.0
      %4421 = vmatprep.subr.mxu0 0.0
      %4422 = vmatpush2.msra.mxu0 0.0
      %4423 = vmatprep.subr.mxu0 0.0
      %4424 = vmatpush2.msra.mxu0 0.0
      %4425 = vmatprep.subr.mxu0 0.0
      %4426 = vmatpush2.msra.mxu0 0.0
      %4427 = vmatprep.subr.mxu0 0.0
      %4428 = vmatpush2.msra.mxu0 0.0
      %4429 = vmatprep.subr.mxu0 0.0
      %4430 = vmatpush2.msra.mxu0 0.0
      %4431 = vmatprep.subr.mxu0 0.0
      %4432 = vmatpush2.msra.mxu0 0.0
      %4433 = vmatprep.subr.mxu0 0.0
      %4434 = vmatpush2.msra.mxu0 0.0
      %4435 = vmatprep.subr.mxu0 0.0
      %4436 = vmatpush2.msra.mxu0 0.0
      %4437 = vmatprep.mubr.f32.mxu0 0.0
      %v4438 = vand.u32 %v2848, 4294901760
      %4439 = vmatmul.mubr.f32.gmra.mxu0 %v4438
      %v4440 = vpop.f32.mrf.mxu0
      %v4441 = vadd.f32 %v4232, %v4440
      %v4442 = vpop.f32.mrf.mxu0
      %v4443 = vadd.f32 %v4234, %v4442
      %4444 = vmatprep.mubr.f32.mxu0 0.0
      %v4445 = vand.u32 %v2849, 4294901760
      %4446 = vmatmul.mubr.f32.gmra.mxu0 %v4445
      %v4447 = vpop.f32.mrf.mxu0
      %v4448 = vadd.f32 %v4239, %v4447
      %v4449 = vpop.f32.mrf.mxu0
      %v4450 = vadd.f32 %v4241, %v4449
      %4451 = vmatprep.mubr.f32.mxu0 0.0
      %v4452 = vand.u32 %v2850, 4294901760
      %4453 = vmatmul.mubr.f32.gmra.mxu0 %v4452
      %v4454 = vpop.f32.mrf.mxu0
      %v4455 = vadd.f32 %v4246, %v4454
      %v4456 = vpop.f32.mrf.mxu0
      %v4457 = vadd.f32 %v4248, %v4456
      %4458 = vmatprep.mubr.f32.mxu0 0.0
      %v4459 = vand.u32 %v2851, 4294901760
      %4460 = vmatmul.mubr.f32.gmra.mxu0 %v4459
      %v4461 = vpop.f32.mrf.mxu0
      %v4462 = vadd.f32 %v4253, %v4461
      %v4463 = vpop.f32.mrf.mxu0
      %v4464 = vadd.f32 %v4255, %v4463
      %4465 = vmatprep.mubr.f32.mxu0 0.0
      %v4466 = vand.u32 %v2852, 4294901760
      %4467 = vmatmul.mubr.f32.gmra.mxu0 %v4466
      %v4468 = vpop.f32.mrf.mxu0
      %v4469 = vadd.f32 %v4260, %v4468
      %v4470 = vpop.f32.mrf.mxu0
      %v4471 = vadd.f32 %v4262, %v4470
      %4472 = vmatprep.mubr.f32.mxu0 0.0
      %v4473 = vand.u32 %v2853, 4294901760
      %4474 = vmatmul.mubr.f32.gmra.mxu0 %v4473
      %v4475 = vpop.f32.mrf.mxu0
      %v4476 = vadd.f32 %v4267, %v4475
      %v4477 = vpop.f32.mrf.mxu0
      %v4478 = vadd.f32 %v4269, %v4477
      %4479 = vmatprep.mubr.f32.mxu0 0.0
      %v4480 = vand.u32 %v2854, 4294901760
      %4481 = vmatmul.mubr.f32.gmra.mxu0 %v4480
      %v4482 = vpop.f32.mrf.mxu0
      %v4483 = vadd.f32 %v4274, %v4482
      %v4484 = vpop.f32.mrf.mxu0
      %v4485 = vadd.f32 %v4276, %v4484
      %4486 = vmatprep.mubr.f32.mxu0 0.0
      %v4487 = vand.u32 %v2855, 4294901760
      %4488 = vmatmul.mubr.f32.gmra.mxu0 %v4487
      %v4489 = vpop.f32.mrf.mxu0
      %v4490 = vadd.f32 %v4281, %v4489
      %v4491 = vpop.f32.mrf.mxu0
      %v4492 = vadd.f32 %v4283, %v4491
      %4493 = vmatprep.mubr.f32.mxu0 0.0
      %v4494 = vand.u32 %v2856, 4294901760
      %4495 = vmatmul.mubr.f32.gmra.mxu0 %v4494
      %v4496 = vpop.f32.mrf.mxu0
      %v4497 = vadd.f32 %v4288, %v4496
      %v4498 = vpop.f32.mrf.mxu0
      %v4499 = vadd.f32 %v4290, %v4498
      %4500 = vmatprep.mubr.f32.mxu0 0.0
      %v4501 = vand.u32 %v2857, 4294901760
      %4502 = vmatmul.mubr.f32.gmra.mxu0 %v4501
      %v4503 = vpop.f32.mrf.mxu0
      %v4504 = vadd.f32 %v4295, %v4503
      %v4505 = vpop.f32.mrf.mxu0
      %v4506 = vadd.f32 %v4297, %v4505
      %4507 = vmatprep.mubr.f32.mxu0 0.0
      %v4508 = vand.u32 %v2858, 4294901760
      %4509 = vmatmul.mubr.f32.gmra.mxu0 %v4508
      %v4510 = vpop.f32.mrf.mxu0
      %v4511 = vadd.f32 %v4302, %v4510
      %v4512 = vpop.f32.mrf.mxu0
      %v4513 = vadd.f32 %v4304, %v4512
      %4514 = vmatprep.mubr.f32.mxu0 0.0
      %v4515 = vand.u32 %v2859, 4294901760
      %4516 = vmatmul.mubr.f32.gmra.mxu0 %v4515
      %v4517 = vpop.f32.mrf.mxu0
      %v4518 = vadd.f32 %v4309, %v4517
      %v4519 = vpop.f32.mrf.mxu0
      %v4520 = vadd.f32 %v4311, %v4519
      %4521 = vmatprep.mubr.f32.mxu0 0.0
      %v4522 = vand.u32 %v2860, 4294901760
      %4523 = vmatmul.mubr.f32.gmra.mxu0 %v4522
      %v4524 = vpop.f32.mrf.mxu0
      %v4525 = vadd.f32 %v4316, %v4524
      %v4526 = vpop.f32.mrf.mxu0
      %v4527 = vadd.f32 %v4318, %v4526
      %4528 = vmatprep.mubr.f32.mxu0 0.0
      %v4529 = vand.u32 %v2861, 4294901760
      %4530 = vmatmul.mubr.f32.gmra.mxu0 %v4529
      %v4531 = vpop.f32.mrf.mxu0
      %v4532 = vadd.f32 %v4323, %v4531
      %v4533 = vpop.f32.mrf.mxu0
      %v4534 = vadd.f32 %v4325, %v4533
      %4535 = vmatprep.mubr.f32.mxu0 0.0
      %v4536 = vand.u32 %v2862, 4294901760
      %4537 = vmatmul.mubr.f32.gmra.mxu0 %v4536
      %v4538 = vpop.f32.mrf.mxu0
      %v4539 = vadd.f32 %v4330, %v4538
      %v4540 = vpop.f32.mrf.mxu0
      %v4541 = vadd.f32 %v4332, %v4540
      %4542 = vmatprep.mubr.f32.mxu0 0.0
      %v4543 = vand.u32 %v2863, 4294901760
      %4544 = vmatmul.mubr.f32.gmra.mxu0 %v4543
      %v4545 = vpop.f32.mrf.mxu0
      %v4546 = vadd.f32 %v4337, %v4545
      %v4547 = vpop.f32.mrf.mxu0
      %v4548 = vadd.f32 %v4339, %v4547
      %4549 = vdwg.mxu0
      %4550 = vmatprep.subr.mxu0 0.0
      %v4551 = vand.u32 %v2847, 4294901760
      %4552 = vmatpush1.msra.mxu0 %v4551
      %4553 = vmatprep.subr.mxu0 0.0
      %v4554 = vand.u32 %v2844, 4294901760
      %4555 = vmatpush1.msra.mxu0 %v4554
      %4556 = vmatprep.subr.mxu0 0.0
      %v4557 = vand.u32 %v2841, 4294901760
      %4558 = vmatpush1.msra.mxu0 %v4557
      %4559 = vmatprep.subr.mxu0 0.0
      %v4560 = vand.u32 %v2838, 4294901760
      %4561 = vmatpush1.msra.mxu0 %v4560
      %4562 = vmatprep.subr.mxu0 0.0
      %v4563 = vand.u32 %v2835, 4294901760
      %4564 = vmatpush1.msra.mxu0 %v4563
      %4565 = vmatprep.subr.mxu0 0.0
      %v4566 = vand.u32 %v2832, 4294901760
      %4567 = vmatpush1.msra.mxu0 %v4566
      %4568 = vmatprep.subr.mxu0 0.0
      %v4569 = vand.u32 %v2829, 4294901760
      %4570 = vmatpush1.msra.mxu0 %v4569
      %4571 = vmatprep.subr.mxu0 0.0
      %v4572 = vand.u32 %v2826, 4294901760
      %4573 = vmatpush1.msra.mxu0 %v4572
      %4574 = vmatprep.subr.mxu0 0.0
      %v4575 = vand.u32 %v2823, 4294901760
      %4576 = vmatpush1.msra.mxu0 %v4575
      %4577 = vmatprep.subr.mxu0 0.0
      %v4578 = vand.u32 %v2820, 4294901760
      %4579 = vmatpush1.msra.mxu0 %v4578
      %4580 = vmatprep.subr.mxu0 0.0
      %v4581 = vand.u32 %v2817, 4294901760
      %4582 = vmatpush1.msra.mxu0 %v4581
      %4583 = vmatprep.subr.mxu0 0.0
      %v4584 = vand.u32 %v2814, 4294901760
      %4585 = vmatpush1.msra.mxu0 %v4584
      %4586 = vmatprep.subr.mxu0 0.0
      %v4587 = vand.u32 %v2811, 4294901760
      %4588 = vmatpush1.msra.mxu0 %v4587
      %4589 = vmatprep.subr.mxu0 0.0
      %v4590 = vand.u32 %v2808, 4294901760
      %4591 = vmatpush1.msra.mxu0 %v4590
      %4592 = vmatprep.subr.mxu0 0.0
      %v4593 = vand.u32 %v2805, 4294901760
      %4594 = vmatpush1.msra.mxu0 %v4593
      %4595 = vmatprep.subr.mxu0 0.0
      %v4596 = vand.u32 %v2802, 4294901760
      %4597 = vmatpush1.msra.mxu0 %v4596
      %4598 = vmatprep.subr.mxu0 0.0
      %4599 = vmatpush2.msra.mxu0 0.0
      %4600 = vmatprep.subr.mxu0 0.0
      %4601 = vmatpush2.msra.mxu0 0.0
      %4602 = vmatprep.subr.mxu0 0.0
      %4603 = vmatpush2.msra.mxu0 0.0
      %4604 = vmatprep.subr.mxu0 0.0
      %4605 = vmatpush2.msra.mxu0 0.0
      %4606 = vmatprep.subr.mxu0 0.0
      %4607 = vmatpush2.msra.mxu0 0.0
      %4608 = vmatprep.subr.mxu0 0.0
      %4609 = vmatpush2.msra.mxu0 0.0
      %4610 = vmatprep.subr.mxu0 0.0
      %4611 = vmatpush2.msra.mxu0 0.0
      %4612 = vmatprep.subr.mxu0 0.0
      %4613 = vmatpush2.msra.mxu0 0.0
      %4614 = vmatprep.subr.mxu0 0.0
      %4615 = vmatpush2.msra.mxu0 0.0
      %4616 = vmatprep.subr.mxu0 0.0
      %4617 = vmatpush2.msra.mxu0 0.0
      %4618 = vmatprep.subr.mxu0 0.0
      %4619 = vmatpush2.msra.mxu0 0.0
      %4620 = vmatprep.subr.mxu0 0.0
      %4621 = vmatpush2.msra.mxu0 0.0
      %4622 = vmatprep.subr.mxu0 0.0
      %4623 = vmatpush2.msra.mxu0 0.0
      %4624 = vmatprep.subr.mxu0 0.0
      %4625 = vmatpush2.msra.mxu0 0.0
      %4626 = vmatprep.subr.mxu0 0.0
      %4627 = vmatpush2.msra.mxu0 0.0
      %4628 = vmatprep.subr.mxu0 0.0
      %4629 = vmatpush2.msra.mxu0 0.0
      %4630 = vmatprep.mubr.f32.mxu0 0.0
      %v4631 = vand.u32 %v2848, 4294901760
      %v4632 = vsub.f32 %v2848, %v4631
      %v4633 = vand.u32 %v4632, 4294901760
      %v4634 = vsub.f32 %v4632, %v4633
      %v4635 = vand.u32 %v4634, 4294901760
      %4636 = vmatmul.mubr.f32.gmra.mxu0 %v4635
      %v4637 = vpop.f32.mrf.mxu0
      %v4638 = vadd.f32 %v2883, %v4637
      %v4639 = vpop.f32.mrf.mxu0
      %4640 = vmatprep.mubr.f32.mxu0 0.0
      %v4641 = vand.u32 %v2849, 4294901760
      %v4642 = vsub.f32 %v2849, %v4641
      %v4643 = vand.u32 %v4642, 4294901760
      %v4644 = vsub.f32 %v4642, %v4643
      %v4645 = vand.u32 %v4644, 4294901760
      %4646 = vmatmul.mubr.f32.gmra.mxu0 %v4645
      %v4647 = vpop.f32.mrf.mxu0
      %v4648 = vadd.f32 %v2888, %v4647
      %v4649 = vpop.f32.mrf.mxu0
      %4650 = vmatprep.mubr.f32.mxu0 0.0
      %v4651 = vand.u32 %v2850, 4294901760
      %v4652 = vsub.f32 %v2850, %v4651
      %v4653 = vand.u32 %v4652, 4294901760
      %v4654 = vsub.f32 %v4652, %v4653
      %v4655 = vand.u32 %v4654, 4294901760
      %4656 = vmatmul.mubr.f32.gmra.mxu0 %v4655
      %v4657 = vpop.f32.mrf.mxu0
      %v4658 = vadd.f32 %v2893, %v4657
      %v4659 = vpop.f32.mrf.mxu0
      %4660 = vmatprep.mubr.f32.mxu0 0.0
      %v4661 = vand.u32 %v2851, 4294901760
      %v4662 = vsub.f32 %v2851, %v4661
      %v4663 = vand.u32 %v4662, 4294901760
      %v4664 = vsub.f32 %v4662, %v4663
      %v4665 = vand.u32 %v4664, 4294901760
      %4666 = vmatmul.mubr.f32.gmra.mxu0 %v4665
      %v4667 = vpop.f32.mrf.mxu0
      %v4668 = vadd.f32 %v2898, %v4667
      %v4669 = vpop.f32.mrf.mxu0
      %4670 = vmatprep.mubr.f32.mxu0 0.0
      %v4671 = vand.u32 %v2852, 4294901760
      %v4672 = vsub.f32 %v2852, %v4671
      %v4673 = vand.u32 %v4672, 4294901760
      %v4674 = vsub.f32 %v4672, %v4673
      %v4675 = vand.u32 %v4674, 4294901760
      %4676 = vmatmul.mubr.f32.gmra.mxu0 %v4675
      %v4677 = vpop.f32.mrf.mxu0
      %v4678 = vadd.f32 %v2903, %v4677
      %v4679 = vpop.f32.mrf.mxu0
      %4680 = vmatprep.mubr.f32.mxu0 0.0
      %v4681 = vand.u32 %v2853, 4294901760
      %v4682 = vsub.f32 %v2853, %v4681
      %v4683 = vand.u32 %v4682, 4294901760
      %v4684 = vsub.f32 %v4682, %v4683
      %v4685 = vand.u32 %v4684, 4294901760
      %4686 = vmatmul.mubr.f32.gmra.mxu0 %v4685
      %v4687 = vpop.f32.mrf.mxu0
      %v4688 = vadd.f32 %v2908, %v4687
      %v4689 = vpop.f32.mrf.mxu0
      %4690 = vmatprep.mubr.f32.mxu0 0.0
      %v4691 = vand.u32 %v2854, 4294901760
      %v4692 = vsub.f32 %v2854, %v4691
      %v4693 = vand.u32 %v4692, 4294901760
      %v4694 = vsub.f32 %v4692, %v4693
      %v4695 = vand.u32 %v4694, 4294901760
      %4696 = vmatmul.mubr.f32.gmra.mxu0 %v4695
      %v4697 = vpop.f32.mrf.mxu0
      %v4698 = vadd.f32 %v2913, %v4697
      %v4699 = vpop.f32.mrf.mxu0
      %4700 = vmatprep.mubr.f32.mxu0 0.0
      %v4701 = vand.u32 %v2855, 4294901760
      %v4702 = vsub.f32 %v2855, %v4701
      %v4703 = vand.u32 %v4702, 4294901760
      %v4704 = vsub.f32 %v4702, %v4703
      %v4705 = vand.u32 %v4704, 4294901760
      %4706 = vmatmul.mubr.f32.gmra.mxu0 %v4705
      %v4707 = vpop.f32.mrf.mxu0
      %v4708 = vadd.f32 %v2918, %v4707
      %v4709 = vpop.f32.mrf.mxu0
      %4710 = vmatprep.mubr.f32.mxu0 0.0
      %v4711 = vand.u32 %v2856, 4294901760
      %v4712 = vsub.f32 %v2856, %v4711
      %v4713 = vand.u32 %v4712, 4294901760
      %v4714 = vsub.f32 %v4712, %v4713
      %v4715 = vand.u32 %v4714, 4294901760
      %4716 = vmatmul.mubr.f32.gmra.mxu0 %v4715
      %v4717 = vpop.f32.mrf.mxu0
      %v4718 = vadd.f32 %v2923, %v4717
      %v4719 = vpop.f32.mrf.mxu0
      %4720 = vmatprep.mubr.f32.mxu0 0.0
      %v4721 = vand.u32 %v2857, 4294901760
      %v4722 = vsub.f32 %v2857, %v4721
      %v4723 = vand.u32 %v4722, 4294901760
      %v4724 = vsub.f32 %v4722, %v4723
      %v4725 = vand.u32 %v4724, 4294901760
      %4726 = vmatmul.mubr.f32.gmra.mxu0 %v4725
      %v4727 = vpop.f32.mrf.mxu0
      %v4728 = vadd.f32 %v2928, %v4727
      %v4729 = vpop.f32.mrf.mxu0
      %4730 = vmatprep.mubr.f32.mxu0 0.0
      %v4731 = vand.u32 %v2858, 4294901760
      %v4732 = vsub.f32 %v2858, %v4731
      %v4733 = vand.u32 %v4732, 4294901760
      %v4734 = vsub.f32 %v4732, %v4733
      %v4735 = vand.u32 %v4734, 4294901760
      %4736 = vmatmul.mubr.f32.gmra.mxu0 %v4735
      %v4737 = vpop.f32.mrf.mxu0
      %v4738 = vadd.f32 %v2933, %v4737
      %v4739 = vpop.f32.mrf.mxu0
      %4740 = vmatprep.mubr.f32.mxu0 0.0
      %v4741 = vand.u32 %v2859, 4294901760
      %v4742 = vsub.f32 %v2859, %v4741
      %v4743 = vand.u32 %v4742, 4294901760
      %v4744 = vsub.f32 %v4742, %v4743
      %v4745 = vand.u32 %v4744, 4294901760
      %4746 = vmatmul.mubr.f32.gmra.mxu0 %v4745
      %v4747 = vpop.f32.mrf.mxu0
      %v4748 = vadd.f32 %v2938, %v4747
      %v4749 = vpop.f32.mrf.mxu0
      %4750 = vmatprep.mubr.f32.mxu0 0.0
      %v4751 = vand.u32 %v2860, 4294901760
      %v4752 = vsub.f32 %v2860, %v4751
      %v4753 = vand.u32 %v4752, 4294901760
      %v4754 = vsub.f32 %v4752, %v4753
      %v4755 = vand.u32 %v4754, 4294901760
      %4756 = vmatmul.mubr.f32.gmra.mxu0 %v4755
      %v4757 = vpop.f32.mrf.mxu0
      %v4758 = vadd.f32 %v2943, %v4757
      %v4759 = vpop.f32.mrf.mxu0
      %4760 = vmatprep.mubr.f32.mxu0 0.0
      %v4761 = vand.u32 %v2861, 4294901760
      %v4762 = vsub.f32 %v2861, %v4761
      %v4763 = vand.u32 %v4762, 4294901760
      %v4764 = vsub.f32 %v4762, %v4763
      %v4765 = vand.u32 %v4764, 4294901760
      %4766 = vmatmul.mubr.f32.gmra.mxu0 %v4765
      %v4767 = vpop.f32.mrf.mxu0
      %v4768 = vadd.f32 %v2948, %v4767
      %v4769 = vpop.f32.mrf.mxu0
      %4770 = vmatprep.mubr.f32.mxu0 0.0
      %v4771 = vand.u32 %v2862, 4294901760
      %v4772 = vsub.f32 %v2862, %v4771
      %v4773 = vand.u32 %v4772, 4294901760
      %v4774 = vsub.f32 %v4772, %v4773
      %v4775 = vand.u32 %v4774, 4294901760
      %4776 = vmatmul.mubr.f32.gmra.mxu0 %v4775
      %v4777 = vpop.f32.mrf.mxu0
      %v4778 = vadd.f32 %v2953, %v4777
      %v4779 = vpop.f32.mrf.mxu0
      %4780 = vmatprep.mubr.f32.mxu0 0.0
      %v4781 = vand.u32 %v2863, 4294901760
      %v4782 = vsub.f32 %v2863, %v4781
      %v4783 = vand.u32 %v4782, 4294901760
      %v4784 = vsub.f32 %v4782, %v4783
      %v4785 = vand.u32 %v4784, 4294901760
      %4786 = vmatmul.mubr.f32.gmra.mxu0 %v4785
      %v4787 = vpop.f32.mrf.mxu0
      %v4788 = vadd.f32 %v2958, %v4787
      %v4789 = vpop.f32.mrf.mxu0
      %4790 = vdwg.mxu0
      %4791 = vmatprep.subr.mxu0 0.0
      %v4792 = vand.u32 %v2847, 4294901760
      %v4793 = vsub.f32 %v2847, %v4792
      %v4794 = vand.u32 %v4793, 4294901760
      %v4795 = vsub.f32 %v4793, %v4794
      %v4796 = vand.u32 %v4795, 4294901760
      %4797 = vmatpush1.msra.mxu0 %v4796
      %4798 = vmatprep.subr.mxu0 0.0
      %v4799 = vand.u32 %v2844, 4294901760
      %v4800 = vsub.f32 %v2844, %v4799
      %v4801 = vand.u32 %v4800, 4294901760
      %v4802 = vsub.f32 %v4800, %v4801
      %v4803 = vand.u32 %v4802, 4294901760
      %4804 = vmatpush1.msra.mxu0 %v4803
      %4805 = vmatprep.subr.mxu0 0.0
      %v4806 = vand.u32 %v2841, 4294901760
      %v4807 = vsub.f32 %v2841, %v4806
      %v4808 = vand.u32 %v4807, 4294901760
      %v4809 = vsub.f32 %v4807, %v4808
      %v4810 = vand.u32 %v4809, 4294901760
      %4811 = vmatpush1.msra.mxu0 %v4810
      %4812 = vmatprep.subr.mxu0 0.0
      %v4813 = vand.u32 %v2838, 4294901760
      %v4814 = vsub.f32 %v2838, %v4813
      %v4815 = vand.u32 %v4814, 4294901760
      %v4816 = vsub.f32 %v4814, %v4815
      %v4817 = vand.u32 %v4816, 4294901760
      %4818 = vmatpush1.msra.mxu0 %v4817
      %4819 = vmatprep.subr.mxu0 0.0
      %v4820 = vand.u32 %v2835, 4294901760
      %v4821 = vsub.f32 %v2835, %v4820
      %v4822 = vand.u32 %v4821, 4294901760
      %v4823 = vsub.f32 %v4821, %v4822
      %v4824 = vand.u32 %v4823, 4294901760
      %4825 = vmatpush1.msra.mxu0 %v4824
      %4826 = vmatprep.subr.mxu0 0.0
      %v4827 = vand.u32 %v2832, 4294901760
      %v4828 = vsub.f32 %v2832, %v4827
      %v4829 = vand.u32 %v4828, 4294901760
      %v4830 = vsub.f32 %v4828, %v4829
      %v4831 = vand.u32 %v4830, 4294901760
      %4832 = vmatpush1.msra.mxu0 %v4831
      %4833 = vmatprep.subr.mxu0 0.0
      %v4834 = vand.u32 %v2829, 4294901760
      %v4835 = vsub.f32 %v2829, %v4834
      %v4836 = vand.u32 %v4835, 4294901760
      %v4837 = vsub.f32 %v4835, %v4836
      %v4838 = vand.u32 %v4837, 4294901760
      %4839 = vmatpush1.msra.mxu0 %v4838
      %4840 = vmatprep.subr.mxu0 0.0
      %v4841 = vand.u32 %v2826, 4294901760
      %v4842 = vsub.f32 %v2826, %v4841
      %v4843 = vand.u32 %v4842, 4294901760
      %v4844 = vsub.f32 %v4842, %v4843
      %v4845 = vand.u32 %v4844, 4294901760
      %4846 = vmatpush1.msra.mxu0 %v4845
      %4847 = vmatprep.subr.mxu0 0.0
      %v4848 = vand.u32 %v2823, 4294901760
      %v4849 = vsub.f32 %v2823, %v4848
      %v4850 = vand.u32 %v4849, 4294901760
      %v4851 = vsub.f32 %v4849, %v4850
      %v4852 = vand.u32 %v4851, 4294901760
      %4853 = vmatpush1.msra.mxu0 %v4852
      %4854 = vmatprep.subr.mxu0 0.0
      %v4855 = vand.u32 %v2820, 4294901760
      %v4856 = vsub.f32 %v2820, %v4855
      %v4857 = vand.u32 %v4856, 4294901760
      %v4858 = vsub.f32 %v4856, %v4857
      %v4859 = vand.u32 %v4858, 4294901760
      %4860 = vmatpush1.msra.mxu0 %v4859
      %4861 = vmatprep.subr.mxu0 0.0
      %v4862 = vand.u32 %v2817, 4294901760
      %v4863 = vsub.f32 %v2817, %v4862
      %v4864 = vand.u32 %v4863, 4294901760
      %v4865 = vsub.f32 %v4863, %v4864
      %v4866 = vand.u32 %v4865, 4294901760
      %4867 = vmatpush1.msra.mxu0 %v4866
      %4868 = vmatprep.subr.mxu0 0.0
      %v4869 = vand.u32 %v2814, 4294901760
      %v4870 = vsub.f32 %v2814, %v4869
      %v4871 = vand.u32 %v4870, 4294901760
      %v4872 = vsub.f32 %v4870, %v4871
      %v4873 = vand.u32 %v4872, 4294901760
      %4874 = vmatpush1.msra.mxu0 %v4873
      %4875 = vmatprep.subr.mxu0 0.0
      %v4876 = vand.u32 %v2811, 4294901760
      %v4877 = vsub.f32 %v2811, %v4876
      %v4878 = vand.u32 %v4877, 4294901760
      %v4879 = vsub.f32 %v4877, %v4878
      %v4880 = vand.u32 %v4879, 4294901760
      %4881 = vmatpush1.msra.mxu0 %v4880
      %4882 = vmatprep.subr.mxu0 0.0
      %v4883 = vand.u32 %v2808, 4294901760
      %v4884 = vsub.f32 %v2808, %v4883
      %v4885 = vand.u32 %v4884, 4294901760
      %v4886 = vsub.f32 %v4884, %v4885
      %v4887 = vand.u32 %v4886, 4294901760
      %4888 = vmatpush1.msra.mxu0 %v4887
      %4889 = vmatprep.subr.mxu0 0.0
      %v4890 = vand.u32 %v2805, 4294901760
      %v4891 = vsub.f32 %v2805, %v4890
      %v4892 = vand.u32 %v4891, 4294901760
      %v4893 = vsub.f32 %v4891, %v4892
      %v4894 = vand.u32 %v4893, 4294901760
      %4895 = vmatpush1.msra.mxu0 %v4894
      %4896 = vmatprep.subr.mxu0 0.0
      %v4897 = vand.u32 %v2802, 4294901760
      %v4898 = vsub.f32 %v2802, %v4897
      %v4899 = vand.u32 %v4898, 4294901760
      %v4900 = vsub.f32 %v4898, %v4899
      %v4901 = vand.u32 %v4900, 4294901760
      %4902 = vmatpush1.msra.mxu0 %v4901
      %4903 = vmatprep.subr.mxu0 0.0
      %4904 = vmatpush2.msra.mxu0 0.0
      %4905 = vmatprep.subr.mxu0 0.0
      %4906 = vmatpush2.msra.mxu0 0.0
      %4907 = vmatprep.subr.mxu0 0.0
      %4908 = vmatpush2.msra.mxu0 0.0
      %4909 = vmatprep.subr.mxu0 0.0
      %4910 = vmatpush2.msra.mxu0 0.0
      %4911 = vmatprep.subr.mxu0 0.0
      %4912 = vmatpush2.msra.mxu0 0.0
      %4913 = vmatprep.subr.mxu0 0.0
      %4914 = vmatpush2.msra.mxu0 0.0
      %4915 = vmatprep.subr.mxu0 0.0
      %4916 = vmatpush2.msra.mxu0 0.0
      %4917 = vmatprep.subr.mxu0 0.0
      %4918 = vmatpush2.msra.mxu0 0.0
      %4919 = vmatprep.subr.mxu0 0.0
      %4920 = vmatpush2.msra.mxu0 0.0
      %4921 = vmatprep.subr.mxu0 0.0
      %4922 = vmatpush2.msra.mxu0 0.0
      %4923 = vmatprep.subr.mxu0 0.0
      %4924 = vmatpush2.msra.mxu0 0.0
      %4925 = vmatprep.subr.mxu0 0.0
      %4926 = vmatpush2.msra.mxu0 0.0
      %4927 = vmatprep.subr.mxu0 0.0
      %4928 = vmatpush2.msra.mxu0 0.0
      %4929 = vmatprep.subr.mxu0 0.0
      %4930 = vmatpush2.msra.mxu0 0.0
      %4931 = vmatprep.subr.mxu0 0.0
      %4932 = vmatpush2.msra.mxu0 0.0
      %4933 = vmatprep.subr.mxu0 0.0
      %4934 = vmatpush2.msra.mxu0 0.0
      %4935 = vmatprep.mubr.f32.mxu0 0.0
      %v4936 = vand.u32 %v2848, 4294901760
      %4937 = vmatmul.mubr.f32.gmra.mxu0 %v4936
      %v4938 = vpop.f32.mrf.mxu0
      %v4939 = vadd.f32 %v4638, %v4938
      %v4940 = vpop.f32.mrf.mxu0
      %4941 = vmatprep.mubr.f32.mxu0 0.0
      %v4942 = vand.u32 %v2849, 4294901760
      %4943 = vmatmul.mubr.f32.gmra.mxu0 %v4942
      %v4944 = vpop.f32.mrf.mxu0
      %v4945 = vadd.f32 %v4648, %v4944
      %v4946 = vpop.f32.mrf.mxu0
      %4947 = vmatprep.mubr.f32.mxu0 0.0
      %v4948 = vand.u32 %v2850, 4294901760
      %4949 = vmatmul.mubr.f32.gmra.mxu0 %v4948
      %v4950 = vpop.f32.mrf.mxu0
      %v4951 = vadd.f32 %v4658, %v4950
      %v4952 = vpop.f32.mrf.mxu0
      %4953 = vmatprep.mubr.f32.mxu0 0.0
      %v4954 = vand.u32 %v2851, 4294901760
      %4955 = vmatmul.mubr.f32.gmra.mxu0 %v4954
      %v4956 = vpop.f32.mrf.mxu0
      %v4957 = vadd.f32 %v4668, %v4956
      %v4958 = vpop.f32.mrf.mxu0
      %4959 = vmatprep.mubr.f32.mxu0 0.0
      %v4960 = vand.u32 %v2852, 4294901760
      %4961 = vmatmul.mubr.f32.gmra.mxu0 %v4960
      %v4962 = vpop.f32.mrf.mxu0
      %v4963 = vadd.f32 %v4678, %v4962
      %v4964 = vpop.f32.mrf.mxu0
      %4965 = vmatprep.mubr.f32.mxu0 0.0
      %v4966 = vand.u32 %v2853, 4294901760
      %4967 = vmatmul.mubr.f32.gmra.mxu0 %v4966
      %v4968 = vpop.f32.mrf.mxu0
      %v4969 = vadd.f32 %v4688, %v4968
      %v4970 = vpop.f32.mrf.mxu0
      %4971 = vmatprep.mubr.f32.mxu0 0.0
      %v4972 = vand.u32 %v2854, 4294901760
      %4973 = vmatmul.mubr.f32.gmra.mxu0 %v4972
      %v4974 = vpop.f32.mrf.mxu0
      %v4975 = vadd.f32 %v4698, %v4974
      %v4976 = vpop.f32.mrf.mxu0
      %4977 = vmatprep.mubr.f32.mxu0 0.0
      %v4978 = vand.u32 %v2855, 4294901760
      %4979 = vmatmul.mubr.f32.gmra.mxu0 %v4978
      %v4980 = vpop.f32.mrf.mxu0
      %v4981 = vadd.f32 %v4708, %v4980
      %v4982 = vpop.f32.mrf.mxu0
      %4983 = vmatprep.mubr.f32.mxu0 0.0
      %v4984 = vand.u32 %v2856, 4294901760
      %4985 = vmatmul.mubr.f32.gmra.mxu0 %v4984
      %v4986 = vpop.f32.mrf.mxu0
      %v4987 = vadd.f32 %v4718, %v4986
      %v4988 = vpop.f32.mrf.mxu0
      %4989 = vmatprep.mubr.f32.mxu0 0.0
      %v4990 = vand.u32 %v2857, 4294901760
      %4991 = vmatmul.mubr.f32.gmra.mxu0 %v4990
      %v4992 = vpop.f32.mrf.mxu0
      %v4993 = vadd.f32 %v4728, %v4992
      %v4994 = vpop.f32.mrf.mxu0
      %4995 = vmatprep.mubr.f32.mxu0 0.0
      %v4996 = vand.u32 %v2858, 4294901760
      %4997 = vmatmul.mubr.f32.gmra.mxu0 %v4996
      %v4998 = vpop.f32.mrf.mxu0
      %v4999 = vadd.f32 %v4738, %v4998
      %v5000 = vpop.f32.mrf.mxu0
      %5001 = vmatprep.mubr.f32.mxu0 0.0
      %v5002 = vand.u32 %v2859, 4294901760
      %5003 = vmatmul.mubr.f32.gmra.mxu0 %v5002
      %v5004 = vpop.f32.mrf.mxu0
      %v5005 = vadd.f32 %v4748, %v5004
      %v5006 = vpop.f32.mrf.mxu0
      %5007 = vmatprep.mubr.f32.mxu0 0.0
      %v5008 = vand.u32 %v2860, 4294901760
      %5009 = vmatmul.mubr.f32.gmra.mxu0 %v5008
      %v5010 = vpop.f32.mrf.mxu0
      %v5011 = vadd.f32 %v4758, %v5010
      %v5012 = vpop.f32.mrf.mxu0
      %5013 = vmatprep.mubr.f32.mxu0 0.0
      %v5014 = vand.u32 %v2861, 4294901760
      %5015 = vmatmul.mubr.f32.gmra.mxu0 %v5014
      %v5016 = vpop.f32.mrf.mxu0
      %v5017 = vadd.f32 %v4768, %v5016
      %v5018 = vpop.f32.mrf.mxu0
      %5019 = vmatprep.mubr.f32.mxu0 0.0
      %v5020 = vand.u32 %v2862, 4294901760
      %5021 = vmatmul.mubr.f32.gmra.mxu0 %v5020
      %v5022 = vpop.f32.mrf.mxu0
      %v5023 = vadd.f32 %v4778, %v5022
      %v5024 = vpop.f32.mrf.mxu0
      %5025 = vmatprep.mubr.f32.mxu0 0.0
      %v5026 = vand.u32 %v2863, 4294901760
      %5027 = vmatmul.mubr.f32.gmra.mxu0 %v5026
      %v5028 = vpop.f32.mrf.mxu0
      %v5029 = vadd.f32 %v4788, %v5028
      %v5030 = vpop.f32.mrf.mxu0
      %5031 = vdwg.mxu0
      %5032 = vmatprep.subr.mxu0 0.0
      %v5033 = vand.u32 %v2847, 4294901760
      %v5034 = vsub.f32 %v2847, %v5033
      %5035 = vmatpush1.msra.mxu0 %v5034
      %5036 = vmatprep.subr.mxu0 0.0
      %v5037 = vand.u32 %v2844, 4294901760
      %v5038 = vsub.f32 %v2844, %v5037
      %5039 = vmatpush1.msra.mxu0 %v5038
      %5040 = vmatprep.subr.mxu0 0.0
      %v5041 = vand.u32 %v2841, 4294901760
      %v5042 = vsub.f32 %v2841, %v5041
      %5043 = vmatpush1.msra.mxu0 %v5042
      %5044 = vmatprep.subr.mxu0 0.0
      %v5045 = vand.u32 %v2838, 4294901760
      %v5046 = vsub.f32 %v2838, %v5045
      %5047 = vmatpush1.msra.mxu0 %v5046
      %5048 = vmatprep.subr.mxu0 0.0
      %v5049 = vand.u32 %v2835, 4294901760
      %v5050 = vsub.f32 %v2835, %v5049
      %5051 = vmatpush1.msra.mxu0 %v5050
      %5052 = vmatprep.subr.mxu0 0.0
      %v5053 = vand.u32 %v2832, 4294901760
      %v5054 = vsub.f32 %v2832, %v5053
      %5055 = vmatpush1.msra.mxu0 %v5054
      %5056 = vmatprep.subr.mxu0 0.0
      %v5057 = vand.u32 %v2829, 4294901760
      %v5058 = vsub.f32 %v2829, %v5057
      %5059 = vmatpush1.msra.mxu0 %v5058
      %5060 = vmatprep.subr.mxu0 0.0
      %v5061 = vand.u32 %v2826, 4294901760
      %v5062 = vsub.f32 %v2826, %v5061
      %5063 = vmatpush1.msra.mxu0 %v5062
      %5064 = vmatprep.subr.mxu0 0.0
      %v5065 = vand.u32 %v2823, 4294901760
      %v5066 = vsub.f32 %v2823, %v5065
      %5067 = vmatpush1.msra.mxu0 %v5066
      %5068 = vmatprep.subr.mxu0 0.0
      %v5069 = vand.u32 %v2820, 4294901760
      %v5070 = vsub.f32 %v2820, %v5069
      %5071 = vmatpush1.msra.mxu0 %v5070
      %5072 = vmatprep.subr.mxu0 0.0
      %v5073 = vand.u32 %v2817, 4294901760
      %v5074 = vsub.f32 %v2817, %v5073
      %5075 = vmatpush1.msra.mxu0 %v5074
      %5076 = vmatprep.subr.mxu0 0.0
      %v5077 = vand.u32 %v2814, 4294901760
      %v5078 = vsub.f32 %v2814, %v5077
      %5079 = vmatpush1.msra.mxu0 %v5078
      %5080 = vmatprep.subr.mxu0 0.0
      %v5081 = vand.u32 %v2811, 4294901760
      %v5082 = vsub.f32 %v2811, %v5081
      %5083 = vmatpush1.msra.mxu0 %v5082
      %5084 = vmatprep.subr.mxu0 0.0
      %v5085 = vand.u32 %v2808, 4294901760
      %v5086 = vsub.f32 %v2808, %v5085
      %5087 = vmatpush1.msra.mxu0 %v5086
      %5088 = vmatprep.subr.mxu0 0.0
      %v5089 = vand.u32 %v2805, 4294901760
      %v5090 = vsub.f32 %v2805, %v5089
      %5091 = vmatpush1.msra.mxu0 %v5090
      %5092 = vmatprep.subr.mxu0 0.0
      %v5093 = vand.u32 %v2802, 4294901760
      %v5094 = vsub.f32 %v2802, %v5093
      %5095 = vmatpush1.msra.mxu0 %v5094
      %5096 = vmatprep.subr.mxu0 0.0
      %5097 = vmatpush2.msra.mxu0 0.0
      %5098 = vmatprep.subr.mxu0 0.0
      %5099 = vmatpush2.msra.mxu0 0.0
      %5100 = vmatprep.subr.mxu0 0.0
      %5101 = vmatpush2.msra.mxu0 0.0
      %5102 = vmatprep.subr.mxu0 0.0
      %5103 = vmatpush2.msra.mxu0 0.0
      %5104 = vmatprep.subr.mxu0 0.0
      %5105 = vmatpush2.msra.mxu0 0.0
      %5106 = vmatprep.subr.mxu0 0.0
      %5107 = vmatpush2.msra.mxu0 0.0
      %5108 = vmatprep.subr.mxu0 0.0
      %5109 = vmatpush2.msra.mxu0 0.0
      %5110 = vmatprep.subr.mxu0 0.0
      %5111 = vmatpush2.msra.mxu0 0.0
      %5112 = vmatprep.subr.mxu0 0.0
      %5113 = vmatpush2.msra.mxu0 0.0
      %5114 = vmatprep.subr.mxu0 0.0
      %5115 = vmatpush2.msra.mxu0 0.0
      %5116 = vmatprep.subr.mxu0 0.0
      %5117 = vmatpush2.msra.mxu0 0.0
      %5118 = vmatprep.subr.mxu0 0.0
      %5119 = vmatpush2.msra.mxu0 0.0
      %5120 = vmatprep.subr.mxu0 0.0
      %5121 = vmatpush2.msra.mxu0 0.0
      %5122 = vmatprep.subr.mxu0 0.0
      %5123 = vmatpush2.msra.mxu0 0.0
      %5124 = vmatprep.subr.mxu0 0.0
      %5125 = vmatpush2.msra.mxu0 0.0
      %5126 = vmatprep.subr.mxu0 0.0
      %5127 = vmatpush2.msra.mxu0 0.0
      %5128 = vmatprep.mubr.f32.mxu0 0.0
      %v5129 = vand.u32 %v2848, 4294901760
      %v5130 = vsub.f32 %v2848, %v5129
      %5131 = vmatmul.mubr.f32.gmra.mxu0 %v5130
      %v5132 = vpop.f32.mrf.mxu0
      %v5133 = vadd.f32 %v4939, %v5132
      %v5134 = vpop.f32.mrf.mxu0
      %5135 = vmatprep.mubr.f32.mxu0 0.0
      %v5136 = vand.u32 %v2849, 4294901760
      %v5137 = vsub.f32 %v2849, %v5136
      %5138 = vmatmul.mubr.f32.gmra.mxu0 %v5137
      %v5139 = vpop.f32.mrf.mxu0
      %v5140 = vadd.f32 %v4945, %v5139
      %v5141 = vpop.f32.mrf.mxu0
      %5142 = vmatprep.mubr.f32.mxu0 0.0
      %v5143 = vand.u32 %v2850, 4294901760
      %v5144 = vsub.f32 %v2850, %v5143
      %5145 = vmatmul.mubr.f32.gmra.mxu0 %v5144
      %v5146 = vpop.f32.mrf.mxu0
      %v5147 = vadd.f32 %v4951, %v5146
      %v5148 = vpop.f32.mrf.mxu0
      %5149 = vmatprep.mubr.f32.mxu0 0.0
      %v5150 = vand.u32 %v2851, 4294901760
      %v5151 = vsub.f32 %v2851, %v5150
      %5152 = vmatmul.mubr.f32.gmra.mxu0 %v5151
      %v5153 = vpop.f32.mrf.mxu0
      %v5154 = vadd.f32 %v4957, %v5153
      %v5155 = vpop.f32.mrf.mxu0
      %5156 = vmatprep.mubr.f32.mxu0 0.0
      %v5157 = vand.u32 %v2852, 4294901760
      %v5158 = vsub.f32 %v2852, %v5157
      %5159 = vmatmul.mubr.f32.gmra.mxu0 %v5158
      %v5160 = vpop.f32.mrf.mxu0
      %v5161 = vadd.f32 %v4963, %v5160
      %v5162 = vpop.f32.mrf.mxu0
      %5163 = vmatprep.mubr.f32.mxu0 0.0
      %v5164 = vand.u32 %v2853, 4294901760
      %v5165 = vsub.f32 %v2853, %v5164
      %5166 = vmatmul.mubr.f32.gmra.mxu0 %v5165
      %v5167 = vpop.f32.mrf.mxu0
      %v5168 = vadd.f32 %v4969, %v5167
      %v5169 = vpop.f32.mrf.mxu0
      %5170 = vmatprep.mubr.f32.mxu0 0.0
      %v5171 = vand.u32 %v2854, 4294901760
      %v5172 = vsub.f32 %v2854, %v5171
      %5173 = vmatmul.mubr.f32.gmra.mxu0 %v5172
      %v5174 = vpop.f32.mrf.mxu0
      %v5175 = vadd.f32 %v4975, %v5174
      %v5176 = vpop.f32.mrf.mxu0
      %5177 = vmatprep.mubr.f32.mxu0 0.0
      %v5178 = vand.u32 %v2855, 4294901760
      %v5179 = vsub.f32 %v2855, %v5178
      %5180 = vmatmul.mubr.f32.gmra.mxu0 %v5179
      %v5181 = vpop.f32.mrf.mxu0
      %v5182 = vadd.f32 %v4981, %v5181
      %v5183 = vpop.f32.mrf.mxu0
      %5184 = vmatprep.mubr.f32.mxu0 0.0
      %v5185 = vand.u32 %v2856, 4294901760
      %v5186 = vsub.f32 %v2856, %v5185
      %5187 = vmatmul.mubr.f32.gmra.mxu0 %v5186
      %v5188 = vpop.f32.mrf.mxu0
      %v5189 = vadd.f32 %v4987, %v5188
      %v5190 = vpop.f32.mrf.mxu0
      %5191 = vmatprep.mubr.f32.mxu0 0.0
      %v5192 = vand.u32 %v2857, 4294901760
      %v5193 = vsub.f32 %v2857, %v5192
      %5194 = vmatmul.mubr.f32.gmra.mxu0 %v5193
      %v5195 = vpop.f32.mrf.mxu0
      %v5196 = vadd.f32 %v4993, %v5195
      %v5197 = vpop.f32.mrf.mxu0
      %5198 = vmatprep.mubr.f32.mxu0 0.0
      %v5199 = vand.u32 %v2858, 4294901760
      %v5200 = vsub.f32 %v2858, %v5199
      %5201 = vmatmul.mubr.f32.gmra.mxu0 %v5200
      %v5202 = vpop.f32.mrf.mxu0
      %v5203 = vadd.f32 %v4999, %v5202
      %v5204 = vpop.f32.mrf.mxu0
      %5205 = vmatprep.mubr.f32.mxu0 0.0
      %v5206 = vand.u32 %v2859, 4294901760
      %v5207 = vsub.f32 %v2859, %v5206
      %5208 = vmatmul.mubr.f32.gmra.mxu0 %v5207
      %v5209 = vpop.f32.mrf.mxu0
      %v5210 = vadd.f32 %v5005, %v5209
      %v5211 = vpop.f32.mrf.mxu0
      %5212 = vmatprep.mubr.f32.mxu0 0.0
      %v5213 = vand.u32 %v2860, 4294901760
      %v5214 = vsub.f32 %v2860, %v5213
      %5215 = vmatmul.mubr.f32.gmra.mxu0 %v5214
      %v5216 = vpop.f32.mrf.mxu0
      %v5217 = vadd.f32 %v5011, %v5216
      %v5218 = vpop.f32.mrf.mxu0
      %5219 = vmatprep.mubr.f32.mxu0 0.0
      %v5220 = vand.u32 %v2861, 4294901760
      %v5221 = vsub.f32 %v2861, %v5220
      %5222 = vmatmul.mubr.f32.gmra.mxu0 %v5221
      %v5223 = vpop.f32.mrf.mxu0
      %v5224 = vadd.f32 %v5017, %v5223
      %v5225 = vpop.f32.mrf.mxu0
      %5226 = vmatprep.mubr.f32.mxu0 0.0
      %v5227 = vand.u32 %v2862, 4294901760
      %v5228 = vsub.f32 %v2862, %v5227
      %5229 = vmatmul.mubr.f32.gmra.mxu0 %v5228
      %v5230 = vpop.f32.mrf.mxu0
      %v5231 = vadd.f32 %v5023, %v5230
      %v5232 = vpop.f32.mrf.mxu0
      %5233 = vmatprep.mubr.f32.mxu0 0.0
      %v5234 = vand.u32 %v2863, 4294901760
      %v5235 = vsub.f32 %v2863, %v5234
      %5236 = vmatmul.mubr.f32.gmra.mxu0 %v5235
      %v5237 = vpop.f32.mrf.mxu0
      %v5238 = vadd.f32 %v5029, %v5237
      %v5239 = vpop.f32.mrf.mxu0
      %5240 = vdwg.mxu0
      %5241 = vmatprep.subr.mxu0 0.0
      %v5242 = vand.u32 %v2847, 4294901760
      %5243 = vmatpush1.msra.mxu0 %v5242
      %5244 = vmatprep.subr.mxu0 0.0
      %v5245 = vand.u32 %v2844, 4294901760
      %5246 = vmatpush1.msra.mxu0 %v5245
      %5247 = vmatprep.subr.mxu0 0.0
      %v5248 = vand.u32 %v2841, 4294901760
      %5249 = vmatpush1.msra.mxu0 %v5248
      %5250 = vmatprep.subr.mxu0 0.0
      %v5251 = vand.u32 %v2838, 4294901760
      %5252 = vmatpush1.msra.mxu0 %v5251
      %5253 = vmatprep.subr.mxu0 0.0
      %v5254 = vand.u32 %v2835, 4294901760
      %5255 = vmatpush1.msra.mxu0 %v5254
      %5256 = vmatprep.subr.mxu0 0.0
      %v5257 = vand.u32 %v2832, 4294901760
      %5258 = vmatpush1.msra.mxu0 %v5257
      %5259 = vmatprep.subr.mxu0 0.0
      %v5260 = vand.u32 %v2829, 4294901760
      %5261 = vmatpush1.msra.mxu0 %v5260
      %5262 = vmatprep.subr.mxu0 0.0
      %v5263 = vand.u32 %v2826, 4294901760
      %5264 = vmatpush1.msra.mxu0 %v5263
      %5265 = vmatprep.subr.mxu0 0.0
      %v5266 = vand.u32 %v2823, 4294901760
      %5267 = vmatpush1.msra.mxu0 %v5266
      %5268 = vmatprep.subr.mxu0 0.0
      %v5269 = vand.u32 %v2820, 4294901760
      %5270 = vmatpush1.msra.mxu0 %v5269
      %5271 = vmatprep.subr.mxu0 0.0
      %v5272 = vand.u32 %v2817, 4294901760
      %5273 = vmatpush1.msra.mxu0 %v5272
      %5274 = vmatprep.subr.mxu0 0.0
      %v5275 = vand.u32 %v2814, 4294901760
      %5276 = vmatpush1.msra.mxu0 %v5275
      %5277 = vmatprep.subr.mxu0 0.0
      %v5278 = vand.u32 %v2811, 4294901760
      %5279 = vmatpush1.msra.mxu0 %v5278
      %5280 = vmatprep.subr.mxu0 0.0
      %v5281 = vand.u32 %v2808, 4294901760
      %5282 = vmatpush1.msra.mxu0 %v5281
      %5283 = vmatprep.subr.mxu0 0.0
      %v5284 = vand.u32 %v2805, 4294901760
      %5285 = vmatpush1.msra.mxu0 %v5284
      %5286 = vmatprep.subr.mxu0 0.0
      %v5287 = vand.u32 %v2802, 4294901760
      %5288 = vmatpush1.msra.mxu0 %v5287
      %5289 = vmatprep.subr.mxu0 0.0
      %5290 = vmatpush2.msra.mxu0 0.0
      %5291 = vmatprep.subr.mxu0 0.0
      %5292 = vmatpush2.msra.mxu0 0.0
      %5293 = vmatprep.subr.mxu0 0.0
      %5294 = vmatpush2.msra.mxu0 0.0
      %5295 = vmatprep.subr.mxu0 0.0
      %5296 = vmatpush2.msra.mxu0 0.0
      %5297 = vmatprep.subr.mxu0 0.0
      %5298 = vmatpush2.msra.mxu0 0.0
      %5299 = vmatprep.subr.mxu0 0.0
      %5300 = vmatpush2.msra.mxu0 0.0
      %5301 = vmatprep.subr.mxu0 0.0
      %5302 = vmatpush2.msra.mxu0 0.0
      %5303 = vmatprep.subr.mxu0 0.0
      %5304 = vmatpush2.msra.mxu0 0.0
      %5305 = vmatprep.subr.mxu0 0.0
      %5306 = vmatpush2.msra.mxu0 0.0
      %5307 = vmatprep.subr.mxu0 0.0
      %5308 = vmatpush2.msra.mxu0 0.0
      %5309 = vmatprep.subr.mxu0 0.0
      %5310 = vmatpush2.msra.mxu0 0.0
      %5311 = vmatprep.subr.mxu0 0.0
      %5312 = vmatpush2.msra.mxu0 0.0
      %5313 = vmatprep.subr.mxu0 0.0
      %5314 = vmatpush2.msra.mxu0 0.0
      %5315 = vmatprep.subr.mxu0 0.0
      %5316 = vmatpush2.msra.mxu0 0.0
      %5317 = vmatprep.subr.mxu0 0.0
      %5318 = vmatpush2.msra.mxu0 0.0
      %5319 = vmatprep.subr.mxu0 0.0
      %5320 = vmatpush2.msra.mxu0 0.0
      %5321 = vmatprep.mubr.f32.mxu0 0.0
      %v5322 = vand.u32 %v2848, 4294901760
      %v5323 = vsub.f32 %v2848, %v5322
      %v5324 = vand.u32 %v5323, 4294901760
      %5325 = vmatmul.mubr.f32.gmra.mxu0 %v5324
      %v5326 = vpop.f32.mrf.mxu0
      %v5327 = vadd.f32 %v5133, %v5326
      %v5328 = vpop.f32.mrf.mxu0
      %5329 = vmatprep.mubr.f32.mxu0 0.0
      %v5330 = vand.u32 %v2849, 4294901760
      %v5331 = vsub.f32 %v2849, %v5330
      %v5332 = vand.u32 %v5331, 4294901760
      %5333 = vmatmul.mubr.f32.gmra.mxu0 %v5332
      %v5334 = vpop.f32.mrf.mxu0
      %v5335 = vadd.f32 %v5140, %v5334
      %v5336 = vpop.f32.mrf.mxu0
      %5337 = vmatprep.mubr.f32.mxu0 0.0
      %v5338 = vand.u32 %v2850, 4294901760
      %v5339 = vsub.f32 %v2850, %v5338
      %v5340 = vand.u32 %v5339, 4294901760
      %5341 = vmatmul.mubr.f32.gmra.mxu0 %v5340
      %v5342 = vpop.f32.mrf.mxu0
      %v5343 = vadd.f32 %v5147, %v5342
      %v5344 = vpop.f32.mrf.mxu0
      %5345 = vmatprep.mubr.f32.mxu0 0.0
      %v5346 = vand.u32 %v2851, 4294901760
      %v5347 = vsub.f32 %v2851, %v5346
      %v5348 = vand.u32 %v5347, 4294901760
      %5349 = vmatmul.mubr.f32.gmra.mxu0 %v5348
      %v5350 = vpop.f32.mrf.mxu0
      %v5351 = vadd.f32 %v5154, %v5350
      %v5352 = vpop.f32.mrf.mxu0
      %5353 = vmatprep.mubr.f32.mxu0 0.0
      %v5354 = vand.u32 %v2852, 4294901760
      %v5355 = vsub.f32 %v2852, %v5354
      %v5356 = vand.u32 %v5355, 4294901760
      %5357 = vmatmul.mubr.f32.gmra.mxu0 %v5356
      %v5358 = vpop.f32.mrf.mxu0
      %v5359 = vadd.f32 %v5161, %v5358
      %v5360 = vpop.f32.mrf.mxu0
      %5361 = vmatprep.mubr.f32.mxu0 0.0
      %v5362 = vand.u32 %v2853, 4294901760
      %v5363 = vsub.f32 %v2853, %v5362
      %v5364 = vand.u32 %v5363, 4294901760
      %5365 = vmatmul.mubr.f32.gmra.mxu0 %v5364
      %v5366 = vpop.f32.mrf.mxu0
      %v5367 = vadd.f32 %v5168, %v5366
      %v5368 = vpop.f32.mrf.mxu0
      %5369 = vmatprep.mubr.f32.mxu0 0.0
      %v5370 = vand.u32 %v2854, 4294901760
      %v5371 = vsub.f32 %v2854, %v5370
      %v5372 = vand.u32 %v5371, 4294901760
      %5373 = vmatmul.mubr.f32.gmra.mxu0 %v5372
      %v5374 = vpop.f32.mrf.mxu0
      %v5375 = vadd.f32 %v5175, %v5374
      %v5376 = vpop.f32.mrf.mxu0
      %5377 = vmatprep.mubr.f32.mxu0 0.0
      %v5378 = vand.u32 %v2855, 4294901760
      %v5379 = vsub.f32 %v2855, %v5378
      %v5380 = vand.u32 %v5379, 4294901760
      %5381 = vmatmul.mubr.f32.gmra.mxu0 %v5380
      %v5382 = vpop.f32.mrf.mxu0
      %v5383 = vadd.f32 %v5182, %v5382
      %v5384 = vpop.f32.mrf.mxu0
      %5385 = vmatprep.mubr.f32.mxu0 0.0
      %v5386 = vand.u32 %v2856, 4294901760
      %v5387 = vsub.f32 %v2856, %v5386
      %v5388 = vand.u32 %v5387, 4294901760
      %5389 = vmatmul.mubr.f32.gmra.mxu0 %v5388
      %v5390 = vpop.f32.mrf.mxu0
      %v5391 = vadd.f32 %v5189, %v5390
      %v5392 = vpop.f32.mrf.mxu0
      %5393 = vmatprep.mubr.f32.mxu0 0.0
      %v5394 = vand.u32 %v2857, 4294901760
      %v5395 = vsub.f32 %v2857, %v5394
      %v5396 = vand.u32 %v5395, 4294901760
      %5397 = vmatmul.mubr.f32.gmra.mxu0 %v5396
      %v5398 = vpop.f32.mrf.mxu0
      %v5399 = vadd.f32 %v5196, %v5398
      %v5400 = vpop.f32.mrf.mxu0
      %5401 = vmatprep.mubr.f32.mxu0 0.0
      %v5402 = vand.u32 %v2858, 4294901760
      %v5403 = vsub.f32 %v2858, %v5402
      %v5404 = vand.u32 %v5403, 4294901760
      %5405 = vmatmul.mubr.f32.gmra.mxu0 %v5404
      %v5406 = vpop.f32.mrf.mxu0
      %v5407 = vadd.f32 %v5203, %v5406
      %v5408 = vpop.f32.mrf.mxu0
      %5409 = vmatprep.mubr.f32.mxu0 0.0
      %v5410 = vand.u32 %v2859, 4294901760
      %v5411 = vsub.f32 %v2859, %v5410
      %v5412 = vand.u32 %v5411, 4294901760
      %5413 = vmatmul.mubr.f32.gmra.mxu0 %v5412
      %v5414 = vpop.f32.mrf.mxu0
      %v5415 = vadd.f32 %v5210, %v5414
      %v5416 = vpop.f32.mrf.mxu0
      %5417 = vmatprep.mubr.f32.mxu0 0.0
      %v5418 = vand.u32 %v2860, 4294901760
      %v5419 = vsub.f32 %v2860, %v5418
      %v5420 = vand.u32 %v5419, 4294901760
      %5421 = vmatmul.mubr.f32.gmra.mxu0 %v5420
      %v5422 = vpop.f32.mrf.mxu0
      %v5423 = vadd.f32 %v5217, %v5422
      %v5424 = vpop.f32.mrf.mxu0
      %5425 = vmatprep.mubr.f32.mxu0 0.0
      %v5426 = vand.u32 %v2861, 4294901760
      %v5427 = vsub.f32 %v2861, %v5426
      %v5428 = vand.u32 %v5427, 4294901760
      %5429 = vmatmul.mubr.f32.gmra.mxu0 %v5428
      %v5430 = vpop.f32.mrf.mxu0
      %v5431 = vadd.f32 %v5224, %v5430
      %v5432 = vpop.f32.mrf.mxu0
      %5433 = vmatprep.mubr.f32.mxu0 0.0
      %v5434 = vand.u32 %v2862, 4294901760
      %v5435 = vsub.f32 %v2862, %v5434
      %v5436 = vand.u32 %v5435, 4294901760
      %5437 = vmatmul.mubr.f32.gmra.mxu0 %v5436
      %v5438 = vpop.f32.mrf.mxu0
      %v5439 = vadd.f32 %v5231, %v5438
      %v5440 = vpop.f32.mrf.mxu0
      %5441 = vmatprep.mubr.f32.mxu0 0.0
      %v5442 = vand.u32 %v2863, 4294901760
      %v5443 = vsub.f32 %v2863, %v5442
      %v5444 = vand.u32 %v5443, 4294901760
      %5445 = vmatmul.mubr.f32.gmra.mxu0 %v5444
      %v5446 = vpop.f32.mrf.mxu0
      %v5447 = vadd.f32 %v5238, %v5446
      %v5448 = vpop.f32.mrf.mxu0
      %5449 = vdwg.mxu0
      %5450 = vmatprep.subr.mxu0 0.0
      %v5451 = vand.u32 %v2847, 4294901760
      %v5452 = vsub.f32 %v2847, %v5451
      %v5453 = vand.u32 %v5452, 4294901760
      %5454 = vmatpush1.msra.mxu0 %v5453
      %5455 = vmatprep.subr.mxu0 0.0
      %v5456 = vand.u32 %v2844, 4294901760
      %v5457 = vsub.f32 %v2844, %v5456
      %v5458 = vand.u32 %v5457, 4294901760
      %5459 = vmatpush1.msra.mxu0 %v5458
      %5460 = vmatprep.subr.mxu0 0.0
      %v5461 = vand.u32 %v2841, 4294901760
      %v5462 = vsub.f32 %v2841, %v5461
      %v5463 = vand.u32 %v5462, 4294901760
      %5464 = vmatpush1.msra.mxu0 %v5463
      %5465 = vmatprep.subr.mxu0 0.0
      %v5466 = vand.u32 %v2838, 4294901760
      %v5467 = vsub.f32 %v2838, %v5466
      %v5468 = vand.u32 %v5467, 4294901760
      %5469 = vmatpush1.msra.mxu0 %v5468
      %5470 = vmatprep.subr.mxu0 0.0
      %v5471 = vand.u32 %v2835, 4294901760
      %v5472 = vsub.f32 %v2835, %v5471
      %v5473 = vand.u32 %v5472, 4294901760
      %5474 = vmatpush1.msra.mxu0 %v5473
      %5475 = vmatprep.subr.mxu0 0.0
      %v5476 = vand.u32 %v2832, 4294901760
      %v5477 = vsub.f32 %v2832, %v5476
      %v5478 = vand.u32 %v5477, 4294901760
      %5479 = vmatpush1.msra.mxu0 %v5478
      %5480 = vmatprep.subr.mxu0 0.0
      %v5481 = vand.u32 %v2829, 4294901760
      %v5482 = vsub.f32 %v2829, %v5481
      %v5483 = vand.u32 %v5482, 4294901760
      %5484 = vmatpush1.msra.mxu0 %v5483
      %5485 = vmatprep.subr.mxu0 0.0
      %v5486 = vand.u32 %v2826, 4294901760
      %v5487 = vsub.f32 %v2826, %v5486
      %v5488 = vand.u32 %v5487, 4294901760
      %5489 = vmatpush1.msra.mxu0 %v5488
      %5490 = vmatprep.subr.mxu0 0.0
      %v5491 = vand.u32 %v2823, 4294901760
      %v5492 = vsub.f32 %v2823, %v5491
      %v5493 = vand.u32 %v5492, 4294901760
      %5494 = vmatpush1.msra.mxu0 %v5493
      %5495 = vmatprep.subr.mxu0 0.0
      %v5496 = vand.u32 %v2820, 4294901760
      %v5497 = vsub.f32 %v2820, %v5496
      %v5498 = vand.u32 %v5497, 4294901760
      %5499 = vmatpush1.msra.mxu0 %v5498
      %5500 = vmatprep.subr.mxu0 0.0
      %v5501 = vand.u32 %v2817, 4294901760
      %v5502 = vsub.f32 %v2817, %v5501
      %v5503 = vand.u32 %v5502, 4294901760
      %5504 = vmatpush1.msra.mxu0 %v5503
      %5505 = vmatprep.subr.mxu0 0.0
      %v5506 = vand.u32 %v2814, 4294901760
      %v5507 = vsub.f32 %v2814, %v5506
      %v5508 = vand.u32 %v5507, 4294901760
      %5509 = vmatpush1.msra.mxu0 %v5508
      %5510 = vmatprep.subr.mxu0 0.0
      %v5511 = vand.u32 %v2811, 4294901760
      %v5512 = vsub.f32 %v2811, %v5511
      %v5513 = vand.u32 %v5512, 4294901760
      %5514 = vmatpush1.msra.mxu0 %v5513
      %5515 = vmatprep.subr.mxu0 0.0
      %v5516 = vand.u32 %v2808, 4294901760
      %v5517 = vsub.f32 %v2808, %v5516
      %v5518 = vand.u32 %v5517, 4294901760
      %5519 = vmatpush1.msra.mxu0 %v5518
      %5520 = vmatprep.subr.mxu0 0.0
      %v5521 = vand.u32 %v2805, 4294901760
      %v5522 = vsub.f32 %v2805, %v5521
      %v5523 = vand.u32 %v5522, 4294901760
      %5524 = vmatpush1.msra.mxu0 %v5523
      %5525 = vmatprep.subr.mxu0 0.0
      %v5526 = vand.u32 %v2802, 4294901760
      %v5527 = vsub.f32 %v2802, %v5526
      %v5528 = vand.u32 %v5527, 4294901760
      %5529 = vmatpush1.msra.mxu0 %v5528
      %5530 = vmatprep.subr.mxu0 0.0
      %5531 = vmatpush2.msra.mxu0 0.0
      %5532 = vmatprep.subr.mxu0 0.0
      %5533 = vmatpush2.msra.mxu0 0.0
      %5534 = vmatprep.subr.mxu0 0.0
      %5535 = vmatpush2.msra.mxu0 0.0
      %5536 = vmatprep.subr.mxu0 0.0
      %5537 = vmatpush2.msra.mxu0 0.0
      %5538 = vmatprep.subr.mxu0 0.0
      %5539 = vmatpush2.msra.mxu0 0.0
      %5540 = vmatprep.subr.mxu0 0.0
      %5541 = vmatpush2.msra.mxu0 0.0
      %5542 = vmatprep.subr.mxu0 0.0
      %5543 = vmatpush2.msra.mxu0 0.0
      %5544 = vmatprep.subr.mxu0 0.0
      %5545 = vmatpush2.msra.mxu0 0.0
      %5546 = vmatprep.subr.mxu0 0.0
      %5547 = vmatpush2.msra.mxu0 0.0
      %5548 = vmatprep.subr.mxu0 0.0
      %5549 = vmatpush2.msra.mxu0 0.0
      %5550 = vmatprep.subr.mxu0 0.0
      %5551 = vmatpush2.msra.mxu0 0.0
      %5552 = vmatprep.subr.mxu0 0.0
      %5553 = vmatpush2.msra.mxu0 0.0
      %5554 = vmatprep.subr.mxu0 0.0
      %5555 = vmatpush2.msra.mxu0 0.0
      %5556 = vmatprep.subr.mxu0 0.0
      %5557 = vmatpush2.msra.mxu0 0.0
      %5558 = vmatprep.subr.mxu0 0.0
      %5559 = vmatpush2.msra.mxu0 0.0
      %5560 = vmatprep.subr.mxu0 0.0
      %5561 = vmatpush2.msra.mxu0 0.0
      %5562 = vmatprep.mubr.f32.mxu0 0.0
      %v5563 = vand.u32 %v2848, 4294901760
      %5564 = vmatmul.mubr.f32.gmra.mxu0 %v5563
      %v5565 = vpop.f32.mrf.mxu0
      %v5566 = vadd.f32 %v5327, %v5565
      %v5567 = vpop.f32.mrf.mxu0
      %5568 = vmatprep.mubr.f32.mxu0 0.0
      %v5569 = vand.u32 %v2849, 4294901760
      %5570 = vmatmul.mubr.f32.gmra.mxu0 %v5569
      %v5571 = vpop.f32.mrf.mxu0
      %v5572 = vadd.f32 %v5335, %v5571
      %v5573 = vpop.f32.mrf.mxu0
      %5574 = vmatprep.mubr.f32.mxu0 0.0
      %v5575 = vand.u32 %v2850, 4294901760
      %5576 = vmatmul.mubr.f32.gmra.mxu0 %v5575
      %v5577 = vpop.f32.mrf.mxu0
      %v5578 = vadd.f32 %v5343, %v5577
      %v5579 = vpop.f32.mrf.mxu0
      %5580 = vmatprep.mubr.f32.mxu0 0.0
      %v5581 = vand.u32 %v2851, 4294901760
      %5582 = vmatmul.mubr.f32.gmra.mxu0 %v5581
      %v5583 = vpop.f32.mrf.mxu0
      %v5584 = vadd.f32 %v5351, %v5583
      %v5585 = vpop.f32.mrf.mxu0
      %5586 = vmatprep.mubr.f32.mxu0 0.0
      %v5587 = vand.u32 %v2852, 4294901760
      %5588 = vmatmul.mubr.f32.gmra.mxu0 %v5587
      %v5589 = vpop.f32.mrf.mxu0
      %v5590 = vadd.f32 %v5359, %v5589
      %v5591 = vpop.f32.mrf.mxu0
      %5592 = vmatprep.mubr.f32.mxu0 0.0
      %v5593 = vand.u32 %v2853, 4294901760
      %5594 = vmatmul.mubr.f32.gmra.mxu0 %v5593
      %v5595 = vpop.f32.mrf.mxu0
      %v5596 = vadd.f32 %v5367, %v5595
      %v5597 = vpop.f32.mrf.mxu0
      %5598 = vmatprep.mubr.f32.mxu0 0.0
      %v5599 = vand.u32 %v2854, 4294901760
      %5600 = vmatmul.mubr.f32.gmra.mxu0 %v5599
      %v5601 = vpop.f32.mrf.mxu0
      %v5602 = vadd.f32 %v5375, %v5601
      %v5603 = vpop.f32.mrf.mxu0
      %5604 = vmatprep.mubr.f32.mxu0 0.0
      %v5605 = vand.u32 %v2855, 4294901760
      %5606 = vmatmul.mubr.f32.gmra.mxu0 %v5605
      %v5607 = vpop.f32.mrf.mxu0
      %v5608 = vadd.f32 %v5383, %v5607
      %v5609 = vpop.f32.mrf.mxu0
      %5610 = vmatprep.mubr.f32.mxu0 0.0
      %v5611 = vand.u32 %v2856, 4294901760
      %5612 = vmatmul.mubr.f32.gmra.mxu0 %v5611
      %v5613 = vpop.f32.mrf.mxu0
      %v5614 = vadd.f32 %v5391, %v5613
      %v5615 = vpop.f32.mrf.mxu0
      %5616 = vmatprep.mubr.f32.mxu0 0.0
      %v5617 = vand.u32 %v2857, 4294901760
      %5618 = vmatmul.mubr.f32.gmra.mxu0 %v5617
      %v5619 = vpop.f32.mrf.mxu0
      %v5620 = vadd.f32 %v5399, %v5619
      %v5621 = vpop.f32.mrf.mxu0
      %5622 = vmatprep.mubr.f32.mxu0 0.0
      %v5623 = vand.u32 %v2858, 4294901760
      %5624 = vmatmul.mubr.f32.gmra.mxu0 %v5623
      %v5625 = vpop.f32.mrf.mxu0
      %v5626 = vadd.f32 %v5407, %v5625
      %v5627 = vpop.f32.mrf.mxu0
      %5628 = vmatprep.mubr.f32.mxu0 0.0
      %v5629 = vand.u32 %v2859, 4294901760
      %5630 = vmatmul.mubr.f32.gmra.mxu0 %v5629
      %v5631 = vpop.f32.mrf.mxu0
      %v5632 = vadd.f32 %v5415, %v5631
      %v5633 = vpop.f32.mrf.mxu0
      %5634 = vmatprep.mubr.f32.mxu0 0.0
      %v5635 = vand.u32 %v2860, 4294901760
      %5636 = vmatmul.mubr.f32.gmra.mxu0 %v5635
      %v5637 = vpop.f32.mrf.mxu0
      %v5638 = vadd.f32 %v5423, %v5637
      %v5639 = vpop.f32.mrf.mxu0
      %5640 = vmatprep.mubr.f32.mxu0 0.0
      %v5641 = vand.u32 %v2861, 4294901760
      %5642 = vmatmul.mubr.f32.gmra.mxu0 %v5641
      %v5643 = vpop.f32.mrf.mxu0
      %v5644 = vadd.f32 %v5431, %v5643
      %v5645 = vpop.f32.mrf.mxu0
      %5646 = vmatprep.mubr.f32.mxu0 0.0
      %v5647 = vand.u32 %v2862, 4294901760
      %5648 = vmatmul.mubr.f32.gmra.mxu0 %v5647
      %v5649 = vpop.f32.mrf.mxu0
      %v5650 = vadd.f32 %v5439, %v5649
      %v5651 = vpop.f32.mrf.mxu0
      %5652 = vmatprep.mubr.f32.mxu0 0.0
      %v5653 = vand.u32 %v2863, 4294901760
      %5654 = vmatmul.mubr.f32.gmra.mxu0 %v5653
      %v5655 = vpop.f32.mrf.mxu0
      %v5656 = vadd.f32 %v5447, %v5655
      %v5657 = vpop.f32.mrf.mxu0
      %5658 = vdwg.mxu0
      %5659 = vmatprep.subr.mxu0 0.0
      %v5660 = vand.u32 %v2847, 4294901760
      %5661 = vmatpush1.msra.mxu0 %v5660
      %5662 = vmatprep.subr.mxu0 0.0
      %v5663 = vand.u32 %v2844, 4294901760
      %5664 = vmatpush1.msra.mxu0 %v5663
      %5665 = vmatprep.subr.mxu0 0.0
      %v5666 = vand.u32 %v2841, 4294901760
      %5667 = vmatpush1.msra.mxu0 %v5666
      %5668 = vmatprep.subr.mxu0 0.0
      %v5669 = vand.u32 %v2838, 4294901760
      %5670 = vmatpush1.msra.mxu0 %v5669
      %5671 = vmatprep.subr.mxu0 0.0
      %v5672 = vand.u32 %v2835, 4294901760
      %5673 = vmatpush1.msra.mxu0 %v5672
      %5674 = vmatprep.subr.mxu0 0.0
      %v5675 = vand.u32 %v2832, 4294901760
      %5676 = vmatpush1.msra.mxu0 %v5675
      %5677 = vmatprep.subr.mxu0 0.0
      %v5678 = vand.u32 %v2829, 4294901760
      %5679 = vmatpush1.msra.mxu0 %v5678
      %5680 = vmatprep.subr.mxu0 0.0
      %v5681 = vand.u32 %v2826, 4294901760
      %5682 = vmatpush1.msra.mxu0 %v5681
      %5683 = vmatprep.subr.mxu0 0.0
      %v5684 = vand.u32 %v2823, 4294901760
      %5685 = vmatpush1.msra.mxu0 %v5684
      %5686 = vmatprep.subr.mxu0 0.0
      %v5687 = vand.u32 %v2820, 4294901760
      %5688 = vmatpush1.msra.mxu0 %v5687
      %5689 = vmatprep.subr.mxu0 0.0
      %v5690 = vand.u32 %v2817, 4294901760
      %5691 = vmatpush1.msra.mxu0 %v5690
      %5692 = vmatprep.subr.mxu0 0.0
      %v5693 = vand.u32 %v2814, 4294901760
      %5694 = vmatpush1.msra.mxu0 %v5693
      %5695 = vmatprep.subr.mxu0 0.0
      %v5696 = vand.u32 %v2811, 4294901760
      %5697 = vmatpush1.msra.mxu0 %v5696
      %5698 = vmatprep.subr.mxu0 0.0
      %v5699 = vand.u32 %v2808, 4294901760
      %5700 = vmatpush1.msra.mxu0 %v5699
      %5701 = vmatprep.subr.mxu0 0.0
      %v5702 = vand.u32 %v2805, 4294901760
      %5703 = vmatpush1.msra.mxu0 %v5702
      %5704 = vmatprep.subr.mxu0 0.0
      %v5705 = vand.u32 %v2802, 4294901760
      %5706 = vmatpush1.msra.mxu0 %v5705
      %5707 = vmatprep.subr.mxu0 0.0
      %5708 = vmatpush2.msra.mxu0 0.0
      %5709 = vmatprep.subr.mxu0 0.0
      %5710 = vmatpush2.msra.mxu0 0.0
      %5711 = vmatprep.subr.mxu0 0.0
      %5712 = vmatpush2.msra.mxu0 0.0
      %5713 = vmatprep.subr.mxu0 0.0
      %5714 = vmatpush2.msra.mxu0 0.0
      %5715 = vmatprep.subr.mxu0 0.0
      %5716 = vmatpush2.msra.mxu0 0.0
      %5717 = vmatprep.subr.mxu0 0.0
      %5718 = vmatpush2.msra.mxu0 0.0
      %5719 = vmatprep.subr.mxu0 0.0
      %5720 = vmatpush2.msra.mxu0 0.0
      %5721 = vmatprep.subr.mxu0 0.0
      %5722 = vmatpush2.msra.mxu0 0.0
      %5723 = vmatprep.subr.mxu0 0.0
      %5724 = vmatpush2.msra.mxu0 0.0
      %5725 = vmatprep.subr.mxu0 0.0
      %5726 = vmatpush2.msra.mxu0 0.0
      %5727 = vmatprep.subr.mxu0 0.0
      %5728 = vmatpush2.msra.mxu0 0.0
      %5729 = vmatprep.subr.mxu0 0.0
      %5730 = vmatpush2.msra.mxu0 0.0
      %5731 = vmatprep.subr.mxu0 0.0
      %5732 = vmatpush2.msra.mxu0 0.0
      %5733 = vmatprep.subr.mxu0 0.0
      %5734 = vmatpush2.msra.mxu0 0.0
      %5735 = vmatprep.subr.mxu0 0.0
      %5736 = vmatpush2.msra.mxu0 0.0
      %5737 = vmatprep.subr.mxu0 0.0
      %5738 = vmatpush2.msra.mxu0 0.0
      %5739 = vmatprep.mubr.f32.mxu0 0.0
      %v5740 = vand.u32 %v2848, 4294901760
      %5741 = vmatmul.mubr.f32.gmra.mxu0 %v5740
      %v5742 = vpop.f32.mrf.mxu0
      %v5743 = vadd.f32 %v5566, %v5742
      %v5744 = vpop.f32.mrf.mxu0
      %5745 = vmatprep.mubr.f32.mxu0 0.0
      %v5746 = vand.u32 %v2849, 4294901760
      %5747 = vmatmul.mubr.f32.gmra.mxu0 %v5746
      %v5748 = vpop.f32.mrf.mxu0
      %v5749 = vadd.f32 %v5572, %v5748
      %v5750 = vpop.f32.mrf.mxu0
      %5751 = vmatprep.mubr.f32.mxu0 0.0
      %v5752 = vand.u32 %v2850, 4294901760
      %5753 = vmatmul.mubr.f32.gmra.mxu0 %v5752
      %v5754 = vpop.f32.mrf.mxu0
      %v5755 = vadd.f32 %v5578, %v5754
      %v5756 = vpop.f32.mrf.mxu0
      %5757 = vmatprep.mubr.f32.mxu0 0.0
      %v5758 = vand.u32 %v2851, 4294901760
      %5759 = vmatmul.mubr.f32.gmra.mxu0 %v5758
      %v5760 = vpop.f32.mrf.mxu0
      %v5761 = vadd.f32 %v5584, %v5760
      %v5762 = vpop.f32.mrf.mxu0
      %5763 = vmatprep.mubr.f32.mxu0 0.0
      %v5764 = vand.u32 %v2852, 4294901760
      %5765 = vmatmul.mubr.f32.gmra.mxu0 %v5764
      %v5766 = vpop.f32.mrf.mxu0
      %v5767 = vadd.f32 %v5590, %v5766
      %v5768 = vpop.f32.mrf.mxu0
      %5769 = vmatprep.mubr.f32.mxu0 0.0
      %v5770 = vand.u32 %v2853, 4294901760
      %5771 = vmatmul.mubr.f32.gmra.mxu0 %v5770
      %v5772 = vpop.f32.mrf.mxu0
      %v5773 = vadd.f32 %v5596, %v5772
      %v5774 = vpop.f32.mrf.mxu0
      %5775 = vmatprep.mubr.f32.mxu0 0.0
      %v5776 = vand.u32 %v2854, 4294901760
      %5777 = vmatmul.mubr.f32.gmra.mxu0 %v5776
      %v5778 = vpop.f32.mrf.mxu0
      %v5779 = vadd.f32 %v5602, %v5778
      %v5780 = vpop.f32.mrf.mxu0
      %5781 = vmatprep.mubr.f32.mxu0 0.0
      %v5782 = vand.u32 %v2855, 4294901760
      %5783 = vmatmul.mubr.f32.gmra.mxu0 %v5782
      %v5784 = vpop.f32.mrf.mxu0
      %v5785 = vadd.f32 %v5608, %v5784
      %v5786 = vpop.f32.mrf.mxu0
      %5787 = vmatprep.mubr.f32.mxu0 0.0
      %v5788 = vand.u32 %v2856, 4294901760
      %5789 = vmatmul.mubr.f32.gmra.mxu0 %v5788
      %v5790 = vpop.f32.mrf.mxu0
      %v5791 = vadd.f32 %v5614, %v5790
      %v5792 = vpop.f32.mrf.mxu0
      %5793 = vmatprep.mubr.f32.mxu0 0.0
      %v5794 = vand.u32 %v2857, 4294901760
      %5795 = vmatmul.mubr.f32.gmra.mxu0 %v5794
      %v5796 = vpop.f32.mrf.mxu0
      %v5797 = vadd.f32 %v5620, %v5796
      %v5798 = vpop.f32.mrf.mxu0
      %5799 = vmatprep.mubr.f32.mxu0 0.0
      %v5800 = vand.u32 %v2858, 4294901760
      %5801 = vmatmul.mubr.f32.gmra.mxu0 %v5800
      %v5802 = vpop.f32.mrf.mxu0
      %v5803 = vadd.f32 %v5626, %v5802
      %v5804 = vpop.f32.mrf.mxu0
      %5805 = vmatprep.mubr.f32.mxu0 0.0
      %v5806 = vand.u32 %v2859, 4294901760
      %5807 = vmatmul.mubr.f32.gmra.mxu0 %v5806
      %v5808 = vpop.f32.mrf.mxu0
      %v5809 = vadd.f32 %v5632, %v5808
      %v5810 = vpop.f32.mrf.mxu0
      %5811 = vmatprep.mubr.f32.mxu0 0.0
      %v5812 = vand.u32 %v2860, 4294901760
      %5813 = vmatmul.mubr.f32.gmra.mxu0 %v5812
      %v5814 = vpop.f32.mrf.mxu0
      %v5815 = vadd.f32 %v5638, %v5814
      %v5816 = vpop.f32.mrf.mxu0
      %5817 = vmatprep.mubr.f32.mxu0 0.0
      %v5818 = vand.u32 %v2861, 4294901760
      %5819 = vmatmul.mubr.f32.gmra.mxu0 %v5818
      %v5820 = vpop.f32.mrf.mxu0
      %v5821 = vadd.f32 %v5644, %v5820
      %v5822 = vpop.f32.mrf.mxu0
      %5823 = vmatprep.mubr.f32.mxu0 0.0
      %v5824 = vand.u32 %v2862, 4294901760
      %5825 = vmatmul.mubr.f32.gmra.mxu0 %v5824
      %v5826 = vpop.f32.mrf.mxu0
      %v5827 = vadd.f32 %v5650, %v5826
      %v5828 = vpop.f32.mrf.mxu0
      %5829 = vmatprep.mubr.f32.mxu0 0.0
      %v5830 = vand.u32 %v2863, 4294901760
      %5831 = vmatmul.mubr.f32.gmra.mxu0 %v5830
      %v5832 = vpop.f32.mrf.mxu0
      %v5833 = vadd.f32 %v5656, %v5832
      %v5834 = vpop.f32.mrf.mxu0
      %5835 = vdwg.mxu0
      %v5836 = vmax.f32 %v4441, 0.0
      %v5837 = vmax.f32 %v4443, 0.0
      %v5838 = vmax.f32 %v5743, 0.0
      %v5839 = vmax.f32 %v4448, 0.0
      %v5840 = vmax.f32 %v4450, 0.0
      %v5841 = vmax.f32 %v5749, 0.0
      %v5842 = vmax.f32 %v4455, 0.0
      %v5843 = vmax.f32 %v4457, 0.0
      %v5844 = vmax.f32 %v5755, 0.0
      %v5845 = vmax.f32 %v4462, 0.0
      %v5846 = vmax.f32 %v4464, 0.0
      %v5847 = vmax.f32 %v5761, 0.0
      %v5848 = vmax.f32 %v4469, 0.0
      %v5849 = vmax.f32 %v4471, 0.0
      %v5850 = vmax.f32 %v5767, 0.0
      %v5851 = vmax.f32 %v4476, 0.0
      %v5852 = vmax.f32 %v4478, 0.0
      %v5853 = vmax.f32 %v5773, 0.0
      %v5854 = vmax.f32 %v4483, 0.0
      %v5855 = vmax.f32 %v4485, 0.0
      %v5856 = vmax.f32 %v5779, 0.0
      %v5857 = vmax.f32 %v4490, 0.0
      %v5858 = vmax.f32 %v4492, 0.0
      %v5859 = vmax.f32 %v5785, 0.0
      %v5860 = vmax.f32 %v4497, 0.0
      %v5861 = vmax.f32 %v4499, 0.0
      %v5862 = vmax.f32 %v5791, 0.0
      %v5863 = vmax.f32 %v4504, 0.0
      %v5864 = vmax.f32 %v4506, 0.0
      %v5865 = vmax.f32 %v5797, 0.0
      %v5866 = vmax.f32 %v4511, 0.0
      %v5867 = vmax.f32 %v4513, 0.0
      %v5868 = vmax.f32 %v5803, 0.0
      %v5869 = vmax.f32 %v4518, 0.0
      %v5870 = vmax.f32 %v4520, 0.0
      %v5871 = vmax.f32 %v5809, 0.0
      %v5872 = vmax.f32 %v4525, 0.0
      %v5873 = vmax.f32 %v4527, 0.0
      %v5874 = vmax.f32 %v5815, 0.0
      %v5875 = vmax.f32 %v4532, 0.0
      %v5876 = vmax.f32 %v4534, 0.0
      %v5877 = vmax.f32 %v5821, 0.0
      %v5878 = vmax.f32 %v4539, 0.0
      %v5879 = vmax.f32 %v4541, 0.0
      %v5880 = vmax.f32 %v5827, 0.0
      %v5881 = vmax.f32 %v4546, 0.0
      %v5882 = vmax.f32 %v4548, 0.0
      %v5883 = vmax.f32 %v5833, 0.0
      %v5884 = vld [vmem:[%s6] sm:$0xf]
      %v5885 = vld [vmem:[%s7] sm:$0xf]
      %5887 = vset.pattern.permute.xlu0 0
      %5888 = vperm.xlu0 %5887, %v5885
      %v5889 = vpop.permute.xlu0 %5888
      %v5891 = vand.u32 %v5882, 4294901760
      %5892 = vmatprep.subr.mxu0 %v5891
      %v5893 = vand.u32 %v5881, 4294901760
      %5894 = vmatpush1.msra.mxu0 %v5893
      %v5895 = vand.u32 %v5879, 4294901760
      %5896 = vmatprep.subr.mxu0 %v5895
      %v5897 = vand.u32 %v5878, 4294901760
      %5898 = vmatpush1.msra.mxu0 %v5897
      %v5899 = vand.u32 %v5876, 4294901760
      %5900 = vmatprep.subr.mxu0 %v5899
      %v5901 = vand.u32 %v5875, 4294901760
      %5902 = vmatpush1.msra.mxu0 %v5901
      %v5903 = vand.u32 %v5873, 4294901760
      %5904 = vmatprep.subr.mxu0 %v5903
      %v5905 = vand.u32 %v5872, 4294901760
      %5906 = vmatpush1.msra.mxu0 %v5905
      %v5907 = vand.u32 %v5870, 4294901760
      %5908 = vmatprep.subr.mxu0 %v5907
      %v5909 = vand.u32 %v5869, 4294901760
      %5910 = vmatpush1.msra.mxu0 %v5909
      %v5911 = vand.u32 %v5867, 4294901760
      %5912 = vmatprep.subr.mxu0 %v5911
      %v5913 = vand.u32 %v5866, 4294901760
      %5914 = vmatpush1.msra.mxu0 %v5913
      %v5915 = vand.u32 %v5864, 4294901760
      %5916 = vmatprep.subr.mxu0 %v5915
      %v5917 = vand.u32 %v5863, 4294901760
      %5918 = vmatpush1.msra.mxu0 %v5917
      %v5919 = vand.u32 %v5861, 4294901760
      %5920 = vmatprep.subr.mxu0 %v5919
      %v5921 = vand.u32 %v5860, 4294901760
      %5922 = vmatpush1.msra.mxu0 %v5921
      %v5923 = vand.u32 %v5858, 4294901760
      %5924 = vmatprep.subr.mxu0 %v5923
      %v5925 = vand.u32 %v5857, 4294901760
      %5926 = vmatpush1.msra.mxu0 %v5925
      %v5927 = vand.u32 %v5855, 4294901760
      %5928 = vmatprep.subr.mxu0 %v5927
      %v5929 = vand.u32 %v5854, 4294901760
      %5930 = vmatpush1.msra.mxu0 %v5929
      %v5931 = vand.u32 %v5852, 4294901760
      %5932 = vmatprep.subr.mxu0 %v5931
      %v5933 = vand.u32 %v5851, 4294901760
      %5934 = vmatpush1.msra.mxu0 %v5933
      %v5935 = vand.u32 %v5849, 4294901760
      %5936 = vmatprep.subr.mxu0 %v5935
      %v5937 = vand.u32 %v5848, 4294901760
      %5938 = vmatpush1.msra.mxu0 %v5937
      %v5939 = vand.u32 %v5846, 4294901760
      %5940 = vmatprep.subr.mxu0 %v5939
      %v5941 = vand.u32 %v5845, 4294901760
      %5942 = vmatpush1.msra.mxu0 %v5941
      %v5943 = vand.u32 %v5843, 4294901760
      %5944 = vmatprep.subr.mxu0 %v5943
      %v5945 = vand.u32 %v5842, 4294901760
      %5946 = vmatpush1.msra.mxu0 %v5945
      %v5947 = vand.u32 %v5840, 4294901760
      %5948 = vmatprep.subr.mxu0 %v5947
      %v5949 = vand.u32 %v5839, 4294901760
      %5950 = vmatpush1.msra.mxu0 %v5949
      %v5951 = vand.u32 %v5837, 4294901760
      %5952 = vmatprep.subr.mxu0 %v5951
      %v5953 = vand.u32 %v5836, 4294901760
      %5954 = vmatpush1.msra.mxu0 %v5953
      %5955 = vmatprep.subr.mxu0 0.0
      %5956 = vmatpush2.msra.mxu0 0.0
      %5957 = vmatprep.subr.mxu0 0.0
      %5958 = vmatpush2.msra.mxu0 0.0
      %5959 = vmatprep.subr.mxu0 0.0
      %5960 = vmatpush2.msra.mxu0 0.0
      %5961 = vmatprep.subr.mxu0 0.0
      %5962 = vmatpush2.msra.mxu0 0.0
      %5963 = vmatprep.subr.mxu0 0.0
      %5964 = vmatpush2.msra.mxu0 0.0
      %5965 = vmatprep.subr.mxu0 0.0
      %5966 = vmatpush2.msra.mxu0 0.0
      %5967 = vmatprep.subr.mxu0 0.0
      %5968 = vmatpush2.msra.mxu0 0.0
      %5969 = vmatprep.subr.mxu0 0.0
      %5970 = vmatpush2.msra.mxu0 0.0
      %5971 = vmatprep.subr.mxu0 0.0
      %5972 = vmatpush2.msra.mxu0 0.0
      %5973 = vmatprep.subr.mxu0 0.0
      %5974 = vmatpush2.msra.mxu0 0.0
      %5975 = vmatprep.subr.mxu0 0.0
      %5976 = vmatpush2.msra.mxu0 0.0
      %5977 = vmatprep.subr.mxu0 0.0
      %5978 = vmatpush2.msra.mxu0 0.0
      %5979 = vmatprep.subr.mxu0 0.0
      %5980 = vmatpush2.msra.mxu0 0.0
      %5981 = vmatprep.subr.mxu0 0.0
      %5982 = vmatpush2.msra.mxu0 0.0
      %5983 = vmatprep.subr.mxu0 0.0
      %5984 = vmatpush2.msra.mxu0 0.0
      %5985 = vmatprep.subr.mxu0 0.0
      %5986 = vmatpush2.msra.mxu0 0.0
      %5987 = vmatprep.mubr.f32.mxu0 0.0
      %v5988 = vand.u32 %v5884, 4294901760
      %v5989 = vsub.f32 %v5884, %v5988
      %v5990 = vand.u32 %v5989, 4294901760
      %v5991 = vsub.f32 %v5989, %v5990
      %v5992 = vand.u32 %v5991, 4294901760
      %5993 = vmatmul.mubr.f32.gmra.mxu0 %v5992
      %v5994 = vpop.f32.mrf.mxu0
      %v5995 = vadd.f32 %v5889, %v5994
      %v5996 = vpop.f32.mrf.mxu0
      %v5997 = vadd.f32 %v5889, %v5996
      %5998 = vdwg.mxu0
      %v5999 = vand.u32 %v5882, 4294901760
      %v6000 = vsub.f32 %v5882, %v5999
      %v6001 = vand.u32 %v6000, 4294901760
      %v6002 = vsub.f32 %v6000, %v6001
      %v6003 = vand.u32 %v6002, 4294901760
      %6004 = vmatprep.subr.mxu0 %v6003
      %v6005 = vand.u32 %v5881, 4294901760
      %v6006 = vsub.f32 %v5881, %v6005
      %v6007 = vand.u32 %v6006, 4294901760
      %v6008 = vsub.f32 %v6006, %v6007
      %v6009 = vand.u32 %v6008, 4294901760
      %6010 = vmatpush1.msra.mxu0 %v6009
      %v6011 = vand.u32 %v5879, 4294901760
      %v6012 = vsub.f32 %v5879, %v6011
      %v6013 = vand.u32 %v6012, 4294901760
      %v6014 = vsub.f32 %v6012, %v6013
      %v6015 = vand.u32 %v6014, 4294901760
      %6016 = vmatprep.subr.mxu0 %v6015
      %v6017 = vand.u32 %v5878, 4294901760
      %v6018 = vsub.f32 %v5878, %v6017
      %v6019 = vand.u32 %v6018, 4294901760
      %v6020 = vsub.f32 %v6018, %v6019
      %v6021 = vand.u32 %v6020, 4294901760
      %6022 = vmatpush1.msra.mxu0 %v6021
      %v6023 = vand.u32 %v5876, 4294901760
      %v6024 = vsub.f32 %v5876, %v6023
      %v6025 = vand.u32 %v6024, 4294901760
      %v6026 = vsub.f32 %v6024, %v6025
      %v6027 = vand.u32 %v6026, 4294901760
      %6028 = vmatprep.subr.mxu0 %v6027
      %v6029 = vand.u32 %v5875, 4294901760
      %v6030 = vsub.f32 %v5875, %v6029
      %v6031 = vand.u32 %v6030, 4294901760
      %v6032 = vsub.f32 %v6030, %v6031
      %v6033 = vand.u32 %v6032, 4294901760
      %6034 = vmatpush1.msra.mxu0 %v6033
      %v6035 = vand.u32 %v5873, 4294901760
      %v6036 = vsub.f32 %v5873, %v6035
      %v6037 = vand.u32 %v6036, 4294901760
      %v6038 = vsub.f32 %v6036, %v6037
      %v6039 = vand.u32 %v6038, 4294901760
      %6040 = vmatprep.subr.mxu0 %v6039
      %v6041 = vand.u32 %v5872, 4294901760
      %v6042 = vsub.f32 %v5872, %v6041
      %v6043 = vand.u32 %v6042, 4294901760
      %v6044 = vsub.f32 %v6042, %v6043
      %v6045 = vand.u32 %v6044, 4294901760
      %6046 = vmatpush1.msra.mxu0 %v6045
      %v6047 = vand.u32 %v5870, 4294901760
      %v6048 = vsub.f32 %v5870, %v6047
      %v6049 = vand.u32 %v6048, 4294901760
      %v6050 = vsub.f32 %v6048, %v6049
      %v6051 = vand.u32 %v6050, 4294901760
      %6052 = vmatprep.subr.mxu0 %v6051
      %v6053 = vand.u32 %v5869, 4294901760
      %v6054 = vsub.f32 %v5869, %v6053
      %v6055 = vand.u32 %v6054, 4294901760
      %v6056 = vsub.f32 %v6054, %v6055
      %v6057 = vand.u32 %v6056, 4294901760
      %6058 = vmatpush1.msra.mxu0 %v6057
      %v6059 = vand.u32 %v5867, 4294901760
      %v6060 = vsub.f32 %v5867, %v6059
      %v6061 = vand.u32 %v6060, 4294901760
      %v6062 = vsub.f32 %v6060, %v6061
      %v6063 = vand.u32 %v6062, 4294901760
      %6064 = vmatprep.subr.mxu0 %v6063
      %v6065 = vand.u32 %v5866, 4294901760
      %v6066 = vsub.f32 %v5866, %v6065
      %v6067 = vand.u32 %v6066, 4294901760
      %v6068 = vsub.f32 %v6066, %v6067
      %v6069 = vand.u32 %v6068, 4294901760
      %6070 = vmatpush1.msra.mxu0 %v6069
      %v6071 = vand.u32 %v5864, 4294901760
      %v6072 = vsub.f32 %v5864, %v6071
      %v6073 = vand.u32 %v6072, 4294901760
      %v6074 = vsub.f32 %v6072, %v6073
      %v6075 = vand.u32 %v6074, 4294901760
      %6076 = vmatprep.subr.mxu0 %v6075
      %v6077 = vand.u32 %v5863, 4294901760
      %v6078 = vsub.f32 %v5863, %v6077
      %v6079 = vand.u32 %v6078, 4294901760
      %v6080 = vsub.f32 %v6078, %v6079
      %v6081 = vand.u32 %v6080, 4294901760
      %6082 = vmatpush1.msra.mxu0 %v6081
      %v6083 = vand.u32 %v5861, 4294901760
      %v6084 = vsub.f32 %v5861, %v6083
      %v6085 = vand.u32 %v6084, 4294901760
      %v6086 = vsub.f32 %v6084, %v6085
      %v6087 = vand.u32 %v6086, 4294901760
      %6088 = vmatprep.subr.mxu0 %v6087
      %v6089 = vand.u32 %v5860, 4294901760
      %v6090 = vsub.f32 %v5860, %v6089
      %v6091 = vand.u32 %v6090, 4294901760
      %v6092 = vsub.f32 %v6090, %v6091
      %v6093 = vand.u32 %v6092, 4294901760
      %6094 = vmatpush1.msra.mxu0 %v6093
      %v6095 = vand.u32 %v5858, 4294901760
      %v6096 = vsub.f32 %v5858, %v6095
      %v6097 = vand.u32 %v6096, 4294901760
      %v6098 = vsub.f32 %v6096, %v6097
      %v6099 = vand.u32 %v6098, 4294901760
      %6100 = vmatprep.subr.mxu0 %v6099
      %v6101 = vand.u32 %v5857, 4294901760
      %v6102 = vsub.f32 %v5857, %v6101
      %v6103 = vand.u32 %v6102, 4294901760
      %v6104 = vsub.f32 %v6102, %v6103
      %v6105 = vand.u32 %v6104, 4294901760
      %6106 = vmatpush1.msra.mxu0 %v6105
      %v6107 = vand.u32 %v5855, 4294901760
      %v6108 = vsub.f32 %v5855, %v6107
      %v6109 = vand.u32 %v6108, 4294901760
      %v6110 = vsub.f32 %v6108, %v6109
      %v6111 = vand.u32 %v6110, 4294901760
      %6112 = vmatprep.subr.mxu0 %v6111
      %v6113 = vand.u32 %v5854, 4294901760
      %v6114 = vsub.f32 %v5854, %v6113
      %v6115 = vand.u32 %v6114, 4294901760
      %v6116 = vsub.f32 %v6114, %v6115
      %v6117 = vand.u32 %v6116, 4294901760
      %6118 = vmatpush1.msra.mxu0 %v6117
      %v6119 = vand.u32 %v5852, 4294901760
      %v6120 = vsub.f32 %v5852, %v6119
      %v6121 = vand.u32 %v6120, 4294901760
      %v6122 = vsub.f32 %v6120, %v6121
      %v6123 = vand.u32 %v6122, 4294901760
      %6124 = vmatprep.subr.mxu0 %v6123
      %v6125 = vand.u32 %v5851, 4294901760
      %v6126 = vsub.f32 %v5851, %v6125
      %v6127 = vand.u32 %v6126, 4294901760
      %v6128 = vsub.f32 %v6126, %v6127
      %v6129 = vand.u32 %v6128, 4294901760
      %6130 = vmatpush1.msra.mxu0 %v6129
      %v6131 = vand.u32 %v5849, 4294901760
      %v6132 = vsub.f32 %v5849, %v6131
      %v6133 = vand.u32 %v6132, 4294901760
      %v6134 = vsub.f32 %v6132, %v6133
      %v6135 = vand.u32 %v6134, 4294901760
      %6136 = vmatprep.subr.mxu0 %v6135
      %v6137 = vand.u32 %v5848, 4294901760
      %v6138 = vsub.f32 %v5848, %v6137
      %v6139 = vand.u32 %v6138, 4294901760
      %v6140 = vsub.f32 %v6138, %v6139
      %v6141 = vand.u32 %v6140, 4294901760
      %6142 = vmatpush1.msra.mxu0 %v6141
      %v6143 = vand.u32 %v5846, 4294901760
      %v6144 = vsub.f32 %v5846, %v6143
      %v6145 = vand.u32 %v6144, 4294901760
      %v6146 = vsub.f32 %v6144, %v6145
      %v6147 = vand.u32 %v6146, 4294901760
      %6148 = vmatprep.subr.mxu0 %v6147
      %v6149 = vand.u32 %v5845, 4294901760
      %v6150 = vsub.f32 %v5845, %v6149
      %v6151 = vand.u32 %v6150, 4294901760
      %v6152 = vsub.f32 %v6150, %v6151
      %v6153 = vand.u32 %v6152, 4294901760
      %6154 = vmatpush1.msra.mxu0 %v6153
      %v6155 = vand.u32 %v5843, 4294901760
      %v6156 = vsub.f32 %v5843, %v6155
      %v6157 = vand.u32 %v6156, 4294901760
      %v6158 = vsub.f32 %v6156, %v6157
      %v6159 = vand.u32 %v6158, 4294901760
      %6160 = vmatprep.subr.mxu0 %v6159
      %v6161 = vand.u32 %v5842, 4294901760
      %v6162 = vsub.f32 %v5842, %v6161
      %v6163 = vand.u32 %v6162, 4294901760
      %v6164 = vsub.f32 %v6162, %v6163
      %v6165 = vand.u32 %v6164, 4294901760
      %6166 = vmatpush1.msra.mxu0 %v6165
      %v6167 = vand.u32 %v5840, 4294901760
      %v6168 = vsub.f32 %v5840, %v6167
      %v6169 = vand.u32 %v6168, 4294901760
      %v6170 = vsub.f32 %v6168, %v6169
      %v6171 = vand.u32 %v6170, 4294901760
      %6172 = vmatprep.subr.mxu0 %v6171
      %v6173 = vand.u32 %v5839, 4294901760
      %v6174 = vsub.f32 %v5839, %v6173
      %v6175 = vand.u32 %v6174, 4294901760
      %v6176 = vsub.f32 %v6174, %v6175
      %v6177 = vand.u32 %v6176, 4294901760
      %6178 = vmatpush1.msra.mxu0 %v6177
      %v6179 = vand.u32 %v5837, 4294901760
      %v6180 = vsub.f32 %v5837, %v6179
      %v6181 = vand.u32 %v6180, 4294901760
      %v6182 = vsub.f32 %v6180, %v6181
      %v6183 = vand.u32 %v6182, 4294901760
      %6184 = vmatprep.subr.mxu0 %v6183
      %v6185 = vand.u32 %v5836, 4294901760
      %v6186 = vsub.f32 %v5836, %v6185
      %v6187 = vand.u32 %v6186, 4294901760
      %v6188 = vsub.f32 %v6186, %v6187
      %v6189 = vand.u32 %v6188, 4294901760
      %6190 = vmatpush1.msra.mxu0 %v6189
      %6191 = vmatprep.subr.mxu0 0.0
      %6192 = vmatpush2.msra.mxu0 0.0
      %6193 = vmatprep.subr.mxu0 0.0
      %6194 = vmatpush2.msra.mxu0 0.0
      %6195 = vmatprep.subr.mxu0 0.0
      %6196 = vmatpush2.msra.mxu0 0.0
      %6197 = vmatprep.subr.mxu0 0.0
      %6198 = vmatpush2.msra.mxu0 0.0
      %6199 = vmatprep.subr.mxu0 0.0
      %6200 = vmatpush2.msra.mxu0 0.0
      %6201 = vmatprep.subr.mxu0 0.0
      %6202 = vmatpush2.msra.mxu0 0.0
      %6203 = vmatprep.subr.mxu0 0.0
      %6204 = vmatpush2.msra.mxu0 0.0
      %6205 = vmatprep.subr.mxu0 0.0
      %6206 = vmatpush2.msra.mxu0 0.0
      %6207 = vmatprep.subr.mxu0 0.0
      %6208 = vmatpush2.msra.mxu0 0.0
      %6209 = vmatprep.subr.mxu0 0.0
      %6210 = vmatpush2.msra.mxu0 0.0
      %6211 = vmatprep.subr.mxu0 0.0
      %6212 = vmatpush2.msra.mxu0 0.0
      %6213 = vmatprep.subr.mxu0 0.0
      %6214 = vmatpush2.msra.mxu0 0.0
      %6215 = vmatprep.subr.mxu0 0.0
      %6216 = vmatpush2.msra.mxu0 0.0
      %6217 = vmatprep.subr.mxu0 0.0
      %6218 = vmatpush2.msra.mxu0 0.0
      %6219 = vmatprep.subr.mxu0 0.0
      %6220 = vmatpush2.msra.mxu0 0.0
      %6221 = vmatprep.subr.mxu0 0.0
      %6222 = vmatpush2.msra.mxu0 0.0
      %6223 = vmatprep.mubr.f32.mxu0 0.0
      %v6224 = vand.u32 %v5884, 4294901760
      %6225 = vmatmul.mubr.f32.gmra.mxu0 %v6224
      %v6226 = vpop.f32.mrf.mxu0
      %v6227 = vadd.f32 %v5995, %v6226
      %v6228 = vpop.f32.mrf.mxu0
      %v6229 = vadd.f32 %v5997, %v6228
      %6230 = vdwg.mxu0
      %v6231 = vand.u32 %v5882, 4294901760
      %v6232 = vsub.f32 %v5882, %v6231
      %6233 = vmatprep.subr.mxu0 %v6232
      %v6234 = vand.u32 %v5881, 4294901760
      %v6235 = vsub.f32 %v5881, %v6234
      %6236 = vmatpush1.msra.mxu0 %v6235
      %v6237 = vand.u32 %v5879, 4294901760
      %v6238 = vsub.f32 %v5879, %v6237
      %6239 = vmatprep.subr.mxu0 %v6238
      %v6240 = vand.u32 %v5878, 4294901760
      %v6241 = vsub.f32 %v5878, %v6240
      %6242 = vmatpush1.msra.mxu0 %v6241
      %v6243 = vand.u32 %v5876, 4294901760
      %v6244 = vsub.f32 %v5876, %v6243
      %6245 = vmatprep.subr.mxu0 %v6244
      %v6246 = vand.u32 %v5875, 4294901760
      %v6247 = vsub.f32 %v5875, %v6246
      %6248 = vmatpush1.msra.mxu0 %v6247
      %v6249 = vand.u32 %v5873, 4294901760
      %v6250 = vsub.f32 %v5873, %v6249
      %6251 = vmatprep.subr.mxu0 %v6250
      %v6252 = vand.u32 %v5872, 4294901760
      %v6253 = vsub.f32 %v5872, %v6252
      %6254 = vmatpush1.msra.mxu0 %v6253
      %v6255 = vand.u32 %v5870, 4294901760
      %v6256 = vsub.f32 %v5870, %v6255
      %6257 = vmatprep.subr.mxu0 %v6256
      %v6258 = vand.u32 %v5869, 4294901760
      %v6259 = vsub.f32 %v5869, %v6258
      %6260 = vmatpush1.msra.mxu0 %v6259
      %v6261 = vand.u32 %v5867, 4294901760
      %v6262 = vsub.f32 %v5867, %v6261
      %6263 = vmatprep.subr.mxu0 %v6262
      %v6264 = vand.u32 %v5866, 4294901760
      %v6265 = vsub.f32 %v5866, %v6264
      %6266 = vmatpush1.msra.mxu0 %v6265
      %v6267 = vand.u32 %v5864, 4294901760
      %v6268 = vsub.f32 %v5864, %v6267
      %6269 = vmatprep.subr.mxu0 %v6268
      %v6270 = vand.u32 %v5863, 4294901760
      %v6271 = vsub.f32 %v5863, %v6270
      %6272 = vmatpush1.msra.mxu0 %v6271
      %v6273 = vand.u32 %v5861, 4294901760
      %v6274 = vsub.f32 %v5861, %v6273
      %6275 = vmatprep.subr.mxu0 %v6274
      %v6276 = vand.u32 %v5860, 4294901760
      %v6277 = vsub.f32 %v5860, %v6276
      %6278 = vmatpush1.msra.mxu0 %v6277
      %v6279 = vand.u32 %v5858, 4294901760
      %v6280 = vsub.f32 %v5858, %v6279
      %6281 = vmatprep.subr.mxu0 %v6280
      %v6282 = vand.u32 %v5857, 4294901760
      %v6283 = vsub.f32 %v5857, %v6282
      %6284 = vmatpush1.msra.mxu0 %v6283
      %v6285 = vand.u32 %v5855, 4294901760
      %v6286 = vsub.f32 %v5855, %v6285
      %6287 = vmatprep.subr.mxu0 %v6286
      %v6288 = vand.u32 %v5854, 4294901760
      %v6289 = vsub.f32 %v5854, %v6288
      %6290 = vmatpush1.msra.mxu0 %v6289
      %v6291 = vand.u32 %v5852, 4294901760
      %v6292 = vsub.f32 %v5852, %v6291
      %6293 = vmatprep.subr.mxu0 %v6292
      %v6294 = vand.u32 %v5851, 4294901760
      %v6295 = vsub.f32 %v5851, %v6294
      %6296 = vmatpush1.msra.mxu0 %v6295
      %v6297 = vand.u32 %v5849, 4294901760
      %v6298 = vsub.f32 %v5849, %v6297
      %6299 = vmatprep.subr.mxu0 %v6298
      %v6300 = vand.u32 %v5848, 4294901760
      %v6301 = vsub.f32 %v5848, %v6300
      %6302 = vmatpush1.msra.mxu0 %v6301
      %v6303 = vand.u32 %v5846, 4294901760
      %v6304 = vsub.f32 %v5846, %v6303
      %6305 = vmatprep.subr.mxu0 %v6304
      %v6306 = vand.u32 %v5845, 4294901760
      %v6307 = vsub.f32 %v5845, %v6306
      %6308 = vmatpush1.msra.mxu0 %v6307
      %v6309 = vand.u32 %v5843, 4294901760
      %v6310 = vsub.f32 %v5843, %v6309
      %6311 = vmatprep.subr.mxu0 %v6310
      %v6312 = vand.u32 %v5842, 4294901760
      %v6313 = vsub.f32 %v5842, %v6312
      %6314 = vmatpush1.msra.mxu0 %v6313
      %v6315 = vand.u32 %v5840, 4294901760
      %v6316 = vsub.f32 %v5840, %v6315
      %6317 = vmatprep.subr.mxu0 %v6316
      %v6318 = vand.u32 %v5839, 4294901760
      %v6319 = vsub.f32 %v5839, %v6318
      %6320 = vmatpush1.msra.mxu0 %v6319
      %v6321 = vand.u32 %v5837, 4294901760
      %v6322 = vsub.f32 %v5837, %v6321
      %6323 = vmatprep.subr.mxu0 %v6322
      %v6324 = vand.u32 %v5836, 4294901760
      %v6325 = vsub.f32 %v5836, %v6324
      %6326 = vmatpush1.msra.mxu0 %v6325
      %6327 = vmatprep.subr.mxu0 0.0
      %6328 = vmatpush2.msra.mxu0 0.0
      %6329 = vmatprep.subr.mxu0 0.0
      %6330 = vmatpush2.msra.mxu0 0.0
      %6331 = vmatprep.subr.mxu0 0.0
      %6332 = vmatpush2.msra.mxu0 0.0
      %6333 = vmatprep.subr.mxu0 0.0
      %6334 = vmatpush2.msra.mxu0 0.0
      %6335 = vmatprep.subr.mxu0 0.0
      %6336 = vmatpush2.msra.mxu0 0.0
      %6337 = vmatprep.subr.mxu0 0.0
      %6338 = vmatpush2.msra.mxu0 0.0
      %6339 = vmatprep.subr.mxu0 0.0
      %6340 = vmatpush2.msra.mxu0 0.0
      %6341 = vmatprep.subr.mxu0 0.0
      %6342 = vmatpush2.msra.mxu0 0.0
      %6343 = vmatprep.subr.mxu0 0.0
      %6344 = vmatpush2.msra.mxu0 0.0
      %6345 = vmatprep.subr.mxu0 0.0
      %6346 = vmatpush2.msra.mxu0 0.0
      %6347 = vmatprep.subr.mxu0 0.0
      %6348 = vmatpush2.msra.mxu0 0.0
      %6349 = vmatprep.subr.mxu0 0.0
      %6350 = vmatpush2.msra.mxu0 0.0
      %6351 = vmatprep.subr.mxu0 0.0
      %6352 = vmatpush2.msra.mxu0 0.0
      %6353 = vmatprep.subr.mxu0 0.0
      %6354 = vmatpush2.msra.mxu0 0.0
      %6355 = vmatprep.subr.mxu0 0.0
      %6356 = vmatpush2.msra.mxu0 0.0
      %6357 = vmatprep.subr.mxu0 0.0
      %6358 = vmatpush2.msra.mxu0 0.0
      %6359 = vmatprep.mubr.f32.mxu0 0.0
      %v6360 = vand.u32 %v5884, 4294901760
      %v6361 = vsub.f32 %v5884, %v6360
      %6362 = vmatmul.mubr.f32.gmra.mxu0 %v6361
      %v6363 = vpop.f32.mrf.mxu0
      %v6364 = vadd.f32 %v6227, %v6363
      %v6365 = vpop.f32.mrf.mxu0
      %v6366 = vadd.f32 %v6229, %v6365
      %6367 = vdwg.mxu0
      %v6368 = vand.u32 %v5882, 4294901760
      %6369 = vmatprep.subr.mxu0 %v6368
      %v6370 = vand.u32 %v5881, 4294901760
      %6371 = vmatpush1.msra.mxu0 %v6370
      %v6372 = vand.u32 %v5879, 4294901760
      %6373 = vmatprep.subr.mxu0 %v6372
      %v6374 = vand.u32 %v5878, 4294901760
      %6375 = vmatpush1.msra.mxu0 %v6374
      %v6376 = vand.u32 %v5876, 4294901760
      %6377 = vmatprep.subr.mxu0 %v6376
      %v6378 = vand.u32 %v5875, 4294901760
      %6379 = vmatpush1.msra.mxu0 %v6378
      %v6380 = vand.u32 %v5873, 4294901760
      %6381 = vmatprep.subr.mxu0 %v6380
      %v6382 = vand.u32 %v5872, 4294901760
      %6383 = vmatpush1.msra.mxu0 %v6382
      %v6384 = vand.u32 %v5870, 4294901760
      %6385 = vmatprep.subr.mxu0 %v6384
      %v6386 = vand.u32 %v5869, 4294901760
      %6387 = vmatpush1.msra.mxu0 %v6386
      %v6388 = vand.u32 %v5867, 4294901760
      %6389 = vmatprep.subr.mxu0 %v6388
      %v6390 = vand.u32 %v5866, 4294901760
      %6391 = vmatpush1.msra.mxu0 %v6390
      %v6392 = vand.u32 %v5864, 4294901760
      %6393 = vmatprep.subr.mxu0 %v6392
      %v6394 = vand.u32 %v5863, 4294901760
      %6395 = vmatpush1.msra.mxu0 %v6394
      %v6396 = vand.u32 %v5861, 4294901760
      %6397 = vmatprep.subr.mxu0 %v6396
      %v6398 = vand.u32 %v5860, 4294901760
      %6399 = vmatpush1.msra.mxu0 %v6398
      %v6400 = vand.u32 %v5858, 4294901760
      %6401 = vmatprep.subr.mxu0 %v6400
      %v6402 = vand.u32 %v5857, 4294901760
      %6403 = vmatpush1.msra.mxu0 %v6402
      %v6404 = vand.u32 %v5855, 4294901760
      %6405 = vmatprep.subr.mxu0 %v6404
      %v6406 = vand.u32 %v5854, 4294901760
      %6407 = vmatpush1.msra.mxu0 %v6406
      %v6408 = vand.u32 %v5852, 4294901760
      %6409 = vmatprep.subr.mxu0 %v6408
      %v6410 = vand.u32 %v5851, 4294901760
      %6411 = vmatpush1.msra.mxu0 %v6410
      %v6412 = vand.u32 %v5849, 4294901760
      %6413 = vmatprep.subr.mxu0 %v6412
      %v6414 = vand.u32 %v5848, 4294901760
      %6415 = vmatpush1.msra.mxu0 %v6414
      %v6416 = vand.u32 %v5846, 4294901760
      %6417 = vmatprep.subr.mxu0 %v6416
      %v6418 = vand.u32 %v5845, 4294901760
      %6419 = vmatpush1.msra.mxu0 %v6418
      %v6420 = vand.u32 %v5843, 4294901760
      %6421 = vmatprep.subr.mxu0 %v6420
      %v6422 = vand.u32 %v5842, 4294901760
      %6423 = vmatpush1.msra.mxu0 %v6422
      %v6424 = vand.u32 %v5840, 4294901760
      %6425 = vmatprep.subr.mxu0 %v6424
      %v6426 = vand.u32 %v5839, 4294901760
      %6427 = vmatpush1.msra.mxu0 %v6426
      %v6428 = vand.u32 %v5837, 4294901760
      %6429 = vmatprep.subr.mxu0 %v6428
      %v6430 = vand.u32 %v5836, 4294901760
      %6431 = vmatpush1.msra.mxu0 %v6430
      %6432 = vmatprep.subr.mxu0 0.0
      %6433 = vmatpush2.msra.mxu0 0.0
      %6434 = vmatprep.subr.mxu0 0.0
      %6435 = vmatpush2.msra.mxu0 0.0
      %6436 = vmatprep.subr.mxu0 0.0
      %6437 = vmatpush2.msra.mxu0 0.0
      %6438 = vmatprep.subr.mxu0 0.0
      %6439 = vmatpush2.msra.mxu0 0.0
      %6440 = vmatprep.subr.mxu0 0.0
      %6441 = vmatpush2.msra.mxu0 0.0
      %6442 = vmatprep.subr.mxu0 0.0
      %6443 = vmatpush2.msra.mxu0 0.0
      %6444 = vmatprep.subr.mxu0 0.0
      %6445 = vmatpush2.msra.mxu0 0.0
      %6446 = vmatprep.subr.mxu0 0.0
      %6447 = vmatpush2.msra.mxu0 0.0
      %6448 = vmatprep.subr.mxu0 0.0
      %6449 = vmatpush2.msra.mxu0 0.0
      %6450 = vmatprep.subr.mxu0 0.0
      %6451 = vmatpush2.msra.mxu0 0.0
      %6452 = vmatprep.subr.mxu0 0.0
      %6453 = vmatpush2.msra.mxu0 0.0
      %6454 = vmatprep.subr.mxu0 0.0
      %6455 = vmatpush2.msra.mxu0 0.0
      %6456 = vmatprep.subr.mxu0 0.0
      %6457 = vmatpush2.msra.mxu0 0.0
      %6458 = vmatprep.subr.mxu0 0.0
      %6459 = vmatpush2.msra.mxu0 0.0
      %6460 = vmatprep.subr.mxu0 0.0
      %6461 = vmatpush2.msra.mxu0 0.0
      %6462 = vmatprep.subr.mxu0 0.0
      %6463 = vmatpush2.msra.mxu0 0.0
      %6464 = vmatprep.mubr.f32.mxu0 0.0
      %v6465 = vand.u32 %v5884, 4294901760
      %v6466 = vsub.f32 %v5884, %v6465
      %v6467 = vand.u32 %v6466, 4294901760
      %6468 = vmatmul.mubr.f32.gmra.mxu0 %v6467
      %v6469 = vpop.f32.mrf.mxu0
      %v6470 = vadd.f32 %v6364, %v6469
      %v6471 = vpop.f32.mrf.mxu0
      %v6472 = vadd.f32 %v6366, %v6471
      %6473 = vdwg.mxu0
      %v6474 = vand.u32 %v5882, 4294901760
      %v6475 = vsub.f32 %v5882, %v6474
      %v6476 = vand.u32 %v6475, 4294901760
      %6477 = vmatprep.subr.mxu0 %v6476
      %v6478 = vand.u32 %v5881, 4294901760
      %v6479 = vsub.f32 %v5881, %v6478
      %v6480 = vand.u32 %v6479, 4294901760
      %6481 = vmatpush1.msra.mxu0 %v6480
      %v6482 = vand.u32 %v5879, 4294901760
      %v6483 = vsub.f32 %v5879, %v6482
      %v6484 = vand.u32 %v6483, 4294901760
      %6485 = vmatprep.subr.mxu0 %v6484
      %v6486 = vand.u32 %v5878, 4294901760
      %v6487 = vsub.f32 %v5878, %v6486
      %v6488 = vand.u32 %v6487, 4294901760
      %6489 = vmatpush1.msra.mxu0 %v6488
      %v6490 = vand.u32 %v5876, 4294901760
      %v6491 = vsub.f32 %v5876, %v6490
      %v6492 = vand.u32 %v6491, 4294901760
      %6493 = vmatprep.subr.mxu0 %v6492
      %v6494 = vand.u32 %v5875, 4294901760
      %v6495 = vsub.f32 %v5875, %v6494
      %v6496 = vand.u32 %v6495, 4294901760
      %6497 = vmatpush1.msra.mxu0 %v6496
      %v6498 = vand.u32 %v5873, 4294901760
      %v6499 = vsub.f32 %v5873, %v6498
      %v6500 = vand.u32 %v6499, 4294901760
      %6501 = vmatprep.subr.mxu0 %v6500
      %v6502 = vand.u32 %v5872, 4294901760
      %v6503 = vsub.f32 %v5872, %v6502
      %v6504 = vand.u32 %v6503, 4294901760
      %6505 = vmatpush1.msra.mxu0 %v6504
      %v6506 = vand.u32 %v5870, 4294901760
      %v6507 = vsub.f32 %v5870, %v6506
      %v6508 = vand.u32 %v6507, 4294901760
      %6509 = vmatprep.subr.mxu0 %v6508
      %v6510 = vand.u32 %v5869, 4294901760
      %v6511 = vsub.f32 %v5869, %v6510
      %v6512 = vand.u32 %v6511, 4294901760
      %6513 = vmatpush1.msra.mxu0 %v6512
      %v6514 = vand.u32 %v5867, 4294901760
      %v6515 = vsub.f32 %v5867, %v6514
      %v6516 = vand.u32 %v6515, 4294901760
      %6517 = vmatprep.subr.mxu0 %v6516
      %v6518 = vand.u32 %v5866, 4294901760
      %v6519 = vsub.f32 %v5866, %v6518
      %v6520 = vand.u32 %v6519, 4294901760
      %6521 = vmatpush1.msra.mxu0 %v6520
      %v6522 = vand.u32 %v5864, 4294901760
      %v6523 = vsub.f32 %v5864, %v6522
      %v6524 = vand.u32 %v6523, 4294901760
      %6525 = vmatprep.subr.mxu0 %v6524
      %v6526 = vand.u32 %v5863, 4294901760
      %v6527 = vsub.f32 %v5863, %v6526
      %v6528 = vand.u32 %v6527, 4294901760
      %6529 = vmatpush1.msra.mxu0 %v6528
      %v6530 = vand.u32 %v5861, 4294901760
      %v6531 = vsub.f32 %v5861, %v6530
      %v6532 = vand.u32 %v6531, 4294901760
      %6533 = vmatprep.subr.mxu0 %v6532
      %v6534 = vand.u32 %v5860, 4294901760
      %v6535 = vsub.f32 %v5860, %v6534
      %v6536 = vand.u32 %v6535, 4294901760
      %6537 = vmatpush1.msra.mxu0 %v6536
      %v6538 = vand.u32 %v5858, 4294901760
      %v6539 = vsub.f32 %v5858, %v6538
      %v6540 = vand.u32 %v6539, 4294901760
      %6541 = vmatprep.subr.mxu0 %v6540
      %v6542 = vand.u32 %v5857, 4294901760
      %v6543 = vsub.f32 %v5857, %v6542
      %v6544 = vand.u32 %v6543, 4294901760
      %6545 = vmatpush1.msra.mxu0 %v6544
      %v6546 = vand.u32 %v5855, 4294901760
      %v6547 = vsub.f32 %v5855, %v6546
      %v6548 = vand.u32 %v6547, 4294901760
      %6549 = vmatprep.subr.mxu0 %v6548
      %v6550 = vand.u32 %v5854, 4294901760
      %v6551 = vsub.f32 %v5854, %v6550
      %v6552 = vand.u32 %v6551, 4294901760
      %6553 = vmatpush1.msra.mxu0 %v6552
      %v6554 = vand.u32 %v5852, 4294901760
      %v6555 = vsub.f32 %v5852, %v6554
      %v6556 = vand.u32 %v6555, 4294901760
      %6557 = vmatprep.subr.mxu0 %v6556
      %v6558 = vand.u32 %v5851, 4294901760
      %v6559 = vsub.f32 %v5851, %v6558
      %v6560 = vand.u32 %v6559, 4294901760
      %6561 = vmatpush1.msra.mxu0 %v6560
      %v6562 = vand.u32 %v5849, 4294901760
      %v6563 = vsub.f32 %v5849, %v6562
      %v6564 = vand.u32 %v6563, 4294901760
      %6565 = vmatprep.subr.mxu0 %v6564
      %v6566 = vand.u32 %v5848, 4294901760
      %v6567 = vsub.f32 %v5848, %v6566
      %v6568 = vand.u32 %v6567, 4294901760
      %6569 = vmatpush1.msra.mxu0 %v6568
      %v6570 = vand.u32 %v5846, 4294901760
      %v6571 = vsub.f32 %v5846, %v6570
      %v6572 = vand.u32 %v6571, 4294901760
      %6573 = vmatprep.subr.mxu0 %v6572
      %v6574 = vand.u32 %v5845, 4294901760
      %v6575 = vsub.f32 %v5845, %v6574
      %v6576 = vand.u32 %v6575, 4294901760
      %6577 = vmatpush1.msra.mxu0 %v6576
      %v6578 = vand.u32 %v5843, 4294901760
      %v6579 = vsub.f32 %v5843, %v6578
      %v6580 = vand.u32 %v6579, 4294901760
      %6581 = vmatprep.subr.mxu0 %v6580
      %v6582 = vand.u32 %v5842, 4294901760
      %v6583 = vsub.f32 %v5842, %v6582
      %v6584 = vand.u32 %v6583, 4294901760
      %6585 = vmatpush1.msra.mxu0 %v6584
      %v6586 = vand.u32 %v5840, 4294901760
      %v6587 = vsub.f32 %v5840, %v6586
      %v6588 = vand.u32 %v6587, 4294901760
      %6589 = vmatprep.subr.mxu0 %v6588
      %v6590 = vand.u32 %v5839, 4294901760
      %v6591 = vsub.f32 %v5839, %v6590
      %v6592 = vand.u32 %v6591, 4294901760
      %6593 = vmatpush1.msra.mxu0 %v6592
      %v6594 = vand.u32 %v5837, 4294901760
      %v6595 = vsub.f32 %v5837, %v6594
      %v6596 = vand.u32 %v6595, 4294901760
      %6597 = vmatprep.subr.mxu0 %v6596
      %v6598 = vand.u32 %v5836, 4294901760
      %v6599 = vsub.f32 %v5836, %v6598
      %v6600 = vand.u32 %v6599, 4294901760
      %6601 = vmatpush1.msra.mxu0 %v6600
      %6602 = vmatprep.subr.mxu0 0.0
      %6603 = vmatpush2.msra.mxu0 0.0
      %6604 = vmatprep.subr.mxu0 0.0
      %6605 = vmatpush2.msra.mxu0 0.0
      %6606 = vmatprep.subr.mxu0 0.0
      %6607 = vmatpush2.msra.mxu0 0.0
      %6608 = vmatprep.subr.mxu0 0.0
      %6609 = vmatpush2.msra.mxu0 0.0
      %6610 = vmatprep.subr.mxu0 0.0
      %6611 = vmatpush2.msra.mxu0 0.0
      %6612 = vmatprep.subr.mxu0 0.0
      %6613 = vmatpush2.msra.mxu0 0.0
      %6614 = vmatprep.subr.mxu0 0.0
      %6615 = vmatpush2.msra.mxu0 0.0
      %6616 = vmatprep.subr.mxu0 0.0
      %6617 = vmatpush2.msra.mxu0 0.0
      %6618 = vmatprep.subr.mxu0 0.0
      %6619 = vmatpush2.msra.mxu0 0.0
      %6620 = vmatprep.subr.mxu0 0.0
      %6621 = vmatpush2.msra.mxu0 0.0
      %6622 = vmatprep.subr.mxu0 0.0
      %6623 = vmatpush2.msra.mxu0 0.0
      %6624 = vmatprep.subr.mxu0 0.0
      %6625 = vmatpush2.msra.mxu0 0.0
      %6626 = vmatprep.subr.mxu0 0.0
      %6627 = vmatpush2.msra.mxu0 0.0
      %6628 = vmatprep.subr.mxu0 0.0
      %6629 = vmatpush2.msra.mxu0 0.0
      %6630 = vmatprep.subr.mxu0 0.0
      %6631 = vmatpush2.msra.mxu0 0.0
      %6632 = vmatprep.subr.mxu0 0.0
      %6633 = vmatpush2.msra.mxu0 0.0
      %6634 = vmatprep.mubr.f32.mxu0 0.0
      %v6635 = vand.u32 %v5884, 4294901760
      %6636 = vmatmul.mubr.f32.gmra.mxu0 %v6635
      %v6637 = vpop.f32.mrf.mxu0
      %v6638 = vadd.f32 %v6470, %v6637
      %v6639 = vpop.f32.mrf.mxu0
      %v6640 = vadd.f32 %v6472, %v6639
      %6641 = vdwg.mxu0
      %v6642 = vand.u32 %v5882, 4294901760
      %6643 = vmatprep.subr.mxu0 %v6642
      %v6644 = vand.u32 %v5881, 4294901760
      %6645 = vmatpush1.msra.mxu0 %v6644
      %v6646 = vand.u32 %v5879, 4294901760
      %6647 = vmatprep.subr.mxu0 %v6646
      %v6648 = vand.u32 %v5878, 4294901760
      %6649 = vmatpush1.msra.mxu0 %v6648
      %v6650 = vand.u32 %v5876, 4294901760
      %6651 = vmatprep.subr.mxu0 %v6650
      %v6652 = vand.u32 %v5875, 4294901760
      %6653 = vmatpush1.msra.mxu0 %v6652
      %v6654 = vand.u32 %v5873, 4294901760
      %6655 = vmatprep.subr.mxu0 %v6654
      %v6656 = vand.u32 %v5872, 4294901760
      %6657 = vmatpush1.msra.mxu0 %v6656
      %v6658 = vand.u32 %v5870, 4294901760
      %6659 = vmatprep.subr.mxu0 %v6658
      %v6660 = vand.u32 %v5869, 4294901760
      %6661 = vmatpush1.msra.mxu0 %v6660
      %v6662 = vand.u32 %v5867, 4294901760
      %6663 = vmatprep.subr.mxu0 %v6662
      %v6664 = vand.u32 %v5866, 4294901760
      %6665 = vmatpush1.msra.mxu0 %v6664
      %v6666 = vand.u32 %v5864, 4294901760
      %6667 = vmatprep.subr.mxu0 %v6666
      %v6668 = vand.u32 %v5863, 4294901760
      %6669 = vmatpush1.msra.mxu0 %v6668
      %v6670 = vand.u32 %v5861, 4294901760
      %6671 = vmatprep.subr.mxu0 %v6670
      %v6672 = vand.u32 %v5860, 4294901760
      %6673 = vmatpush1.msra.mxu0 %v6672
      %v6674 = vand.u32 %v5858, 4294901760
      %6675 = vmatprep.subr.mxu0 %v6674
      %v6676 = vand.u32 %v5857, 4294901760
      %6677 = vmatpush1.msra.mxu0 %v6676
      %v6678 = vand.u32 %v5855, 4294901760
      %6679 = vmatprep.subr.mxu0 %v6678
      %v6680 = vand.u32 %v5854, 4294901760
      %6681 = vmatpush1.msra.mxu0 %v6680
      %v6682 = vand.u32 %v5852, 4294901760
      %6683 = vmatprep.subr.mxu0 %v6682
      %v6684 = vand.u32 %v5851, 4294901760
      %6685 = vmatpush1.msra.mxu0 %v6684
      %v6686 = vand.u32 %v5849, 4294901760
      %6687 = vmatprep.subr.mxu0 %v6686
      %v6688 = vand.u32 %v5848, 4294901760
      %6689 = vmatpush1.msra.mxu0 %v6688
      %v6690 = vand.u32 %v5846, 4294901760
      %6691 = vmatprep.subr.mxu0 %v6690
      %v6692 = vand.u32 %v5845, 4294901760
      %6693 = vmatpush1.msra.mxu0 %v6692
      %v6694 = vand.u32 %v5843, 4294901760
      %6695 = vmatprep.subr.mxu0 %v6694
      %v6696 = vand.u32 %v5842, 4294901760
      %6697 = vmatpush1.msra.mxu0 %v6696
      %v6698 = vand.u32 %v5840, 4294901760
      %6699 = vmatprep.subr.mxu0 %v6698
      %v6700 = vand.u32 %v5839, 4294901760
      %6701 = vmatpush1.msra.mxu0 %v6700
      %v6702 = vand.u32 %v5837, 4294901760
      %6703 = vmatprep.subr.mxu0 %v6702
      %v6704 = vand.u32 %v5836, 4294901760
      %6705 = vmatpush1.msra.mxu0 %v6704
      %6706 = vmatprep.subr.mxu0 0.0
      %6707 = vmatpush2.msra.mxu0 0.0
      %6708 = vmatprep.subr.mxu0 0.0
      %6709 = vmatpush2.msra.mxu0 0.0
      %6710 = vmatprep.subr.mxu0 0.0
      %6711 = vmatpush2.msra.mxu0 0.0
      %6712 = vmatprep.subr.mxu0 0.0
      %6713 = vmatpush2.msra.mxu0 0.0
      %6714 = vmatprep.subr.mxu0 0.0
      %6715 = vmatpush2.msra.mxu0 0.0
      %6716 = vmatprep.subr.mxu0 0.0
      %6717 = vmatpush2.msra.mxu0 0.0
      %6718 = vmatprep.subr.mxu0 0.0
      %6719 = vmatpush2.msra.mxu0 0.0
      %6720 = vmatprep.subr.mxu0 0.0
      %6721 = vmatpush2.msra.mxu0 0.0
      %6722 = vmatprep.subr.mxu0 0.0
      %6723 = vmatpush2.msra.mxu0 0.0
      %6724 = vmatprep.subr.mxu0 0.0
      %6725 = vmatpush2.msra.mxu0 0.0
      %6726 = vmatprep.subr.mxu0 0.0
      %6727 = vmatpush2.msra.mxu0 0.0
      %6728 = vmatprep.subr.mxu0 0.0
      %6729 = vmatpush2.msra.mxu0 0.0
      %6730 = vmatprep.subr.mxu0 0.0
      %6731 = vmatpush2.msra.mxu0 0.0
      %6732 = vmatprep.subr.mxu0 0.0
      %6733 = vmatpush2.msra.mxu0 0.0
      %6734 = vmatprep.subr.mxu0 0.0
      %6735 = vmatpush2.msra.mxu0 0.0
      %6736 = vmatprep.subr.mxu0 0.0
      %6737 = vmatpush2.msra.mxu0 0.0
      %6738 = vmatprep.mubr.f32.mxu0 0.0
      %v6739 = vand.u32 %v5884, 4294901760
      %6740 = vmatmul.mubr.f32.gmra.mxu0 %v6739
      %v6741 = vpop.f32.mrf.mxu0
      %v6742 = vadd.f32 %v6638, %v6741
      %v6743 = vpop.f32.mrf.mxu0
      %v6744 = vadd.f32 %v6640, %v6743
      %6745 = vdwg.mxu0
      %6746 = vmatprep.subr.mxu0 0.0
      %v6747 = vand.u32 %v5883, 4294901760
      %6748 = vmatpush1.msra.mxu0 %v6747
      %6749 = vmatprep.subr.mxu0 0.0
      %v6750 = vand.u32 %v5880, 4294901760
      %6751 = vmatpush1.msra.mxu0 %v6750
      %6752 = vmatprep.subr.mxu0 0.0
      %v6753 = vand.u32 %v5877, 4294901760
      %6754 = vmatpush1.msra.mxu0 %v6753
      %6755 = vmatprep.subr.mxu0 0.0
      %v6756 = vand.u32 %v5874, 4294901760
      %6757 = vmatpush1.msra.mxu0 %v6756
      %6758 = vmatprep.subr.mxu0 0.0
      %v6759 = vand.u32 %v5871, 4294901760
      %6760 = vmatpush1.msra.mxu0 %v6759
      %6761 = vmatprep.subr.mxu0 0.0
      %v6762 = vand.u32 %v5868, 4294901760
      %6763 = vmatpush1.msra.mxu0 %v6762
      %6764 = vmatprep.subr.mxu0 0.0
      %v6765 = vand.u32 %v5865, 4294901760
      %6766 = vmatpush1.msra.mxu0 %v6765
      %6767 = vmatprep.subr.mxu0 0.0
      %v6768 = vand.u32 %v5862, 4294901760
      %6769 = vmatpush1.msra.mxu0 %v6768
      %6770 = vmatprep.subr.mxu0 0.0
      %v6771 = vand.u32 %v5859, 4294901760
      %6772 = vmatpush1.msra.mxu0 %v6771
      %6773 = vmatprep.subr.mxu0 0.0
      %v6774 = vand.u32 %v5856, 4294901760
      %6775 = vmatpush1.msra.mxu0 %v6774
      %6776 = vmatprep.subr.mxu0 0.0
      %v6777 = vand.u32 %v5853, 4294901760
      %6778 = vmatpush1.msra.mxu0 %v6777
      %6779 = vmatprep.subr.mxu0 0.0
      %v6780 = vand.u32 %v5850, 4294901760
      %6781 = vmatpush1.msra.mxu0 %v6780
      %6782 = vmatprep.subr.mxu0 0.0
      %v6783 = vand.u32 %v5847, 4294901760
      %6784 = vmatpush1.msra.mxu0 %v6783
      %6785 = vmatprep.subr.mxu0 0.0
      %v6786 = vand.u32 %v5844, 4294901760
      %6787 = vmatpush1.msra.mxu0 %v6786
      %6788 = vmatprep.subr.mxu0 0.0
      %v6789 = vand.u32 %v5841, 4294901760
      %6790 = vmatpush1.msra.mxu0 %v6789
      %6791 = vmatprep.subr.mxu0 0.0
      %v6792 = vand.u32 %v5838, 4294901760
      %6793 = vmatpush1.msra.mxu0 %v6792
      %6794 = vmatprep.subr.mxu0 0.0
      %6795 = vmatpush2.msra.mxu0 0.0
      %6796 = vmatprep.subr.mxu0 0.0
      %6797 = vmatpush2.msra.mxu0 0.0
      %6798 = vmatprep.subr.mxu0 0.0
      %6799 = vmatpush2.msra.mxu0 0.0
      %6800 = vmatprep.subr.mxu0 0.0
      %6801 = vmatpush2.msra.mxu0 0.0
      %6802 = vmatprep.subr.mxu0 0.0
      %6803 = vmatpush2.msra.mxu0 0.0
      %6804 = vmatprep.subr.mxu0 0.0
      %6805 = vmatpush2.msra.mxu0 0.0
      %6806 = vmatprep.subr.mxu0 0.0
      %6807 = vmatpush2.msra.mxu0 0.0
      %6808 = vmatprep.subr.mxu0 0.0
      %6809 = vmatpush2.msra.mxu0 0.0
      %6810 = vmatprep.subr.mxu0 0.0
      %6811 = vmatpush2.msra.mxu0 0.0
      %6812 = vmatprep.subr.mxu0 0.0
      %6813 = vmatpush2.msra.mxu0 0.0
      %6814 = vmatprep.subr.mxu0 0.0
      %6815 = vmatpush2.msra.mxu0 0.0
      %6816 = vmatprep.subr.mxu0 0.0
      %6817 = vmatpush2.msra.mxu0 0.0
      %6818 = vmatprep.subr.mxu0 0.0
      %6819 = vmatpush2.msra.mxu0 0.0
      %6820 = vmatprep.subr.mxu0 0.0
      %6821 = vmatpush2.msra.mxu0 0.0
      %6822 = vmatprep.subr.mxu0 0.0
      %6823 = vmatpush2.msra.mxu0 0.0
      %6824 = vmatprep.subr.mxu0 0.0
      %6825 = vmatpush2.msra.mxu0 0.0
      %6826 = vmatprep.mubr.f32.mxu0 0.0
      %v6827 = vand.u32 %v5884, 4294901760
      %v6828 = vsub.f32 %v5884, %v6827
      %v6829 = vand.u32 %v6828, 4294901760
      %v6830 = vsub.f32 %v6828, %v6829
      %v6831 = vand.u32 %v6830, 4294901760
      %6832 = vmatmul.mubr.f32.gmra.mxu0 %v6831
      %v6833 = vpop.f32.mrf.mxu0
      %v6834 = vadd.f32 %v5889, %v6833
      %v6835 = vpop.f32.mrf.mxu0
      %6836 = vdwg.mxu0
      %6837 = vmatprep.subr.mxu0 0.0
      %v6838 = vand.u32 %v5883, 4294901760
      %v6839 = vsub.f32 %v5883, %v6838
      %v6840 = vand.u32 %v6839, 4294901760
      %v6841 = vsub.f32 %v6839, %v6840
      %v6842 = vand.u32 %v6841, 4294901760
      %6843 = vmatpush1.msra.mxu0 %v6842
      %6844 = vmatprep.subr.mxu0 0.0
      %v6845 = vand.u32 %v5880, 4294901760
      %v6846 = vsub.f32 %v5880, %v6845
      %v6847 = vand.u32 %v6846, 4294901760
      %v6848 = vsub.f32 %v6846, %v6847
      %v6849 = vand.u32 %v6848, 4294901760
      %6850 = vmatpush1.msra.mxu0 %v6849
      %6851 = vmatprep.subr.mxu0 0.0
      %v6852 = vand.u32 %v5877, 4294901760
      %v6853 = vsub.f32 %v5877, %v6852
      %v6854 = vand.u32 %v6853, 4294901760
      %v6855 = vsub.f32 %v6853, %v6854
      %v6856 = vand.u32 %v6855, 4294901760
      %6857 = vmatpush1.msra.mxu0 %v6856
      %6858 = vmatprep.subr.mxu0 0.0
      %v6859 = vand.u32 %v5874, 4294901760
      %v6860 = vsub.f32 %v5874, %v6859
      %v6861 = vand.u32 %v6860, 4294901760
      %v6862 = vsub.f32 %v6860, %v6861
      %v6863 = vand.u32 %v6862, 4294901760
      %6864 = vmatpush1.msra.mxu0 %v6863
      %6865 = vmatprep.subr.mxu0 0.0
      %v6866 = vand.u32 %v5871, 4294901760
      %v6867 = vsub.f32 %v5871, %v6866
      %v6868 = vand.u32 %v6867, 4294901760
      %v6869 = vsub.f32 %v6867, %v6868
      %v6870 = vand.u32 %v6869, 4294901760
      %6871 = vmatpush1.msra.mxu0 %v6870
      %6872 = vmatprep.subr.mxu0 0.0
      %v6873 = vand.u32 %v5868, 4294901760
      %v6874 = vsub.f32 %v5868, %v6873
      %v6875 = vand.u32 %v6874, 4294901760
      %v6876 = vsub.f32 %v6874, %v6875
      %v6877 = vand.u32 %v6876, 4294901760
      %6878 = vmatpush1.msra.mxu0 %v6877
      %6879 = vmatprep.subr.mxu0 0.0
      %v6880 = vand.u32 %v5865, 4294901760
      %v6881 = vsub.f32 %v5865, %v6880
      %v6882 = vand.u32 %v6881, 4294901760
      %v6883 = vsub.f32 %v6881, %v6882
      %v6884 = vand.u32 %v6883, 4294901760
      %6885 = vmatpush1.msra.mxu0 %v6884
      %6886 = vmatprep.subr.mxu0 0.0
      %v6887 = vand.u32 %v5862, 4294901760
      %v6888 = vsub.f32 %v5862, %v6887
      %v6889 = vand.u32 %v6888, 4294901760
      %v6890 = vsub.f32 %v6888, %v6889
      %v6891 = vand.u32 %v6890, 4294901760
      %6892 = vmatpush1.msra.mxu0 %v6891
      %6893 = vmatprep.subr.mxu0 0.0
      %v6894 = vand.u32 %v5859, 4294901760
      %v6895 = vsub.f32 %v5859, %v6894
      %v6896 = vand.u32 %v6895, 4294901760
      %v6897 = vsub.f32 %v6895, %v6896
      %v6898 = vand.u32 %v6897, 4294901760
      %6899 = vmatpush1.msra.mxu0 %v6898
      %6900 = vmatprep.subr.mxu0 0.0
      %v6901 = vand.u32 %v5856, 4294901760
      %v6902 = vsub.f32 %v5856, %v6901
      %v6903 = vand.u32 %v6902, 4294901760
      %v6904 = vsub.f32 %v6902, %v6903
      %v6905 = vand.u32 %v6904, 4294901760
      %6906 = vmatpush1.msra.mxu0 %v6905
      %6907 = vmatprep.subr.mxu0 0.0
      %v6908 = vand.u32 %v5853, 4294901760
      %v6909 = vsub.f32 %v5853, %v6908
      %v6910 = vand.u32 %v6909, 4294901760
      %v6911 = vsub.f32 %v6909, %v6910
      %v6912 = vand.u32 %v6911, 4294901760
      %6913 = vmatpush1.msra.mxu0 %v6912
      %6914 = vmatprep.subr.mxu0 0.0
      %v6915 = vand.u32 %v5850, 4294901760
      %v6916 = vsub.f32 %v5850, %v6915
      %v6917 = vand.u32 %v6916, 4294901760
      %v6918 = vsub.f32 %v6916, %v6917
      %v6919 = vand.u32 %v6918, 4294901760
      %6920 = vmatpush1.msra.mxu0 %v6919
      %6921 = vmatprep.subr.mxu0 0.0
      %v6922 = vand.u32 %v5847, 4294901760
      %v6923 = vsub.f32 %v5847, %v6922
      %v6924 = vand.u32 %v6923, 4294901760
      %v6925 = vsub.f32 %v6923, %v6924
      %v6926 = vand.u32 %v6925, 4294901760
      %6927 = vmatpush1.msra.mxu0 %v6926
      %6928 = vmatprep.subr.mxu0 0.0
      %v6929 = vand.u32 %v5844, 4294901760
      %v6930 = vsub.f32 %v5844, %v6929
      %v6931 = vand.u32 %v6930, 4294901760
      %v6932 = vsub.f32 %v6930, %v6931
      %v6933 = vand.u32 %v6932, 4294901760
      %6934 = vmatpush1.msra.mxu0 %v6933
      %6935 = vmatprep.subr.mxu0 0.0
      %v6936 = vand.u32 %v5841, 4294901760
      %v6937 = vsub.f32 %v5841, %v6936
      %v6938 = vand.u32 %v6937, 4294901760
      %v6939 = vsub.f32 %v6937, %v6938
      %v6940 = vand.u32 %v6939, 4294901760
      %6941 = vmatpush1.msra.mxu0 %v6940
      %6942 = vmatprep.subr.mxu0 0.0
      %v6943 = vand.u32 %v5838, 4294901760
      %v6944 = vsub.f32 %v5838, %v6943
      %v6945 = vand.u32 %v6944, 4294901760
      %v6946 = vsub.f32 %v6944, %v6945
      %v6947 = vand.u32 %v6946, 4294901760
      %6948 = vmatpush1.msra.mxu0 %v6947
      %6949 = vmatprep.subr.mxu0 0.0
      %6950 = vmatpush2.msra.mxu0 0.0
      %6951 = vmatprep.subr.mxu0 0.0
      %6952 = vmatpush2.msra.mxu0 0.0
      %6953 = vmatprep.subr.mxu0 0.0
      %6954 = vmatpush2.msra.mxu0 0.0
      %6955 = vmatprep.subr.mxu0 0.0
      %6956 = vmatpush2.msra.mxu0 0.0
      %6957 = vmatprep.subr.mxu0 0.0
      %6958 = vmatpush2.msra.mxu0 0.0
      %6959 = vmatprep.subr.mxu0 0.0
      %6960 = vmatpush2.msra.mxu0 0.0
      %6961 = vmatprep.subr.mxu0 0.0
      %6962 = vmatpush2.msra.mxu0 0.0
      %6963 = vmatprep.subr.mxu0 0.0
      %6964 = vmatpush2.msra.mxu0 0.0
      %6965 = vmatprep.subr.mxu0 0.0
      %6966 = vmatpush2.msra.mxu0 0.0
      %6967 = vmatprep.subr.mxu0 0.0
      %6968 = vmatpush2.msra.mxu0 0.0
      %6969 = vmatprep.subr.mxu0 0.0
      %6970 = vmatpush2.msra.mxu0 0.0
      %6971 = vmatprep.subr.mxu0 0.0
      %6972 = vmatpush2.msra.mxu0 0.0
      %6973 = vmatprep.subr.mxu0 0.0
      %6974 = vmatpush2.msra.mxu0 0.0
      %6975 = vmatprep.subr.mxu0 0.0
      %6976 = vmatpush2.msra.mxu0 0.0
      %6977 = vmatprep.subr.mxu0 0.0
      %6978 = vmatpush2.msra.mxu0 0.0
      %6979 = vmatprep.subr.mxu0 0.0
      %6980 = vmatpush2.msra.mxu0 0.0
      %6981 = vmatprep.mubr.f32.mxu0 0.0
      %v6982 = vand.u32 %v5884, 4294901760
      %6983 = vmatmul.mubr.f32.gmra.mxu0 %v6982
      %v6984 = vpop.f32.mrf.mxu0
      %v6985 = vadd.f32 %v6834, %v6984
      %v6986 = vpop.f32.mrf.mxu0
      %6987 = vdwg.mxu0
      %6988 = vmatprep.subr.mxu0 0.0
      %v6989 = vand.u32 %v5883, 4294901760
      %v6990 = vsub.f32 %v5883, %v6989
      %6991 = vmatpush1.msra.mxu0 %v6990
      %6992 = vmatprep.subr.mxu0 0.0
      %v6993 = vand.u32 %v5880, 4294901760
      %v6994 = vsub.f32 %v5880, %v6993
      %6995 = vmatpush1.msra.mxu0 %v6994
      %6996 = vmatprep.subr.mxu0 0.0
      %v6997 = vand.u32 %v5877, 4294901760
      %v6998 = vsub.f32 %v5877, %v6997
      %6999 = vmatpush1.msra.mxu0 %v6998
      %7000 = vmatprep.subr.mxu0 0.0
      %v7001 = vand.u32 %v5874, 4294901760
      %v7002 = vsub.f32 %v5874, %v7001
      %7003 = vmatpush1.msra.mxu0 %v7002
      %7004 = vmatprep.subr.mxu0 0.0
      %v7005 = vand.u32 %v5871, 4294901760
      %v7006 = vsub.f32 %v5871, %v7005
      %7007 = vmatpush1.msra.mxu0 %v7006
      %7008 = vmatprep.subr.mxu0 0.0
      %v7009 = vand.u32 %v5868, 4294901760
      %v7010 = vsub.f32 %v5868, %v7009
      %7011 = vmatpush1.msra.mxu0 %v7010
      %7012 = vmatprep.subr.mxu0 0.0
      %v7013 = vand.u32 %v5865, 4294901760
      %v7014 = vsub.f32 %v5865, %v7013
      %7015 = vmatpush1.msra.mxu0 %v7014
      %7016 = vmatprep.subr.mxu0 0.0
      %v7017 = vand.u32 %v5862, 4294901760
      %v7018 = vsub.f32 %v5862, %v7017
      %7019 = vmatpush1.msra.mxu0 %v7018
      %7020 = vmatprep.subr.mxu0 0.0
      %v7021 = vand.u32 %v5859, 4294901760
      %v7022 = vsub.f32 %v5859, %v7021
      %7023 = vmatpush1.msra.mxu0 %v7022
      %7024 = vmatprep.subr.mxu0 0.0
      %v7025 = vand.u32 %v5856, 4294901760
      %v7026 = vsub.f32 %v5856, %v7025
      %7027 = vmatpush1.msra.mxu0 %v7026
      %7028 = vmatprep.subr.mxu0 0.0
      %v7029 = vand.u32 %v5853, 4294901760
      %v7030 = vsub.f32 %v5853, %v7029
      %7031 = vmatpush1.msra.mxu0 %v7030
      %7032 = vmatprep.subr.mxu0 0.0
      %v7033 = vand.u32 %v5850, 4294901760
      %v7034 = vsub.f32 %v5850, %v7033
      %7035 = vmatpush1.msra.mxu0 %v7034
      %7036 = vmatprep.subr.mxu0 0.0
      %v7037 = vand.u32 %v5847, 4294901760
      %v7038 = vsub.f32 %v5847, %v7037
      %7039 = vmatpush1.msra.mxu0 %v7038
      %7040 = vmatprep.subr.mxu0 0.0
      %v7041 = vand.u32 %v5844, 4294901760
      %v7042 = vsub.f32 %v5844, %v7041
      %7043 = vmatpush1.msra.mxu0 %v7042
      %7044 = vmatprep.subr.mxu0 0.0
      %v7045 = vand.u32 %v5841, 4294901760
      %v7046 = vsub.f32 %v5841, %v7045
      %7047 = vmatpush1.msra.mxu0 %v7046
      %7048 = vmatprep.subr.mxu0 0.0
      %v7049 = vand.u32 %v5838, 4294901760
      %v7050 = vsub.f32 %v5838, %v7049
      %7051 = vmatpush1.msra.mxu0 %v7050
      %7052 = vmatprep.subr.mxu0 0.0
      %7053 = vmatpush2.msra.mxu0 0.0
      %7054 = vmatprep.subr.mxu0 0.0
      %7055 = vmatpush2.msra.mxu0 0.0
      %7056 = vmatprep.subr.mxu0 0.0
      %7057 = vmatpush2.msra.mxu0 0.0
      %7058 = vmatprep.subr.mxu0 0.0
      %7059 = vmatpush2.msra.mxu0 0.0
      %7060 = vmatprep.subr.mxu0 0.0
      %7061 = vmatpush2.msra.mxu0 0.0
      %7062 = vmatprep.subr.mxu0 0.0
      %7063 = vmatpush2.msra.mxu0 0.0
      %7064 = vmatprep.subr.mxu0 0.0
      %7065 = vmatpush2.msra.mxu0 0.0
      %7066 = vmatprep.subr.mxu0 0.0
      %7067 = vmatpush2.msra.mxu0 0.0
      %7068 = vmatprep.subr.mxu0 0.0
      %7069 = vmatpush2.msra.mxu0 0.0
      %7070 = vmatprep.subr.mxu0 0.0
      %7071 = vmatpush2.msra.mxu0 0.0
      %7072 = vmatprep.subr.mxu0 0.0
      %7073 = vmatpush2.msra.mxu0 0.0
      %7074 = vmatprep.subr.mxu0 0.0
      %7075 = vmatpush2.msra.mxu0 0.0
      %7076 = vmatprep.subr.mxu0 0.0
      %7077 = vmatpush2.msra.mxu0 0.0
      %7078 = vmatprep.subr.mxu0 0.0
      %7079 = vmatpush2.msra.mxu0 0.0
      %7080 = vmatprep.subr.mxu0 0.0
      %7081 = vmatpush2.msra.mxu0 0.0
      %7082 = vmatprep.subr.mxu0 0.0
      %7083 = vmatpush2.msra.mxu0 0.0
      %7084 = vmatprep.mubr.f32.mxu0 0.0
      %v7085 = vand.u32 %v5884, 4294901760
      %v7086 = vsub.f32 %v5884, %v7085
      %7087 = vmatmul.mubr.f32.gmra.mxu0 %v7086
      %v7088 = vpop.f32.mrf.mxu0
      %v7089 = vadd.f32 %v6985, %v7088
      %v7090 = vpop.f32.mrf.mxu0
      %7091 = vdwg.mxu0
      %7092 = vmatprep.subr.mxu0 0.0
      %v7093 = vand.u32 %v5883, 4294901760
      %7094 = vmatpush1.msra.mxu0 %v7093
      %7095 = vmatprep.subr.mxu0 0.0
      %v7096 = vand.u32 %v5880, 4294901760
      %7097 = vmatpush1.msra.mxu0 %v7096
      %7098 = vmatprep.subr.mxu0 0.0
      %v7099 = vand.u32 %v5877, 4294901760
      %7100 = vmatpush1.msra.mxu0 %v7099
      %7101 = vmatprep.subr.mxu0 0.0
      %v7102 = vand.u32 %v5874, 4294901760
      %7103 = vmatpush1.msra.mxu0 %v7102
      %7104 = vmatprep.subr.mxu0 0.0
      %v7105 = vand.u32 %v5871, 4294901760
      %7106 = vmatpush1.msra.mxu0 %v7105
      %7107 = vmatprep.subr.mxu0 0.0
      %v7108 = vand.u32 %v5868, 4294901760
      %7109 = vmatpush1.msra.mxu0 %v7108
      %7110 = vmatprep.subr.mxu0 0.0
      %v7111 = vand.u32 %v5865, 4294901760
      %7112 = vmatpush1.msra.mxu0 %v7111
      %7113 = vmatprep.subr.mxu0 0.0
      %v7114 = vand.u32 %v5862, 4294901760
      %7115 = vmatpush1.msra.mxu0 %v7114
      %7116 = vmatprep.subr.mxu0 0.0
      %v7117 = vand.u32 %v5859, 4294901760
      %7118 = vmatpush1.msra.mxu0 %v7117
      %7119 = vmatprep.subr.mxu0 0.0
      %v7120 = vand.u32 %v5856, 4294901760
      %7121 = vmatpush1.msra.mxu0 %v7120
      %7122 = vmatprep.subr.mxu0 0.0
      %v7123 = vand.u32 %v5853, 4294901760
      %7124 = vmatpush1.msra.mxu0 %v7123
      %7125 = vmatprep.subr.mxu0 0.0
      %v7126 = vand.u32 %v5850, 4294901760
      %7127 = vmatpush1.msra.mxu0 %v7126
      %7128 = vmatprep.subr.mxu0 0.0
      %v7129 = vand.u32 %v5847, 4294901760
      %7130 = vmatpush1.msra.mxu0 %v7129
      %7131 = vmatprep.subr.mxu0 0.0
      %v7132 = vand.u32 %v5844, 4294901760
      %7133 = vmatpush1.msra.mxu0 %v7132
      %7134 = vmatprep.subr.mxu0 0.0
      %v7135 = vand.u32 %v5841, 4294901760
      %7136 = vmatpush1.msra.mxu0 %v7135
      %7137 = vmatprep.subr.mxu0 0.0
      %v7138 = vand.u32 %v5838, 4294901760
      %7139 = vmatpush1.msra.mxu0 %v7138
      %7140 = vmatprep.subr.mxu0 0.0
      %7141 = vmatpush2.msra.mxu0 0.0
      %7142 = vmatprep.subr.mxu0 0.0
      %7143 = vmatpush2.msra.mxu0 0.0
      %7144 = vmatprep.subr.mxu0 0.0
      %7145 = vmatpush2.msra.mxu0 0.0
      %7146 = vmatprep.subr.mxu0 0.0
      %7147 = vmatpush2.msra.mxu0 0.0
      %7148 = vmatprep.subr.mxu0 0.0
      %7149 = vmatpush2.msra.mxu0 0.0
      %7150 = vmatprep.subr.mxu0 0.0
      %7151 = vmatpush2.msra.mxu0 0.0
      %7152 = vmatprep.subr.mxu0 0.0
      %7153 = vmatpush2.msra.mxu0 0.0
      %7154 = vmatprep.subr.mxu0 0.0
      %7155 = vmatpush2.msra.mxu0 0.0
      %7156 = vmatprep.subr.mxu0 0.0
      %7157 = vmatpush2.msra.mxu0 0.0
      %7158 = vmatprep.subr.mxu0 0.0
      %7159 = vmatpush2.msra.mxu0 0.0
      %7160 = vmatprep.subr.mxu0 0.0
      %7161 = vmatpush2.msra.mxu0 0.0
      %7162 = vmatprep.subr.mxu0 0.0
      %7163 = vmatpush2.msra.mxu0 0.0
      %7164 = vmatprep.subr.mxu0 0.0
      %7165 = vmatpush2.msra.mxu0 0.0
      %7166 = vmatprep.subr.mxu0 0.0
      %7167 = vmatpush2.msra.mxu0 0.0
      %7168 = vmatprep.subr.mxu0 0.0
      %7169 = vmatpush2.msra.mxu0 0.0
      %7170 = vmatprep.subr.mxu0 0.0
      %7171 = vmatpush2.msra.mxu0 0.0
      %7172 = vmatprep.mubr.f32.mxu0 0.0
      %v7173 = vand.u32 %v5884, 4294901760
      %v7174 = vsub.f32 %v5884, %v7173
      %v7175 = vand.u32 %v7174, 4294901760
      %7176 = vmatmul.mubr.f32.gmra.mxu0 %v7175
      %v7177 = vpop.f32.mrf.mxu0
      %v7178 = vadd.f32 %v7089, %v7177
      %v7179 = vpop.f32.mrf.mxu0
      %7180 = vdwg.mxu0
      %7181 = vmatprep.subr.mxu0 0.0
      %v7182 = vand.u32 %v5883, 4294901760
      %v7183 = vsub.f32 %v5883, %v7182
      %v7184 = vand.u32 %v7183, 4294901760
      %7185 = vmatpush1.msra.mxu0 %v7184
      %7186 = vmatprep.subr.mxu0 0.0
      %v7187 = vand.u32 %v5880, 4294901760
      %v7188 = vsub.f32 %v5880, %v7187
      %v7189 = vand.u32 %v7188, 4294901760
      %7190 = vmatpush1.msra.mxu0 %v7189
      %7191 = vmatprep.subr.mxu0 0.0
      %v7192 = vand.u32 %v5877, 4294901760
      %v7193 = vsub.f32 %v5877, %v7192
      %v7194 = vand.u32 %v7193, 4294901760
      %7195 = vmatpush1.msra.mxu0 %v7194
      %7196 = vmatprep.subr.mxu0 0.0
      %v7197 = vand.u32 %v5874, 4294901760
      %v7198 = vsub.f32 %v5874, %v7197
      %v7199 = vand.u32 %v7198, 4294901760
      %7200 = vmatpush1.msra.mxu0 %v7199
      %7201 = vmatprep.subr.mxu0 0.0
      %v7202 = vand.u32 %v5871, 4294901760
      %v7203 = vsub.f32 %v5871, %v7202
      %v7204 = vand.u32 %v7203, 4294901760
      %7205 = vmatpush1.msra.mxu0 %v7204
      %7206 = vmatprep.subr.mxu0 0.0
      %v7207 = vand.u32 %v5868, 4294901760
      %v7208 = vsub.f32 %v5868, %v7207
      %v7209 = vand.u32 %v7208, 4294901760
      %7210 = vmatpush1.msra.mxu0 %v7209
      %7211 = vmatprep.subr.mxu0 0.0
      %v7212 = vand.u32 %v5865, 4294901760
      %v7213 = vsub.f32 %v5865, %v7212
      %v7214 = vand.u32 %v7213, 4294901760
      %7215 = vmatpush1.msra.mxu0 %v7214
      %7216 = vmatprep.subr.mxu0 0.0
      %v7217 = vand.u32 %v5862, 4294901760
      %v7218 = vsub.f32 %v5862, %v7217
      %v7219 = vand.u32 %v7218, 4294901760
      %7220 = vmatpush1.msra.mxu0 %v7219
      %7221 = vmatprep.subr.mxu0 0.0
      %v7222 = vand.u32 %v5859, 4294901760
      %v7223 = vsub.f32 %v5859, %v7222
      %v7224 = vand.u32 %v7223, 4294901760
      %7225 = vmatpush1.msra.mxu0 %v7224
      %7226 = vmatprep.subr.mxu0 0.0
      %v7227 = vand.u32 %v5856, 4294901760
      %v7228 = vsub.f32 %v5856, %v7227
      %v7229 = vand.u32 %v7228, 4294901760
      %7230 = vmatpush1.msra.mxu0 %v7229
      %7231 = vmatprep.subr.mxu0 0.0
      %v7232 = vand.u32 %v5853, 4294901760
      %v7233 = vsub.f32 %v5853, %v7232
      %v7234 = vand.u32 %v7233, 4294901760
      %7235 = vmatpush1.msra.mxu0 %v7234
      %7236 = vmatprep.subr.mxu0 0.0
      %v7237 = vand.u32 %v5850, 4294901760
      %v7238 = vsub.f32 %v5850, %v7237
      %v7239 = vand.u32 %v7238, 4294901760
      %7240 = vmatpush1.msra.mxu0 %v7239
      %7241 = vmatprep.subr.mxu0 0.0
      %v7242 = vand.u32 %v5847, 4294901760
      %v7243 = vsub.f32 %v5847, %v7242
      %v7244 = vand.u32 %v7243, 4294901760
      %7245 = vmatpush1.msra.mxu0 %v7244
      %7246 = vmatprep.subr.mxu0 0.0
      %v7247 = vand.u32 %v5844, 4294901760
      %v7248 = vsub.f32 %v5844, %v7247
      %v7249 = vand.u32 %v7248, 4294901760
      %7250 = vmatpush1.msra.mxu0 %v7249
      %7251 = vmatprep.subr.mxu0 0.0
      %v7252 = vand.u32 %v5841, 4294901760
      %v7253 = vsub.f32 %v5841, %v7252
      %v7254 = vand.u32 %v7253, 4294901760
      %7255 = vmatpush1.msra.mxu0 %v7254
      %7256 = vmatprep.subr.mxu0 0.0
      %v7257 = vand.u32 %v5838, 4294901760
      %v7258 = vsub.f32 %v5838, %v7257
      %v7259 = vand.u32 %v7258, 4294901760
      %7260 = vmatpush1.msra.mxu0 %v7259
      %7261 = vmatprep.subr.mxu0 0.0
      %7262 = vmatpush2.msra.mxu0 0.0
      %7263 = vmatprep.subr.mxu0 0.0
      %7264 = vmatpush2.msra.mxu0 0.0
      %7265 = vmatprep.subr.mxu0 0.0
      %7266 = vmatpush2.msra.mxu0 0.0
      %7267 = vmatprep.subr.mxu0 0.0
      %7268 = vmatpush2.msra.mxu0 0.0
      %7269 = vmatprep.subr.mxu0 0.0
      %7270 = vmatpush2.msra.mxu0 0.0
      %7271 = vmatprep.subr.mxu0 0.0
      %7272 = vmatpush2.msra.mxu0 0.0
      %7273 = vmatprep.subr.mxu0 0.0
      %7274 = vmatpush2.msra.mxu0 0.0
      %7275 = vmatprep.subr.mxu0 0.0
      %7276 = vmatpush2.msra.mxu0 0.0
      %7277 = vmatprep.subr.mxu0 0.0
      %7278 = vmatpush2.msra.mxu0 0.0
      %7279 = vmatprep.subr.mxu0 0.0
      %7280 = vmatpush2.msra.mxu0 0.0
      %7281 = vmatprep.subr.mxu0 0.0
      %7282 = vmatpush2.msra.mxu0 0.0
      %7283 = vmatprep.subr.mxu0 0.0
      %7284 = vmatpush2.msra.mxu0 0.0
      %7285 = vmatprep.subr.mxu0 0.0
      %7286 = vmatpush2.msra.mxu0 0.0
      %7287 = vmatprep.subr.mxu0 0.0
      %7288 = vmatpush2.msra.mxu0 0.0
      %7289 = vmatprep.subr.mxu0 0.0
      %7290 = vmatpush2.msra.mxu0 0.0
      %7291 = vmatprep.subr.mxu0 0.0
      %7292 = vmatpush2.msra.mxu0 0.0
      %7293 = vmatprep.mubr.f32.mxu0 0.0
      %v7294 = vand.u32 %v5884, 4294901760
      %7295 = vmatmul.mubr.f32.gmra.mxu0 %v7294
      %v7296 = vpop.f32.mrf.mxu0
      %v7297 = vadd.f32 %v7178, %v7296
      %v7298 = vpop.f32.mrf.mxu0
      %7299 = vdwg.mxu0
      %7300 = vmatprep.subr.mxu0 0.0
      %v7301 = vand.u32 %v5883, 4294901760
      %7302 = vmatpush1.msra.mxu0 %v7301
      %7303 = vmatprep.subr.mxu0 0.0
      %v7304 = vand.u32 %v5880, 4294901760
      %7305 = vmatpush1.msra.mxu0 %v7304
      %7306 = vmatprep.subr.mxu0 0.0
      %v7307 = vand.u32 %v5877, 4294901760
      %7308 = vmatpush1.msra.mxu0 %v7307
      %7309 = vmatprep.subr.mxu0 0.0
      %v7310 = vand.u32 %v5874, 4294901760
      %7311 = vmatpush1.msra.mxu0 %v7310
      %7312 = vmatprep.subr.mxu0 0.0
      %v7313 = vand.u32 %v5871, 4294901760
      %7314 = vmatpush1.msra.mxu0 %v7313
      %7315 = vmatprep.subr.mxu0 0.0
      %v7316 = vand.u32 %v5868, 4294901760
      %7317 = vmatpush1.msra.mxu0 %v7316
      %7318 = vmatprep.subr.mxu0 0.0
      %v7319 = vand.u32 %v5865, 4294901760
      %7320 = vmatpush1.msra.mxu0 %v7319
      %7321 = vmatprep.subr.mxu0 0.0
      %v7322 = vand.u32 %v5862, 4294901760
      %7323 = vmatpush1.msra.mxu0 %v7322
      %7324 = vmatprep.subr.mxu0 0.0
      %v7325 = vand.u32 %v5859, 4294901760
      %7326 = vmatpush1.msra.mxu0 %v7325
      %7327 = vmatprep.subr.mxu0 0.0
      %v7328 = vand.u32 %v5856, 4294901760
      %7329 = vmatpush1.msra.mxu0 %v7328
      %7330 = vmatprep.subr.mxu0 0.0
      %v7331 = vand.u32 %v5853, 4294901760
      %7332 = vmatpush1.msra.mxu0 %v7331
      %7333 = vmatprep.subr.mxu0 0.0
      %v7334 = vand.u32 %v5850, 4294901760
      %7335 = vmatpush1.msra.mxu0 %v7334
      %7336 = vmatprep.subr.mxu0 0.0
      %v7337 = vand.u32 %v5847, 4294901760
      %7338 = vmatpush1.msra.mxu0 %v7337
      %7339 = vmatprep.subr.mxu0 0.0
      %v7340 = vand.u32 %v5844, 4294901760
      %7341 = vmatpush1.msra.mxu0 %v7340
      %7342 = vmatprep.subr.mxu0 0.0
      %v7343 = vand.u32 %v5841, 4294901760
      %7344 = vmatpush1.msra.mxu0 %v7343
      %7345 = vmatprep.subr.mxu0 0.0
      %v7346 = vand.u32 %v5838, 4294901760
      %7347 = vmatpush1.msra.mxu0 %v7346
      %7348 = vmatprep.subr.mxu0 0.0
      %7349 = vmatpush2.msra.mxu0 0.0
      %7350 = vmatprep.subr.mxu0 0.0
      %7351 = vmatpush2.msra.mxu0 0.0
      %7352 = vmatprep.subr.mxu0 0.0
      %7353 = vmatpush2.msra.mxu0 0.0
      %7354 = vmatprep.subr.mxu0 0.0
      %7355 = vmatpush2.msra.mxu0 0.0
      %7356 = vmatprep.subr.mxu0 0.0
      %7357 = vmatpush2.msra.mxu0 0.0
      %7358 = vmatprep.subr.mxu0 0.0
      %7359 = vmatpush2.msra.mxu0 0.0
      %7360 = vmatprep.subr.mxu0 0.0
      %7361 = vmatpush2.msra.mxu0 0.0
      %7362 = vmatprep.subr.mxu0 0.0
      %7363 = vmatpush2.msra.mxu0 0.0
      %7364 = vmatprep.subr.mxu0 0.0
      %7365 = vmatpush2.msra.mxu0 0.0
      %7366 = vmatprep.subr.mxu0 0.0
      %7367 = vmatpush2.msra.mxu0 0.0
      %7368 = vmatprep.subr.mxu0 0.0
      %7369 = vmatpush2.msra.mxu0 0.0
      %7370 = vmatprep.subr.mxu0 0.0
      %7371 = vmatpush2.msra.mxu0 0.0
      %7372 = vmatprep.subr.mxu0 0.0
      %7373 = vmatpush2.msra.mxu0 0.0
      %7374 = vmatprep.subr.mxu0 0.0
      %7375 = vmatpush2.msra.mxu0 0.0
      %7376 = vmatprep.subr.mxu0 0.0
      %7377 = vmatpush2.msra.mxu0 0.0
      %7378 = vmatprep.subr.mxu0 0.0
      %7379 = vmatpush2.msra.mxu0 0.0
      %7380 = vmatprep.mubr.f32.mxu0 0.0
      %v7381 = vand.u32 %v5884, 4294901760
      %7382 = vmatmul.mubr.f32.gmra.mxu0 %v7381
      %v7383 = vpop.f32.mrf.mxu0
      %v7384 = vadd.f32 %v7297, %v7383
      %v7385 = vpop.f32.mrf.mxu0
      %7386 = vdwg.mxu0
      %v7389 = vcombine.low %v6742, %v6744
      %7391 = vst [vmem:[%s329] sm:$0xff] %v7389
      %7392 = vst [vmem:[%s329 + $0x8] sm:$0xf] %v7384
      %s7393 = smul.u32 3, %s19
      %p7394 = scmp.lt.s32.totalorder %s7393, 5
      %s7395 = scalar_select %p7394, %s7393, 5
      %s7396 = smul.addr %s7395, 4
      %s7397 = scalar_lea.vmem %s8, %s7396
      // Predicated region
      $region53: #{absolute_dynamics_forward.1} parent=51 // pred_check
        %p7398 = pneg %p215
      $region54: #{absolute_dynamics_forward.1} parent=51 // pred_check_branch
        %7400 = sbr.rel (%p7398) target = $region56
      $region55: #{absolute_dynamics_forward.1} parent=51 // pred_region
        %s7401 = smul.u32 3, %s19
      $region56: #{absolute_dynamics_forward.1} parent=51 // pred_fallthru
        _
    $region52: #{absolute_dynamics_forward.1} parent=5 // pred_fallthru
      _
    %p7402 = scmp.le.s32.totalorder 2, %s14
    // Predicated region
    $region57: #{absolute_dynamics_forward.1} parent=5 // pred_check
      %p7403 = pneg %p7402
    $region58: #{absolute_dynamics_forward.1} parent=5 // pred_check_branch
      %7405 = sbr.rel (%p7403) target = $region60
    $region59: #{absolute_dynamics_forward.1} parent=5 // pred_region
      %s7406 = ssub.s32 %s14, 2
      // Predicated region
      $region61: #{absolute_dynamics_forward.1} parent=59 // pred_check
        %p7407 = pneg %p221
      $region62: #{absolute_dynamics_forward.1} parent=59 // pred_check_branch
        %7409 = sbr.rel (%p7407) target = $region64
      $region63: #{absolute_dynamics_forward.1} parent=59 // pred_region
        %s7410 = smul.u32 3, %s20
        %p7411 = scmp.lt.s32.totalorder %s7410, 5
        %s7412 = scalar_select %p7411, %s7410, 5
        %s7413 = smul.addr %s7412, 4
        %s7414 = scalar_lea.vmem %s8, %s7413
      $region64: #{absolute_dynamics_forward.1} parent=59 // pred_fallthru
        _
    $region60: #{absolute_dynamics_forward.1} parent=5 // pred_fallthru
      _
  $region6: #{absolute_dynamics_forward.1} parent=0 // loop_footer
    %s18 = sadd.s32 1, %s14
  $region7: #{absolute_dynamics_forward.1} parent=0 // loop_footer_branch
    %13 = sbr.rel target = $region3
  $region8: #{absolute_dynamics_forward.1} parent=0 // loop_exit
    _

</llo_original>
